<compile_context>
chip_gen: v7x
topology: tpu7x:2x2x1
jax: 0.10.0
libtpu: 0.0.40
codegen_flags: <defaults>
</compile_context>

<pallas_src>
import functools

import jax
import jax.numpy as jnp
from jax.experimental import pallas as pl
from jax.experimental.pallas import tpu as pltpu

NN1, NN2, NN3 = 32, 16, 8
_LANE = 128      # batch rides the lane axis; tiles padded to a lane multiple
_MAX_BT = 2048   # per-step cap: h1=(32,2048) f32 ~ the 64-vreg file, no spill blowup


def mlp_kernel(x_ref, w1_ref, b1_ref, w2_ref, b2_ref,
               w3_ref, b3_ref, w4_ref, b4_ref, o_ref):
    x = x_ref[...]                                              # (1, BT)

    # fc1: in_features = 1 -> pure VPU outer product, no MXU push for K=1.
    h = jnp.maximum(w1_ref[...] * x + b1_ref[...], 0.0)        # (32, BT)

    # fc2: (16,32) @ (32,BT) on the MXU.  HIGHEST precision = exact f32
    # multi-pass; cost is irrelevant at this occupancy and keeps the 1e-5
    # tolerance solid.  Bias/ReLU on the VPU.
    h = jnp.dot(w2_ref[...], h, preferred_element_type=jnp.float32,
                precision=jax.lax.Precision.HIGHEST)
    h = jnp.maximum(h + b2_ref[...], 0.0)                       # (16, BT)

    # fc3: (8,16) @ (16,BT) on the MXU.
    h = jnp.dot(w3_ref[...], h, preferred_element_type=jnp.float32,
                precision=jax.lax.Precision.HIGHEST)
    h = jnp.maximum(h + b3_ref[...], 0.0)                       # (8, BT)

    # fc4: out_features = 1 -> VPU multiply + 8-sublane reduce (XLU); the
    # (1,1) bias is a plain scalar read from SMEM.
    out = jnp.sum(w4_ref[...] * h, axis=0, keepdims=True) + b4_ref[0, 0]
    o_ref[...] = out.astype(o_ref.dtype)                        # (1, BT)


def _default_num_steps():
    """1 grid step on single-TC chips (v5e/v6e); 2 on v7x (2 TCs/chip)."""
    try:
        kind = jax.devices()[0].device_kind.lower()
        if "v7" in kind or "7x" in kind:
            return 2
    except Exception:
        pass
    return 1


@functools.partial(jax.jit, static_argnames=("batch_tile",))
def regression_model_forward(x, params, *, batch_tile=None):
    """x: [B, 1] float32. Returns [B, 1] float32."""
    w1, b1 = params["fc1"]
    w2, b2 = params["fc2"]
    w3, b3 = params["fc3"]
    w4, b4 = params["fc4"]

    B = x.shape[0]
    if batch_tile is None:
        n_steps = _default_num_steps()
        bt = min(_MAX_BT, pl.cdiv(pl.cdiv(B, n_steps), _LANE) * _LANE)
    else:
        bt = batch_tile
    n_steps = pl.cdiv(B, bt)
    Bp = n_steps * bt

    # Lane-dense slab: [B,1] -> [1,B] is a free bitcast; one fused pad (no
    # zeros + dynamic-update-slice) avoids an extra HBM round-trip.  Pad,
    # pallas_call and the final slice all live inside this jit.
    x_lanes = jnp.pad(x.reshape(1, B), ((0, 0), (0, Bp - B)))

    const = lambda shape: pl.BlockSpec(shape, lambda i: (0, 0))
    smem = pl.BlockSpec(memory_space=pltpu.MemorySpace.SMEM)

    out = pl.pallas_call(
        mlp_kernel,
        out_shape=jax.ShapeDtypeStruct((1, Bp), jnp.float32),
        grid=(n_steps,),
        in_specs=[
            pl.BlockSpec((1, bt), lambda i: (0, i)),   # x tile (lane-dense)
            const(w1.shape), const(b1.shape),
            const(w2.shape), const(b2.shape),
            const(w3.shape), const(b3.shape),
            const(w4.shape), smem,                     # b4 (1,1) scalar in SMEM
        ],
        out_specs=pl.BlockSpec((1, bt), lambda i: (0, i)),
        compiler_params=pltpu.CompilerParams(
            dimension_semantics=("parallel",)),
    )(x_lanes, w1, b1, w2, b2, w3, b3, w4, b4)

    # Padded columns B..Bp hold bias-only garbage; always slice with [:B].
    return out[0, :B].reshape(B, 1)


def init_params(key):
    """Deterministic init mimicking PyTorch Linear's U(-1/sqrt(in), 1/sqrt(in)).

    Weights are stored for the transposed (W @ x) formulation:
      fc1 -> (32, 1), fc2 -> (16, 32), fc3 -> (8, 16), fc4 -> (8, 1) (= W4.T)
    Biases fc1..fc3 are column vectors (out, 1); fc4 bias is (1, 1).
    """
    params = {}
    layers = [("fc1", 1, NN1), ("fc2", NN1, NN2), ("fc3", NN2, NN3), ("fc4", NN3, 1)]
    for name, fin, fout in layers:
        key, kw, kb = jax.random.split(key, 3)
        bound = 1.0 / jnp.sqrt(fin)
        if name == "fc4":
            w = jax.random.uniform(kw, (fin, fout), jnp.float32, -bound, bound)  # (8,1)
        else:
            w = jax.random.uniform(kw, (fout, fin), jnp.float32, -bound, bound)  # (out,in)
        b = jax.random.uniform(kb, (fout, 1), jnp.float32, -bound, bound)
        params[name] = (w, b)
    return params


def ref_forward(x, p):
    """Pure-JAX reference in the standard [B, feat] layout."""
    h = jnp.maximum(x @ p["fc1"][0].T + p["fc1"][1].T, 0.0)
    h = jnp.maximum(h @ p["fc2"][0].T + p["fc2"][1].T, 0.0)
    h = jnp.maximum(h @ p["fc3"][0].T + p["fc3"][1].T, 0.0)
    return h @ p["fc4"][0] + p["fc4"][1].T


if __name__ == "__main__":
    key = jax.random.PRNGKey(0)
    params = init_params(key)

    # Same sizing as the original script (N = 2000 scalar inputs, R^1 -> R^1).
    B = 2000
    x = jnp.linspace(-10.0, 10.0, B, dtype=jnp.float32).reshape(B, 1)

    out = jax.block_until_ready(regression_model_forward(x, params))

    expected = ref_forward(x, params)
    assert out.shape == (B, 1)
    assert jnp.allclose(out, expected, atol=1e-5, rtol=1e-5)
    print("KERNEL_OK")
</pallas_src>

<mosaic_0001>
module attributes {stable_mosaic.version = 11 : i64} {
  func.func @mlp_kernel(%arg0: i32, %arg1: memref<1x2048xf32, #tpu.memory_space<vmem>>, %arg2: memref<32x1xf32, #tpu.memory_space<vmem>>, %arg3: memref<32x1xf32, #tpu.memory_space<vmem>>, %arg4: memref<16x32xf32, #tpu.memory_space<vmem>>, %arg5: memref<16x1xf32, #tpu.memory_space<vmem>>, %arg6: memref<8x16xf32, #tpu.memory_space<vmem>>, %arg7: memref<8x1xf32, #tpu.memory_space<vmem>>, %arg8: memref<8x1xf32, #tpu.memory_space<vmem>>, %arg9: memref<1x1xf32, #tpu.memory_space<smem>>, %arg10: memref<1x2048xf32, #tpu.memory_space<vmem>>) attributes {dimension_semantics = [#tpu.dimension_semantics<parallel>], iteration_bounds = array<i64: 1>, scalar_prefetch = 0 : i64, scratch_operands = 0 : i64, tpu.core_type = #tpu.core_type<tc>, window_params = [{transform_indices = @transform_0, window_bounds = array<i64: 1, 2048>}, {pipeline_mode = #tpu.pipeline_mode<synchronous>, transform_indices = @transform_1, window_bounds = array<i64: 32, 1>}, {pipeline_mode = #tpu.pipeline_mode<synchronous>, transform_indices = @transform_2, window_bounds = array<i64: 32, 1>}, {pipeline_mode = #tpu.pipeline_mode<synchronous>, transform_indices = @transform_3, window_bounds = array<i64: 16, 32>}, {pipeline_mode = #tpu.pipeline_mode<synchronous>, transform_indices = @transform_4, window_bounds = array<i64: 16, 1>}, {pipeline_mode = #tpu.pipeline_mode<synchronous>, transform_indices = @transform_5, window_bounds = array<i64: 8, 16>}, {pipeline_mode = #tpu.pipeline_mode<synchronous>, transform_indices = @transform_6, window_bounds = array<i64: 8, 1>}, {pipeline_mode = #tpu.pipeline_mode<synchronous>, transform_indices = @transform_7, window_bounds = array<i64: 8, 1>}, {transform_indices = @transform_8, window_bounds = array<i64: 1, 1>}, {transform_indices = @transform_9, window_bounds = array<i64: 1, 2048>}]} {
    %c0 = arith.constant 0 : index
    %c0_0 = arith.constant 0 : index
    %0 = vector.load %arg1[%c0, %c0_0] : memref<1x2048xf32, #tpu.memory_space<vmem>>, vector<1x2048xf32>
    %c0_1 = arith.constant 0 : index
    %c0_2 = arith.constant 0 : index
    %1 = vector.load %arg2[%c0_1, %c0_2] : memref<32x1xf32, #tpu.memory_space<vmem>>, vector<32x1xf32>
    %2 = vector.broadcast %1 : vector<32x1xf32> to vector<32x2048xf32>
    %3 = vector.broadcast %0 : vector<1x2048xf32> to vector<32x2048xf32>
    %4 = arith.mulf %2, %3 : vector<32x2048xf32>
    %c0_3 = arith.constant 0 : index
    %c0_4 = arith.constant 0 : index
    %5 = vector.load %arg3[%c0_3, %c0_4] : memref<32x1xf32, #tpu.memory_space<vmem>>, vector<32x1xf32>
    %6 = vector.broadcast %5 : vector<32x1xf32> to vector<32x2048xf32>
    %7 = arith.addf %4, %6 : vector<32x2048xf32>
    %cst = arith.constant 0.000000e+00 : f32
    %8 = vector.broadcast %cst : f32 to vector<32x2048xf32>
    %9 = arith.maximumf %7, %8 : vector<32x2048xf32>
    %c0_5 = arith.constant 0 : index
    %c0_6 = arith.constant 0 : index
    %10 = vector.load %arg4[%c0_5, %c0_6] : memref<16x32xf32, #tpu.memory_space<vmem>>, vector<16x32xf32>
    %cst_7 = arith.constant dense<0.000000e+00> : vector<16x2048xf32>
    %11 = tpu.matmul %10, %9, %cst_7 {dimension_numbers = #tpu.dot_dimension_numbers<[1], [0], [0], [1], [0, 0, 1, 1], [], []>, precision = #tpu.contract_precision<fp32>} : vector<16x32xf32>, vector<32x2048xf32>, vector<16x2048xf32> -> vector<16x2048xf32>
    %c0_8 = arith.constant 0 : index
    %c0_9 = arith.constant 0 : index
    %12 = vector.load %arg5[%c0_8, %c0_9] : memref<16x1xf32, #tpu.memory_space<vmem>>, vector<16x1xf32>
    %13 = vector.broadcast %12 : vector<16x1xf32> to vector<16x2048xf32>
    %14 = arith.addf %11, %13 : vector<16x2048xf32>
    %cst_10 = arith.constant 0.000000e+00 : f32
    %15 = vector.broadcast %cst_10 : f32 to vector<16x2048xf32>
    %16 = arith.maximumf %14, %15 : vector<16x2048xf32>
    %c0_11 = arith.constant 0 : index
    %c0_12 = arith.constant 0 : index
    %17 = vector.load %arg6[%c0_11, %c0_12] : memref<8x16xf32, #tpu.memory_space<vmem>>, vector<8x16xf32>
    %cst_13 = arith.constant dense<0.000000e+00> : vector<8x2048xf32>
    %18 = tpu.matmul %17, %16, %cst_13 {dimension_numbers = #tpu.dot_dimension_numbers<[1], [0], [0], [1], [0, 0, 1, 1], [], []>, precision = #tpu.contract_precision<fp32>} : vector<8x16xf32>, vector<16x2048xf32>, vector<8x2048xf32> -> vector<8x2048xf32>
    %c0_14 = arith.constant 0 : index
    %c0_15 = arith.constant 0 : index
    %19 = vector.load %arg7[%c0_14, %c0_15] : memref<8x1xf32, #tpu.memory_space<vmem>>, vector<8x1xf32>
    %20 = vector.broadcast %19 : vector<8x1xf32> to vector<8x2048xf32>
    %21 = arith.addf %18, %20 : vector<8x2048xf32>
    %cst_16 = arith.constant 0.000000e+00 : f32
    %22 = vector.broadcast %cst_16 : f32 to vector<8x2048xf32>
    %23 = arith.maximumf %21, %22 : vector<8x2048xf32>
    %c0_17 = arith.constant 0 : index
    %c0_18 = arith.constant 0 : index
    %24 = vector.load %arg8[%c0_17, %c0_18] : memref<8x1xf32, #tpu.memory_space<vmem>>, vector<8x1xf32>
    %25 = vector.broadcast %24 : vector<8x1xf32> to vector<8x2048xf32>
    %26 = arith.mulf %25, %23 : vector<8x2048xf32>
    %cst_19 = arith.constant dense<0.000000e+00> : vector<2048xf32>
    %27 = vector.multi_reduction <add>, %26, %cst_19 [0] : vector<8x2048xf32> to vector<2048xf32>
    %28 = vector.shape_cast %27 : vector<2048xf32> to vector<1x2048xf32>
    %c0_20 = arith.constant 0 : index
    %c0_21 = arith.constant 0 : index
    %29 = memref.load %arg9[%c0_20, %c0_21] : memref<1x1xf32, #tpu.memory_space<smem>>
    %30 = vector.broadcast %29 : f32 to vector<1x2048xf32>
    %31 = arith.addf %28, %30 : vector<1x2048xf32>
    %c0_22 = arith.constant 0 : index
    %c0_23 = arith.constant 0 : index
    %32 = vector.load %arg10[%c0_22, %c0_23] : memref<1x2048xf32, #tpu.memory_space<vmem>>, vector<1x2048xf32>
    tpu.vector_store %arg10[%c0_22, %c0_23], %31 {strides = array<i32>} : memref<1x2048xf32, #tpu.memory_space<vmem>>, vector<1x2048xf32>,
    return
  }
  func.func @transform_0(%arg0: i32) -> (i32, i32) {
    %c0_i32 = arith.constant 0 : i32
    %c0_i32_0 = arith.constant 0 : i32
    return %c0_i32, %arg0 : i32, i32
  }
  func.func @transform_1(%arg0: i32) -> (i32, i32) {
    %c0_i32 = arith.constant 0 : i32
    %c0_i32_0 = arith.constant 0 : i32
    %c0_i32_1 = arith.constant 0 : i32
    return %c0_i32, %c0_i32_0 : i32, i32
  }
  func.func @transform_2(%arg0: i32) -> (i32, i32) {
    %c0_i32 = arith.constant 0 : i32
    %c0_i32_0 = arith.constant 0 : i32
    %c0_i32_1 = arith.constant 0 : i32
    return %c0_i32, %c0_i32_0 : i32, i32
  }
  func.func @transform_3(%arg0: i32) -> (i32, i32) {
    %c0_i32 = arith.constant 0 : i32
    %c0_i32_0 = arith.constant 0 : i32
    %c0_i32_1 = arith.constant 0 : i32
    return %c0_i32, %c0_i32_0 : i32, i32
  }
  func.func @transform_4(%arg0: i32) -> (i32, i32) {
    %c0_i32 = arith.constant 0 : i32
    %c0_i32_0 = arith.constant 0 : i32
    %c0_i32_1 = arith.constant 0 : i32
    return %c0_i32, %c0_i32_0 : i32, i32
  }
  func.func @transform_5(%arg0: i32) -> (i32, i32) {
    %c0_i32 = arith.constant 0 : i32
    %c0_i32_0 = arith.constant 0 : i32
    %c0_i32_1 = arith.constant 0 : i32
    return %c0_i32, %c0_i32_0 : i32, i32
  }
  func.func @transform_6(%arg0: i32) -> (i32, i32) {
    %c0_i32 = arith.constant 0 : i32
    %c0_i32_0 = arith.constant 0 : i32
    %c0_i32_1 = arith.constant 0 : i32
    return %c0_i32, %c0_i32_0 : i32, i32
  }
  func.func @transform_7(%arg0: i32) -> (i32, i32) {
    %c0_i32 = arith.constant 0 : i32
    %c0_i32_0 = arith.constant 0 : i32
    %c0_i32_1 = arith.constant 0 : i32
    return %c0_i32, %c0_i32_0 : i32, i32
  }
  func.func @transform_8(%arg0: i32) -> (i32, i32) {
    %c0_i32 = arith.constant 0 : i32
    %c0_i32_0 = arith.constant 0 : i32
    %c0_i32_1 = arith.constant 0 : i32
    return %c0_i32, %c0_i32_0 : i32, i32
  }
  func.func @transform_9(%arg0: i32) -> (i32, i32) {
    %c0_i32 = arith.constant 0 : i32
    %c0_i32_0 = arith.constant 0 : i32
    return %c0_i32, %arg0 : i32, i32
  }
}

</mosaic_0001>

<llo_original>
// kernel: regression_model_forward.1
$region0: #{regression_model_forward.1}
  #allocation0 [shape = 'u32[]', space=smem, size = 0x4, offset = 0x4, fixed_abs, tag = 'smem constant byte address 0x4 - core index']
  #allocation1 [shape = 'u32[144,128]{1,0:T(1,128)}', space=vmem, size = 0x12000, scoped, tag = 'internal scratch']
  #allocation2 [shape = 'f32[1,1]{1,0:T(1,128)S(6)}', space=smem, size = 0x200, scoped, tag = 'scoped memory for regression_model_forward.1']
  %s0 = inlined_call_operand.vmem [shape: f32[1,2048], index: 0, kind: input, shape index: {}]
  %s1 = inlined_call_operand.vmem [shape: f32[32,1], index: 1, kind: input, shape index: {}]
  %s2 = inlined_call_operand.vmem [shape: f32[32,1], index: 2, kind: input, shape index: {}]
  %s3 = inlined_call_operand.vmem [shape: f32[16,32], index: 3, kind: input, shape index: {}]
  %s4 = inlined_call_operand.vmem [shape: f32[16,1], index: 4, kind: input, shape index: {}]
  %s5 = inlined_call_operand.vmem [shape: f32[8,16], index: 5, kind: input, shape index: {}]
  %s6 = inlined_call_operand.vmem [shape: f32[8,1], index: 6, kind: input, shape index: {}]
  %s7 = inlined_call_operand.vmem [shape: f32[8,1], index: 7, kind: input, shape index: {}]
  %s8 = inlined_call_operand.<no memory space> [shape: f32[1,1], index: 8, kind: input, shape index: {}]
  %s9 = inlined_call_operand.vmem [shape: f32[1,2048], index: 9, kind: output, shape index: {}]
  %s10 = sld [smem:[#allocation0]]
  $region46: #{regression_model_forward.1} parent=0
    _
  %s12 = ssub.s32 1, %s10
  %s13 = scalar_select 0, %s12, %s10
  %14 = sst [smem:[#allocation2]] %s8
  // Predicated region
  $region2: #{regression_model_forward.1} parent=0 // pred_check
    _
  $region3: #{regression_model_forward.1} parent=0 // pred_check_branch
    %16 = sbr.rel (0) target = $region5
  $region4: #{regression_model_forward.1} parent=0 // pred_region
    _
  $region5: #{regression_model_forward.1} parent=0 // pred_fallthru
    _
  // Predicated region
  $region6: #{regression_model_forward.1} parent=0 // pred_check
    _
  $region7: #{regression_model_forward.1} parent=0 // pred_check_branch
    %18 = sbr.rel (0) target = $region9
  $region8: #{regression_model_forward.1} parent=0 // pred_region
    _
  $region9: #{regression_model_forward.1} parent=0 // pred_fallthru
    _
  // Predicated region
  $region10: #{regression_model_forward.1} parent=0 // pred_check
    _
  $region11: #{regression_model_forward.1} parent=0 // pred_check_branch
    %20 = sbr.rel (0) target = $region13
  $region12: #{regression_model_forward.1} parent=0 // pred_region
    _
  $region13: #{regression_model_forward.1} parent=0 // pred_fallthru
    _
  // Predicated region
  $region14: #{regression_model_forward.1} parent=0 // pred_check
    _
  $region15: #{regression_model_forward.1} parent=0 // pred_check_branch
    %22 = sbr.rel (0) target = $region17
  $region16: #{regression_model_forward.1} parent=0 // pred_region
    _
  $region17: #{regression_model_forward.1} parent=0 // pred_fallthru
    _
  // Predicated region
  $region18: #{regression_model_forward.1} parent=0 // pred_check
    _
  $region19: #{regression_model_forward.1} parent=0 // pred_check_branch
    %24 = sbr.rel (0) target = $region21
  $region20: #{regression_model_forward.1} parent=0 // pred_region
    _
  $region21: #{regression_model_forward.1} parent=0 // pred_fallthru
    _
  // Predicated region
  $region22: #{regression_model_forward.1} parent=0 // pred_check
    _
  $region23: #{regression_model_forward.1} parent=0 // pred_check_branch
    %26 = sbr.rel (0) target = $region25
  $region24: #{regression_model_forward.1} parent=0 // pred_region
    _
  $region25: #{regression_model_forward.1} parent=0 // pred_fallthru
    _
  // Predicated region
  $region26: #{regression_model_forward.1} parent=0 // pred_check
    _
  $region27: #{regression_model_forward.1} parent=0 // pred_check_branch
    %28 = sbr.rel (0) target = $region29
  $region28: #{regression_model_forward.1} parent=0 // pred_region
    _
  $region29: #{regression_model_forward.1} parent=0 // pred_fallthru
    _
  // Predicated region
  $region30: #{regression_model_forward.1} parent=0 // pred_check
    _
  $region31: #{regression_model_forward.1} parent=0 // pred_check_branch
    %30 = sbr.rel (0) target = $region33
  $region32: #{regression_model_forward.1} parent=0 // pred_region
    _
  $region33: #{regression_model_forward.1} parent=0 // pred_fallthru
    _
  // Predicated region
  $region34: #{regression_model_forward.1} parent=0 // pred_check
    _
  $region35: #{regression_model_forward.1} parent=0 // pred_check_branch
    %32 = sbr.rel (0) target = $region37
  $region36: #{regression_model_forward.1} parent=0 // pred_region
    _
  $region37: #{regression_model_forward.1} parent=0 // pred_fallthru
    _
  %v33 = vld [vmem:[%s0] sm:$0xff]
  %v34 = vld [vmem:[%s0 + $0x8] sm:$0xff]
  %v35 = vld [vmem:[%s1] sm:$0xff]
  %v36 = vld [vmem:[%s1 + $0x8] sm:$0xff]
  %v37 = vld [vmem:[%s1 + $0x10] sm:$0xff]
  %v38 = vld [vmem:[%s1 + $0x18] sm:$0xff]
  %40 = vset.pattern.permute.xlu0 0
  %41 = vperm.xlu0 %40, %v35
  %v42 = vpop.permute.xlu0 %41
  %45 = vset.pattern.permute.xlu0 0
  %46 = vperm.xlu0 %45, %v36
  %v47 = vpop.permute.xlu0 %46
  %50 = vset.pattern.permute.xlu0 0
  %51 = vperm.xlu0 %50, %v37
  %v52 = vpop.permute.xlu0 %51
  %55 = vset.pattern.permute.xlu0 0
  %56 = vperm.xlu0 %55, %v38
  %v57 = vpop.permute.xlu0 %56
  %v61 = vlaneseq
  %v62 = vshrl.u32 %v61, 7
  %v63 = vsub.s32 0, %v62
  %v64 = vrot.slane %v33, %v63
  %v65 = vlaneseq
  %v66 = vshrl.u32 %v65, 7
  %v67 = vsub.s32 1, %v66
  %v68 = vrot.slane %v33, %v67
  %v69 = vlaneseq
  %v70 = vshrl.u32 %v69, 7
  %v71 = vsub.s32 2, %v70
  %v72 = vrot.slane %v33, %v71
  %v73 = vlaneseq
  %v74 = vshrl.u32 %v73, 7
  %v75 = vsub.s32 3, %v74
  %v76 = vrot.slane %v33, %v75
  %v77 = vlaneseq
  %v78 = vshrl.u32 %v77, 7
  %v79 = vsub.s32 4, %v78
  %v80 = vrot.slane %v33, %v79
  %v81 = vlaneseq
  %v82 = vshrl.u32 %v81, 7
  %v83 = vsub.s32 5, %v82
  %v84 = vrot.slane %v33, %v83
  %v85 = vlaneseq
  %v86 = vshrl.u32 %v85, 7
  %v87 = vsub.s32 6, %v86
  %v88 = vrot.slane %v33, %v87
  %v89 = vlaneseq
  %v90 = vshrl.u32 %v89, 7
  %v91 = vsub.s32 7, %v90
  %v92 = vrot.slane %v33, %v91
  %v93 = vlaneseq
  %v94 = vshrl.u32 %v93, 7
  %v95 = vsub.s32 0, %v94
  %v96 = vrot.slane %v34, %v95
  %v97 = vlaneseq
  %v98 = vshrl.u32 %v97, 7
  %v99 = vsub.s32 1, %v98
  %v100 = vrot.slane %v34, %v99
  %v101 = vlaneseq
  %v102 = vshrl.u32 %v101, 7
  %v103 = vsub.s32 2, %v102
  %v104 = vrot.slane %v34, %v103
  %v105 = vlaneseq
  %v106 = vshrl.u32 %v105, 7
  %v107 = vsub.s32 3, %v106
  %v108 = vrot.slane %v34, %v107
  %v109 = vlaneseq
  %v110 = vshrl.u32 %v109, 7
  %v111 = vsub.s32 4, %v110
  %v112 = vrot.slane %v34, %v111
  %v113 = vlaneseq
  %v114 = vshrl.u32 %v113, 7
  %v115 = vsub.s32 5, %v114
  %v116 = vrot.slane %v34, %v115
  %v117 = vlaneseq
  %v118 = vshrl.u32 %v117, 7
  %v119 = vsub.s32 6, %v118
  %v120 = vrot.slane %v34, %v119
  %v121 = vlaneseq
  %v122 = vshrl.u32 %v121, 7
  %v123 = vsub.s32 7, %v122
  %v124 = vrot.slane %v34, %v123
  %v141 = vmul.f32 %v42, %v64
  %v142 = vmul.f32 %v42, %v68
  %v143 = vmul.f32 %v42, %v72
  %v144 = vmul.f32 %v42, %v76
  %v145 = vmul.f32 %v42, %v80
  %v146 = vmul.f32 %v42, %v84
  %v147 = vmul.f32 %v42, %v88
  %v148 = vmul.f32 %v42, %v92
  %v149 = vmul.f32 %v42, %v96
  %v150 = vmul.f32 %v42, %v100
  %v151 = vmul.f32 %v42, %v104
  %v152 = vmul.f32 %v42, %v108
  %v153 = vmul.f32 %v42, %v112
  %v154 = vmul.f32 %v42, %v116
  %v155 = vmul.f32 %v42, %v120
  %v156 = vmul.f32 %v42, %v124
  %v157 = vmul.f32 %v47, %v64
  %v158 = vmul.f32 %v47, %v68
  %v159 = vmul.f32 %v47, %v72
  %v160 = vmul.f32 %v47, %v76
  %v161 = vmul.f32 %v47, %v80
  %v162 = vmul.f32 %v47, %v84
  %v163 = vmul.f32 %v47, %v88
  %v164 = vmul.f32 %v47, %v92
  %v165 = vmul.f32 %v47, %v96
  %v166 = vmul.f32 %v47, %v100
  %v167 = vmul.f32 %v47, %v104
  %v168 = vmul.f32 %v47, %v108
  %v169 = vmul.f32 %v47, %v112
  %v170 = vmul.f32 %v47, %v116
  %v171 = vmul.f32 %v47, %v120
  %v172 = vmul.f32 %v47, %v124
  %v173 = vmul.f32 %v52, %v64
  %v174 = vmul.f32 %v52, %v68
  %v175 = vmul.f32 %v52, %v72
  %v176 = vmul.f32 %v52, %v76
  %v177 = vmul.f32 %v52, %v80
  %v178 = vmul.f32 %v52, %v84
  %v179 = vmul.f32 %v52, %v88
  %v180 = vmul.f32 %v52, %v92
  %v181 = vmul.f32 %v52, %v96
  %v182 = vmul.f32 %v52, %v100
  %v183 = vmul.f32 %v52, %v104
  %v184 = vmul.f32 %v52, %v108
  %v185 = vmul.f32 %v52, %v112
  %v186 = vmul.f32 %v52, %v116
  %v187 = vmul.f32 %v52, %v120
  %v188 = vmul.f32 %v52, %v124
  %v189 = vmul.f32 %v57, %v64
  %v190 = vmul.f32 %v57, %v68
  %v191 = vmul.f32 %v57, %v72
  %v192 = vmul.f32 %v57, %v76
  %v193 = vmul.f32 %v57, %v80
  %v194 = vmul.f32 %v57, %v84
  %v195 = vmul.f32 %v57, %v88
  %v196 = vmul.f32 %v57, %v92
  %v197 = vmul.f32 %v57, %v96
  %v198 = vmul.f32 %v57, %v100
  %v199 = vmul.f32 %v57, %v104
  %v200 = vmul.f32 %v57, %v108
  %v201 = vmul.f32 %v57, %v112
  %v202 = vmul.f32 %v57, %v116
  %v203 = vmul.f32 %v57, %v120
  %v204 = vmul.f32 %v57, %v124
  %v205 = vld [vmem:[%s2] sm:$0xff]
  %v206 = vld [vmem:[%s2 + $0x8] sm:$0xff]
  %v207 = vld [vmem:[%s2 + $0x10] sm:$0xff]
  %v208 = vld [vmem:[%s2 + $0x18] sm:$0xff]
  %210 = vset.pattern.permute.xlu0 0
  %211 = vperm.xlu0 %210, %v205
  %v212 = vpop.permute.xlu0 %211
  %215 = vset.pattern.permute.xlu0 0
  %216 = vperm.xlu0 %215, %v206
  %v217 = vpop.permute.xlu0 %216
  %220 = vset.pattern.permute.xlu0 0
  %221 = vperm.xlu0 %220, %v207
  %v222 = vpop.permute.xlu0 %221
  %225 = vset.pattern.permute.xlu0 0
  %226 = vperm.xlu0 %225, %v208
  %v227 = vpop.permute.xlu0 %226
  %v229 = vadd.f32 %v141, %v212
  %v230 = vadd.f32 %v142, %v212
  %v231 = vadd.f32 %v143, %v212
  %v232 = vadd.f32 %v144, %v212
  %v233 = vadd.f32 %v145, %v212
  %v234 = vadd.f32 %v146, %v212
  %v235 = vadd.f32 %v147, %v212
  %v236 = vadd.f32 %v148, %v212
  %v237 = vadd.f32 %v149, %v212
  %v238 = vadd.f32 %v150, %v212
  %v239 = vadd.f32 %v151, %v212
  %v240 = vadd.f32 %v152, %v212
  %v241 = vadd.f32 %v153, %v212
  %v242 = vadd.f32 %v154, %v212
  %v243 = vadd.f32 %v155, %v212
  %v244 = vadd.f32 %v156, %v212
  %v245 = vadd.f32 %v157, %v217
  %v246 = vadd.f32 %v158, %v217
  %v247 = vadd.f32 %v159, %v217
  %v248 = vadd.f32 %v160, %v217
  %v249 = vadd.f32 %v161, %v217
  %v250 = vadd.f32 %v162, %v217
  %v251 = vadd.f32 %v163, %v217
  %v252 = vadd.f32 %v164, %v217
  %v253 = vadd.f32 %v165, %v217
  %v254 = vadd.f32 %v166, %v217
  %v255 = vadd.f32 %v167, %v217
  %v256 = vadd.f32 %v168, %v217
  %v257 = vadd.f32 %v169, %v217
  %v258 = vadd.f32 %v170, %v217
  %v259 = vadd.f32 %v171, %v217
  %v260 = vadd.f32 %v172, %v217
  %v261 = vadd.f32 %v173, %v222
  %v262 = vadd.f32 %v174, %v222
  %v263 = vadd.f32 %v175, %v222
  %v264 = vadd.f32 %v176, %v222
  %v265 = vadd.f32 %v177, %v222
  %v266 = vadd.f32 %v178, %v222
  %v267 = vadd.f32 %v179, %v222
  %v268 = vadd.f32 %v180, %v222
  %v269 = vadd.f32 %v181, %v222
  %v270 = vadd.f32 %v182, %v222
  %v271 = vadd.f32 %v183, %v222
  %v272 = vadd.f32 %v184, %v222
  %v273 = vadd.f32 %v185, %v222
  %v274 = vadd.f32 %v186, %v222
  %v275 = vadd.f32 %v187, %v222
  %v276 = vadd.f32 %v188, %v222
  %v277 = vadd.f32 %v189, %v227
  %v278 = vadd.f32 %v190, %v227
  %v279 = vadd.f32 %v191, %v227
  %v280 = vadd.f32 %v192, %v227
  %v281 = vadd.f32 %v193, %v227
  %v282 = vadd.f32 %v194, %v227
  %v283 = vadd.f32 %v195, %v227
  %v284 = vadd.f32 %v196, %v227
  %v285 = vadd.f32 %v197, %v227
  %v286 = vadd.f32 %v198, %v227
  %v287 = vadd.f32 %v199, %v227
  %v288 = vadd.f32 %v200, %v227
  %v289 = vadd.f32 %v201, %v227
  %v290 = vadd.f32 %v202, %v227
  %v291 = vadd.f32 %v203, %v227
  %v292 = vadd.f32 %v204, %v227
  %v293 = vmax.f32 %v229, 0.0
  %v294 = vmax.f32 %v230, 0.0
  %v295 = vmax.f32 %v231, 0.0
  %v296 = vmax.f32 %v232, 0.0
  %v297 = vmax.f32 %v233, 0.0
  %v298 = vmax.f32 %v234, 0.0
  %v299 = vmax.f32 %v235, 0.0
  %v300 = vmax.f32 %v236, 0.0
  %v301 = vmax.f32 %v237, 0.0
  %v302 = vmax.f32 %v238, 0.0
  %v303 = vmax.f32 %v239, 0.0
  %v304 = vmax.f32 %v240, 0.0
  %v305 = vmax.f32 %v241, 0.0
  %v306 = vmax.f32 %v242, 0.0
  %v307 = vmax.f32 %v243, 0.0
  %v308 = vmax.f32 %v244, 0.0
  %v309 = vmax.f32 %v245, 0.0
  %v310 = vmax.f32 %v246, 0.0
  %v311 = vmax.f32 %v247, 0.0
  %v312 = vmax.f32 %v248, 0.0
  %v313 = vmax.f32 %v249, 0.0
  %v314 = vmax.f32 %v250, 0.0
  %v315 = vmax.f32 %v251, 0.0
  %v316 = vmax.f32 %v252, 0.0
  %v317 = vmax.f32 %v253, 0.0
  %v318 = vmax.f32 %v254, 0.0
  %v319 = vmax.f32 %v255, 0.0
  %v320 = vmax.f32 %v256, 0.0
  %v321 = vmax.f32 %v257, 0.0
  %v322 = vmax.f32 %v258, 0.0
  %v323 = vmax.f32 %v259, 0.0
  %v324 = vmax.f32 %v260, 0.0
  %v325 = vmax.f32 %v261, 0.0
  %v326 = vmax.f32 %v262, 0.0
  %v327 = vmax.f32 %v263, 0.0
  %v328 = vmax.f32 %v264, 0.0
  %v329 = vmax.f32 %v265, 0.0
  %v330 = vmax.f32 %v266, 0.0
  %v331 = vmax.f32 %v267, 0.0
  %v332 = vmax.f32 %v268, 0.0
  %v333 = vmax.f32 %v269, 0.0
  %v334 = vmax.f32 %v270, 0.0
  %v335 = vmax.f32 %v271, 0.0
  %v336 = vmax.f32 %v272, 0.0
  %v337 = vmax.f32 %v273, 0.0
  %v338 = vmax.f32 %v274, 0.0
  %v339 = vmax.f32 %v275, 0.0
  %v340 = vmax.f32 %v276, 0.0
  %v341 = vmax.f32 %v277, 0.0
  %v342 = vmax.f32 %v278, 0.0
  %v343 = vmax.f32 %v279, 0.0
  %v344 = vmax.f32 %v280, 0.0
  %v345 = vmax.f32 %v281, 0.0
  %v346 = vmax.f32 %v282, 0.0
  %v347 = vmax.f32 %v283, 0.0
  %v348 = vmax.f32 %v284, 0.0
  %v349 = vmax.f32 %v285, 0.0
  %v350 = vmax.f32 %v286, 0.0
  %v351 = vmax.f32 %v287, 0.0
  %v352 = vmax.f32 %v288, 0.0
  %v353 = vmax.f32 %v289, 0.0
  %v354 = vmax.f32 %v290, 0.0
  %v355 = vmax.f32 %v291, 0.0
  %v356 = vmax.f32 %v292, 0.0
  %v357 = vld [vmem:[%s3] sm:$0xff]
  %v358 = vld [vmem:[%s3 + $0x8] sm:$0xff]
  %v359 = vld [vmem:[%s4] sm:$0xff]
  %v360 = vld [vmem:[%s4 + $0x8] sm:$0xff]
  %362 = vset.pattern.permute.xlu0 0
  %363 = vperm.xlu0 %362, %v359
  %v364 = vpop.permute.xlu0 %363
  %367 = vset.pattern.permute.xlu0 0
  %368 = vperm.xlu0 %367, %v360
  %v369 = vpop.permute.xlu0 %368
  %vm371 = vcmask 261120
  %v373 = vsel %vm371, %v357, 0
  %v376 = vsel %vm371, %v358, 0
  %v378 = vand.u32 %v294, 4294901760
  %379 = vmatprep.subr.mxu0 %v378
  %v380 = vand.u32 %v293, 4294901760
  %381 = vmatpush1.msra.mxu0 %v380
  %v382 = vand.u32 %v310, 4294901760
  %383 = vmatprep.subr.mxu0 %v382
  %v384 = vand.u32 %v309, 4294901760
  %385 = vmatpush1.msra.mxu0 %v384
  %v386 = vand.u32 %v326, 4294901760
  %387 = vmatprep.subr.mxu0 %v386
  %v388 = vand.u32 %v325, 4294901760
  %389 = vmatpush1.msra.mxu0 %v388
  %v390 = vand.u32 %v342, 4294901760
  %391 = vmatprep.subr.mxu0 %v390
  %v392 = vand.u32 %v341, 4294901760
  %393 = vmatpush1.msra.mxu0 %v392
  %394 = vmatprep.subr.mxu0 0.0
  %395 = vmatpush1.msra.mxu0 0.0
  %396 = vmatprep.subr.mxu0 0.0
  %397 = vmatpush1.msra.mxu0 0.0
  %398 = vmatprep.subr.mxu0 0.0
  %399 = vmatpush1.msra.mxu0 0.0
  %400 = vmatprep.subr.mxu0 0.0
  %401 = vmatpush1.msra.mxu0 0.0
  %402 = vmatprep.subr.mxu0 0.0
  %403 = vmatpush1.msra.mxu0 0.0
  %404 = vmatprep.subr.mxu0 0.0
  %405 = vmatpush1.msra.mxu0 0.0
  %406 = vmatprep.subr.mxu0 0.0
  %407 = vmatpush1.msra.mxu0 0.0
  %408 = vmatprep.subr.mxu0 0.0
  %409 = vmatpush1.msra.mxu0 0.0
  %410 = vmatprep.subr.mxu0 0.0
  %411 = vmatpush1.msra.mxu0 0.0
  %412 = vmatprep.subr.mxu0 0.0
  %413 = vmatpush1.msra.mxu0 0.0
  %414 = vmatprep.subr.mxu0 0.0
  %415 = vmatpush1.msra.mxu0 0.0
  %416 = vmatprep.subr.mxu0 0.0
  %417 = vmatpush1.msra.mxu0 0.0
  %418 = vmatprep.subr.mxu0 0.0
  %419 = vmatpush1.msra.mxu0 0.0
  %420 = vmatprep.subr.mxu0 0.0
  %421 = vmatpush1.msra.mxu0 0.0
  %422 = vmatprep.subr.mxu0 0.0
  %423 = vmatpush1.msra.mxu0 0.0
  %424 = vmatprep.subr.mxu0 0.0
  %425 = vmatpush1.msra.mxu0 0.0
  %426 = vmatprep.subr.mxu0 0.0
  %427 = vmatpush1.msra.mxu0 0.0
  %428 = vmatprep.subr.mxu0 0.0
  %429 = vmatpush1.msra.mxu0 0.0
  %430 = vmatprep.subr.mxu0 0.0
  %431 = vmatpush1.msra.mxu0 0.0
  %432 = vmatprep.subr.mxu0 0.0
  %433 = vmatpush1.msra.mxu0 0.0
  %434 = vmatprep.subr.mxu0 0.0
  %435 = vmatpush1.msra.mxu0 0.0
  %436 = vmatprep.subr.mxu0 0.0
  %437 = vmatpush1.msra.mxu0 0.0
  %438 = vmatprep.subr.mxu0 0.0
  %439 = vmatpush1.msra.mxu0 0.0
  %440 = vmatprep.subr.mxu0 0.0
  %441 = vmatpush1.msra.mxu0 0.0
  %442 = vmatprep.subr.mxu0 0.0
  %443 = vmatpush1.msra.mxu0 0.0
  %444 = vmatprep.subr.mxu0 0.0
  %445 = vmatpush1.msra.mxu0 0.0
  %446 = vmatprep.subr.mxu0 0.0
  %447 = vmatpush1.msra.mxu0 0.0
  %448 = vmatprep.subr.mxu0 0.0
  %449 = vmatpush1.msra.mxu0 0.0
  %450 = vmatprep.mubr.f32.mxu0 0.0
  %v451 = vand.u32 %v373, 4294901760
  %v452 = vsub.f32 %v373, %v451
  %v453 = vand.u32 %v452, 4294901760
  %v454 = vsub.f32 %v452, %v453
  %v455 = vand.u32 %v454, 4294901760
  %456 = vmatmul.mubr.f32.gmra.mrb[0].mxu0 %v455
  %v457 = vpop.f32.mrb[0].mxu0
  %v458 = vadd.f32 %v364, %v457
  %v459 = vpop.f32.mrb[0].mxu0
  %v460 = vadd.f32 %v364, %v459
  %461 = vmatprep.mubr.f32.mxu0 0.0
  %v462 = vand.u32 %v376, 4294901760
  %v463 = vsub.f32 %v376, %v462
  %v464 = vand.u32 %v463, 4294901760
  %v465 = vsub.f32 %v463, %v464
  %v466 = vand.u32 %v465, 4294901760
  %467 = vmatmul.mubr.f32.gmra.mrb[0].mxu0 %v466
  %v468 = vpop.f32.mrb[0].mxu0
  %v469 = vadd.f32 %v369, %v468
  %v470 = vpop.f32.mrb[0].mxu0
  %v471 = vadd.f32 %v369, %v470
  %472 = vdwg.mxu0
  %v473 = vand.u32 %v294, 4294901760
  %v474 = vsub.f32 %v294, %v473
  %v475 = vand.u32 %v474, 4294901760
  %v476 = vsub.f32 %v474, %v475
  %v477 = vand.u32 %v476, 4294901760
  %478 = vmatprep.subr.mxu0 %v477
  %v479 = vand.u32 %v293, 4294901760
  %v480 = vsub.f32 %v293, %v479
  %v481 = vand.u32 %v480, 4294901760
  %v482 = vsub.f32 %v480, %v481
  %v483 = vand.u32 %v482, 4294901760
  %484 = vmatpush1.msra.mxu0 %v483
  %v485 = vand.u32 %v310, 4294901760
  %v486 = vsub.f32 %v310, %v485
  %v487 = vand.u32 %v486, 4294901760
  %v488 = vsub.f32 %v486, %v487
  %v489 = vand.u32 %v488, 4294901760
  %490 = vmatprep.subr.mxu0 %v489
  %v491 = vand.u32 %v309, 4294901760
  %v492 = vsub.f32 %v309, %v491
  %v493 = vand.u32 %v492, 4294901760
  %v494 = vsub.f32 %v492, %v493
  %v495 = vand.u32 %v494, 4294901760
  %496 = vmatpush1.msra.mxu0 %v495
  %v497 = vand.u32 %v326, 4294901760
  %v498 = vsub.f32 %v326, %v497
  %v499 = vand.u32 %v498, 4294901760
  %v500 = vsub.f32 %v498, %v499
  %v501 = vand.u32 %v500, 4294901760
  %502 = vmatprep.subr.mxu0 %v501
  %v503 = vand.u32 %v325, 4294901760
  %v504 = vsub.f32 %v325, %v503
  %v505 = vand.u32 %v504, 4294901760
  %v506 = vsub.f32 %v504, %v505
  %v507 = vand.u32 %v506, 4294901760
  %508 = vmatpush1.msra.mxu0 %v507
  %v509 = vand.u32 %v342, 4294901760
  %v510 = vsub.f32 %v342, %v509
  %v511 = vand.u32 %v510, 4294901760
  %v512 = vsub.f32 %v510, %v511
  %v513 = vand.u32 %v512, 4294901760
  %514 = vmatprep.subr.mxu0 %v513
  %v515 = vand.u32 %v341, 4294901760
  %v516 = vsub.f32 %v341, %v515
  %v517 = vand.u32 %v516, 4294901760
  %v518 = vsub.f32 %v516, %v517
  %v519 = vand.u32 %v518, 4294901760
  %520 = vmatpush1.msra.mxu0 %v519
  %521 = vmatprep.subr.mxu0 0.0
  %522 = vmatpush1.msra.mxu0 0.0
  %523 = vmatprep.subr.mxu0 0.0
  %524 = vmatpush1.msra.mxu0 0.0
  %525 = vmatprep.subr.mxu0 0.0
  %526 = vmatpush1.msra.mxu0 0.0
  %527 = vmatprep.subr.mxu0 0.0
  %528 = vmatpush1.msra.mxu0 0.0
  %529 = vmatprep.subr.mxu0 0.0
  %530 = vmatpush1.msra.mxu0 0.0
  %531 = vmatprep.subr.mxu0 0.0
  %532 = vmatpush1.msra.mxu0 0.0
  %533 = vmatprep.subr.mxu0 0.0
  %534 = vmatpush1.msra.mxu0 0.0
  %535 = vmatprep.subr.mxu0 0.0
  %536 = vmatpush1.msra.mxu0 0.0
  %537 = vmatprep.subr.mxu0 0.0
  %538 = vmatpush1.msra.mxu0 0.0
  %539 = vmatprep.subr.mxu0 0.0
  %540 = vmatpush1.msra.mxu0 0.0
  %541 = vmatprep.subr.mxu0 0.0
  %542 = vmatpush1.msra.mxu0 0.0
  %543 = vmatprep.subr.mxu0 0.0
  %544 = vmatpush1.msra.mxu0 0.0
  %545 = vmatprep.subr.mxu0 0.0
  %546 = vmatpush1.msra.mxu0 0.0
  %547 = vmatprep.subr.mxu0 0.0
  %548 = vmatpush1.msra.mxu0 0.0
  %549 = vmatprep.subr.mxu0 0.0
  %550 = vmatpush1.msra.mxu0 0.0
  %551 = vmatprep.subr.mxu0 0.0
  %552 = vmatpush1.msra.mxu0 0.0
  %553 = vmatprep.subr.mxu0 0.0
  %554 = vmatpush1.msra.mxu0 0.0
  %555 = vmatprep.subr.mxu0 0.0
  %556 = vmatpush1.msra.mxu0 0.0
  %557 = vmatprep.subr.mxu0 0.0
  %558 = vmatpush1.msra.mxu0 0.0
  %559 = vmatprep.subr.mxu0 0.0
  %560 = vmatpush1.msra.mxu0 0.0
  %561 = vmatprep.subr.mxu0 0.0
  %562 = vmatpush1.msra.mxu0 0.0
  %563 = vmatprep.subr.mxu0 0.0
  %564 = vmatpush1.msra.mxu0 0.0
  %565 = vmatprep.subr.mxu0 0.0
  %566 = vmatpush1.msra.mxu0 0.0
  %567 = vmatprep.subr.mxu0 0.0
  %568 = vmatpush1.msra.mxu0 0.0
  %569 = vmatprep.subr.mxu0 0.0
  %570 = vmatpush1.msra.mxu0 0.0
  %571 = vmatprep.subr.mxu0 0.0
  %572 = vmatpush1.msra.mxu0 0.0
  %573 = vmatprep.subr.mxu0 0.0
  %574 = vmatpush1.msra.mxu0 0.0
  %575 = vmatprep.subr.mxu0 0.0
  %576 = vmatpush1.msra.mxu0 0.0
  %577 = vmatprep.mubr.f32.mxu0 0.0
  %v578 = vand.u32 %v373, 4294901760
  %579 = vmatmul.mubr.f32.gmra.mrb[0].mxu0 %v578
  %v580 = vpop.f32.mrb[0].mxu0
  %v581 = vadd.f32 %v458, %v580
  %v582 = vpop.f32.mrb[0].mxu0
  %v583 = vadd.f32 %v460, %v582
  %584 = vmatprep.mubr.f32.mxu0 0.0
  %v585 = vand.u32 %v376, 4294901760
  %586 = vmatmul.mubr.f32.gmra.mrb[0].mxu0 %v585
  %v587 = vpop.f32.mrb[0].mxu0
  %v588 = vadd.f32 %v469, %v587
  %v589 = vpop.f32.mrb[0].mxu0
  %v590 = vadd.f32 %v471, %v589
  %591 = vdwg.mxu0
  %v592 = vand.u32 %v294, 4294901760
  %v593 = vsub.f32 %v294, %v592
  %594 = vmatprep.subr.mxu0 %v593
  %v595 = vand.u32 %v293, 4294901760
  %v596 = vsub.f32 %v293, %v595
  %597 = vmatpush1.msra.mxu0 %v596
  %v598 = vand.u32 %v310, 4294901760
  %v599 = vsub.f32 %v310, %v598
  %600 = vmatprep.subr.mxu0 %v599
  %v601 = vand.u32 %v309, 4294901760
  %v602 = vsub.f32 %v309, %v601
  %603 = vmatpush1.msra.mxu0 %v602
  %v604 = vand.u32 %v326, 4294901760
  %v605 = vsub.f32 %v326, %v604
  %606 = vmatprep.subr.mxu0 %v605
  %v607 = vand.u32 %v325, 4294901760
  %v608 = vsub.f32 %v325, %v607
  %609 = vmatpush1.msra.mxu0 %v608
  %v610 = vand.u32 %v342, 4294901760
  %v611 = vsub.f32 %v342, %v610
  %612 = vmatprep.subr.mxu0 %v611
  %v613 = vand.u32 %v341, 4294901760
  %v614 = vsub.f32 %v341, %v613
  %615 = vmatpush1.msra.mxu0 %v614
  %616 = vmatprep.subr.mxu0 0.0
  %617 = vmatpush1.msra.mxu0 0.0
  %618 = vmatprep.subr.mxu0 0.0
  %619 = vmatpush1.msra.mxu0 0.0
  %620 = vmatprep.subr.mxu0 0.0
  %621 = vmatpush1.msra.mxu0 0.0
  %622 = vmatprep.subr.mxu0 0.0
  %623 = vmatpush1.msra.mxu0 0.0
  %624 = vmatprep.subr.mxu0 0.0
  %625 = vmatpush1.msra.mxu0 0.0
  %626 = vmatprep.subr.mxu0 0.0
  %627 = vmatpush1.msra.mxu0 0.0
  %628 = vmatprep.subr.mxu0 0.0
  %629 = vmatpush1.msra.mxu0 0.0
  %630 = vmatprep.subr.mxu0 0.0
  %631 = vmatpush1.msra.mxu0 0.0
  %632 = vmatprep.subr.mxu0 0.0
  %633 = vmatpush1.msra.mxu0 0.0
  %634 = vmatprep.subr.mxu0 0.0
  %635 = vmatpush1.msra.mxu0 0.0
  %636 = vmatprep.subr.mxu0 0.0
  %637 = vmatpush1.msra.mxu0 0.0
  %638 = vmatprep.subr.mxu0 0.0
  %639 = vmatpush1.msra.mxu0 0.0
  %640 = vmatprep.subr.mxu0 0.0
  %641 = vmatpush1.msra.mxu0 0.0
  %642 = vmatprep.subr.mxu0 0.0
  %643 = vmatpush1.msra.mxu0 0.0
  %644 = vmatprep.subr.mxu0 0.0
  %645 = vmatpush1.msra.mxu0 0.0
  %646 = vmatprep.subr.mxu0 0.0
  %647 = vmatpush1.msra.mxu0 0.0
  %648 = vmatprep.subr.mxu0 0.0
  %649 = vmatpush1.msra.mxu0 0.0
  %650 = vmatprep.subr.mxu0 0.0
  %651 = vmatpush1.msra.mxu0 0.0
  %652 = vmatprep.subr.mxu0 0.0
  %653 = vmatpush1.msra.mxu0 0.0
  %654 = vmatprep.subr.mxu0 0.0
  %655 = vmatpush1.msra.mxu0 0.0
  %656 = vmatprep.subr.mxu0 0.0
  %657 = vmatpush1.msra.mxu0 0.0
  %658 = vmatprep.subr.mxu0 0.0
  %659 = vmatpush1.msra.mxu0 0.0
  %660 = vmatprep.subr.mxu0 0.0
  %661 = vmatpush1.msra.mxu0 0.0
  %662 = vmatprep.subr.mxu0 0.0
  %663 = vmatpush1.msra.mxu0 0.0
  %664 = vmatprep.subr.mxu0 0.0
  %665 = vmatpush1.msra.mxu0 0.0
  %666 = vmatprep.subr.mxu0 0.0
  %667 = vmatpush1.msra.mxu0 0.0
  %668 = vmatprep.subr.mxu0 0.0
  %669 = vmatpush1.msra.mxu0 0.0
  %670 = vmatprep.subr.mxu0 0.0
  %671 = vmatpush1.msra.mxu0 0.0
  %672 = vmatprep.mubr.f32.mxu0 0.0
  %v673 = vand.u32 %v373, 4294901760
  %v674 = vsub.f32 %v373, %v673
  %675 = vmatmul.mubr.f32.gmra.mrb[0].mxu0 %v674
  %v676 = vpop.f32.mrb[0].mxu0
  %v677 = vadd.f32 %v581, %v676
  %v678 = vpop.f32.mrb[0].mxu0
  %v679 = vadd.f32 %v583, %v678
  %680 = vmatprep.mubr.f32.mxu0 0.0
  %v681 = vand.u32 %v376, 4294901760
  %v682 = vsub.f32 %v376, %v681
  %683 = vmatmul.mubr.f32.gmra.mrb[0].mxu0 %v682
  %v684 = vpop.f32.mrb[0].mxu0
  %v685 = vadd.f32 %v588, %v684
  %v686 = vpop.f32.mrb[0].mxu0
  %v687 = vadd.f32 %v590, %v686
  %688 = vdwg.mxu0
  %v689 = vand.u32 %v294, 4294901760
  %690 = vmatprep.subr.mxu0 %v689
  %v691 = vand.u32 %v293, 4294901760
  %692 = vmatpush1.msra.mxu0 %v691
  %v693 = vand.u32 %v310, 4294901760
  %694 = vmatprep.subr.mxu0 %v693
  %v695 = vand.u32 %v309, 4294901760
  %696 = vmatpush1.msra.mxu0 %v695
  %v697 = vand.u32 %v326, 4294901760
  %698 = vmatprep.subr.mxu0 %v697
  %v699 = vand.u32 %v325, 4294901760
  %700 = vmatpush1.msra.mxu0 %v699
  %v701 = vand.u32 %v342, 4294901760
  %702 = vmatprep.subr.mxu0 %v701
  %v703 = vand.u32 %v341, 4294901760
  %704 = vmatpush1.msra.mxu0 %v703
  %705 = vmatprep.subr.mxu0 0.0
  %706 = vmatpush1.msra.mxu0 0.0
  %707 = vmatprep.subr.mxu0 0.0
  %708 = vmatpush1.msra.mxu0 0.0
  %709 = vmatprep.subr.mxu0 0.0
  %710 = vmatpush1.msra.mxu0 0.0
  %711 = vmatprep.subr.mxu0 0.0
  %712 = vmatpush1.msra.mxu0 0.0
  %713 = vmatprep.subr.mxu0 0.0
  %714 = vmatpush1.msra.mxu0 0.0
  %715 = vmatprep.subr.mxu0 0.0
  %716 = vmatpush1.msra.mxu0 0.0
  %717 = vmatprep.subr.mxu0 0.0
  %718 = vmatpush1.msra.mxu0 0.0
  %719 = vmatprep.subr.mxu0 0.0
  %720 = vmatpush1.msra.mxu0 0.0
  %721 = vmatprep.subr.mxu0 0.0
  %722 = vmatpush1.msra.mxu0 0.0
  %723 = vmatprep.subr.mxu0 0.0
  %724 = vmatpush1.msra.mxu0 0.0
  %725 = vmatprep.subr.mxu0 0.0
  %726 = vmatpush1.msra.mxu0 0.0
  %727 = vmatprep.subr.mxu0 0.0
  %728 = vmatpush1.msra.mxu0 0.0
  %729 = vmatprep.subr.mxu0 0.0
  %730 = vmatpush1.msra.mxu0 0.0
  %731 = vmatprep.subr.mxu0 0.0
  %732 = vmatpush1.msra.mxu0 0.0
  %733 = vmatprep.subr.mxu0 0.0
  %734 = vmatpush1.msra.mxu0 0.0
  %735 = vmatprep.subr.mxu0 0.0
  %736 = vmatpush1.msra.mxu0 0.0
  %737 = vmatprep.subr.mxu0 0.0
  %738 = vmatpush1.msra.mxu0 0.0
  %739 = vmatprep.subr.mxu0 0.0
  %740 = vmatpush1.msra.mxu0 0.0
  %741 = vmatprep.subr.mxu0 0.0
  %742 = vmatpush1.msra.mxu0 0.0
  %743 = vmatprep.subr.mxu0 0.0
  %744 = vmatpush1.msra.mxu0 0.0
  %745 = vmatprep.subr.mxu0 0.0
  %746 = vmatpush1.msra.mxu0 0.0
  %747 = vmatprep.subr.mxu0 0.0
  %748 = vmatpush1.msra.mxu0 0.0
  %749 = vmatprep.subr.mxu0 0.0
  %750 = vmatpush1.msra.mxu0 0.0
  %751 = vmatprep.subr.mxu0 0.0
  %752 = vmatpush1.msra.mxu0 0.0
  %753 = vmatprep.subr.mxu0 0.0
  %754 = vmatpush1.msra.mxu0 0.0
  %755 = vmatprep.subr.mxu0 0.0
  %756 = vmatpush1.msra.mxu0 0.0
  %757 = vmatprep.subr.mxu0 0.0
  %758 = vmatpush1.msra.mxu0 0.0
  %759 = vmatprep.subr.mxu0 0.0
  %760 = vmatpush1.msra.mxu0 0.0
  %761 = vmatprep.mubr.f32.mxu0 0.0
  %v762 = vand.u32 %v373, 4294901760
  %v763 = vsub.f32 %v373, %v762
  %v764 = vand.u32 %v763, 4294901760
  %765 = vmatmul.mubr.f32.gmra.mrb[0].mxu0 %v764
  %v766 = vpop.f32.mrb[0].mxu0
  %v767 = vadd.f32 %v677, %v766
  %v768 = vpop.f32.mrb[0].mxu0
  %v769 = vadd.f32 %v679, %v768
  %770 = vmatprep.mubr.f32.mxu0 0.0
  %v771 = vand.u32 %v376, 4294901760
  %v772 = vsub.f32 %v376, %v771
  %v773 = vand.u32 %v772, 4294901760
  %774 = vmatmul.mubr.f32.gmra.mrb[0].mxu0 %v773
  %v775 = vpop.f32.mrb[0].mxu0
  %v776 = vadd.f32 %v685, %v775
  %v777 = vpop.f32.mrb[0].mxu0
  %v778 = vadd.f32 %v687, %v777
  %779 = vdwg.mxu0
  %v780 = vand.u32 %v294, 4294901760
  %v781 = vsub.f32 %v294, %v780
  %v782 = vand.u32 %v781, 4294901760
  %783 = vmatprep.subr.mxu0 %v782
  %v784 = vand.u32 %v293, 4294901760
  %v785 = vsub.f32 %v293, %v784
  %v786 = vand.u32 %v785, 4294901760
  %787 = vmatpush1.msra.mxu0 %v786
  %v788 = vand.u32 %v310, 4294901760
  %v789 = vsub.f32 %v310, %v788
  %v790 = vand.u32 %v789, 4294901760
  %791 = vmatprep.subr.mxu0 %v790
  %v792 = vand.u32 %v309, 4294901760
  %v793 = vsub.f32 %v309, %v792
  %v794 = vand.u32 %v793, 4294901760
  %795 = vmatpush1.msra.mxu0 %v794
  %v796 = vand.u32 %v326, 4294901760
  %v797 = vsub.f32 %v326, %v796
  %v798 = vand.u32 %v797, 4294901760
  %799 = vmatprep.subr.mxu0 %v798
  %v800 = vand.u32 %v325, 4294901760
  %v801 = vsub.f32 %v325, %v800
  %v802 = vand.u32 %v801, 4294901760
  %803 = vmatpush1.msra.mxu0 %v802
  %v804 = vand.u32 %v342, 4294901760
  %v805 = vsub.f32 %v342, %v804
  %v806 = vand.u32 %v805, 4294901760
  %807 = vmatprep.subr.mxu0 %v806
  %v808 = vand.u32 %v341, 4294901760
  %v809 = vsub.f32 %v341, %v808
  %v810 = vand.u32 %v809, 4294901760
  %811 = vmatpush1.msra.mxu0 %v810
  %812 = vmatprep.subr.mxu0 0.0
  %813 = vmatpush1.msra.mxu0 0.0
  %814 = vmatprep.subr.mxu0 0.0
  %815 = vmatpush1.msra.mxu0 0.0
  %816 = vmatprep.subr.mxu0 0.0
  %817 = vmatpush1.msra.mxu0 0.0
  %818 = vmatprep.subr.mxu0 0.0
  %819 = vmatpush1.msra.mxu0 0.0
  %820 = vmatprep.subr.mxu0 0.0
  %821 = vmatpush1.msra.mxu0 0.0
  %822 = vmatprep.subr.mxu0 0.0
  %823 = vmatpush1.msra.mxu0 0.0
  %824 = vmatprep.subr.mxu0 0.0
  %825 = vmatpush1.msra.mxu0 0.0
  %826 = vmatprep.subr.mxu0 0.0
  %827 = vmatpush1.msra.mxu0 0.0
  %828 = vmatprep.subr.mxu0 0.0
  %829 = vmatpush1.msra.mxu0 0.0
  %830 = vmatprep.subr.mxu0 0.0
  %831 = vmatpush1.msra.mxu0 0.0
  %832 = vmatprep.subr.mxu0 0.0
  %833 = vmatpush1.msra.mxu0 0.0
  %834 = vmatprep.subr.mxu0 0.0
  %835 = vmatpush1.msra.mxu0 0.0
  %836 = vmatprep.subr.mxu0 0.0
  %837 = vmatpush1.msra.mxu0 0.0
  %838 = vmatprep.subr.mxu0 0.0
  %839 = vmatpush1.msra.mxu0 0.0
  %840 = vmatprep.subr.mxu0 0.0
  %841 = vmatpush1.msra.mxu0 0.0
  %842 = vmatprep.subr.mxu0 0.0
  %843 = vmatpush1.msra.mxu0 0.0
  %844 = vmatprep.subr.mxu0 0.0
  %845 = vmatpush1.msra.mxu0 0.0
  %846 = vmatprep.subr.mxu0 0.0
  %847 = vmatpush1.msra.mxu0 0.0
  %848 = vmatprep.subr.mxu0 0.0
  %849 = vmatpush1.msra.mxu0 0.0
  %850 = vmatprep.subr.mxu0 0.0
  %851 = vmatpush1.msra.mxu0 0.0
  %852 = vmatprep.subr.mxu0 0.0
  %853 = vmatpush1.msra.mxu0 0.0
  %854 = vmatprep.subr.mxu0 0.0
  %855 = vmatpush1.msra.mxu0 0.0
  %856 = vmatprep.subr.mxu0 0.0
  %857 = vmatpush1.msra.mxu0 0.0
  %858 = vmatprep.subr.mxu0 0.0
  %859 = vmatpush1.msra.mxu0 0.0
  %860 = vmatprep.subr.mxu0 0.0
  %861 = vmatpush1.msra.mxu0 0.0
  %862 = vmatprep.subr.mxu0 0.0
  %863 = vmatpush1.msra.mxu0 0.0
  %864 = vmatprep.subr.mxu0 0.0
  %865 = vmatpush1.msra.mxu0 0.0
  %866 = vmatprep.subr.mxu0 0.0
  %867 = vmatpush1.msra.mxu0 0.0
  %868 = vmatprep.mubr.f32.mxu0 0.0
  %v869 = vand.u32 %v373, 4294901760
  %870 = vmatmul.mubr.f32.gmra.mrb[0].mxu0 %v869
  %v871 = vpop.f32.mrb[0].mxu0
  %v872 = vadd.f32 %v767, %v871
  %v873 = vpop.f32.mrb[0].mxu0
  %v874 = vadd.f32 %v769, %v873
  %875 = vmatprep.mubr.f32.mxu0 0.0
  %v876 = vand.u32 %v376, 4294901760
  %877 = vmatmul.mubr.f32.gmra.mrb[0].mxu0 %v876
  %v878 = vpop.f32.mrb[0].mxu0
  %v879 = vadd.f32 %v776, %v878
  %v880 = vpop.f32.mrb[0].mxu0
  %v881 = vadd.f32 %v778, %v880
  %882 = vdwg.mxu0
  %v883 = vand.u32 %v294, 4294901760
  %884 = vmatprep.subr.mxu0 %v883
  %v885 = vand.u32 %v293, 4294901760
  %886 = vmatpush1.msra.mxu0 %v885
  %v887 = vand.u32 %v310, 4294901760
  %888 = vmatprep.subr.mxu0 %v887
  %v889 = vand.u32 %v309, 4294901760
  %890 = vmatpush1.msra.mxu0 %v889
  %v891 = vand.u32 %v326, 4294901760
  %892 = vmatprep.subr.mxu0 %v891
  %v893 = vand.u32 %v325, 4294901760
  %894 = vmatpush1.msra.mxu0 %v893
  %v895 = vand.u32 %v342, 4294901760
  %896 = vmatprep.subr.mxu0 %v895
  %v897 = vand.u32 %v341, 4294901760
  %898 = vmatpush1.msra.mxu0 %v897
  %899 = vmatprep.subr.mxu0 0.0
  %900 = vmatpush1.msra.mxu0 0.0
  %901 = vmatprep.subr.mxu0 0.0
  %902 = vmatpush1.msra.mxu0 0.0
  %903 = vmatprep.subr.mxu0 0.0
  %904 = vmatpush1.msra.mxu0 0.0
  %905 = vmatprep.subr.mxu0 0.0
  %906 = vmatpush1.msra.mxu0 0.0
  %907 = vmatprep.subr.mxu0 0.0
  %908 = vmatpush1.msra.mxu0 0.0
  %909 = vmatprep.subr.mxu0 0.0
  %910 = vmatpush1.msra.mxu0 0.0
  %911 = vmatprep.subr.mxu0 0.0
  %912 = vmatpush1.msra.mxu0 0.0
  %913 = vmatprep.subr.mxu0 0.0
  %914 = vmatpush1.msra.mxu0 0.0
  %915 = vmatprep.subr.mxu0 0.0
  %916 = vmatpush1.msra.mxu0 0.0
  %917 = vmatprep.subr.mxu0 0.0
  %918 = vmatpush1.msra.mxu0 0.0
  %919 = vmatprep.subr.mxu0 0.0
  %920 = vmatpush1.msra.mxu0 0.0
  %921 = vmatprep.subr.mxu0 0.0
  %922 = vmatpush1.msra.mxu0 0.0
  %923 = vmatprep.subr.mxu0 0.0
  %924 = vmatpush1.msra.mxu0 0.0
  %925 = vmatprep.subr.mxu0 0.0
  %926 = vmatpush1.msra.mxu0 0.0
  %927 = vmatprep.subr.mxu0 0.0
  %928 = vmatpush1.msra.mxu0 0.0
  %929 = vmatprep.subr.mxu0 0.0
  %930 = vmatpush1.msra.mxu0 0.0
  %931 = vmatprep.subr.mxu0 0.0
  %932 = vmatpush1.msra.mxu0 0.0
  %933 = vmatprep.subr.mxu0 0.0
  %934 = vmatpush1.msra.mxu0 0.0
  %935 = vmatprep.subr.mxu0 0.0
  %936 = vmatpush1.msra.mxu0 0.0
  %937 = vmatprep.subr.mxu0 0.0
  %938 = vmatpush1.msra.mxu0 0.0
  %939 = vmatprep.subr.mxu0 0.0
  %940 = vmatpush1.msra.mxu0 0.0
  %941 = vmatprep.subr.mxu0 0.0
  %942 = vmatpush1.msra.mxu0 0.0
  %943 = vmatprep.subr.mxu0 0.0
  %944 = vmatpush1.msra.mxu0 0.0
  %945 = vmatprep.subr.mxu0 0.0
  %946 = vmatpush1.msra.mxu0 0.0
  %947 = vmatprep.subr.mxu0 0.0
  %948 = vmatpush1.msra.mxu0 0.0
  %949 = vmatprep.subr.mxu0 0.0
  %950 = vmatpush1.msra.mxu0 0.0
  %951 = vmatprep.subr.mxu0 0.0
  %952 = vmatpush1.msra.mxu0 0.0
  %953 = vmatprep.subr.mxu0 0.0
  %954 = vmatpush1.msra.mxu0 0.0
  %955 = vmatprep.mubr.f32.mxu0 0.0
  %v956 = vand.u32 %v373, 4294901760
  %957 = vmatmul.mubr.f32.gmra.mrb[0].mxu0 %v956
  %v958 = vpop.f32.mrb[0].mxu0
  %v959 = vadd.f32 %v872, %v958
  %v960 = vpop.f32.mrb[0].mxu0
  %v961 = vadd.f32 %v874, %v960
  %962 = vmatprep.mubr.f32.mxu0 0.0
  %v963 = vand.u32 %v376, 4294901760
  %964 = vmatmul.mubr.f32.gmra.mrb[0].mxu0 %v963
  %v965 = vpop.f32.mrb[0].mxu0
  %v966 = vadd.f32 %v879, %v965
  %v967 = vpop.f32.mrb[0].mxu0
  %v968 = vadd.f32 %v881, %v967
  %969 = vdwg.mxu0
  %v970 = vand.u32 %v296, 4294901760
  %971 = vmatprep.subr.mxu0 %v970
  %v972 = vand.u32 %v295, 4294901760
  %973 = vmatpush1.msra.mxu0 %v972
  %v974 = vand.u32 %v312, 4294901760
  %975 = vmatprep.subr.mxu0 %v974
  %v976 = vand.u32 %v311, 4294901760
  %977 = vmatpush1.msra.mxu0 %v976
  %v978 = vand.u32 %v328, 4294901760
  %979 = vmatprep.subr.mxu0 %v978
  %v980 = vand.u32 %v327, 4294901760
  %981 = vmatpush1.msra.mxu0 %v980
  %v982 = vand.u32 %v344, 4294901760
  %983 = vmatprep.subr.mxu0 %v982
  %v984 = vand.u32 %v343, 4294901760
  %985 = vmatpush1.msra.mxu0 %v984
  %986 = vmatprep.subr.mxu0 0.0
  %987 = vmatpush1.msra.mxu0 0.0
  %988 = vmatprep.subr.mxu0 0.0
  %989 = vmatpush1.msra.mxu0 0.0
  %990 = vmatprep.subr.mxu0 0.0
  %991 = vmatpush1.msra.mxu0 0.0
  %992 = vmatprep.subr.mxu0 0.0
  %993 = vmatpush1.msra.mxu0 0.0
  %994 = vmatprep.subr.mxu0 0.0
  %995 = vmatpush1.msra.mxu0 0.0
  %996 = vmatprep.subr.mxu0 0.0
  %997 = vmatpush1.msra.mxu0 0.0
  %998 = vmatprep.subr.mxu0 0.0
  %999 = vmatpush1.msra.mxu0 0.0
  %1000 = vmatprep.subr.mxu0 0.0
  %1001 = vmatpush1.msra.mxu0 0.0
  %1002 = vmatprep.subr.mxu0 0.0
  %1003 = vmatpush1.msra.mxu0 0.0
  %1004 = vmatprep.subr.mxu0 0.0
  %1005 = vmatpush1.msra.mxu0 0.0
  %1006 = vmatprep.subr.mxu0 0.0
  %1007 = vmatpush1.msra.mxu0 0.0
  %1008 = vmatprep.subr.mxu0 0.0
  %1009 = vmatpush1.msra.mxu0 0.0
  %1010 = vmatprep.subr.mxu0 0.0
  %1011 = vmatpush1.msra.mxu0 0.0
  %1012 = vmatprep.subr.mxu0 0.0
  %1013 = vmatpush1.msra.mxu0 0.0
  %1014 = vmatprep.subr.mxu0 0.0
  %1015 = vmatpush1.msra.mxu0 0.0
  %1016 = vmatprep.subr.mxu0 0.0
  %1017 = vmatpush1.msra.mxu0 0.0
  %1018 = vmatprep.subr.mxu0 0.0
  %1019 = vmatpush1.msra.mxu0 0.0
  %1020 = vmatprep.subr.mxu0 0.0
  %1021 = vmatpush1.msra.mxu0 0.0
  %1022 = vmatprep.subr.mxu0 0.0
  %1023 = vmatpush1.msra.mxu0 0.0
  %1024 = vmatprep.subr.mxu0 0.0
  %1025 = vmatpush1.msra.mxu0 0.0
  %1026 = vmatprep.subr.mxu0 0.0
  %1027 = vmatpush1.msra.mxu0 0.0
  %1028 = vmatprep.subr.mxu0 0.0
  %1029 = vmatpush1.msra.mxu0 0.0
  %1030 = vmatprep.subr.mxu0 0.0
  %1031 = vmatpush1.msra.mxu0 0.0
  %1032 = vmatprep.subr.mxu0 0.0
  %1033 = vmatpush1.msra.mxu0 0.0
  %1034 = vmatprep.subr.mxu0 0.0
  %1035 = vmatpush1.msra.mxu0 0.0
  %1036 = vmatprep.subr.mxu0 0.0
  %1037 = vmatpush1.msra.mxu0 0.0
  %1038 = vmatprep.subr.mxu0 0.0
  %1039 = vmatpush1.msra.mxu0 0.0
  %1040 = vmatprep.subr.mxu0 0.0
  %1041 = vmatpush1.msra.mxu0 0.0
  %1042 = vmatprep.mubr.f32.mxu0 0.0
  %v1043 = vand.u32 %v373, 4294901760
  %v1044 = vsub.f32 %v373, %v1043
  %v1045 = vand.u32 %v1044, 4294901760
  %v1046 = vsub.f32 %v1044, %v1045
  %v1047 = vand.u32 %v1046, 4294901760
  %1048 = vmatmul.mubr.f32.gmra.mrb[0].mxu0 %v1047
  %v1049 = vpop.f32.mrb[0].mxu0
  %v1050 = vadd.f32 %v364, %v1049
  %v1051 = vpop.f32.mrb[0].mxu0
  %v1052 = vadd.f32 %v364, %v1051
  %1053 = vmatprep.mubr.f32.mxu0 0.0
  %v1054 = vand.u32 %v376, 4294901760
  %v1055 = vsub.f32 %v376, %v1054
  %v1056 = vand.u32 %v1055, 4294901760
  %v1057 = vsub.f32 %v1055, %v1056
  %v1058 = vand.u32 %v1057, 4294901760
  %1059 = vmatmul.mubr.f32.gmra.mrb[0].mxu0 %v1058
  %v1060 = vpop.f32.mrb[0].mxu0
  %v1061 = vadd.f32 %v369, %v1060
  %v1062 = vpop.f32.mrb[0].mxu0
  %v1063 = vadd.f32 %v369, %v1062
  %1064 = vdwg.mxu0
  %v1065 = vand.u32 %v296, 4294901760
  %v1066 = vsub.f32 %v296, %v1065
  %v1067 = vand.u32 %v1066, 4294901760
  %v1068 = vsub.f32 %v1066, %v1067
  %v1069 = vand.u32 %v1068, 4294901760
  %1070 = vmatprep.subr.mxu0 %v1069
  %v1071 = vand.u32 %v295, 4294901760
  %v1072 = vsub.f32 %v295, %v1071
  %v1073 = vand.u32 %v1072, 4294901760
  %v1074 = vsub.f32 %v1072, %v1073
  %v1075 = vand.u32 %v1074, 4294901760
  %1076 = vmatpush1.msra.mxu0 %v1075
  %v1077 = vand.u32 %v312, 4294901760
  %v1078 = vsub.f32 %v312, %v1077
  %v1079 = vand.u32 %v1078, 4294901760
  %v1080 = vsub.f32 %v1078, %v1079
  %v1081 = vand.u32 %v1080, 4294901760
  %1082 = vmatprep.subr.mxu0 %v1081
  %v1083 = vand.u32 %v311, 4294901760
  %v1084 = vsub.f32 %v311, %v1083
  %v1085 = vand.u32 %v1084, 4294901760
  %v1086 = vsub.f32 %v1084, %v1085
  %v1087 = vand.u32 %v1086, 4294901760
  %1088 = vmatpush1.msra.mxu0 %v1087
  %v1089 = vand.u32 %v328, 4294901760
  %v1090 = vsub.f32 %v328, %v1089
  %v1091 = vand.u32 %v1090, 4294901760
  %v1092 = vsub.f32 %v1090, %v1091
  %v1093 = vand.u32 %v1092, 4294901760
  %1094 = vmatprep.subr.mxu0 %v1093
  %v1095 = vand.u32 %v327, 4294901760
  %v1096 = vsub.f32 %v327, %v1095
  %v1097 = vand.u32 %v1096, 4294901760
  %v1098 = vsub.f32 %v1096, %v1097
  %v1099 = vand.u32 %v1098, 4294901760
  %1100 = vmatpush1.msra.mxu0 %v1099
  %v1101 = vand.u32 %v344, 4294901760
  %v1102 = vsub.f32 %v344, %v1101
  %v1103 = vand.u32 %v1102, 4294901760
  %v1104 = vsub.f32 %v1102, %v1103
  %v1105 = vand.u32 %v1104, 4294901760
  %1106 = vmatprep.subr.mxu0 %v1105
  %v1107 = vand.u32 %v343, 4294901760
  %v1108 = vsub.f32 %v343, %v1107
  %v1109 = vand.u32 %v1108, 4294901760
  %v1110 = vsub.f32 %v1108, %v1109
  %v1111 = vand.u32 %v1110, 4294901760
  %1112 = vmatpush1.msra.mxu0 %v1111
  %1113 = vmatprep.subr.mxu0 0.0
  %1114 = vmatpush1.msra.mxu0 0.0
  %1115 = vmatprep.subr.mxu0 0.0
  %1116 = vmatpush1.msra.mxu0 0.0
  %1117 = vmatprep.subr.mxu0 0.0
  %1118 = vmatpush1.msra.mxu0 0.0
  %1119 = vmatprep.subr.mxu0 0.0
  %1120 = vmatpush1.msra.mxu0 0.0
  %1121 = vmatprep.subr.mxu0 0.0
  %1122 = vmatpush1.msra.mxu0 0.0
  %1123 = vmatprep.subr.mxu0 0.0
  %1124 = vmatpush1.msra.mxu0 0.0
  %1125 = vmatprep.subr.mxu0 0.0
  %1126 = vmatpush1.msra.mxu0 0.0
  %1127 = vmatprep.subr.mxu0 0.0
  %1128 = vmatpush1.msra.mxu0 0.0
  %1129 = vmatprep.subr.mxu0 0.0
  %1130 = vmatpush1.msra.mxu0 0.0
  %1131 = vmatprep.subr.mxu0 0.0
  %1132 = vmatpush1.msra.mxu0 0.0
  %1133 = vmatprep.subr.mxu0 0.0
  %1134 = vmatpush1.msra.mxu0 0.0
  %1135 = vmatprep.subr.mxu0 0.0
  %1136 = vmatpush1.msra.mxu0 0.0
  %1137 = vmatprep.subr.mxu0 0.0
  %1138 = vmatpush1.msra.mxu0 0.0
  %1139 = vmatprep.subr.mxu0 0.0
  %1140 = vmatpush1.msra.mxu0 0.0
  %1141 = vmatprep.subr.mxu0 0.0
  %1142 = vmatpush1.msra.mxu0 0.0
  %1143 = vmatprep.subr.mxu0 0.0
  %1144 = vmatpush1.msra.mxu0 0.0
  %1145 = vmatprep.subr.mxu0 0.0
  %1146 = vmatpush1.msra.mxu0 0.0
  %1147 = vmatprep.subr.mxu0 0.0
  %1148 = vmatpush1.msra.mxu0 0.0
  %1149 = vmatprep.subr.mxu0 0.0
  %1150 = vmatpush1.msra.mxu0 0.0
  %1151 = vmatprep.subr.mxu0 0.0
  %1152 = vmatpush1.msra.mxu0 0.0
  %1153 = vmatprep.subr.mxu0 0.0
  %1154 = vmatpush1.msra.mxu0 0.0
  %1155 = vmatprep.subr.mxu0 0.0
  %1156 = vmatpush1.msra.mxu0 0.0
  %1157 = vmatprep.subr.mxu0 0.0
  %1158 = vmatpush1.msra.mxu0 0.0
  %1159 = vmatprep.subr.mxu0 0.0
  %1160 = vmatpush1.msra.mxu0 0.0
  %1161 = vmatprep.subr.mxu0 0.0
  %1162 = vmatpush1.msra.mxu0 0.0
  %1163 = vmatprep.subr.mxu0 0.0
  %1164 = vmatpush1.msra.mxu0 0.0
  %1165 = vmatprep.subr.mxu0 0.0
  %1166 = vmatpush1.msra.mxu0 0.0
  %1167 = vmatprep.subr.mxu0 0.0
  %1168 = vmatpush1.msra.mxu0 0.0
  %1169 = vmatprep.mubr.f32.mxu0 0.0
  %v1170 = vand.u32 %v373, 4294901760
  %1171 = vmatmul.mubr.f32.gmra.mrb[0].mxu0 %v1170
  %v1172 = vpop.f32.mrb[0].mxu0
  %v1173 = vadd.f32 %v1050, %v1172
  %v1174 = vpop.f32.mrb[0].mxu0
  %v1175 = vadd.f32 %v1052, %v1174
  %1176 = vmatprep.mubr.f32.mxu0 0.0
  %v1177 = vand.u32 %v376, 4294901760
  %1178 = vmatmul.mubr.f32.gmra.mrb[0].mxu0 %v1177
  %v1179 = vpop.f32.mrb[0].mxu0
  %v1180 = vadd.f32 %v1061, %v1179
  %v1181 = vpop.f32.mrb[0].mxu0
  %v1182 = vadd.f32 %v1063, %v1181
  %1183 = vdwg.mxu0
  %v1184 = vand.u32 %v296, 4294901760
  %v1185 = vsub.f32 %v296, %v1184
  %1186 = vmatprep.subr.mxu0 %v1185
  %v1187 = vand.u32 %v295, 4294901760
  %v1188 = vsub.f32 %v295, %v1187
  %1189 = vmatpush1.msra.mxu0 %v1188
  %v1190 = vand.u32 %v312, 4294901760
  %v1191 = vsub.f32 %v312, %v1190
  %1192 = vmatprep.subr.mxu0 %v1191
  %v1193 = vand.u32 %v311, 4294901760
  %v1194 = vsub.f32 %v311, %v1193
  %1195 = vmatpush1.msra.mxu0 %v1194
  %v1196 = vand.u32 %v328, 4294901760
  %v1197 = vsub.f32 %v328, %v1196
  %1198 = vmatprep.subr.mxu0 %v1197
  %v1199 = vand.u32 %v327, 4294901760
  %v1200 = vsub.f32 %v327, %v1199
  %1201 = vmatpush1.msra.mxu0 %v1200
  %v1202 = vand.u32 %v344, 4294901760
  %v1203 = vsub.f32 %v344, %v1202
  %1204 = vmatprep.subr.mxu0 %v1203
  %v1205 = vand.u32 %v343, 4294901760
  %v1206 = vsub.f32 %v343, %v1205
  %1207 = vmatpush1.msra.mxu0 %v1206
  %1208 = vmatprep.subr.mxu0 0.0
  %1209 = vmatpush1.msra.mxu0 0.0
  %1210 = vmatprep.subr.mxu0 0.0
  %1211 = vmatpush1.msra.mxu0 0.0
  %1212 = vmatprep.subr.mxu0 0.0
  %1213 = vmatpush1.msra.mxu0 0.0
  %1214 = vmatprep.subr.mxu0 0.0
  %1215 = vmatpush1.msra.mxu0 0.0
  %1216 = vmatprep.subr.mxu0 0.0
  %1217 = vmatpush1.msra.mxu0 0.0
  %1218 = vmatprep.subr.mxu0 0.0
  %1219 = vmatpush1.msra.mxu0 0.0
  %1220 = vmatprep.subr.mxu0 0.0
  %1221 = vmatpush1.msra.mxu0 0.0
  %1222 = vmatprep.subr.mxu0 0.0
  %1223 = vmatpush1.msra.mxu0 0.0
  %1224 = vmatprep.subr.mxu0 0.0
  %1225 = vmatpush1.msra.mxu0 0.0
  %1226 = vmatprep.subr.mxu0 0.0
  %1227 = vmatpush1.msra.mxu0 0.0
  %1228 = vmatprep.subr.mxu0 0.0
  %1229 = vmatpush1.msra.mxu0 0.0
  %1230 = vmatprep.subr.mxu0 0.0
  %1231 = vmatpush1.msra.mxu0 0.0
  %1232 = vmatprep.subr.mxu0 0.0
  %1233 = vmatpush1.msra.mxu0 0.0
  %1234 = vmatprep.subr.mxu0 0.0
  %1235 = vmatpush1.msra.mxu0 0.0
  %1236 = vmatprep.subr.mxu0 0.0
  %1237 = vmatpush1.msra.mxu0 0.0
  %1238 = vmatprep.subr.mxu0 0.0
  %1239 = vmatpush1.msra.mxu0 0.0
  %1240 = vmatprep.subr.mxu0 0.0
  %1241 = vmatpush1.msra.mxu0 0.0
  %1242 = vmatprep.subr.mxu0 0.0
  %1243 = vmatpush1.msra.mxu0 0.0
  %1244 = vmatprep.subr.mxu0 0.0
  %1245 = vmatpush1.msra.mxu0 0.0
  %1246 = vmatprep.subr.mxu0 0.0
  %1247 = vmatpush1.msra.mxu0 0.0
  %1248 = vmatprep.subr.mxu0 0.0
  %1249 = vmatpush1.msra.mxu0 0.0
  %1250 = vmatprep.subr.mxu0 0.0
  %1251 = vmatpush1.msra.mxu0 0.0
  %1252 = vmatprep.subr.mxu0 0.0
  %1253 = vmatpush1.msra.mxu0 0.0
  %1254 = vmatprep.subr.mxu0 0.0
  %1255 = vmatpush1.msra.mxu0 0.0
  %1256 = vmatprep.subr.mxu0 0.0
  %1257 = vmatpush1.msra.mxu0 0.0
  %1258 = vmatprep.subr.mxu0 0.0
  %1259 = vmatpush1.msra.mxu0 0.0
  %1260 = vmatprep.subr.mxu0 0.0
  %1261 = vmatpush1.msra.mxu0 0.0
  %1262 = vmatprep.subr.mxu0 0.0
  %1263 = vmatpush1.msra.mxu0 0.0
  %1264 = vmatprep.mubr.f32.mxu0 0.0
  %v1265 = vand.u32 %v373, 4294901760
  %v1266 = vsub.f32 %v373, %v1265
  %1267 = vmatmul.mubr.f32.gmra.mrb[0].mxu0 %v1266
  %v1268 = vpop.f32.mrb[0].mxu0
  %v1269 = vadd.f32 %v1173, %v1268
  %v1270 = vpop.f32.mrb[0].mxu0
  %v1271 = vadd.f32 %v1175, %v1270
  %1272 = vmatprep.mubr.f32.mxu0 0.0
  %v1273 = vand.u32 %v376, 4294901760
  %v1274 = vsub.f32 %v376, %v1273
  %1275 = vmatmul.mubr.f32.gmra.mrb[0].mxu0 %v1274
  %v1276 = vpop.f32.mrb[0].mxu0
  %v1277 = vadd.f32 %v1180, %v1276
  %v1278 = vpop.f32.mrb[0].mxu0
  %v1279 = vadd.f32 %v1182, %v1278
  %1280 = vdwg.mxu0
  %v1281 = vand.u32 %v296, 4294901760
  %1282 = vmatprep.subr.mxu0 %v1281
  %v1283 = vand.u32 %v295, 4294901760
  %1284 = vmatpush1.msra.mxu0 %v1283
  %v1285 = vand.u32 %v312, 4294901760
  %1286 = vmatprep.subr.mxu0 %v1285
  %v1287 = vand.u32 %v311, 4294901760
  %1288 = vmatpush1.msra.mxu0 %v1287
  %v1289 = vand.u32 %v328, 4294901760
  %1290 = vmatprep.subr.mxu0 %v1289
  %v1291 = vand.u32 %v327, 4294901760
  %1292 = vmatpush1.msra.mxu0 %v1291
  %v1293 = vand.u32 %v344, 4294901760
  %1294 = vmatprep.subr.mxu0 %v1293
  %v1295 = vand.u32 %v343, 4294901760
  %1296 = vmatpush1.msra.mxu0 %v1295
  %1297 = vmatprep.subr.mxu0 0.0
  %1298 = vmatpush1.msra.mxu0 0.0
  %1299 = vmatprep.subr.mxu0 0.0
  %1300 = vmatpush1.msra.mxu0 0.0
  %1301 = vmatprep.subr.mxu0 0.0
  %1302 = vmatpush1.msra.mxu0 0.0
  %1303 = vmatprep.subr.mxu0 0.0
  %1304 = vmatpush1.msra.mxu0 0.0
  %1305 = vmatprep.subr.mxu0 0.0
  %1306 = vmatpush1.msra.mxu0 0.0
  %1307 = vmatprep.subr.mxu0 0.0
  %1308 = vmatpush1.msra.mxu0 0.0
  %1309 = vmatprep.subr.mxu0 0.0
  %1310 = vmatpush1.msra.mxu0 0.0
  %1311 = vmatprep.subr.mxu0 0.0
  %1312 = vmatpush1.msra.mxu0 0.0
  %1313 = vmatprep.subr.mxu0 0.0
  %1314 = vmatpush1.msra.mxu0 0.0
  %1315 = vmatprep.subr.mxu0 0.0
  %1316 = vmatpush1.msra.mxu0 0.0
  %1317 = vmatprep.subr.mxu0 0.0
  %1318 = vmatpush1.msra.mxu0 0.0
  %1319 = vmatprep.subr.mxu0 0.0
  %1320 = vmatpush1.msra.mxu0 0.0
  %1321 = vmatprep.subr.mxu0 0.0
  %1322 = vmatpush1.msra.mxu0 0.0
  %1323 = vmatprep.subr.mxu0 0.0
  %1324 = vmatpush1.msra.mxu0 0.0
  %1325 = vmatprep.subr.mxu0 0.0
  %1326 = vmatpush1.msra.mxu0 0.0
  %1327 = vmatprep.subr.mxu0 0.0
  %1328 = vmatpush1.msra.mxu0 0.0
  %1329 = vmatprep.subr.mxu0 0.0
  %1330 = vmatpush1.msra.mxu0 0.0
  %1331 = vmatprep.subr.mxu0 0.0
  %1332 = vmatpush1.msra.mxu0 0.0
  %1333 = vmatprep.subr.mxu0 0.0
  %1334 = vmatpush1.msra.mxu0 0.0
  %1335 = vmatprep.subr.mxu0 0.0
  %1336 = vmatpush1.msra.mxu0 0.0
  %1337 = vmatprep.subr.mxu0 0.0
  %1338 = vmatpush1.msra.mxu0 0.0
  %1339 = vmatprep.subr.mxu0 0.0
  %1340 = vmatpush1.msra.mxu0 0.0
  %1341 = vmatprep.subr.mxu0 0.0
  %1342 = vmatpush1.msra.mxu0 0.0
  %1343 = vmatprep.subr.mxu0 0.0
  %1344 = vmatpush1.msra.mxu0 0.0
  %1345 = vmatprep.subr.mxu0 0.0
  %1346 = vmatpush1.msra.mxu0 0.0
  %1347 = vmatprep.subr.mxu0 0.0
  %1348 = vmatpush1.msra.mxu0 0.0
  %1349 = vmatprep.subr.mxu0 0.0
  %1350 = vmatpush1.msra.mxu0 0.0
  %1351 = vmatprep.subr.mxu0 0.0
  %1352 = vmatpush1.msra.mxu0 0.0
  %1353 = vmatprep.mubr.f32.mxu0 0.0
  %v1354 = vand.u32 %v373, 4294901760
  %v1355 = vsub.f32 %v373, %v1354
  %v1356 = vand.u32 %v1355, 4294901760
  %1357 = vmatmul.mubr.f32.gmra.mrb[0].mxu0 %v1356
  %v1358 = vpop.f32.mrb[0].mxu0
  %v1359 = vadd.f32 %v1269, %v1358
  %v1360 = vpop.f32.mrb[0].mxu0
  %v1361 = vadd.f32 %v1271, %v1360
  %1362 = vmatprep.mubr.f32.mxu0 0.0
  %v1363 = vand.u32 %v376, 4294901760
  %v1364 = vsub.f32 %v376, %v1363
  %v1365 = vand.u32 %v1364, 4294901760
  %1366 = vmatmul.mubr.f32.gmra.mrb[0].mxu0 %v1365
  %v1367 = vpop.f32.mrb[0].mxu0
  %v1368 = vadd.f32 %v1277, %v1367
  %v1369 = vpop.f32.mrb[0].mxu0
  %v1370 = vadd.f32 %v1279, %v1369
  %1371 = vdwg.mxu0
  %v1372 = vand.u32 %v296, 4294901760
  %v1373 = vsub.f32 %v296, %v1372
  %v1374 = vand.u32 %v1373, 4294901760
  %1375 = vmatprep.subr.mxu0 %v1374
  %v1376 = vand.u32 %v295, 4294901760
  %v1377 = vsub.f32 %v295, %v1376
  %v1378 = vand.u32 %v1377, 4294901760
  %1379 = vmatpush1.msra.mxu0 %v1378
  %v1380 = vand.u32 %v312, 4294901760
  %v1381 = vsub.f32 %v312, %v1380
  %v1382 = vand.u32 %v1381, 4294901760
  %1383 = vmatprep.subr.mxu0 %v1382
  %v1384 = vand.u32 %v311, 4294901760
  %v1385 = vsub.f32 %v311, %v1384
  %v1386 = vand.u32 %v1385, 4294901760
  %1387 = vmatpush1.msra.mxu0 %v1386
  %v1388 = vand.u32 %v328, 4294901760
  %v1389 = vsub.f32 %v328, %v1388
  %v1390 = vand.u32 %v1389, 4294901760
  %1391 = vmatprep.subr.mxu0 %v1390
  %v1392 = vand.u32 %v327, 4294901760
  %v1393 = vsub.f32 %v327, %v1392
  %v1394 = vand.u32 %v1393, 4294901760
  %1395 = vmatpush1.msra.mxu0 %v1394
  %v1396 = vand.u32 %v344, 4294901760
  %v1397 = vsub.f32 %v344, %v1396
  %v1398 = vand.u32 %v1397, 4294901760
  %1399 = vmatprep.subr.mxu0 %v1398
  %v1400 = vand.u32 %v343, 4294901760
  %v1401 = vsub.f32 %v343, %v1400
  %v1402 = vand.u32 %v1401, 4294901760
  %1403 = vmatpush1.msra.mxu0 %v1402
  %1404 = vmatprep.subr.mxu0 0.0
  %1405 = vmatpush1.msra.mxu0 0.0
  %1406 = vmatprep.subr.mxu0 0.0
  %1407 = vmatpush1.msra.mxu0 0.0
  %1408 = vmatprep.subr.mxu0 0.0
  %1409 = vmatpush1.msra.mxu0 0.0
  %1410 = vmatprep.subr.mxu0 0.0
  %1411 = vmatpush1.msra.mxu0 0.0
  %1412 = vmatprep.subr.mxu0 0.0
  %1413 = vmatpush1.msra.mxu0 0.0
  %1414 = vmatprep.subr.mxu0 0.0
  %1415 = vmatpush1.msra.mxu0 0.0
  %1416 = vmatprep.subr.mxu0 0.0
  %1417 = vmatpush1.msra.mxu0 0.0
  %1418 = vmatprep.subr.mxu0 0.0
  %1419 = vmatpush1.msra.mxu0 0.0
  %1420 = vmatprep.subr.mxu0 0.0
  %1421 = vmatpush1.msra.mxu0 0.0
  %1422 = vmatprep.subr.mxu0 0.0
  %1423 = vmatpush1.msra.mxu0 0.0
  %1424 = vmatprep.subr.mxu0 0.0
  %1425 = vmatpush1.msra.mxu0 0.0
  %1426 = vmatprep.subr.mxu0 0.0
  %1427 = vmatpush1.msra.mxu0 0.0
  %1428 = vmatprep.subr.mxu0 0.0
  %1429 = vmatpush1.msra.mxu0 0.0
  %1430 = vmatprep.subr.mxu0 0.0
  %1431 = vmatpush1.msra.mxu0 0.0
  %1432 = vmatprep.subr.mxu0 0.0
  %1433 = vmatpush1.msra.mxu0 0.0
  %1434 = vmatprep.subr.mxu0 0.0
  %1435 = vmatpush1.msra.mxu0 0.0
  %1436 = vmatprep.subr.mxu0 0.0
  %1437 = vmatpush1.msra.mxu0 0.0
  %1438 = vmatprep.subr.mxu0 0.0
  %1439 = vmatpush1.msra.mxu0 0.0
  %1440 = vmatprep.subr.mxu0 0.0
  %1441 = vmatpush1.msra.mxu0 0.0
  %1442 = vmatprep.subr.mxu0 0.0
  %1443 = vmatpush1.msra.mxu0 0.0
  %1444 = vmatprep.subr.mxu0 0.0
  %1445 = vmatpush1.msra.mxu0 0.0
  %1446 = vmatprep.subr.mxu0 0.0
  %1447 = vmatpush1.msra.mxu0 0.0
  %1448 = vmatprep.subr.mxu0 0.0
  %1449 = vmatpush1.msra.mxu0 0.0
  %1450 = vmatprep.subr.mxu0 0.0
  %1451 = vmatpush1.msra.mxu0 0.0
  %1452 = vmatprep.subr.mxu0 0.0
  %1453 = vmatpush1.msra.mxu0 0.0
  %1454 = vmatprep.subr.mxu0 0.0
  %1455 = vmatpush1.msra.mxu0 0.0
  %1456 = vmatprep.subr.mxu0 0.0
  %1457 = vmatpush1.msra.mxu0 0.0
  %1458 = vmatprep.subr.mxu0 0.0
  %1459 = vmatpush1.msra.mxu0 0.0
  %1460 = vmatprep.mubr.f32.mxu0 0.0
  %v1461 = vand.u32 %v373, 4294901760
  %1462 = vmatmul.mubr.f32.gmra.mrb[0].mxu0 %v1461
  %v1463 = vpop.f32.mrb[0].mxu0
  %v1464 = vadd.f32 %v1359, %v1463
  %v1465 = vpop.f32.mrb[0].mxu0
  %v1466 = vadd.f32 %v1361, %v1465
  %1467 = vmatprep.mubr.f32.mxu0 0.0
  %v1468 = vand.u32 %v376, 4294901760
  %1469 = vmatmul.mubr.f32.gmra.mrb[0].mxu0 %v1468
  %v1470 = vpop.f32.mrb[0].mxu0
  %v1471 = vadd.f32 %v1368, %v1470
  %v1472 = vpop.f32.mrb[0].mxu0
  %v1473 = vadd.f32 %v1370, %v1472
  %1474 = vdwg.mxu0
  %v1475 = vand.u32 %v296, 4294901760
  %1476 = vmatprep.subr.mxu0 %v1475
  %v1477 = vand.u32 %v295, 4294901760
  %1478 = vmatpush1.msra.mxu0 %v1477
  %v1479 = vand.u32 %v312, 4294901760
  %1480 = vmatprep.subr.mxu0 %v1479
  %v1481 = vand.u32 %v311, 4294901760
  %1482 = vmatpush1.msra.mxu0 %v1481
  %v1483 = vand.u32 %v328, 4294901760
  %1484 = vmatprep.subr.mxu0 %v1483
  %v1485 = vand.u32 %v327, 4294901760
  %1486 = vmatpush1.msra.mxu0 %v1485
  %v1487 = vand.u32 %v344, 4294901760
  %1488 = vmatprep.subr.mxu0 %v1487
  %v1489 = vand.u32 %v343, 4294901760
  %1490 = vmatpush1.msra.mxu0 %v1489
  %1491 = vmatprep.subr.mxu0 0.0
  %1492 = vmatpush1.msra.mxu0 0.0
  %1493 = vmatprep.subr.mxu0 0.0
  %1494 = vmatpush1.msra.mxu0 0.0
  %1495 = vmatprep.subr.mxu0 0.0
  %1496 = vmatpush1.msra.mxu0 0.0
  %1497 = vmatprep.subr.mxu0 0.0
  %1498 = vmatpush1.msra.mxu0 0.0
  %1499 = vmatprep.subr.mxu0 0.0
  %1500 = vmatpush1.msra.mxu0 0.0
  %1501 = vmatprep.subr.mxu0 0.0
  %1502 = vmatpush1.msra.mxu0 0.0
  %1503 = vmatprep.subr.mxu0 0.0
  %1504 = vmatpush1.msra.mxu0 0.0
  %1505 = vmatprep.subr.mxu0 0.0
  %1506 = vmatpush1.msra.mxu0 0.0
  %1507 = vmatprep.subr.mxu0 0.0
  %1508 = vmatpush1.msra.mxu0 0.0
  %1509 = vmatprep.subr.mxu0 0.0
  %1510 = vmatpush1.msra.mxu0 0.0
  %1511 = vmatprep.subr.mxu0 0.0
  %1512 = vmatpush1.msra.mxu0 0.0
  %1513 = vmatprep.subr.mxu0 0.0
  %1514 = vmatpush1.msra.mxu0 0.0
  %1515 = vmatprep.subr.mxu0 0.0
  %1516 = vmatpush1.msra.mxu0 0.0
  %1517 = vmatprep.subr.mxu0 0.0
  %1518 = vmatpush1.msra.mxu0 0.0
  %1519 = vmatprep.subr.mxu0 0.0
  %1520 = vmatpush1.msra.mxu0 0.0
  %1521 = vmatprep.subr.mxu0 0.0
  %1522 = vmatpush1.msra.mxu0 0.0
  %1523 = vmatprep.subr.mxu0 0.0
  %1524 = vmatpush1.msra.mxu0 0.0
  %1525 = vmatprep.subr.mxu0 0.0
  %1526 = vmatpush1.msra.mxu0 0.0
  %1527 = vmatprep.subr.mxu0 0.0
  %1528 = vmatpush1.msra.mxu0 0.0
  %1529 = vmatprep.subr.mxu0 0.0
  %1530 = vmatpush1.msra.mxu0 0.0
  %1531 = vmatprep.subr.mxu0 0.0
  %1532 = vmatpush1.msra.mxu0 0.0
  %1533 = vmatprep.subr.mxu0 0.0
  %1534 = vmatpush1.msra.mxu0 0.0
  %1535 = vmatprep.subr.mxu0 0.0
  %1536 = vmatpush1.msra.mxu0 0.0
  %1537 = vmatprep.subr.mxu0 0.0
  %1538 = vmatpush1.msra.mxu0 0.0
  %1539 = vmatprep.subr.mxu0 0.0
  %1540 = vmatpush1.msra.mxu0 0.0
  %1541 = vmatprep.subr.mxu0 0.0
  %1542 = vmatpush1.msra.mxu0 0.0
  %1543 = vmatprep.subr.mxu0 0.0
  %1544 = vmatpush1.msra.mxu0 0.0
  %1545 = vmatprep.subr.mxu0 0.0
  %1546 = vmatpush1.msra.mxu0 0.0
  %1547 = vmatprep.mubr.f32.mxu0 0.0
  %v1548 = vand.u32 %v373, 4294901760
  %1549 = vmatmul.mubr.f32.gmra.mrb[0].mxu0 %v1548
  %v1550 = vpop.f32.mrb[0].mxu0
  %v1551 = vadd.f32 %v1464, %v1550
  %v1552 = vpop.f32.mrb[0].mxu0
  %v1553 = vadd.f32 %v1466, %v1552
  %1554 = vmatprep.mubr.f32.mxu0 0.0
  %v1555 = vand.u32 %v376, 4294901760
  %1556 = vmatmul.mubr.f32.gmra.mrb[0].mxu0 %v1555
  %v1557 = vpop.f32.mrb[0].mxu0
  %v1558 = vadd.f32 %v1471, %v1557
  %v1559 = vpop.f32.mrb[0].mxu0
  %v1560 = vadd.f32 %v1473, %v1559
  %1561 = vdwg.mxu0
  %v1562 = vand.u32 %v298, 4294901760
  %1563 = vmatprep.subr.mxu0 %v1562
  %v1564 = vand.u32 %v297, 4294901760
  %1565 = vmatpush1.msra.mxu0 %v1564
  %v1566 = vand.u32 %v314, 4294901760
  %1567 = vmatprep.subr.mxu0 %v1566
  %v1568 = vand.u32 %v313, 4294901760
  %1569 = vmatpush1.msra.mxu0 %v1568
  %v1570 = vand.u32 %v330, 4294901760
  %1571 = vmatprep.subr.mxu0 %v1570
  %v1572 = vand.u32 %v329, 4294901760
  %1573 = vmatpush1.msra.mxu0 %v1572
  %v1574 = vand.u32 %v346, 4294901760
  %1575 = vmatprep.subr.mxu0 %v1574
  %v1576 = vand.u32 %v345, 4294901760
  %1577 = vmatpush1.msra.mxu0 %v1576
  %1578 = vmatprep.subr.mxu0 0.0
  %1579 = vmatpush1.msra.mxu0 0.0
  %1580 = vmatprep.subr.mxu0 0.0
  %1581 = vmatpush1.msra.mxu0 0.0
  %1582 = vmatprep.subr.mxu0 0.0
  %1583 = vmatpush1.msra.mxu0 0.0
  %1584 = vmatprep.subr.mxu0 0.0
  %1585 = vmatpush1.msra.mxu0 0.0
  %1586 = vmatprep.subr.mxu0 0.0
  %1587 = vmatpush1.msra.mxu0 0.0
  %1588 = vmatprep.subr.mxu0 0.0
  %1589 = vmatpush1.msra.mxu0 0.0
  %1590 = vmatprep.subr.mxu0 0.0
  %1591 = vmatpush1.msra.mxu0 0.0
  %1592 = vmatprep.subr.mxu0 0.0
  %1593 = vmatpush1.msra.mxu0 0.0
  %1594 = vmatprep.subr.mxu0 0.0
  %1595 = vmatpush1.msra.mxu0 0.0
  %1596 = vmatprep.subr.mxu0 0.0
  %1597 = vmatpush1.msra.mxu0 0.0
  %1598 = vmatprep.subr.mxu0 0.0
  %1599 = vmatpush1.msra.mxu0 0.0
  %1600 = vmatprep.subr.mxu0 0.0
  %1601 = vmatpush1.msra.mxu0 0.0
  %1602 = vmatprep.subr.mxu0 0.0
  %1603 = vmatpush1.msra.mxu0 0.0
  %1604 = vmatprep.subr.mxu0 0.0
  %1605 = vmatpush1.msra.mxu0 0.0
  %1606 = vmatprep.subr.mxu0 0.0
  %1607 = vmatpush1.msra.mxu0 0.0
  %1608 = vmatprep.subr.mxu0 0.0
  %1609 = vmatpush1.msra.mxu0 0.0
  %1610 = vmatprep.subr.mxu0 0.0
  %1611 = vmatpush1.msra.mxu0 0.0
  %1612 = vmatprep.subr.mxu0 0.0
  %1613 = vmatpush1.msra.mxu0 0.0
  %1614 = vmatprep.subr.mxu0 0.0
  %1615 = vmatpush1.msra.mxu0 0.0
  %1616 = vmatprep.subr.mxu0 0.0
  %1617 = vmatpush1.msra.mxu0 0.0
  %1618 = vmatprep.subr.mxu0 0.0
  %1619 = vmatpush1.msra.mxu0 0.0
  %1620 = vmatprep.subr.mxu0 0.0
  %1621 = vmatpush1.msra.mxu0 0.0
  %1622 = vmatprep.subr.mxu0 0.0
  %1623 = vmatpush1.msra.mxu0 0.0
  %1624 = vmatprep.subr.mxu0 0.0
  %1625 = vmatpush1.msra.mxu0 0.0
  %1626 = vmatprep.subr.mxu0 0.0
  %1627 = vmatpush1.msra.mxu0 0.0
  %1628 = vmatprep.subr.mxu0 0.0
  %1629 = vmatpush1.msra.mxu0 0.0
  %1630 = vmatprep.subr.mxu0 0.0
  %1631 = vmatpush1.msra.mxu0 0.0
  %1632 = vmatprep.subr.mxu0 0.0
  %1633 = vmatpush1.msra.mxu0 0.0
  %1634 = vmatprep.mubr.f32.mxu0 0.0
  %v1635 = vand.u32 %v373, 4294901760
  %v1636 = vsub.f32 %v373, %v1635
  %v1637 = vand.u32 %v1636, 4294901760
  %v1638 = vsub.f32 %v1636, %v1637
  %v1639 = vand.u32 %v1638, 4294901760
  %1640 = vmatmul.mubr.f32.gmra.mrb[0].mxu0 %v1639
  %v1641 = vpop.f32.mrb[0].mxu0
  %v1642 = vadd.f32 %v364, %v1641
  %v1643 = vpop.f32.mrb[0].mxu0
  %v1644 = vadd.f32 %v364, %v1643
  %1645 = vmatprep.mubr.f32.mxu0 0.0
  %v1646 = vand.u32 %v376, 4294901760
  %v1647 = vsub.f32 %v376, %v1646
  %v1648 = vand.u32 %v1647, 4294901760
  %v1649 = vsub.f32 %v1647, %v1648
  %v1650 = vand.u32 %v1649, 4294901760
  %1651 = vmatmul.mubr.f32.gmra.mrb[0].mxu0 %v1650
  %v1652 = vpop.f32.mrb[0].mxu0
  %v1653 = vadd.f32 %v369, %v1652
  %v1654 = vpop.f32.mrb[0].mxu0
  %v1655 = vadd.f32 %v369, %v1654
  %1656 = vdwg.mxu0
  %v1657 = vand.u32 %v298, 4294901760
  %v1658 = vsub.f32 %v298, %v1657
  %v1659 = vand.u32 %v1658, 4294901760
  %v1660 = vsub.f32 %v1658, %v1659
  %v1661 = vand.u32 %v1660, 4294901760
  %1662 = vmatprep.subr.mxu0 %v1661
  %v1663 = vand.u32 %v297, 4294901760
  %v1664 = vsub.f32 %v297, %v1663
  %v1665 = vand.u32 %v1664, 4294901760
  %v1666 = vsub.f32 %v1664, %v1665
  %v1667 = vand.u32 %v1666, 4294901760
  %1668 = vmatpush1.msra.mxu0 %v1667
  %v1669 = vand.u32 %v314, 4294901760
  %v1670 = vsub.f32 %v314, %v1669
  %v1671 = vand.u32 %v1670, 4294901760
  %v1672 = vsub.f32 %v1670, %v1671
  %v1673 = vand.u32 %v1672, 4294901760
  %1674 = vmatprep.subr.mxu0 %v1673
  %v1675 = vand.u32 %v313, 4294901760
  %v1676 = vsub.f32 %v313, %v1675
  %v1677 = vand.u32 %v1676, 4294901760
  %v1678 = vsub.f32 %v1676, %v1677
  %v1679 = vand.u32 %v1678, 4294901760
  %1680 = vmatpush1.msra.mxu0 %v1679
  %v1681 = vand.u32 %v330, 4294901760
  %v1682 = vsub.f32 %v330, %v1681
  %v1683 = vand.u32 %v1682, 4294901760
  %v1684 = vsub.f32 %v1682, %v1683
  %v1685 = vand.u32 %v1684, 4294901760
  %1686 = vmatprep.subr.mxu0 %v1685
  %v1687 = vand.u32 %v329, 4294901760
  %v1688 = vsub.f32 %v329, %v1687
  %v1689 = vand.u32 %v1688, 4294901760
  %v1690 = vsub.f32 %v1688, %v1689
  %v1691 = vand.u32 %v1690, 4294901760
  %1692 = vmatpush1.msra.mxu0 %v1691
  %v1693 = vand.u32 %v346, 4294901760
  %v1694 = vsub.f32 %v346, %v1693
  %v1695 = vand.u32 %v1694, 4294901760
  %v1696 = vsub.f32 %v1694, %v1695
  %v1697 = vand.u32 %v1696, 4294901760
  %1698 = vmatprep.subr.mxu0 %v1697
  %v1699 = vand.u32 %v345, 4294901760
  %v1700 = vsub.f32 %v345, %v1699
  %v1701 = vand.u32 %v1700, 4294901760
  %v1702 = vsub.f32 %v1700, %v1701
  %v1703 = vand.u32 %v1702, 4294901760
  %1704 = vmatpush1.msra.mxu0 %v1703
  %1705 = vmatprep.subr.mxu0 0.0
  %1706 = vmatpush1.msra.mxu0 0.0
  %1707 = vmatprep.subr.mxu0 0.0
  %1708 = vmatpush1.msra.mxu0 0.0
  %1709 = vmatprep.subr.mxu0 0.0
  %1710 = vmatpush1.msra.mxu0 0.0
  %1711 = vmatprep.subr.mxu0 0.0
  %1712 = vmatpush1.msra.mxu0 0.0
  %1713 = vmatprep.subr.mxu0 0.0
  %1714 = vmatpush1.msra.mxu0 0.0
  %1715 = vmatprep.subr.mxu0 0.0
  %1716 = vmatpush1.msra.mxu0 0.0
  %1717 = vmatprep.subr.mxu0 0.0
  %1718 = vmatpush1.msra.mxu0 0.0
  %1719 = vmatprep.subr.mxu0 0.0
  %1720 = vmatpush1.msra.mxu0 0.0
  %1721 = vmatprep.subr.mxu0 0.0
  %1722 = vmatpush1.msra.mxu0 0.0
  %1723 = vmatprep.subr.mxu0 0.0
  %1724 = vmatpush1.msra.mxu0 0.0
  %1725 = vmatprep.subr.mxu0 0.0
  %1726 = vmatpush1.msra.mxu0 0.0
  %1727 = vmatprep.subr.mxu0 0.0
  %1728 = vmatpush1.msra.mxu0 0.0
  %1729 = vmatprep.subr.mxu0 0.0
  %1730 = vmatpush1.msra.mxu0 0.0
  %1731 = vmatprep.subr.mxu0 0.0
  %1732 = vmatpush1.msra.mxu0 0.0
  %1733 = vmatprep.subr.mxu0 0.0
  %1734 = vmatpush1.msra.mxu0 0.0
  %1735 = vmatprep.subr.mxu0 0.0
  %1736 = vmatpush1.msra.mxu0 0.0
  %1737 = vmatprep.subr.mxu0 0.0
  %1738 = vmatpush1.msra.mxu0 0.0
  %1739 = vmatprep.subr.mxu0 0.0
  %1740 = vmatpush1.msra.mxu0 0.0
  %1741 = vmatprep.subr.mxu0 0.0
  %1742 = vmatpush1.msra.mxu0 0.0
  %1743 = vmatprep.subr.mxu0 0.0
  %1744 = vmatpush1.msra.mxu0 0.0
  %1745 = vmatprep.subr.mxu0 0.0
  %1746 = vmatpush1.msra.mxu0 0.0
  %1747 = vmatprep.subr.mxu0 0.0
  %1748 = vmatpush1.msra.mxu0 0.0
  %1749 = vmatprep.subr.mxu0 0.0
  %1750 = vmatpush1.msra.mxu0 0.0
  %1751 = vmatprep.subr.mxu0 0.0
  %1752 = vmatpush1.msra.mxu0 0.0
  %1753 = vmatprep.subr.mxu0 0.0
  %1754 = vmatpush1.msra.mxu0 0.0
  %1755 = vmatprep.subr.mxu0 0.0
  %1756 = vmatpush1.msra.mxu0 0.0
  %1757 = vmatprep.subr.mxu0 0.0
  %1758 = vmatpush1.msra.mxu0 0.0
  %1759 = vmatprep.subr.mxu0 0.0
  %1760 = vmatpush1.msra.mxu0 0.0
  %1761 = vmatprep.mubr.f32.mxu0 0.0
  %v1762 = vand.u32 %v373, 4294901760
  %1763 = vmatmul.mubr.f32.gmra.mrb[0].mxu0 %v1762
  %v1764 = vpop.f32.mrb[0].mxu0
  %v1765 = vadd.f32 %v1642, %v1764
  %v1766 = vpop.f32.mrb[0].mxu0
  %v1767 = vadd.f32 %v1644, %v1766
  %1768 = vmatprep.mubr.f32.mxu0 0.0
  %v1769 = vand.u32 %v376, 4294901760
  %1770 = vmatmul.mubr.f32.gmra.mrb[0].mxu0 %v1769
  %v1771 = vpop.f32.mrb[0].mxu0
  %v1772 = vadd.f32 %v1653, %v1771
  %v1773 = vpop.f32.mrb[0].mxu0
  %v1774 = vadd.f32 %v1655, %v1773
  %1775 = vdwg.mxu0
  %v1776 = vand.u32 %v298, 4294901760
  %v1777 = vsub.f32 %v298, %v1776
  %1778 = vmatprep.subr.mxu0 %v1777
  %v1779 = vand.u32 %v297, 4294901760
  %v1780 = vsub.f32 %v297, %v1779
  %1781 = vmatpush1.msra.mxu0 %v1780
  %v1782 = vand.u32 %v314, 4294901760
  %v1783 = vsub.f32 %v314, %v1782
  %1784 = vmatprep.subr.mxu0 %v1783
  %v1785 = vand.u32 %v313, 4294901760
  %v1786 = vsub.f32 %v313, %v1785
  %1787 = vmatpush1.msra.mxu0 %v1786
  %v1788 = vand.u32 %v330, 4294901760
  %v1789 = vsub.f32 %v330, %v1788
  %1790 = vmatprep.subr.mxu0 %v1789
  %v1791 = vand.u32 %v329, 4294901760
  %v1792 = vsub.f32 %v329, %v1791
  %1793 = vmatpush1.msra.mxu0 %v1792
  %v1794 = vand.u32 %v346, 4294901760
  %v1795 = vsub.f32 %v346, %v1794
  %1796 = vmatprep.subr.mxu0 %v1795
  %v1797 = vand.u32 %v345, 4294901760
  %v1798 = vsub.f32 %v345, %v1797
  %1799 = vmatpush1.msra.mxu0 %v1798
  %1800 = vmatprep.subr.mxu0 0.0
  %1801 = vmatpush1.msra.mxu0 0.0
  %1802 = vmatprep.subr.mxu0 0.0
  %1803 = vmatpush1.msra.mxu0 0.0
  %1804 = vmatprep.subr.mxu0 0.0
  %1805 = vmatpush1.msra.mxu0 0.0
  %1806 = vmatprep.subr.mxu0 0.0
  %1807 = vmatpush1.msra.mxu0 0.0
  %1808 = vmatprep.subr.mxu0 0.0
  %1809 = vmatpush1.msra.mxu0 0.0
  %1810 = vmatprep.subr.mxu0 0.0
  %1811 = vmatpush1.msra.mxu0 0.0
  %1812 = vmatprep.subr.mxu0 0.0
  %1813 = vmatpush1.msra.mxu0 0.0
  %1814 = vmatprep.subr.mxu0 0.0
  %1815 = vmatpush1.msra.mxu0 0.0
  %1816 = vmatprep.subr.mxu0 0.0
  %1817 = vmatpush1.msra.mxu0 0.0
  %1818 = vmatprep.subr.mxu0 0.0
  %1819 = vmatpush1.msra.mxu0 0.0
  %1820 = vmatprep.subr.mxu0 0.0
  %1821 = vmatpush1.msra.mxu0 0.0
  %1822 = vmatprep.subr.mxu0 0.0
  %1823 = vmatpush1.msra.mxu0 0.0
  %1824 = vmatprep.subr.mxu0 0.0
  %1825 = vmatpush1.msra.mxu0 0.0
  %1826 = vmatprep.subr.mxu0 0.0
  %1827 = vmatpush1.msra.mxu0 0.0
  %1828 = vmatprep.subr.mxu0 0.0
  %1829 = vmatpush1.msra.mxu0 0.0
  %1830 = vmatprep.subr.mxu0 0.0
  %1831 = vmatpush1.msra.mxu0 0.0
  %1832 = vmatprep.subr.mxu0 0.0
  %1833 = vmatpush1.msra.mxu0 0.0
  %1834 = vmatprep.subr.mxu0 0.0
  %1835 = vmatpush1.msra.mxu0 0.0
  %1836 = vmatprep.subr.mxu0 0.0
  %1837 = vmatpush1.msra.mxu0 0.0
  %1838 = vmatprep.subr.mxu0 0.0
  %1839 = vmatpush1.msra.mxu0 0.0
  %1840 = vmatprep.subr.mxu0 0.0
  %1841 = vmatpush1.msra.mxu0 0.0
  %1842 = vmatprep.subr.mxu0 0.0
  %1843 = vmatpush1.msra.mxu0 0.0
  %1844 = vmatprep.subr.mxu0 0.0
  %1845 = vmatpush1.msra.mxu0 0.0
  %1846 = vmatprep.subr.mxu0 0.0
  %1847 = vmatpush1.msra.mxu0 0.0
  %1848 = vmatprep.subr.mxu0 0.0
  %1849 = vmatpush1.msra.mxu0 0.0
  %1850 = vmatprep.subr.mxu0 0.0
  %1851 = vmatpush1.msra.mxu0 0.0
  %1852 = vmatprep.subr.mxu0 0.0
  %1853 = vmatpush1.msra.mxu0 0.0
  %1854 = vmatprep.subr.mxu0 0.0
  %1855 = vmatpush1.msra.mxu0 0.0
  %1856 = vmatprep.mubr.f32.mxu0 0.0
  %v1857 = vand.u32 %v373, 4294901760
  %v1858 = vsub.f32 %v373, %v1857
  %1859 = vmatmul.mubr.f32.gmra.mrb[0].mxu0 %v1858
  %v1860 = vpop.f32.mrb[0].mxu0
  %v1861 = vadd.f32 %v1765, %v1860
  %v1862 = vpop.f32.mrb[0].mxu0
  %v1863 = vadd.f32 %v1767, %v1862
  %1864 = vmatprep.mubr.f32.mxu0 0.0
  %v1865 = vand.u32 %v376, 4294901760
  %v1866 = vsub.f32 %v376, %v1865
  %1867 = vmatmul.mubr.f32.gmra.mrb[0].mxu0 %v1866
  %v1868 = vpop.f32.mrb[0].mxu0
  %v1869 = vadd.f32 %v1772, %v1868
  %v1870 = vpop.f32.mrb[0].mxu0
  %v1871 = vadd.f32 %v1774, %v1870
  %1872 = vdwg.mxu0
  %v1873 = vand.u32 %v298, 4294901760
  %1874 = vmatprep.subr.mxu0 %v1873
  %v1875 = vand.u32 %v297, 4294901760
  %1876 = vmatpush1.msra.mxu0 %v1875
  %v1877 = vand.u32 %v314, 4294901760
  %1878 = vmatprep.subr.mxu0 %v1877
  %v1879 = vand.u32 %v313, 4294901760
  %1880 = vmatpush1.msra.mxu0 %v1879
  %v1881 = vand.u32 %v330, 4294901760
  %1882 = vmatprep.subr.mxu0 %v1881
  %v1883 = vand.u32 %v329, 4294901760
  %1884 = vmatpush1.msra.mxu0 %v1883
  %v1885 = vand.u32 %v346, 4294901760
  %1886 = vmatprep.subr.mxu0 %v1885
  %v1887 = vand.u32 %v345, 4294901760
  %1888 = vmatpush1.msra.mxu0 %v1887
  %1889 = vmatprep.subr.mxu0 0.0
  %1890 = vmatpush1.msra.mxu0 0.0
  %1891 = vmatprep.subr.mxu0 0.0
  %1892 = vmatpush1.msra.mxu0 0.0
  %1893 = vmatprep.subr.mxu0 0.0
  %1894 = vmatpush1.msra.mxu0 0.0
  %1895 = vmatprep.subr.mxu0 0.0
  %1896 = vmatpush1.msra.mxu0 0.0
  %1897 = vmatprep.subr.mxu0 0.0
  %1898 = vmatpush1.msra.mxu0 0.0
  %1899 = vmatprep.subr.mxu0 0.0
  %1900 = vmatpush1.msra.mxu0 0.0
  %1901 = vmatprep.subr.mxu0 0.0
  %1902 = vmatpush1.msra.mxu0 0.0
  %1903 = vmatprep.subr.mxu0 0.0
  %1904 = vmatpush1.msra.mxu0 0.0
  %1905 = vmatprep.subr.mxu0 0.0
  %1906 = vmatpush1.msra.mxu0 0.0
  %1907 = vmatprep.subr.mxu0 0.0
  %1908 = vmatpush1.msra.mxu0 0.0
  %1909 = vmatprep.subr.mxu0 0.0
  %1910 = vmatpush1.msra.mxu0 0.0
  %1911 = vmatprep.subr.mxu0 0.0
  %1912 = vmatpush1.msra.mxu0 0.0
  %1913 = vmatprep.subr.mxu0 0.0
  %1914 = vmatpush1.msra.mxu0 0.0
  %1915 = vmatprep.subr.mxu0 0.0
  %1916 = vmatpush1.msra.mxu0 0.0
  %1917 = vmatprep.subr.mxu0 0.0
  %1918 = vmatpush1.msra.mxu0 0.0
  %1919 = vmatprep.subr.mxu0 0.0
  %1920 = vmatpush1.msra.mxu0 0.0
  %1921 = vmatprep.subr.mxu0 0.0
  %1922 = vmatpush1.msra.mxu0 0.0
  %1923 = vmatprep.subr.mxu0 0.0
  %1924 = vmatpush1.msra.mxu0 0.0
  %1925 = vmatprep.subr.mxu0 0.0
  %1926 = vmatpush1.msra.mxu0 0.0
  %1927 = vmatprep.subr.mxu0 0.0
  %1928 = vmatpush1.msra.mxu0 0.0
  %1929 = vmatprep.subr.mxu0 0.0
  %1930 = vmatpush1.msra.mxu0 0.0
  %1931 = vmatprep.subr.mxu0 0.0
  %1932 = vmatpush1.msra.mxu0 0.0
  %1933 = vmatprep.subr.mxu0 0.0
  %1934 = vmatpush1.msra.mxu0 0.0
  %1935 = vmatprep.subr.mxu0 0.0
  %1936 = vmatpush1.msra.mxu0 0.0
  %1937 = vmatprep.subr.mxu0 0.0
  %1938 = vmatpush1.msra.mxu0 0.0
  %1939 = vmatprep.subr.mxu0 0.0
  %1940 = vmatpush1.msra.mxu0 0.0
  %1941 = vmatprep.subr.mxu0 0.0
  %1942 = vmatpush1.msra.mxu0 0.0
  %1943 = vmatprep.subr.mxu0 0.0
  %1944 = vmatpush1.msra.mxu0 0.0
  %1945 = vmatprep.mubr.f32.mxu0 0.0
  %v1946 = vand.u32 %v373, 4294901760
  %v1947 = vsub.f32 %v373, %v1946
  %v1948 = vand.u32 %v1947, 4294901760
  %1949 = vmatmul.mubr.f32.gmra.mrb[0].mxu0 %v1948
  %v1950 = vpop.f32.mrb[0].mxu0
  %v1951 = vadd.f32 %v1861, %v1950
  %v1952 = vpop.f32.mrb[0].mxu0
  %v1953 = vadd.f32 %v1863, %v1952
  %1954 = vmatprep.mubr.f32.mxu0 0.0
  %v1955 = vand.u32 %v376, 4294901760
  %v1956 = vsub.f32 %v376, %v1955
  %v1957 = vand.u32 %v1956, 4294901760
  %1958 = vmatmul.mubr.f32.gmra.mrb[0].mxu0 %v1957
  %v1959 = vpop.f32.mrb[0].mxu0
  %v1960 = vadd.f32 %v1869, %v1959
  %v1961 = vpop.f32.mrb[0].mxu0
  %v1962 = vadd.f32 %v1871, %v1961
  %1963 = vdwg.mxu0
  %v1964 = vand.u32 %v298, 4294901760
  %v1965 = vsub.f32 %v298, %v1964
  %v1966 = vand.u32 %v1965, 4294901760
  %1967 = vmatprep.subr.mxu0 %v1966
  %v1968 = vand.u32 %v297, 4294901760
  %v1969 = vsub.f32 %v297, %v1968
  %v1970 = vand.u32 %v1969, 4294901760
  %1971 = vmatpush1.msra.mxu0 %v1970
  %v1972 = vand.u32 %v314, 4294901760
  %v1973 = vsub.f32 %v314, %v1972
  %v1974 = vand.u32 %v1973, 4294901760
  %1975 = vmatprep.subr.mxu0 %v1974
  %v1976 = vand.u32 %v313, 4294901760
  %v1977 = vsub.f32 %v313, %v1976
  %v1978 = vand.u32 %v1977, 4294901760
  %1979 = vmatpush1.msra.mxu0 %v1978
  %v1980 = vand.u32 %v330, 4294901760
  %v1981 = vsub.f32 %v330, %v1980
  %v1982 = vand.u32 %v1981, 4294901760
  %1983 = vmatprep.subr.mxu0 %v1982
  %v1984 = vand.u32 %v329, 4294901760
  %v1985 = vsub.f32 %v329, %v1984
  %v1986 = vand.u32 %v1985, 4294901760
  %1987 = vmatpush1.msra.mxu0 %v1986
  %v1988 = vand.u32 %v346, 4294901760
  %v1989 = vsub.f32 %v346, %v1988
  %v1990 = vand.u32 %v1989, 4294901760
  %1991 = vmatprep.subr.mxu0 %v1990
  %v1992 = vand.u32 %v345, 4294901760
  %v1993 = vsub.f32 %v345, %v1992
  %v1994 = vand.u32 %v1993, 4294901760
  %1995 = vmatpush1.msra.mxu0 %v1994
  %1996 = vmatprep.subr.mxu0 0.0
  %1997 = vmatpush1.msra.mxu0 0.0
  %1998 = vmatprep.subr.mxu0 0.0
  %1999 = vmatpush1.msra.mxu0 0.0
  %2000 = vmatprep.subr.mxu0 0.0
  %2001 = vmatpush1.msra.mxu0 0.0
  %2002 = vmatprep.subr.mxu0 0.0
  %2003 = vmatpush1.msra.mxu0 0.0
  %2004 = vmatprep.subr.mxu0 0.0
  %2005 = vmatpush1.msra.mxu0 0.0
  %2006 = vmatprep.subr.mxu0 0.0
  %2007 = vmatpush1.msra.mxu0 0.0
  %2008 = vmatprep.subr.mxu0 0.0
  %2009 = vmatpush1.msra.mxu0 0.0
  %2010 = vmatprep.subr.mxu0 0.0
  %2011 = vmatpush1.msra.mxu0 0.0
  %2012 = vmatprep.subr.mxu0 0.0
  %2013 = vmatpush1.msra.mxu0 0.0
  %2014 = vmatprep.subr.mxu0 0.0
  %2015 = vmatpush1.msra.mxu0 0.0
  %2016 = vmatprep.subr.mxu0 0.0
  %2017 = vmatpush1.msra.mxu0 0.0
  %2018 = vmatprep.subr.mxu0 0.0
  %2019 = vmatpush1.msra.mxu0 0.0
  %2020 = vmatprep.subr.mxu0 0.0
  %2021 = vmatpush1.msra.mxu0 0.0
  %2022 = vmatprep.subr.mxu0 0.0
  %2023 = vmatpush1.msra.mxu0 0.0
  %2024 = vmatprep.subr.mxu0 0.0
  %2025 = vmatpush1.msra.mxu0 0.0
  %2026 = vmatprep.subr.mxu0 0.0
  %2027 = vmatpush1.msra.mxu0 0.0
  %2028 = vmatprep.subr.mxu0 0.0
  %2029 = vmatpush1.msra.mxu0 0.0
  %2030 = vmatprep.subr.mxu0 0.0
  %2031 = vmatpush1.msra.mxu0 0.0
  %2032 = vmatprep.subr.mxu0 0.0
  %2033 = vmatpush1.msra.mxu0 0.0
  %2034 = vmatprep.subr.mxu0 0.0
  %2035 = vmatpush1.msra.mxu0 0.0
  %2036 = vmatprep.subr.mxu0 0.0
  %2037 = vmatpush1.msra.mxu0 0.0
  %2038 = vmatprep.subr.mxu0 0.0
  %2039 = vmatpush1.msra.mxu0 0.0
  %2040 = vmatprep.subr.mxu0 0.0
  %2041 = vmatpush1.msra.mxu0 0.0
  %2042 = vmatprep.subr.mxu0 0.0
  %2043 = vmatpush1.msra.mxu0 0.0
  %2044 = vmatprep.subr.mxu0 0.0
  %2045 = vmatpush1.msra.mxu0 0.0
  %2046 = vmatprep.subr.mxu0 0.0
  %2047 = vmatpush1.msra.mxu0 0.0
  %2048 = vmatprep.subr.mxu0 0.0
  %2049 = vmatpush1.msra.mxu0 0.0
  %2050 = vmatprep.subr.mxu0 0.0
  %2051 = vmatpush1.msra.mxu0 0.0
  %2052 = vmatprep.mubr.f32.mxu0 0.0
  %v2053 = vand.u32 %v373, 4294901760
  %2054 = vmatmul.mubr.f32.gmra.mrb[0].mxu0 %v2053
  %v2055 = vpop.f32.mrb[0].mxu0
  %v2056 = vadd.f32 %v1951, %v2055
  %v2057 = vpop.f32.mrb[0].mxu0
  %v2058 = vadd.f32 %v1953, %v2057
  %2059 = vmatprep.mubr.f32.mxu0 0.0
  %v2060 = vand.u32 %v376, 4294901760
  %2061 = vmatmul.mubr.f32.gmra.mrb[0].mxu0 %v2060
  %v2062 = vpop.f32.mrb[0].mxu0
  %v2063 = vadd.f32 %v1960, %v2062
  %v2064 = vpop.f32.mrb[0].mxu0
  %v2065 = vadd.f32 %v1962, %v2064
  %2066 = vdwg.mxu0
  %v2067 = vand.u32 %v298, 4294901760
  %2068 = vmatprep.subr.mxu0 %v2067
  %v2069 = vand.u32 %v297, 4294901760
  %2070 = vmatpush1.msra.mxu0 %v2069
  %v2071 = vand.u32 %v314, 4294901760
  %2072 = vmatprep.subr.mxu0 %v2071
  %v2073 = vand.u32 %v313, 4294901760
  %2074 = vmatpush1.msra.mxu0 %v2073
  %v2075 = vand.u32 %v330, 4294901760
  %2076 = vmatprep.subr.mxu0 %v2075
  %v2077 = vand.u32 %v329, 4294901760
  %2078 = vmatpush1.msra.mxu0 %v2077
  %v2079 = vand.u32 %v346, 4294901760
  %2080 = vmatprep.subr.mxu0 %v2079
  %v2081 = vand.u32 %v345, 4294901760
  %2082 = vmatpush1.msra.mxu0 %v2081
  %2083 = vmatprep.subr.mxu0 0.0
  %2084 = vmatpush1.msra.mxu0 0.0
  %2085 = vmatprep.subr.mxu0 0.0
  %2086 = vmatpush1.msra.mxu0 0.0
  %2087 = vmatprep.subr.mxu0 0.0
  %2088 = vmatpush1.msra.mxu0 0.0
  %2089 = vmatprep.subr.mxu0 0.0
  %2090 = vmatpush1.msra.mxu0 0.0
  %2091 = vmatprep.subr.mxu0 0.0
  %2092 = vmatpush1.msra.mxu0 0.0
  %2093 = vmatprep.subr.mxu0 0.0
  %2094 = vmatpush1.msra.mxu0 0.0
  %2095 = vmatprep.subr.mxu0 0.0
  %2096 = vmatpush1.msra.mxu0 0.0
  %2097 = vmatprep.subr.mxu0 0.0
  %2098 = vmatpush1.msra.mxu0 0.0
  %2099 = vmatprep.subr.mxu0 0.0
  %2100 = vmatpush1.msra.mxu0 0.0
  %2101 = vmatprep.subr.mxu0 0.0
  %2102 = vmatpush1.msra.mxu0 0.0
  %2103 = vmatprep.subr.mxu0 0.0
  %2104 = vmatpush1.msra.mxu0 0.0
  %2105 = vmatprep.subr.mxu0 0.0
  %2106 = vmatpush1.msra.mxu0 0.0
  %2107 = vmatprep.subr.mxu0 0.0
  %2108 = vmatpush1.msra.mxu0 0.0
  %2109 = vmatprep.subr.mxu0 0.0
  %2110 = vmatpush1.msra.mxu0 0.0
  %2111 = vmatprep.subr.mxu0 0.0
  %2112 = vmatpush1.msra.mxu0 0.0
  %2113 = vmatprep.subr.mxu0 0.0
  %2114 = vmatpush1.msra.mxu0 0.0
  %2115 = vmatprep.subr.mxu0 0.0
  %2116 = vmatpush1.msra.mxu0 0.0
  %2117 = vmatprep.subr.mxu0 0.0
  %2118 = vmatpush1.msra.mxu0 0.0
  %2119 = vmatprep.subr.mxu0 0.0
  %2120 = vmatpush1.msra.mxu0 0.0
  %2121 = vmatprep.subr.mxu0 0.0
  %2122 = vmatpush1.msra.mxu0 0.0
  %2123 = vmatprep.subr.mxu0 0.0
  %2124 = vmatpush1.msra.mxu0 0.0
  %2125 = vmatprep.subr.mxu0 0.0
  %2126 = vmatpush1.msra.mxu0 0.0
  %2127 = vmatprep.subr.mxu0 0.0
  %2128 = vmatpush1.msra.mxu0 0.0
  %2129 = vmatprep.subr.mxu0 0.0
  %2130 = vmatpush1.msra.mxu0 0.0
  %2131 = vmatprep.subr.mxu0 0.0
  %2132 = vmatpush1.msra.mxu0 0.0
  %2133 = vmatprep.subr.mxu0 0.0
  %2134 = vmatpush1.msra.mxu0 0.0
  %2135 = vmatprep.subr.mxu0 0.0
  %2136 = vmatpush1.msra.mxu0 0.0
  %2137 = vmatprep.subr.mxu0 0.0
  %2138 = vmatpush1.msra.mxu0 0.0
  %2139 = vmatprep.mubr.f32.mxu0 0.0
  %v2140 = vand.u32 %v373, 4294901760
  %2141 = vmatmul.mubr.f32.gmra.mrb[0].mxu0 %v2140
  %v2142 = vpop.f32.mrb[0].mxu0
  %v2143 = vadd.f32 %v2056, %v2142
  %v2144 = vpop.f32.mrb[0].mxu0
  %v2145 = vadd.f32 %v2058, %v2144
  %2146 = vmatprep.mubr.f32.mxu0 0.0
  %v2147 = vand.u32 %v376, 4294901760
  %2148 = vmatmul.mubr.f32.gmra.mrb[0].mxu0 %v2147
  %v2149 = vpop.f32.mrb[0].mxu0
  %v2150 = vadd.f32 %v2063, %v2149
  %v2151 = vpop.f32.mrb[0].mxu0
  %v2152 = vadd.f32 %v2065, %v2151
  %2153 = vdwg.mxu0
  %v2154 = vand.u32 %v300, 4294901760
  %2155 = vmatprep.subr.mxu0 %v2154
  %v2156 = vand.u32 %v299, 4294901760
  %2157 = vmatpush1.msra.mxu0 %v2156
  %v2158 = vand.u32 %v316, 4294901760
  %2159 = vmatprep.subr.mxu0 %v2158
  %v2160 = vand.u32 %v315, 4294901760
  %2161 = vmatpush1.msra.mxu0 %v2160
  %v2162 = vand.u32 %v332, 4294901760
  %2163 = vmatprep.subr.mxu0 %v2162
  %v2164 = vand.u32 %v331, 4294901760
  %2165 = vmatpush1.msra.mxu0 %v2164
  %v2166 = vand.u32 %v348, 4294901760
  %2167 = vmatprep.subr.mxu0 %v2166
  %v2168 = vand.u32 %v347, 4294901760
  %2169 = vmatpush1.msra.mxu0 %v2168
  %2170 = vmatprep.subr.mxu0 0.0
  %2171 = vmatpush1.msra.mxu0 0.0
  %2172 = vmatprep.subr.mxu0 0.0
  %2173 = vmatpush1.msra.mxu0 0.0
  %2174 = vmatprep.subr.mxu0 0.0
  %2175 = vmatpush1.msra.mxu0 0.0
  %2176 = vmatprep.subr.mxu0 0.0
  %2177 = vmatpush1.msra.mxu0 0.0
  %2178 = vmatprep.subr.mxu0 0.0
  %2179 = vmatpush1.msra.mxu0 0.0
  %2180 = vmatprep.subr.mxu0 0.0
  %2181 = vmatpush1.msra.mxu0 0.0
  %2182 = vmatprep.subr.mxu0 0.0
  %2183 = vmatpush1.msra.mxu0 0.0
  %2184 = vmatprep.subr.mxu0 0.0
  %2185 = vmatpush1.msra.mxu0 0.0
  %2186 = vmatprep.subr.mxu0 0.0
  %2187 = vmatpush1.msra.mxu0 0.0
  %2188 = vmatprep.subr.mxu0 0.0
  %2189 = vmatpush1.msra.mxu0 0.0
  %2190 = vmatprep.subr.mxu0 0.0
  %2191 = vmatpush1.msra.mxu0 0.0
  %2192 = vmatprep.subr.mxu0 0.0
  %2193 = vmatpush1.msra.mxu0 0.0
  %2194 = vmatprep.subr.mxu0 0.0
  %2195 = vmatpush1.msra.mxu0 0.0
  %2196 = vmatprep.subr.mxu0 0.0
  %2197 = vmatpush1.msra.mxu0 0.0
  %2198 = vmatprep.subr.mxu0 0.0
  %2199 = vmatpush1.msra.mxu0 0.0
  %2200 = vmatprep.subr.mxu0 0.0
  %2201 = vmatpush1.msra.mxu0 0.0
  %2202 = vmatprep.subr.mxu0 0.0
  %2203 = vmatpush1.msra.mxu0 0.0
  %2204 = vmatprep.subr.mxu0 0.0
  %2205 = vmatpush1.msra.mxu0 0.0
  %2206 = vmatprep.subr.mxu0 0.0
  %2207 = vmatpush1.msra.mxu0 0.0
  %2208 = vmatprep.subr.mxu0 0.0
  %2209 = vmatpush1.msra.mxu0 0.0
  %2210 = vmatprep.subr.mxu0 0.0
  %2211 = vmatpush1.msra.mxu0 0.0
  %2212 = vmatprep.subr.mxu0 0.0
  %2213 = vmatpush1.msra.mxu0 0.0
  %2214 = vmatprep.subr.mxu0 0.0
  %2215 = vmatpush1.msra.mxu0 0.0
  %2216 = vmatprep.subr.mxu0 0.0
  %2217 = vmatpush1.msra.mxu0 0.0
  %2218 = vmatprep.subr.mxu0 0.0
  %2219 = vmatpush1.msra.mxu0 0.0
  %2220 = vmatprep.subr.mxu0 0.0
  %2221 = vmatpush1.msra.mxu0 0.0
  %2222 = vmatprep.subr.mxu0 0.0
  %2223 = vmatpush1.msra.mxu0 0.0
  %2224 = vmatprep.subr.mxu0 0.0
  %2225 = vmatpush1.msra.mxu0 0.0
  %2226 = vmatprep.mubr.f32.mxu0 0.0
  %v2227 = vand.u32 %v373, 4294901760
  %v2228 = vsub.f32 %v373, %v2227
  %v2229 = vand.u32 %v2228, 4294901760
  %v2230 = vsub.f32 %v2228, %v2229
  %v2231 = vand.u32 %v2230, 4294901760
  %2232 = vmatmul.mubr.f32.gmra.mrb[0].mxu0 %v2231
  %v2233 = vpop.f32.mrb[0].mxu0
  %v2234 = vadd.f32 %v364, %v2233
  %v2235 = vpop.f32.mrb[0].mxu0
  %v2236 = vadd.f32 %v364, %v2235
  %2237 = vmatprep.mubr.f32.mxu0 0.0
  %v2238 = vand.u32 %v376, 4294901760
  %v2239 = vsub.f32 %v376, %v2238
  %v2240 = vand.u32 %v2239, 4294901760
  %v2241 = vsub.f32 %v2239, %v2240
  %v2242 = vand.u32 %v2241, 4294901760
  %2243 = vmatmul.mubr.f32.gmra.mrb[0].mxu0 %v2242
  %v2244 = vpop.f32.mrb[0].mxu0
  %v2245 = vadd.f32 %v369, %v2244
  %v2246 = vpop.f32.mrb[0].mxu0
  %v2247 = vadd.f32 %v369, %v2246
  %2248 = vdwg.mxu0
  %v2249 = vand.u32 %v300, 4294901760
  %v2250 = vsub.f32 %v300, %v2249
  %v2251 = vand.u32 %v2250, 4294901760
  %v2252 = vsub.f32 %v2250, %v2251
  %v2253 = vand.u32 %v2252, 4294901760
  %2254 = vmatprep.subr.mxu0 %v2253
  %v2255 = vand.u32 %v299, 4294901760
  %v2256 = vsub.f32 %v299, %v2255
  %v2257 = vand.u32 %v2256, 4294901760
  %v2258 = vsub.f32 %v2256, %v2257
  %v2259 = vand.u32 %v2258, 4294901760
  %2260 = vmatpush1.msra.mxu0 %v2259
  %v2261 = vand.u32 %v316, 4294901760
  %v2262 = vsub.f32 %v316, %v2261
  %v2263 = vand.u32 %v2262, 4294901760
  %v2264 = vsub.f32 %v2262, %v2263
  %v2265 = vand.u32 %v2264, 4294901760
  %2266 = vmatprep.subr.mxu0 %v2265
  %v2267 = vand.u32 %v315, 4294901760
  %v2268 = vsub.f32 %v315, %v2267
  %v2269 = vand.u32 %v2268, 4294901760
  %v2270 = vsub.f32 %v2268, %v2269
  %v2271 = vand.u32 %v2270, 4294901760
  %2272 = vmatpush1.msra.mxu0 %v2271
  %v2273 = vand.u32 %v332, 4294901760
  %v2274 = vsub.f32 %v332, %v2273
  %v2275 = vand.u32 %v2274, 4294901760
  %v2276 = vsub.f32 %v2274, %v2275
  %v2277 = vand.u32 %v2276, 4294901760
  %2278 = vmatprep.subr.mxu0 %v2277
  %v2279 = vand.u32 %v331, 4294901760
  %v2280 = vsub.f32 %v331, %v2279
  %v2281 = vand.u32 %v2280, 4294901760
  %v2282 = vsub.f32 %v2280, %v2281
  %v2283 = vand.u32 %v2282, 4294901760
  %2284 = vmatpush1.msra.mxu0 %v2283
  %v2285 = vand.u32 %v348, 4294901760
  %v2286 = vsub.f32 %v348, %v2285
  %v2287 = vand.u32 %v2286, 4294901760
  %v2288 = vsub.f32 %v2286, %v2287
  %v2289 = vand.u32 %v2288, 4294901760
  %2290 = vmatprep.subr.mxu0 %v2289
  %v2291 = vand.u32 %v347, 4294901760
  %v2292 = vsub.f32 %v347, %v2291
  %v2293 = vand.u32 %v2292, 4294901760
  %v2294 = vsub.f32 %v2292, %v2293
  %v2295 = vand.u32 %v2294, 4294901760
  %2296 = vmatpush1.msra.mxu0 %v2295
  %2297 = vmatprep.subr.mxu0 0.0
  %2298 = vmatpush1.msra.mxu0 0.0
  %2299 = vmatprep.subr.mxu0 0.0
  %2300 = vmatpush1.msra.mxu0 0.0
  %2301 = vmatprep.subr.mxu0 0.0
  %2302 = vmatpush1.msra.mxu0 0.0
  %2303 = vmatprep.subr.mxu0 0.0
  %2304 = vmatpush1.msra.mxu0 0.0
  %2305 = vmatprep.subr.mxu0 0.0
  %2306 = vmatpush1.msra.mxu0 0.0
  %2307 = vmatprep.subr.mxu0 0.0
  %2308 = vmatpush1.msra.mxu0 0.0
  %2309 = vmatprep.subr.mxu0 0.0
  %2310 = vmatpush1.msra.mxu0 0.0
  %2311 = vmatprep.subr.mxu0 0.0
  %2312 = vmatpush1.msra.mxu0 0.0
  %2313 = vmatprep.subr.mxu0 0.0
  %2314 = vmatpush1.msra.mxu0 0.0
  %2315 = vmatprep.subr.mxu0 0.0
  %2316 = vmatpush1.msra.mxu0 0.0
  %2317 = vmatprep.subr.mxu0 0.0
  %2318 = vmatpush1.msra.mxu0 0.0
  %2319 = vmatprep.subr.mxu0 0.0
  %2320 = vmatpush1.msra.mxu0 0.0
  %2321 = vmatprep.subr.mxu0 0.0
  %2322 = vmatpush1.msra.mxu0 0.0
  %2323 = vmatprep.subr.mxu0 0.0
  %2324 = vmatpush1.msra.mxu0 0.0
  %2325 = vmatprep.subr.mxu0 0.0
  %2326 = vmatpush1.msra.mxu0 0.0
  %2327 = vmatprep.subr.mxu0 0.0
  %2328 = vmatpush1.msra.mxu0 0.0
  %2329 = vmatprep.subr.mxu0 0.0
  %2330 = vmatpush1.msra.mxu0 0.0
  %2331 = vmatprep.subr.mxu0 0.0
  %2332 = vmatpush1.msra.mxu0 0.0
  %2333 = vmatprep.subr.mxu0 0.0
  %2334 = vmatpush1.msra.mxu0 0.0
  %2335 = vmatprep.subr.mxu0 0.0
  %2336 = vmatpush1.msra.mxu0 0.0
  %2337 = vmatprep.subr.mxu0 0.0
  %2338 = vmatpush1.msra.mxu0 0.0
  %2339 = vmatprep.subr.mxu0 0.0
  %2340 = vmatpush1.msra.mxu0 0.0
  %2341 = vmatprep.subr.mxu0 0.0
  %2342 = vmatpush1.msra.mxu0 0.0
  %2343 = vmatprep.subr.mxu0 0.0
  %2344 = vmatpush1.msra.mxu0 0.0
  %2345 = vmatprep.subr.mxu0 0.0
  %2346 = vmatpush1.msra.mxu0 0.0
  %2347 = vmatprep.subr.mxu0 0.0
  %2348 = vmatpush1.msra.mxu0 0.0
  %2349 = vmatprep.subr.mxu0 0.0
  %2350 = vmatpush1.msra.mxu0 0.0
  %2351 = vmatprep.subr.mxu0 0.0
  %2352 = vmatpush1.msra.mxu0 0.0
  %2353 = vmatprep.mubr.f32.mxu0 0.0
  %v2354 = vand.u32 %v373, 4294901760
  %2355 = vmatmul.mubr.f32.gmra.mrb[0].mxu0 %v2354
  %v2356 = vpop.f32.mrb[0].mxu0
  %v2357 = vadd.f32 %v2234, %v2356
  %v2358 = vpop.f32.mrb[0].mxu0
  %v2359 = vadd.f32 %v2236, %v2358
  %2360 = vmatprep.mubr.f32.mxu0 0.0
  %v2361 = vand.u32 %v376, 4294901760
  %2362 = vmatmul.mubr.f32.gmra.mrb[0].mxu0 %v2361
  %v2363 = vpop.f32.mrb[0].mxu0
  %v2364 = vadd.f32 %v2245, %v2363
  %v2365 = vpop.f32.mrb[0].mxu0
  %v2366 = vadd.f32 %v2247, %v2365
  %2367 = vdwg.mxu0
  %v2368 = vand.u32 %v300, 4294901760
  %v2369 = vsub.f32 %v300, %v2368
  %2370 = vmatprep.subr.mxu0 %v2369
  %v2371 = vand.u32 %v299, 4294901760
  %v2372 = vsub.f32 %v299, %v2371
  %2373 = vmatpush1.msra.mxu0 %v2372
  %v2374 = vand.u32 %v316, 4294901760
  %v2375 = vsub.f32 %v316, %v2374
  %2376 = vmatprep.subr.mxu0 %v2375
  %v2377 = vand.u32 %v315, 4294901760
  %v2378 = vsub.f32 %v315, %v2377
  %2379 = vmatpush1.msra.mxu0 %v2378
  %v2380 = vand.u32 %v332, 4294901760
  %v2381 = vsub.f32 %v332, %v2380
  %2382 = vmatprep.subr.mxu0 %v2381
  %v2383 = vand.u32 %v331, 4294901760
  %v2384 = vsub.f32 %v331, %v2383
  %2385 = vmatpush1.msra.mxu0 %v2384
  %v2386 = vand.u32 %v348, 4294901760
  %v2387 = vsub.f32 %v348, %v2386
  %2388 = vmatprep.subr.mxu0 %v2387
  %v2389 = vand.u32 %v347, 4294901760
  %v2390 = vsub.f32 %v347, %v2389
  %2391 = vmatpush1.msra.mxu0 %v2390
  %2392 = vmatprep.subr.mxu0 0.0
  %2393 = vmatpush1.msra.mxu0 0.0
  %2394 = vmatprep.subr.mxu0 0.0
  %2395 = vmatpush1.msra.mxu0 0.0
  %2396 = vmatprep.subr.mxu0 0.0
  %2397 = vmatpush1.msra.mxu0 0.0
  %2398 = vmatprep.subr.mxu0 0.0
  %2399 = vmatpush1.msra.mxu0 0.0
  %2400 = vmatprep.subr.mxu0 0.0
  %2401 = vmatpush1.msra.mxu0 0.0
  %2402 = vmatprep.subr.mxu0 0.0
  %2403 = vmatpush1.msra.mxu0 0.0
  %2404 = vmatprep.subr.mxu0 0.0
  %2405 = vmatpush1.msra.mxu0 0.0
  %2406 = vmatprep.subr.mxu0 0.0
  %2407 = vmatpush1.msra.mxu0 0.0
  %2408 = vmatprep.subr.mxu0 0.0
  %2409 = vmatpush1.msra.mxu0 0.0
  %2410 = vmatprep.subr.mxu0 0.0
  %2411 = vmatpush1.msra.mxu0 0.0
  %2412 = vmatprep.subr.mxu0 0.0
  %2413 = vmatpush1.msra.mxu0 0.0
  %2414 = vmatprep.subr.mxu0 0.0
  %2415 = vmatpush1.msra.mxu0 0.0
  %2416 = vmatprep.subr.mxu0 0.0
  %2417 = vmatpush1.msra.mxu0 0.0
  %2418 = vmatprep.subr.mxu0 0.0
  %2419 = vmatpush1.msra.mxu0 0.0
  %2420 = vmatprep.subr.mxu0 0.0
  %2421 = vmatpush1.msra.mxu0 0.0
  %2422 = vmatprep.subr.mxu0 0.0
  %2423 = vmatpush1.msra.mxu0 0.0
  %2424 = vmatprep.subr.mxu0 0.0
  %2425 = vmatpush1.msra.mxu0 0.0
  %2426 = vmatprep.subr.mxu0 0.0
  %2427 = vmatpush1.msra.mxu0 0.0
  %2428 = vmatprep.subr.mxu0 0.0
  %2429 = vmatpush1.msra.mxu0 0.0
  %2430 = vmatprep.subr.mxu0 0.0
  %2431 = vmatpush1.msra.mxu0 0.0
  %2432 = vmatprep.subr.mxu0 0.0
  %2433 = vmatpush1.msra.mxu0 0.0
  %2434 = vmatprep.subr.mxu0 0.0
  %2435 = vmatpush1.msra.mxu0 0.0
  %2436 = vmatprep.subr.mxu0 0.0
  %2437 = vmatpush1.msra.mxu0 0.0
  %2438 = vmatprep.subr.mxu0 0.0
  %2439 = vmatpush1.msra.mxu0 0.0
  %2440 = vmatprep.subr.mxu0 0.0
  %2441 = vmatpush1.msra.mxu0 0.0
  %2442 = vmatprep.subr.mxu0 0.0
  %2443 = vmatpush1.msra.mxu0 0.0
  %2444 = vmatprep.subr.mxu0 0.0
  %2445 = vmatpush1.msra.mxu0 0.0
  %2446 = vmatprep.subr.mxu0 0.0
  %2447 = vmatpush1.msra.mxu0 0.0
  %2448 = vmatprep.mubr.f32.mxu0 0.0
  %v2449 = vand.u32 %v373, 4294901760
  %v2450 = vsub.f32 %v373, %v2449
  %2451 = vmatmul.mubr.f32.gmra.mrb[0].mxu0 %v2450
  %v2452 = vpop.f32.mrb[0].mxu0
  %v2453 = vadd.f32 %v2357, %v2452
  %v2454 = vpop.f32.mrb[0].mxu0
  %v2455 = vadd.f32 %v2359, %v2454
  %2456 = vmatprep.mubr.f32.mxu0 0.0
  %v2457 = vand.u32 %v376, 4294901760
  %v2458 = vsub.f32 %v376, %v2457
  %2459 = vmatmul.mubr.f32.gmra.mrb[0].mxu0 %v2458
  %v2460 = vpop.f32.mrb[0].mxu0
  %v2461 = vadd.f32 %v2364, %v2460
  %v2462 = vpop.f32.mrb[0].mxu0
  %v2463 = vadd.f32 %v2366, %v2462
  %2464 = vdwg.mxu0
  %v2465 = vand.u32 %v300, 4294901760
  %2466 = vmatprep.subr.mxu0 %v2465
  %v2467 = vand.u32 %v299, 4294901760
  %2468 = vmatpush1.msra.mxu0 %v2467
  %v2469 = vand.u32 %v316, 4294901760
  %2470 = vmatprep.subr.mxu0 %v2469
  %v2471 = vand.u32 %v315, 4294901760
  %2472 = vmatpush1.msra.mxu0 %v2471
  %v2473 = vand.u32 %v332, 4294901760
  %2474 = vmatprep.subr.mxu0 %v2473
  %v2475 = vand.u32 %v331, 4294901760
  %2476 = vmatpush1.msra.mxu0 %v2475
  %v2477 = vand.u32 %v348, 4294901760
  %2478 = vmatprep.subr.mxu0 %v2477
  %v2479 = vand.u32 %v347, 4294901760
  %2480 = vmatpush1.msra.mxu0 %v2479
  %2481 = vmatprep.subr.mxu0 0.0
  %2482 = vmatpush1.msra.mxu0 0.0
  %2483 = vmatprep.subr.mxu0 0.0
  %2484 = vmatpush1.msra.mxu0 0.0
  %2485 = vmatprep.subr.mxu0 0.0
  %2486 = vmatpush1.msra.mxu0 0.0
  %2487 = vmatprep.subr.mxu0 0.0
  %2488 = vmatpush1.msra.mxu0 0.0
  %2489 = vmatprep.subr.mxu0 0.0
  %2490 = vmatpush1.msra.mxu0 0.0
  %2491 = vmatprep.subr.mxu0 0.0
  %2492 = vmatpush1.msra.mxu0 0.0
  %2493 = vmatprep.subr.mxu0 0.0
  %2494 = vmatpush1.msra.mxu0 0.0
  %2495 = vmatprep.subr.mxu0 0.0
  %2496 = vmatpush1.msra.mxu0 0.0
  %2497 = vmatprep.subr.mxu0 0.0
  %2498 = vmatpush1.msra.mxu0 0.0
  %2499 = vmatprep.subr.mxu0 0.0
  %2500 = vmatpush1.msra.mxu0 0.0
  %2501 = vmatprep.subr.mxu0 0.0
  %2502 = vmatpush1.msra.mxu0 0.0
  %2503 = vmatprep.subr.mxu0 0.0
  %2504 = vmatpush1.msra.mxu0 0.0
  %2505 = vmatprep.subr.mxu0 0.0
  %2506 = vmatpush1.msra.mxu0 0.0
  %2507 = vmatprep.subr.mxu0 0.0
  %2508 = vmatpush1.msra.mxu0 0.0
  %2509 = vmatprep.subr.mxu0 0.0
  %2510 = vmatpush1.msra.mxu0 0.0
  %2511 = vmatprep.subr.mxu0 0.0
  %2512 = vmatpush1.msra.mxu0 0.0
  %2513 = vmatprep.subr.mxu0 0.0
  %2514 = vmatpush1.msra.mxu0 0.0
  %2515 = vmatprep.subr.mxu0 0.0
  %2516 = vmatpush1.msra.mxu0 0.0
  %2517 = vmatprep.subr.mxu0 0.0
  %2518 = vmatpush1.msra.mxu0 0.0
  %2519 = vmatprep.subr.mxu0 0.0
  %2520 = vmatpush1.msra.mxu0 0.0
  %2521 = vmatprep.subr.mxu0 0.0
  %2522 = vmatpush1.msra.mxu0 0.0
  %2523 = vmatprep.subr.mxu0 0.0
  %2524 = vmatpush1.msra.mxu0 0.0
  %2525 = vmatprep.subr.mxu0 0.0
  %2526 = vmatpush1.msra.mxu0 0.0
  %2527 = vmatprep.subr.mxu0 0.0
  %2528 = vmatpush1.msra.mxu0 0.0
  %2529 = vmatprep.subr.mxu0 0.0
  %2530 = vmatpush1.msra.mxu0 0.0
  %2531 = vmatprep.subr.mxu0 0.0
  %2532 = vmatpush1.msra.mxu0 0.0
  %2533 = vmatprep.subr.mxu0 0.0
  %2534 = vmatpush1.msra.mxu0 0.0
  %2535 = vmatprep.subr.mxu0 0.0
  %2536 = vmatpush1.msra.mxu0 0.0
  %2537 = vmatprep.mubr.f32.mxu0 0.0
  %v2538 = vand.u32 %v373, 4294901760
  %v2539 = vsub.f32 %v373, %v2538
  %v2540 = vand.u32 %v2539, 4294901760
  %2541 = vmatmul.mubr.f32.gmra.mrb[0].mxu0 %v2540
  %v2542 = vpop.f32.mrb[0].mxu0
  %v2543 = vadd.f32 %v2453, %v2542
  %v2544 = vpop.f32.mrb[0].mxu0
  %v2545 = vadd.f32 %v2455, %v2544
  %2546 = vmatprep.mubr.f32.mxu0 0.0
  %v2547 = vand.u32 %v376, 4294901760
  %v2548 = vsub.f32 %v376, %v2547
  %v2549 = vand.u32 %v2548, 4294901760
  %2550 = vmatmul.mubr.f32.gmra.mrb[0].mxu0 %v2549
  %v2551 = vpop.f32.mrb[0].mxu0
  %v2552 = vadd.f32 %v2461, %v2551
  %v2553 = vpop.f32.mrb[0].mxu0
  %v2554 = vadd.f32 %v2463, %v2553
  %2555 = vdwg.mxu0
  %v2556 = vand.u32 %v300, 4294901760
  %v2557 = vsub.f32 %v300, %v2556
  %v2558 = vand.u32 %v2557, 4294901760
  %2559 = vmatprep.subr.mxu0 %v2558
  %v2560 = vand.u32 %v299, 4294901760
  %v2561 = vsub.f32 %v299, %v2560
  %v2562 = vand.u32 %v2561, 4294901760
  %2563 = vmatpush1.msra.mxu0 %v2562
  %v2564 = vand.u32 %v316, 4294901760
  %v2565 = vsub.f32 %v316, %v2564
  %v2566 = vand.u32 %v2565, 4294901760
  %2567 = vmatprep.subr.mxu0 %v2566
  %v2568 = vand.u32 %v315, 4294901760
  %v2569 = vsub.f32 %v315, %v2568
  %v2570 = vand.u32 %v2569, 4294901760
  %2571 = vmatpush1.msra.mxu0 %v2570
  %v2572 = vand.u32 %v332, 4294901760
  %v2573 = vsub.f32 %v332, %v2572
  %v2574 = vand.u32 %v2573, 4294901760
  %2575 = vmatprep.subr.mxu0 %v2574
  %v2576 = vand.u32 %v331, 4294901760
  %v2577 = vsub.f32 %v331, %v2576
  %v2578 = vand.u32 %v2577, 4294901760
  %2579 = vmatpush1.msra.mxu0 %v2578
  %v2580 = vand.u32 %v348, 4294901760
  %v2581 = vsub.f32 %v348, %v2580
  %v2582 = vand.u32 %v2581, 4294901760
  %2583 = vmatprep.subr.mxu0 %v2582
  %v2584 = vand.u32 %v347, 4294901760
  %v2585 = vsub.f32 %v347, %v2584
  %v2586 = vand.u32 %v2585, 4294901760
  %2587 = vmatpush1.msra.mxu0 %v2586
  %2588 = vmatprep.subr.mxu0 0.0
  %2589 = vmatpush1.msra.mxu0 0.0
  %2590 = vmatprep.subr.mxu0 0.0
  %2591 = vmatpush1.msra.mxu0 0.0
  %2592 = vmatprep.subr.mxu0 0.0
  %2593 = vmatpush1.msra.mxu0 0.0
  %2594 = vmatprep.subr.mxu0 0.0
  %2595 = vmatpush1.msra.mxu0 0.0
  %2596 = vmatprep.subr.mxu0 0.0
  %2597 = vmatpush1.msra.mxu0 0.0
  %2598 = vmatprep.subr.mxu0 0.0
  %2599 = vmatpush1.msra.mxu0 0.0
  %2600 = vmatprep.subr.mxu0 0.0
  %2601 = vmatpush1.msra.mxu0 0.0
  %2602 = vmatprep.subr.mxu0 0.0
  %2603 = vmatpush1.msra.mxu0 0.0
  %2604 = vmatprep.subr.mxu0 0.0
  %2605 = vmatpush1.msra.mxu0 0.0
  %2606 = vmatprep.subr.mxu0 0.0
  %2607 = vmatpush1.msra.mxu0 0.0
  %2608 = vmatprep.subr.mxu0 0.0
  %2609 = vmatpush1.msra.mxu0 0.0
  %2610 = vmatprep.subr.mxu0 0.0
  %2611 = vmatpush1.msra.mxu0 0.0
  %2612 = vmatprep.subr.mxu0 0.0
  %2613 = vmatpush1.msra.mxu0 0.0
  %2614 = vmatprep.subr.mxu0 0.0
  %2615 = vmatpush1.msra.mxu0 0.0
  %2616 = vmatprep.subr.mxu0 0.0
  %2617 = vmatpush1.msra.mxu0 0.0
  %2618 = vmatprep.subr.mxu0 0.0
  %2619 = vmatpush1.msra.mxu0 0.0
  %2620 = vmatprep.subr.mxu0 0.0
  %2621 = vmatpush1.msra.mxu0 0.0
  %2622 = vmatprep.subr.mxu0 0.0
  %2623 = vmatpush1.msra.mxu0 0.0
  %2624 = vmatprep.subr.mxu0 0.0
  %2625 = vmatpush1.msra.mxu0 0.0
  %2626 = vmatprep.subr.mxu0 0.0
  %2627 = vmatpush1.msra.mxu0 0.0
  %2628 = vmatprep.subr.mxu0 0.0
  %2629 = vmatpush1.msra.mxu0 0.0
  %2630 = vmatprep.subr.mxu0 0.0
  %2631 = vmatpush1.msra.mxu0 0.0
  %2632 = vmatprep.subr.mxu0 0.0
  %2633 = vmatpush1.msra.mxu0 0.0
  %2634 = vmatprep.subr.mxu0 0.0
  %2635 = vmatpush1.msra.mxu0 0.0
  %2636 = vmatprep.subr.mxu0 0.0
  %2637 = vmatpush1.msra.mxu0 0.0
  %2638 = vmatprep.subr.mxu0 0.0
  %2639 = vmatpush1.msra.mxu0 0.0
  %2640 = vmatprep.subr.mxu0 0.0
  %2641 = vmatpush1.msra.mxu0 0.0
  %2642 = vmatprep.subr.mxu0 0.0
  %2643 = vmatpush1.msra.mxu0 0.0
  %2644 = vmatprep.mubr.f32.mxu0 0.0
  %v2645 = vand.u32 %v373, 4294901760
  %2646 = vmatmul.mubr.f32.gmra.mrb[0].mxu0 %v2645
  %v2647 = vpop.f32.mrb[0].mxu0
  %v2648 = vadd.f32 %v2543, %v2647
  %v2649 = vpop.f32.mrb[0].mxu0
  %v2650 = vadd.f32 %v2545, %v2649
  %2651 = vmatprep.mubr.f32.mxu0 0.0
  %v2652 = vand.u32 %v376, 4294901760
  %2653 = vmatmul.mubr.f32.gmra.mrb[0].mxu0 %v2652
  %v2654 = vpop.f32.mrb[0].mxu0
  %v2655 = vadd.f32 %v2552, %v2654
  %v2656 = vpop.f32.mrb[0].mxu0
  %v2657 = vadd.f32 %v2554, %v2656
  %2658 = vdwg.mxu0
  %v2659 = vand.u32 %v300, 4294901760
  %2660 = vmatprep.subr.mxu0 %v2659
  %v2661 = vand.u32 %v299, 4294901760
  %2662 = vmatpush1.msra.mxu0 %v2661
  %v2663 = vand.u32 %v316, 4294901760
  %2664 = vmatprep.subr.mxu0 %v2663
  %v2665 = vand.u32 %v315, 4294901760
  %2666 = vmatpush1.msra.mxu0 %v2665
  %v2667 = vand.u32 %v332, 4294901760
  %2668 = vmatprep.subr.mxu0 %v2667
  %v2669 = vand.u32 %v331, 4294901760
  %2670 = vmatpush1.msra.mxu0 %v2669
  %v2671 = vand.u32 %v348, 4294901760
  %2672 = vmatprep.subr.mxu0 %v2671
  %v2673 = vand.u32 %v347, 4294901760
  %2674 = vmatpush1.msra.mxu0 %v2673
  %2675 = vmatprep.subr.mxu0 0.0
  %2676 = vmatpush1.msra.mxu0 0.0
  %2677 = vmatprep.subr.mxu0 0.0
  %2678 = vmatpush1.msra.mxu0 0.0
  %2679 = vmatprep.subr.mxu0 0.0
  %2680 = vmatpush1.msra.mxu0 0.0
  %2681 = vmatprep.subr.mxu0 0.0
  %2682 = vmatpush1.msra.mxu0 0.0
  %2683 = vmatprep.subr.mxu0 0.0
  %2684 = vmatpush1.msra.mxu0 0.0
  %2685 = vmatprep.subr.mxu0 0.0
  %2686 = vmatpush1.msra.mxu0 0.0
  %2687 = vmatprep.subr.mxu0 0.0
  %2688 = vmatpush1.msra.mxu0 0.0
  %2689 = vmatprep.subr.mxu0 0.0
  %2690 = vmatpush1.msra.mxu0 0.0
  %2691 = vmatprep.subr.mxu0 0.0
  %2692 = vmatpush1.msra.mxu0 0.0
  %2693 = vmatprep.subr.mxu0 0.0
  %2694 = vmatpush1.msra.mxu0 0.0
  %2695 = vmatprep.subr.mxu0 0.0
  %2696 = vmatpush1.msra.mxu0 0.0
  %2697 = vmatprep.subr.mxu0 0.0
  %2698 = vmatpush1.msra.mxu0 0.0
  %2699 = vmatprep.subr.mxu0 0.0
  %2700 = vmatpush1.msra.mxu0 0.0
  %2701 = vmatprep.subr.mxu0 0.0
  %2702 = vmatpush1.msra.mxu0 0.0
  %2703 = vmatprep.subr.mxu0 0.0
  %2704 = vmatpush1.msra.mxu0 0.0
  %2705 = vmatprep.subr.mxu0 0.0
  %2706 = vmatpush1.msra.mxu0 0.0
  %2707 = vmatprep.subr.mxu0 0.0
  %2708 = vmatpush1.msra.mxu0 0.0
  %2709 = vmatprep.subr.mxu0 0.0
  %2710 = vmatpush1.msra.mxu0 0.0
  %2711 = vmatprep.subr.mxu0 0.0
  %2712 = vmatpush1.msra.mxu0 0.0
  %2713 = vmatprep.subr.mxu0 0.0
  %2714 = vmatpush1.msra.mxu0 0.0
  %2715 = vmatprep.subr.mxu0 0.0
  %2716 = vmatpush1.msra.mxu0 0.0
  %2717 = vmatprep.subr.mxu0 0.0
  %2718 = vmatpush1.msra.mxu0 0.0
  %2719 = vmatprep.subr.mxu0 0.0
  %2720 = vmatpush1.msra.mxu0 0.0
  %2721 = vmatprep.subr.mxu0 0.0
  %2722 = vmatpush1.msra.mxu0 0.0
  %2723 = vmatprep.subr.mxu0 0.0
  %2724 = vmatpush1.msra.mxu0 0.0
  %2725 = vmatprep.subr.mxu0 0.0
  %2726 = vmatpush1.msra.mxu0 0.0
  %2727 = vmatprep.subr.mxu0 0.0
  %2728 = vmatpush1.msra.mxu0 0.0
  %2729 = vmatprep.subr.mxu0 0.0
  %2730 = vmatpush1.msra.mxu0 0.0
  %2731 = vmatprep.mubr.f32.mxu0 0.0
  %v2732 = vand.u32 %v373, 4294901760
  %2733 = vmatmul.mubr.f32.gmra.mrb[0].mxu0 %v2732
  %v2734 = vpop.f32.mrb[0].mxu0
  %v2735 = vadd.f32 %v2648, %v2734
  %v2736 = vpop.f32.mrb[0].mxu0
  %v2737 = vadd.f32 %v2650, %v2736
  %2738 = vmatprep.mubr.f32.mxu0 0.0
  %v2739 = vand.u32 %v376, 4294901760
  %2740 = vmatmul.mubr.f32.gmra.mrb[0].mxu0 %v2739
  %v2741 = vpop.f32.mrb[0].mxu0
  %v2742 = vadd.f32 %v2655, %v2741
  %v2743 = vpop.f32.mrb[0].mxu0
  %v2744 = vadd.f32 %v2657, %v2743
  %2745 = vdwg.mxu0
  %v2746 = vand.u32 %v302, 4294901760
  %2747 = vmatprep.subr.mxu0 %v2746
  %v2748 = vand.u32 %v301, 4294901760
  %2749 = vmatpush1.msra.mxu0 %v2748
  %v2750 = vand.u32 %v318, 4294901760
  %2751 = vmatprep.subr.mxu0 %v2750
  %v2752 = vand.u32 %v317, 4294901760
  %2753 = vmatpush1.msra.mxu0 %v2752
  %v2754 = vand.u32 %v334, 4294901760
  %2755 = vmatprep.subr.mxu0 %v2754
  %v2756 = vand.u32 %v333, 4294901760
  %2757 = vmatpush1.msra.mxu0 %v2756
  %v2758 = vand.u32 %v350, 4294901760
  %2759 = vmatprep.subr.mxu0 %v2758
  %v2760 = vand.u32 %v349, 4294901760
  %2761 = vmatpush1.msra.mxu0 %v2760
  %2762 = vmatprep.subr.mxu0 0.0
  %2763 = vmatpush1.msra.mxu0 0.0
  %2764 = vmatprep.subr.mxu0 0.0
  %2765 = vmatpush1.msra.mxu0 0.0
  %2766 = vmatprep.subr.mxu0 0.0
  %2767 = vmatpush1.msra.mxu0 0.0
  %2768 = vmatprep.subr.mxu0 0.0
  %2769 = vmatpush1.msra.mxu0 0.0
  %2770 = vmatprep.subr.mxu0 0.0
  %2771 = vmatpush1.msra.mxu0 0.0
  %2772 = vmatprep.subr.mxu0 0.0
  %2773 = vmatpush1.msra.mxu0 0.0
  %2774 = vmatprep.subr.mxu0 0.0
  %2775 = vmatpush1.msra.mxu0 0.0
  %2776 = vmatprep.subr.mxu0 0.0
  %2777 = vmatpush1.msra.mxu0 0.0
  %2778 = vmatprep.subr.mxu0 0.0
  %2779 = vmatpush1.msra.mxu0 0.0
  %2780 = vmatprep.subr.mxu0 0.0
  %2781 = vmatpush1.msra.mxu0 0.0
  %2782 = vmatprep.subr.mxu0 0.0
  %2783 = vmatpush1.msra.mxu0 0.0
  %2784 = vmatprep.subr.mxu0 0.0
  %2785 = vmatpush1.msra.mxu0 0.0
  %2786 = vmatprep.subr.mxu0 0.0
  %2787 = vmatpush1.msra.mxu0 0.0
  %2788 = vmatprep.subr.mxu0 0.0
  %2789 = vmatpush1.msra.mxu0 0.0
  %2790 = vmatprep.subr.mxu0 0.0
  %2791 = vmatpush1.msra.mxu0 0.0
  %2792 = vmatprep.subr.mxu0 0.0
  %2793 = vmatpush1.msra.mxu0 0.0
  %2794 = vmatprep.subr.mxu0 0.0
  %2795 = vmatpush1.msra.mxu0 0.0
  %2796 = vmatprep.subr.mxu0 0.0
  %2797 = vmatpush1.msra.mxu0 0.0
  %2798 = vmatprep.subr.mxu0 0.0
  %2799 = vmatpush1.msra.mxu0 0.0
  %2800 = vmatprep.subr.mxu0 0.0
  %2801 = vmatpush1.msra.mxu0 0.0
  %2802 = vmatprep.subr.mxu0 0.0
  %2803 = vmatpush1.msra.mxu0 0.0
  %2804 = vmatprep.subr.mxu0 0.0
  %2805 = vmatpush1.msra.mxu0 0.0
  %2806 = vmatprep.subr.mxu0 0.0
  %2807 = vmatpush1.msra.mxu0 0.0
  %2808 = vmatprep.subr.mxu0 0.0
  %2809 = vmatpush1.msra.mxu0 0.0
  %2810 = vmatprep.subr.mxu0 0.0
  %2811 = vmatpush1.msra.mxu0 0.0
  %2812 = vmatprep.subr.mxu0 0.0
  %2813 = vmatpush1.msra.mxu0 0.0
  %2814 = vmatprep.subr.mxu0 0.0
  %2815 = vmatpush1.msra.mxu0 0.0
  %2816 = vmatprep.subr.mxu0 0.0
  %2817 = vmatpush1.msra.mxu0 0.0
  %2818 = vmatprep.mubr.f32.mxu0 0.0
  %v2819 = vand.u32 %v373, 4294901760
  %v2820 = vsub.f32 %v373, %v2819
  %v2821 = vand.u32 %v2820, 4294901760
  %v2822 = vsub.f32 %v2820, %v2821
  %v2823 = vand.u32 %v2822, 4294901760
  %2824 = vmatmul.mubr.f32.gmra.mrb[0].mxu0 %v2823
  %v2825 = vpop.f32.mrb[0].mxu0
  %v2826 = vadd.f32 %v364, %v2825
  %v2827 = vpop.f32.mrb[0].mxu0
  %v2828 = vadd.f32 %v364, %v2827
  %2829 = vmatprep.mubr.f32.mxu0 0.0
  %v2830 = vand.u32 %v376, 4294901760
  %v2831 = vsub.f32 %v376, %v2830
  %v2832 = vand.u32 %v2831, 4294901760
  %v2833 = vsub.f32 %v2831, %v2832
  %v2834 = vand.u32 %v2833, 4294901760
  %2835 = vmatmul.mubr.f32.gmra.mrb[0].mxu0 %v2834
  %v2836 = vpop.f32.mrb[0].mxu0
  %v2837 = vadd.f32 %v369, %v2836
  %v2838 = vpop.f32.mrb[0].mxu0
  %v2839 = vadd.f32 %v369, %v2838
  %2840 = vdwg.mxu0
  %v2841 = vand.u32 %v302, 4294901760
  %v2842 = vsub.f32 %v302, %v2841
  %v2843 = vand.u32 %v2842, 4294901760
  %v2844 = vsub.f32 %v2842, %v2843
  %v2845 = vand.u32 %v2844, 4294901760
  %2846 = vmatprep.subr.mxu0 %v2845
  %v2847 = vand.u32 %v301, 4294901760
  %v2848 = vsub.f32 %v301, %v2847
  %v2849 = vand.u32 %v2848, 4294901760
  %v2850 = vsub.f32 %v2848, %v2849
  %v2851 = vand.u32 %v2850, 4294901760
  %2852 = vmatpush1.msra.mxu0 %v2851
  %v2853 = vand.u32 %v318, 4294901760
  %v2854 = vsub.f32 %v318, %v2853
  %v2855 = vand.u32 %v2854, 4294901760
  %v2856 = vsub.f32 %v2854, %v2855
  %v2857 = vand.u32 %v2856, 4294901760
  %2858 = vmatprep.subr.mxu0 %v2857
  %v2859 = vand.u32 %v317, 4294901760
  %v2860 = vsub.f32 %v317, %v2859
  %v2861 = vand.u32 %v2860, 4294901760
  %v2862 = vsub.f32 %v2860, %v2861
  %v2863 = vand.u32 %v2862, 4294901760
  %2864 = vmatpush1.msra.mxu0 %v2863
  %v2865 = vand.u32 %v334, 4294901760
  %v2866 = vsub.f32 %v334, %v2865
  %v2867 = vand.u32 %v2866, 4294901760
  %v2868 = vsub.f32 %v2866, %v2867
  %v2869 = vand.u32 %v2868, 4294901760
  %2870 = vmatprep.subr.mxu0 %v2869
  %v2871 = vand.u32 %v333, 4294901760
  %v2872 = vsub.f32 %v333, %v2871
  %v2873 = vand.u32 %v2872, 4294901760
  %v2874 = vsub.f32 %v2872, %v2873
  %v2875 = vand.u32 %v2874, 4294901760
  %2876 = vmatpush1.msra.mxu0 %v2875
  %v2877 = vand.u32 %v350, 4294901760
  %v2878 = vsub.f32 %v350, %v2877
  %v2879 = vand.u32 %v2878, 4294901760
  %v2880 = vsub.f32 %v2878, %v2879
  %v2881 = vand.u32 %v2880, 4294901760
  %2882 = vmatprep.subr.mxu0 %v2881
  %v2883 = vand.u32 %v349, 4294901760
  %v2884 = vsub.f32 %v349, %v2883
  %v2885 = vand.u32 %v2884, 4294901760
  %v2886 = vsub.f32 %v2884, %v2885
  %v2887 = vand.u32 %v2886, 4294901760
  %2888 = vmatpush1.msra.mxu0 %v2887
  %2889 = vmatprep.subr.mxu0 0.0
  %2890 = vmatpush1.msra.mxu0 0.0
  %2891 = vmatprep.subr.mxu0 0.0
  %2892 = vmatpush1.msra.mxu0 0.0
  %2893 = vmatprep.subr.mxu0 0.0
  %2894 = vmatpush1.msra.mxu0 0.0
  %2895 = vmatprep.subr.mxu0 0.0
  %2896 = vmatpush1.msra.mxu0 0.0
  %2897 = vmatprep.subr.mxu0 0.0
  %2898 = vmatpush1.msra.mxu0 0.0
  %2899 = vmatprep.subr.mxu0 0.0
  %2900 = vmatpush1.msra.mxu0 0.0
  %2901 = vmatprep.subr.mxu0 0.0
  %2902 = vmatpush1.msra.mxu0 0.0
  %2903 = vmatprep.subr.mxu0 0.0
  %2904 = vmatpush1.msra.mxu0 0.0
  %2905 = vmatprep.subr.mxu0 0.0
  %2906 = vmatpush1.msra.mxu0 0.0
  %2907 = vmatprep.subr.mxu0 0.0
  %2908 = vmatpush1.msra.mxu0 0.0
  %2909 = vmatprep.subr.mxu0 0.0
  %2910 = vmatpush1.msra.mxu0 0.0
  %2911 = vmatprep.subr.mxu0 0.0
  %2912 = vmatpush1.msra.mxu0 0.0
  %2913 = vmatprep.subr.mxu0 0.0
  %2914 = vmatpush1.msra.mxu0 0.0
  %2915 = vmatprep.subr.mxu0 0.0
  %2916 = vmatpush1.msra.mxu0 0.0
  %2917 = vmatprep.subr.mxu0 0.0
  %2918 = vmatpush1.msra.mxu0 0.0
  %2919 = vmatprep.subr.mxu0 0.0
  %2920 = vmatpush1.msra.mxu0 0.0
  %2921 = vmatprep.subr.mxu0 0.0
  %2922 = vmatpush1.msra.mxu0 0.0
  %2923 = vmatprep.subr.mxu0 0.0
  %2924 = vmatpush1.msra.mxu0 0.0
  %2925 = vmatprep.subr.mxu0 0.0
  %2926 = vmatpush1.msra.mxu0 0.0
  %2927 = vmatprep.subr.mxu0 0.0
  %2928 = vmatpush1.msra.mxu0 0.0
  %2929 = vmatprep.subr.mxu0 0.0
  %2930 = vmatpush1.msra.mxu0 0.0
  %2931 = vmatprep.subr.mxu0 0.0
  %2932 = vmatpush1.msra.mxu0 0.0
  %2933 = vmatprep.subr.mxu0 0.0
  %2934 = vmatpush1.msra.mxu0 0.0
  %2935 = vmatprep.subr.mxu0 0.0
  %2936 = vmatpush1.msra.mxu0 0.0
  %2937 = vmatprep.subr.mxu0 0.0
  %2938 = vmatpush1.msra.mxu0 0.0
  %2939 = vmatprep.subr.mxu0 0.0
  %2940 = vmatpush1.msra.mxu0 0.0
  %2941 = vmatprep.subr.mxu0 0.0
  %2942 = vmatpush1.msra.mxu0 0.0
  %2943 = vmatprep.subr.mxu0 0.0
  %2944 = vmatpush1.msra.mxu0 0.0
  %2945 = vmatprep.mubr.f32.mxu0 0.0
  %v2946 = vand.u32 %v373, 4294901760
  %2947 = vmatmul.mubr.f32.gmra.mrb[0].mxu0 %v2946
  %v2948 = vpop.f32.mrb[0].mxu0
  %v2949 = vadd.f32 %v2826, %v2948
  %v2950 = vpop.f32.mrb[0].mxu0
  %v2951 = vadd.f32 %v2828, %v2950
  %2952 = vmatprep.mubr.f32.mxu0 0.0
  %v2953 = vand.u32 %v376, 4294901760
  %2954 = vmatmul.mubr.f32.gmra.mrb[0].mxu0 %v2953
  %v2955 = vpop.f32.mrb[0].mxu0
  %v2956 = vadd.f32 %v2837, %v2955
  %v2957 = vpop.f32.mrb[0].mxu0
  %v2958 = vadd.f32 %v2839, %v2957
  %2959 = vdwg.mxu0
  %v2960 = vand.u32 %v302, 4294901760
  %v2961 = vsub.f32 %v302, %v2960
  %2962 = vmatprep.subr.mxu0 %v2961
  %v2963 = vand.u32 %v301, 4294901760
  %v2964 = vsub.f32 %v301, %v2963
  %2965 = vmatpush1.msra.mxu0 %v2964
  %v2966 = vand.u32 %v318, 4294901760
  %v2967 = vsub.f32 %v318, %v2966
  %2968 = vmatprep.subr.mxu0 %v2967
  %v2969 = vand.u32 %v317, 4294901760
  %v2970 = vsub.f32 %v317, %v2969
  %2971 = vmatpush1.msra.mxu0 %v2970
  %v2972 = vand.u32 %v334, 4294901760
  %v2973 = vsub.f32 %v334, %v2972
  %2974 = vmatprep.subr.mxu0 %v2973
  %v2975 = vand.u32 %v333, 4294901760
  %v2976 = vsub.f32 %v333, %v2975
  %2977 = vmatpush1.msra.mxu0 %v2976
  %v2978 = vand.u32 %v350, 4294901760
  %v2979 = vsub.f32 %v350, %v2978
  %2980 = vmatprep.subr.mxu0 %v2979
  %v2981 = vand.u32 %v349, 4294901760
  %v2982 = vsub.f32 %v349, %v2981
  %2983 = vmatpush1.msra.mxu0 %v2982
  %2984 = vmatprep.subr.mxu0 0.0
  %2985 = vmatpush1.msra.mxu0 0.0
  %2986 = vmatprep.subr.mxu0 0.0
  %2987 = vmatpush1.msra.mxu0 0.0
  %2988 = vmatprep.subr.mxu0 0.0
  %2989 = vmatpush1.msra.mxu0 0.0
  %2990 = vmatprep.subr.mxu0 0.0
  %2991 = vmatpush1.msra.mxu0 0.0
  %2992 = vmatprep.subr.mxu0 0.0
  %2993 = vmatpush1.msra.mxu0 0.0
  %2994 = vmatprep.subr.mxu0 0.0
  %2995 = vmatpush1.msra.mxu0 0.0
  %2996 = vmatprep.subr.mxu0 0.0
  %2997 = vmatpush1.msra.mxu0 0.0
  %2998 = vmatprep.subr.mxu0 0.0
  %2999 = vmatpush1.msra.mxu0 0.0
  %3000 = vmatprep.subr.mxu0 0.0
  %3001 = vmatpush1.msra.mxu0 0.0
  %3002 = vmatprep.subr.mxu0 0.0
  %3003 = vmatpush1.msra.mxu0 0.0
  %3004 = vmatprep.subr.mxu0 0.0
  %3005 = vmatpush1.msra.mxu0 0.0
  %3006 = vmatprep.subr.mxu0 0.0
  %3007 = vmatpush1.msra.mxu0 0.0
  %3008 = vmatprep.subr.mxu0 0.0
  %3009 = vmatpush1.msra.mxu0 0.0
  %3010 = vmatprep.subr.mxu0 0.0
  %3011 = vmatpush1.msra.mxu0 0.0
  %3012 = vmatprep.subr.mxu0 0.0
  %3013 = vmatpush1.msra.mxu0 0.0
  %3014 = vmatprep.subr.mxu0 0.0
  %3015 = vmatpush1.msra.mxu0 0.0
  %3016 = vmatprep.subr.mxu0 0.0
  %3017 = vmatpush1.msra.mxu0 0.0
  %3018 = vmatprep.subr.mxu0 0.0
  %3019 = vmatpush1.msra.mxu0 0.0
  %3020 = vmatprep.subr.mxu0 0.0
  %3021 = vmatpush1.msra.mxu0 0.0
  %3022 = vmatprep.subr.mxu0 0.0
  %3023 = vmatpush1.msra.mxu0 0.0
  %3024 = vmatprep.subr.mxu0 0.0
  %3025 = vmatpush1.msra.mxu0 0.0
  %3026 = vmatprep.subr.mxu0 0.0
  %3027 = vmatpush1.msra.mxu0 0.0
  %3028 = vmatprep.subr.mxu0 0.0
  %3029 = vmatpush1.msra.mxu0 0.0
  %3030 = vmatprep.subr.mxu0 0.0
  %3031 = vmatpush1.msra.mxu0 0.0
  %3032 = vmatprep.subr.mxu0 0.0
  %3033 = vmatpush1.msra.mxu0 0.0
  %3034 = vmatprep.subr.mxu0 0.0
  %3035 = vmatpush1.msra.mxu0 0.0
  %3036 = vmatprep.subr.mxu0 0.0
  %3037 = vmatpush1.msra.mxu0 0.0
  %3038 = vmatprep.subr.mxu0 0.0
  %3039 = vmatpush1.msra.mxu0 0.0
  %3040 = vmatprep.mubr.f32.mxu0 0.0
  %v3041 = vand.u32 %v373, 4294901760
  %v3042 = vsub.f32 %v373, %v3041
  %3043 = vmatmul.mubr.f32.gmra.mrb[0].mxu0 %v3042
  %v3044 = vpop.f32.mrb[0].mxu0
  %v3045 = vadd.f32 %v2949, %v3044
  %v3046 = vpop.f32.mrb[0].mxu0
  %v3047 = vadd.f32 %v2951, %v3046
  %3048 = vmatprep.mubr.f32.mxu0 0.0
  %v3049 = vand.u32 %v376, 4294901760
  %v3050 = vsub.f32 %v376, %v3049
  %3051 = vmatmul.mubr.f32.gmra.mrb[0].mxu0 %v3050
  %v3052 = vpop.f32.mrb[0].mxu0
  %v3053 = vadd.f32 %v2956, %v3052
  %v3054 = vpop.f32.mrb[0].mxu0
  %v3055 = vadd.f32 %v2958, %v3054
  %3056 = vdwg.mxu0
  %v3057 = vand.u32 %v302, 4294901760
  %3058 = vmatprep.subr.mxu0 %v3057
  %v3059 = vand.u32 %v301, 4294901760
  %3060 = vmatpush1.msra.mxu0 %v3059
  %v3061 = vand.u32 %v318, 4294901760
  %3062 = vmatprep.subr.mxu0 %v3061
  %v3063 = vand.u32 %v317, 4294901760
  %3064 = vmatpush1.msra.mxu0 %v3063
  %v3065 = vand.u32 %v334, 4294901760
  %3066 = vmatprep.subr.mxu0 %v3065
  %v3067 = vand.u32 %v333, 4294901760
  %3068 = vmatpush1.msra.mxu0 %v3067
  %v3069 = vand.u32 %v350, 4294901760
  %3070 = vmatprep.subr.mxu0 %v3069
  %v3071 = vand.u32 %v349, 4294901760
  %3072 = vmatpush1.msra.mxu0 %v3071
  %3073 = vmatprep.subr.mxu0 0.0
  %3074 = vmatpush1.msra.mxu0 0.0
  %3075 = vmatprep.subr.mxu0 0.0
  %3076 = vmatpush1.msra.mxu0 0.0
  %3077 = vmatprep.subr.mxu0 0.0
  %3078 = vmatpush1.msra.mxu0 0.0
  %3079 = vmatprep.subr.mxu0 0.0
  %3080 = vmatpush1.msra.mxu0 0.0
  %3081 = vmatprep.subr.mxu0 0.0
  %3082 = vmatpush1.msra.mxu0 0.0
  %3083 = vmatprep.subr.mxu0 0.0
  %3084 = vmatpush1.msra.mxu0 0.0
  %3085 = vmatprep.subr.mxu0 0.0
  %3086 = vmatpush1.msra.mxu0 0.0
  %3087 = vmatprep.subr.mxu0 0.0
  %3088 = vmatpush1.msra.mxu0 0.0
  %3089 = vmatprep.subr.mxu0 0.0
  %3090 = vmatpush1.msra.mxu0 0.0
  %3091 = vmatprep.subr.mxu0 0.0
  %3092 = vmatpush1.msra.mxu0 0.0
  %3093 = vmatprep.subr.mxu0 0.0
  %3094 = vmatpush1.msra.mxu0 0.0
  %3095 = vmatprep.subr.mxu0 0.0
  %3096 = vmatpush1.msra.mxu0 0.0
  %3097 = vmatprep.subr.mxu0 0.0
  %3098 = vmatpush1.msra.mxu0 0.0
  %3099 = vmatprep.subr.mxu0 0.0
  %3100 = vmatpush1.msra.mxu0 0.0
  %3101 = vmatprep.subr.mxu0 0.0
  %3102 = vmatpush1.msra.mxu0 0.0
  %3103 = vmatprep.subr.mxu0 0.0
  %3104 = vmatpush1.msra.mxu0 0.0
  %3105 = vmatprep.subr.mxu0 0.0
  %3106 = vmatpush1.msra.mxu0 0.0
  %3107 = vmatprep.subr.mxu0 0.0
  %3108 = vmatpush1.msra.mxu0 0.0
  %3109 = vmatprep.subr.mxu0 0.0
  %3110 = vmatpush1.msra.mxu0 0.0
  %3111 = vmatprep.subr.mxu0 0.0
  %3112 = vmatpush1.msra.mxu0 0.0
  %3113 = vmatprep.subr.mxu0 0.0
  %3114 = vmatpush1.msra.mxu0 0.0
  %3115 = vmatprep.subr.mxu0 0.0
  %3116 = vmatpush1.msra.mxu0 0.0
  %3117 = vmatprep.subr.mxu0 0.0
  %3118 = vmatpush1.msra.mxu0 0.0
  %3119 = vmatprep.subr.mxu0 0.0
  %3120 = vmatpush1.msra.mxu0 0.0
  %3121 = vmatprep.subr.mxu0 0.0
  %3122 = vmatpush1.msra.mxu0 0.0
  %3123 = vmatprep.subr.mxu0 0.0
  %3124 = vmatpush1.msra.mxu0 0.0
  %3125 = vmatprep.subr.mxu0 0.0
  %3126 = vmatpush1.msra.mxu0 0.0
  %3127 = vmatprep.subr.mxu0 0.0
  %3128 = vmatpush1.msra.mxu0 0.0
  %3129 = vmatprep.mubr.f32.mxu0 0.0
  %v3130 = vand.u32 %v373, 4294901760
  %v3131 = vsub.f32 %v373, %v3130
  %v3132 = vand.u32 %v3131, 4294901760
  %3133 = vmatmul.mubr.f32.gmra.mrb[0].mxu0 %v3132
  %v3134 = vpop.f32.mrb[0].mxu0
  %v3135 = vadd.f32 %v3045, %v3134
  %v3136 = vpop.f32.mrb[0].mxu0
  %v3137 = vadd.f32 %v3047, %v3136
  %3138 = vmatprep.mubr.f32.mxu0 0.0
  %v3139 = vand.u32 %v376, 4294901760
  %v3140 = vsub.f32 %v376, %v3139
  %v3141 = vand.u32 %v3140, 4294901760
  %3142 = vmatmul.mubr.f32.gmra.mrb[0].mxu0 %v3141
  %v3143 = vpop.f32.mrb[0].mxu0
  %v3144 = vadd.f32 %v3053, %v3143
  %v3145 = vpop.f32.mrb[0].mxu0
  %v3146 = vadd.f32 %v3055, %v3145
  %3147 = vdwg.mxu0
  %v3148 = vand.u32 %v302, 4294901760
  %v3149 = vsub.f32 %v302, %v3148
  %v3150 = vand.u32 %v3149, 4294901760
  %3151 = vmatprep.subr.mxu0 %v3150
  %v3152 = vand.u32 %v301, 4294901760
  %v3153 = vsub.f32 %v301, %v3152
  %v3154 = vand.u32 %v3153, 4294901760
  %3155 = vmatpush1.msra.mxu0 %v3154
  %v3156 = vand.u32 %v318, 4294901760
  %v3157 = vsub.f32 %v318, %v3156
  %v3158 = vand.u32 %v3157, 4294901760
  %3159 = vmatprep.subr.mxu0 %v3158
  %v3160 = vand.u32 %v317, 4294901760
  %v3161 = vsub.f32 %v317, %v3160
  %v3162 = vand.u32 %v3161, 4294901760
  %3163 = vmatpush1.msra.mxu0 %v3162
  %v3164 = vand.u32 %v334, 4294901760
  %v3165 = vsub.f32 %v334, %v3164
  %v3166 = vand.u32 %v3165, 4294901760
  %3167 = vmatprep.subr.mxu0 %v3166
  %v3168 = vand.u32 %v333, 4294901760
  %v3169 = vsub.f32 %v333, %v3168
  %v3170 = vand.u32 %v3169, 4294901760
  %3171 = vmatpush1.msra.mxu0 %v3170
  %v3172 = vand.u32 %v350, 4294901760
  %v3173 = vsub.f32 %v350, %v3172
  %v3174 = vand.u32 %v3173, 4294901760
  %3175 = vmatprep.subr.mxu0 %v3174
  %v3176 = vand.u32 %v349, 4294901760
  %v3177 = vsub.f32 %v349, %v3176
  %v3178 = vand.u32 %v3177, 4294901760
  %3179 = vmatpush1.msra.mxu0 %v3178
  %3180 = vmatprep.subr.mxu0 0.0
  %3181 = vmatpush1.msra.mxu0 0.0
  %3182 = vmatprep.subr.mxu0 0.0
  %3183 = vmatpush1.msra.mxu0 0.0
  %3184 = vmatprep.subr.mxu0 0.0
  %3185 = vmatpush1.msra.mxu0 0.0
  %3186 = vmatprep.subr.mxu0 0.0
  %3187 = vmatpush1.msra.mxu0 0.0
  %3188 = vmatprep.subr.mxu0 0.0
  %3189 = vmatpush1.msra.mxu0 0.0
  %3190 = vmatprep.subr.mxu0 0.0
  %3191 = vmatpush1.msra.mxu0 0.0
  %3192 = vmatprep.subr.mxu0 0.0
  %3193 = vmatpush1.msra.mxu0 0.0
  %3194 = vmatprep.subr.mxu0 0.0
  %3195 = vmatpush1.msra.mxu0 0.0
  %3196 = vmatprep.subr.mxu0 0.0
  %3197 = vmatpush1.msra.mxu0 0.0
  %3198 = vmatprep.subr.mxu0 0.0
  %3199 = vmatpush1.msra.mxu0 0.0
  %3200 = vmatprep.subr.mxu0 0.0
  %3201 = vmatpush1.msra.mxu0 0.0
  %3202 = vmatprep.subr.mxu0 0.0
  %3203 = vmatpush1.msra.mxu0 0.0
  %3204 = vmatprep.subr.mxu0 0.0
  %3205 = vmatpush1.msra.mxu0 0.0
  %3206 = vmatprep.subr.mxu0 0.0
  %3207 = vmatpush1.msra.mxu0 0.0
  %3208 = vmatprep.subr.mxu0 0.0
  %3209 = vmatpush1.msra.mxu0 0.0
  %3210 = vmatprep.subr.mxu0 0.0
  %3211 = vmatpush1.msra.mxu0 0.0
  %3212 = vmatprep.subr.mxu0 0.0
  %3213 = vmatpush1.msra.mxu0 0.0
  %3214 = vmatprep.subr.mxu0 0.0
  %3215 = vmatpush1.msra.mxu0 0.0
  %3216 = vmatprep.subr.mxu0 0.0
  %3217 = vmatpush1.msra.mxu0 0.0
  %3218 = vmatprep.subr.mxu0 0.0
  %3219 = vmatpush1.msra.mxu0 0.0
  %3220 = vmatprep.subr.mxu0 0.0
  %3221 = vmatpush1.msra.mxu0 0.0
  %3222 = vmatprep.subr.mxu0 0.0
  %3223 = vmatpush1.msra.mxu0 0.0
  %3224 = vmatprep.subr.mxu0 0.0
  %3225 = vmatpush1.msra.mxu0 0.0
  %3226 = vmatprep.subr.mxu0 0.0
  %3227 = vmatpush1.msra.mxu0 0.0
  %3228 = vmatprep.subr.mxu0 0.0
  %3229 = vmatpush1.msra.mxu0 0.0
  %3230 = vmatprep.subr.mxu0 0.0
  %3231 = vmatpush1.msra.mxu0 0.0
  %3232 = vmatprep.subr.mxu0 0.0
  %3233 = vmatpush1.msra.mxu0 0.0
  %3234 = vmatprep.subr.mxu0 0.0
  %3235 = vmatpush1.msra.mxu0 0.0
  %3236 = vmatprep.mubr.f32.mxu0 0.0
  %v3237 = vand.u32 %v373, 4294901760
  %3238 = vmatmul.mubr.f32.gmra.mrb[0].mxu0 %v3237
  %v3239 = vpop.f32.mrb[0].mxu0
  %v3240 = vadd.f32 %v3135, %v3239
  %v3241 = vpop.f32.mrb[0].mxu0
  %v3242 = vadd.f32 %v3137, %v3241
  %3243 = vmatprep.mubr.f32.mxu0 0.0
  %v3244 = vand.u32 %v376, 4294901760
  %3245 = vmatmul.mubr.f32.gmra.mrb[0].mxu0 %v3244
  %v3246 = vpop.f32.mrb[0].mxu0
  %v3247 = vadd.f32 %v3144, %v3246
  %v3248 = vpop.f32.mrb[0].mxu0
  %v3249 = vadd.f32 %v3146, %v3248
  %3250 = vdwg.mxu0
  %v3251 = vand.u32 %v302, 4294901760
  %3252 = vmatprep.subr.mxu0 %v3251
  %v3253 = vand.u32 %v301, 4294901760
  %3254 = vmatpush1.msra.mxu0 %v3253
  %v3255 = vand.u32 %v318, 4294901760
  %3256 = vmatprep.subr.mxu0 %v3255
  %v3257 = vand.u32 %v317, 4294901760
  %3258 = vmatpush1.msra.mxu0 %v3257
  %v3259 = vand.u32 %v334, 4294901760
  %3260 = vmatprep.subr.mxu0 %v3259
  %v3261 = vand.u32 %v333, 4294901760
  %3262 = vmatpush1.msra.mxu0 %v3261
  %v3263 = vand.u32 %v350, 4294901760
  %3264 = vmatprep.subr.mxu0 %v3263
  %v3265 = vand.u32 %v349, 4294901760
  %3266 = vmatpush1.msra.mxu0 %v3265
  %3267 = vmatprep.subr.mxu0 0.0
  %3268 = vmatpush1.msra.mxu0 0.0
  %3269 = vmatprep.subr.mxu0 0.0
  %3270 = vmatpush1.msra.mxu0 0.0
  %3271 = vmatprep.subr.mxu0 0.0
  %3272 = vmatpush1.msra.mxu0 0.0
  %3273 = vmatprep.subr.mxu0 0.0
  %3274 = vmatpush1.msra.mxu0 0.0
  %3275 = vmatprep.subr.mxu0 0.0
  %3276 = vmatpush1.msra.mxu0 0.0
  %3277 = vmatprep.subr.mxu0 0.0
  %3278 = vmatpush1.msra.mxu0 0.0
  %3279 = vmatprep.subr.mxu0 0.0
  %3280 = vmatpush1.msra.mxu0 0.0
  %3281 = vmatprep.subr.mxu0 0.0
  %3282 = vmatpush1.msra.mxu0 0.0
  %3283 = vmatprep.subr.mxu0 0.0
  %3284 = vmatpush1.msra.mxu0 0.0
  %3285 = vmatprep.subr.mxu0 0.0
  %3286 = vmatpush1.msra.mxu0 0.0
  %3287 = vmatprep.subr.mxu0 0.0
  %3288 = vmatpush1.msra.mxu0 0.0
  %3289 = vmatprep.subr.mxu0 0.0
  %3290 = vmatpush1.msra.mxu0 0.0
  %3291 = vmatprep.subr.mxu0 0.0
  %3292 = vmatpush1.msra.mxu0 0.0
  %3293 = vmatprep.subr.mxu0 0.0
  %3294 = vmatpush1.msra.mxu0 0.0
  %3295 = vmatprep.subr.mxu0 0.0
  %3296 = vmatpush1.msra.mxu0 0.0
  %3297 = vmatprep.subr.mxu0 0.0
  %3298 = vmatpush1.msra.mxu0 0.0
  %3299 = vmatprep.subr.mxu0 0.0
  %3300 = vmatpush1.msra.mxu0 0.0
  %3301 = vmatprep.subr.mxu0 0.0
  %3302 = vmatpush1.msra.mxu0 0.0
  %3303 = vmatprep.subr.mxu0 0.0
  %3304 = vmatpush1.msra.mxu0 0.0
  %3305 = vmatprep.subr.mxu0 0.0
  %3306 = vmatpush1.msra.mxu0 0.0
  %3307 = vmatprep.subr.mxu0 0.0
  %3308 = vmatpush1.msra.mxu0 0.0
  %3309 = vmatprep.subr.mxu0 0.0
  %3310 = vmatpush1.msra.mxu0 0.0
  %3311 = vmatprep.subr.mxu0 0.0
  %3312 = vmatpush1.msra.mxu0 0.0
  %3313 = vmatprep.subr.mxu0 0.0
  %3314 = vmatpush1.msra.mxu0 0.0
  %3315 = vmatprep.subr.mxu0 0.0
  %3316 = vmatpush1.msra.mxu0 0.0
  %3317 = vmatprep.subr.mxu0 0.0
  %3318 = vmatpush1.msra.mxu0 0.0
  %3319 = vmatprep.subr.mxu0 0.0
  %3320 = vmatpush1.msra.mxu0 0.0
  %3321 = vmatprep.subr.mxu0 0.0
  %3322 = vmatpush1.msra.mxu0 0.0
  %3323 = vmatprep.mubr.f32.mxu0 0.0
  %v3324 = vand.u32 %v373, 4294901760
  %3325 = vmatmul.mubr.f32.gmra.mrb[0].mxu0 %v3324
  %v3326 = vpop.f32.mrb[0].mxu0
  %v3327 = vadd.f32 %v3240, %v3326
  %v3328 = vpop.f32.mrb[0].mxu0
  %v3329 = vadd.f32 %v3242, %v3328
  %3330 = vmatprep.mubr.f32.mxu0 0.0
  %v3331 = vand.u32 %v376, 4294901760
  %3332 = vmatmul.mubr.f32.gmra.mrb[0].mxu0 %v3331
  %v3333 = vpop.f32.mrb[0].mxu0
  %v3334 = vadd.f32 %v3247, %v3333
  %v3335 = vpop.f32.mrb[0].mxu0
  %v3336 = vadd.f32 %v3249, %v3335
  %3337 = vdwg.mxu0
  %v3338 = vand.u32 %v304, 4294901760
  %3339 = vmatprep.subr.mxu0 %v3338
  %v3340 = vand.u32 %v303, 4294901760
  %3341 = vmatpush1.msra.mxu0 %v3340
  %v3342 = vand.u32 %v320, 4294901760
  %3343 = vmatprep.subr.mxu0 %v3342
  %v3344 = vand.u32 %v319, 4294901760
  %3345 = vmatpush1.msra.mxu0 %v3344
  %v3346 = vand.u32 %v336, 4294901760
  %3347 = vmatprep.subr.mxu0 %v3346
  %v3348 = vand.u32 %v335, 4294901760
  %3349 = vmatpush1.msra.mxu0 %v3348
  %v3350 = vand.u32 %v352, 4294901760
  %3351 = vmatprep.subr.mxu0 %v3350
  %v3352 = vand.u32 %v351, 4294901760
  %3353 = vmatpush1.msra.mxu0 %v3352
  %3354 = vmatprep.subr.mxu0 0.0
  %3355 = vmatpush1.msra.mxu0 0.0
  %3356 = vmatprep.subr.mxu0 0.0
  %3357 = vmatpush1.msra.mxu0 0.0
  %3358 = vmatprep.subr.mxu0 0.0
  %3359 = vmatpush1.msra.mxu0 0.0
  %3360 = vmatprep.subr.mxu0 0.0
  %3361 = vmatpush1.msra.mxu0 0.0
  %3362 = vmatprep.subr.mxu0 0.0
  %3363 = vmatpush1.msra.mxu0 0.0
  %3364 = vmatprep.subr.mxu0 0.0
  %3365 = vmatpush1.msra.mxu0 0.0
  %3366 = vmatprep.subr.mxu0 0.0
  %3367 = vmatpush1.msra.mxu0 0.0
  %3368 = vmatprep.subr.mxu0 0.0
  %3369 = vmatpush1.msra.mxu0 0.0
  %3370 = vmatprep.subr.mxu0 0.0
  %3371 = vmatpush1.msra.mxu0 0.0
  %3372 = vmatprep.subr.mxu0 0.0
  %3373 = vmatpush1.msra.mxu0 0.0
  %3374 = vmatprep.subr.mxu0 0.0
  %3375 = vmatpush1.msra.mxu0 0.0
  %3376 = vmatprep.subr.mxu0 0.0
  %3377 = vmatpush1.msra.mxu0 0.0
  %3378 = vmatprep.subr.mxu0 0.0
  %3379 = vmatpush1.msra.mxu0 0.0
  %3380 = vmatprep.subr.mxu0 0.0
  %3381 = vmatpush1.msra.mxu0 0.0
  %3382 = vmatprep.subr.mxu0 0.0
  %3383 = vmatpush1.msra.mxu0 0.0
  %3384 = vmatprep.subr.mxu0 0.0
  %3385 = vmatpush1.msra.mxu0 0.0
  %3386 = vmatprep.subr.mxu0 0.0
  %3387 = vmatpush1.msra.mxu0 0.0
  %3388 = vmatprep.subr.mxu0 0.0
  %3389 = vmatpush1.msra.mxu0 0.0
  %3390 = vmatprep.subr.mxu0 0.0
  %3391 = vmatpush1.msra.mxu0 0.0
  %3392 = vmatprep.subr.mxu0 0.0
  %3393 = vmatpush1.msra.mxu0 0.0
  %3394 = vmatprep.subr.mxu0 0.0
  %3395 = vmatpush1.msra.mxu0 0.0
  %3396 = vmatprep.subr.mxu0 0.0
  %3397 = vmatpush1.msra.mxu0 0.0
  %3398 = vmatprep.subr.mxu0 0.0
  %3399 = vmatpush1.msra.mxu0 0.0
  %3400 = vmatprep.subr.mxu0 0.0
  %3401 = vmatpush1.msra.mxu0 0.0
  %3402 = vmatprep.subr.mxu0 0.0
  %3403 = vmatpush1.msra.mxu0 0.0
  %3404 = vmatprep.subr.mxu0 0.0
  %3405 = vmatpush1.msra.mxu0 0.0
  %3406 = vmatprep.subr.mxu0 0.0
  %3407 = vmatpush1.msra.mxu0 0.0
  %3408 = vmatprep.subr.mxu0 0.0
  %3409 = vmatpush1.msra.mxu0 0.0
  %3410 = vmatprep.mubr.f32.mxu0 0.0
  %v3411 = vand.u32 %v373, 4294901760
  %v3412 = vsub.f32 %v373, %v3411
  %v3413 = vand.u32 %v3412, 4294901760
  %v3414 = vsub.f32 %v3412, %v3413
  %v3415 = vand.u32 %v3414, 4294901760
  %3416 = vmatmul.mubr.f32.gmra.mrb[0].mxu0 %v3415
  %v3417 = vpop.f32.mrb[0].mxu0
  %v3418 = vadd.f32 %v364, %v3417
  %v3419 = vpop.f32.mrb[0].mxu0
  %v3420 = vadd.f32 %v364, %v3419
  %3421 = vmatprep.mubr.f32.mxu0 0.0
  %v3422 = vand.u32 %v376, 4294901760
  %v3423 = vsub.f32 %v376, %v3422
  %v3424 = vand.u32 %v3423, 4294901760
  %v3425 = vsub.f32 %v3423, %v3424
  %v3426 = vand.u32 %v3425, 4294901760
  %3427 = vmatmul.mubr.f32.gmra.mrb[0].mxu0 %v3426
  %v3428 = vpop.f32.mrb[0].mxu0
  %v3429 = vadd.f32 %v369, %v3428
  %v3430 = vpop.f32.mrb[0].mxu0
  %v3431 = vadd.f32 %v369, %v3430
  %3432 = vdwg.mxu0
  %v3433 = vand.u32 %v304, 4294901760
  %v3434 = vsub.f32 %v304, %v3433
  %v3435 = vand.u32 %v3434, 4294901760
  %v3436 = vsub.f32 %v3434, %v3435
  %v3437 = vand.u32 %v3436, 4294901760
  %3438 = vmatprep.subr.mxu0 %v3437
  %v3439 = vand.u32 %v303, 4294901760
  %v3440 = vsub.f32 %v303, %v3439
  %v3441 = vand.u32 %v3440, 4294901760
  %v3442 = vsub.f32 %v3440, %v3441
  %v3443 = vand.u32 %v3442, 4294901760
  %3444 = vmatpush1.msra.mxu0 %v3443
  %v3445 = vand.u32 %v320, 4294901760
  %v3446 = vsub.f32 %v320, %v3445
  %v3447 = vand.u32 %v3446, 4294901760
  %v3448 = vsub.f32 %v3446, %v3447
  %v3449 = vand.u32 %v3448, 4294901760
  %3450 = vmatprep.subr.mxu0 %v3449
  %v3451 = vand.u32 %v319, 4294901760
  %v3452 = vsub.f32 %v319, %v3451
  %v3453 = vand.u32 %v3452, 4294901760
  %v3454 = vsub.f32 %v3452, %v3453
  %v3455 = vand.u32 %v3454, 4294901760
  %3456 = vmatpush1.msra.mxu0 %v3455
  %v3457 = vand.u32 %v336, 4294901760
  %v3458 = vsub.f32 %v336, %v3457
  %v3459 = vand.u32 %v3458, 4294901760
  %v3460 = vsub.f32 %v3458, %v3459
  %v3461 = vand.u32 %v3460, 4294901760
  %3462 = vmatprep.subr.mxu0 %v3461
  %v3463 = vand.u32 %v335, 4294901760
  %v3464 = vsub.f32 %v335, %v3463
  %v3465 = vand.u32 %v3464, 4294901760
  %v3466 = vsub.f32 %v3464, %v3465
  %v3467 = vand.u32 %v3466, 4294901760
  %3468 = vmatpush1.msra.mxu0 %v3467
  %v3469 = vand.u32 %v352, 4294901760
  %v3470 = vsub.f32 %v352, %v3469
  %v3471 = vand.u32 %v3470, 4294901760
  %v3472 = vsub.f32 %v3470, %v3471
  %v3473 = vand.u32 %v3472, 4294901760
  %3474 = vmatprep.subr.mxu0 %v3473
  %v3475 = vand.u32 %v351, 4294901760
  %v3476 = vsub.f32 %v351, %v3475
  %v3477 = vand.u32 %v3476, 4294901760
  %v3478 = vsub.f32 %v3476, %v3477
  %v3479 = vand.u32 %v3478, 4294901760
  %3480 = vmatpush1.msra.mxu0 %v3479
  %3481 = vmatprep.subr.mxu0 0.0
  %3482 = vmatpush1.msra.mxu0 0.0
  %3483 = vmatprep.subr.mxu0 0.0
  %3484 = vmatpush1.msra.mxu0 0.0
  %3485 = vmatprep.subr.mxu0 0.0
  %3486 = vmatpush1.msra.mxu0 0.0
  %3487 = vmatprep.subr.mxu0 0.0
  %3488 = vmatpush1.msra.mxu0 0.0
  %3489 = vmatprep.subr.mxu0 0.0
  %3490 = vmatpush1.msra.mxu0 0.0
  %3491 = vmatprep.subr.mxu0 0.0
  %3492 = vmatpush1.msra.mxu0 0.0
  %3493 = vmatprep.subr.mxu0 0.0
  %3494 = vmatpush1.msra.mxu0 0.0
  %3495 = vmatprep.subr.mxu0 0.0
  %3496 = vmatpush1.msra.mxu0 0.0
  %3497 = vmatprep.subr.mxu0 0.0
  %3498 = vmatpush1.msra.mxu0 0.0
  %3499 = vmatprep.subr.mxu0 0.0
  %3500 = vmatpush1.msra.mxu0 0.0
  %3501 = vmatprep.subr.mxu0 0.0
  %3502 = vmatpush1.msra.mxu0 0.0
  %3503 = vmatprep.subr.mxu0 0.0
  %3504 = vmatpush1.msra.mxu0 0.0
  %3505 = vmatprep.subr.mxu0 0.0
  %3506 = vmatpush1.msra.mxu0 0.0
  %3507 = vmatprep.subr.mxu0 0.0
  %3508 = vmatpush1.msra.mxu0 0.0
  %3509 = vmatprep.subr.mxu0 0.0
  %3510 = vmatpush1.msra.mxu0 0.0
  %3511 = vmatprep.subr.mxu0 0.0
  %3512 = vmatpush1.msra.mxu0 0.0
  %3513 = vmatprep.subr.mxu0 0.0
  %3514 = vmatpush1.msra.mxu0 0.0
  %3515 = vmatprep.subr.mxu0 0.0
  %3516 = vmatpush1.msra.mxu0 0.0
  %3517 = vmatprep.subr.mxu0 0.0
  %3518 = vmatpush1.msra.mxu0 0.0
  %3519 = vmatprep.subr.mxu0 0.0
  %3520 = vmatpush1.msra.mxu0 0.0
  %3521 = vmatprep.subr.mxu0 0.0
  %3522 = vmatpush1.msra.mxu0 0.0
  %3523 = vmatprep.subr.mxu0 0.0
  %3524 = vmatpush1.msra.mxu0 0.0
  %3525 = vmatprep.subr.mxu0 0.0
  %3526 = vmatpush1.msra.mxu0 0.0
  %3527 = vmatprep.subr.mxu0 0.0
  %3528 = vmatpush1.msra.mxu0 0.0
  %3529 = vmatprep.subr.mxu0 0.0
  %3530 = vmatpush1.msra.mxu0 0.0
  %3531 = vmatprep.subr.mxu0 0.0
  %3532 = vmatpush1.msra.mxu0 0.0
  %3533 = vmatprep.subr.mxu0 0.0
  %3534 = vmatpush1.msra.mxu0 0.0
  %3535 = vmatprep.subr.mxu0 0.0
  %3536 = vmatpush1.msra.mxu0 0.0
  %3537 = vmatprep.mubr.f32.mxu0 0.0
  %v3538 = vand.u32 %v373, 4294901760
  %3539 = vmatmul.mubr.f32.gmra.mrb[0].mxu0 %v3538
  %v3540 = vpop.f32.mrb[0].mxu0
  %v3541 = vadd.f32 %v3418, %v3540
  %v3542 = vpop.f32.mrb[0].mxu0
  %v3543 = vadd.f32 %v3420, %v3542
  %3544 = vmatprep.mubr.f32.mxu0 0.0
  %v3545 = vand.u32 %v376, 4294901760
  %3546 = vmatmul.mubr.f32.gmra.mrb[0].mxu0 %v3545
  %v3547 = vpop.f32.mrb[0].mxu0
  %v3548 = vadd.f32 %v3429, %v3547
  %v3549 = vpop.f32.mrb[0].mxu0
  %v3550 = vadd.f32 %v3431, %v3549
  %3551 = vdwg.mxu0
  %v3552 = vand.u32 %v304, 4294901760
  %v3553 = vsub.f32 %v304, %v3552
  %3554 = vmatprep.subr.mxu0 %v3553
  %v3555 = vand.u32 %v303, 4294901760
  %v3556 = vsub.f32 %v303, %v3555
  %3557 = vmatpush1.msra.mxu0 %v3556
  %v3558 = vand.u32 %v320, 4294901760
  %v3559 = vsub.f32 %v320, %v3558
  %3560 = vmatprep.subr.mxu0 %v3559
  %v3561 = vand.u32 %v319, 4294901760
  %v3562 = vsub.f32 %v319, %v3561
  %3563 = vmatpush1.msra.mxu0 %v3562
  %v3564 = vand.u32 %v336, 4294901760
  %v3565 = vsub.f32 %v336, %v3564
  %3566 = vmatprep.subr.mxu0 %v3565
  %v3567 = vand.u32 %v335, 4294901760
  %v3568 = vsub.f32 %v335, %v3567
  %3569 = vmatpush1.msra.mxu0 %v3568
  %v3570 = vand.u32 %v352, 4294901760
  %v3571 = vsub.f32 %v352, %v3570
  %3572 = vmatprep.subr.mxu0 %v3571
  %v3573 = vand.u32 %v351, 4294901760
  %v3574 = vsub.f32 %v351, %v3573
  %3575 = vmatpush1.msra.mxu0 %v3574
  %3576 = vmatprep.subr.mxu0 0.0
  %3577 = vmatpush1.msra.mxu0 0.0
  %3578 = vmatprep.subr.mxu0 0.0
  %3579 = vmatpush1.msra.mxu0 0.0
  %3580 = vmatprep.subr.mxu0 0.0
  %3581 = vmatpush1.msra.mxu0 0.0
  %3582 = vmatprep.subr.mxu0 0.0
  %3583 = vmatpush1.msra.mxu0 0.0
  %3584 = vmatprep.subr.mxu0 0.0
  %3585 = vmatpush1.msra.mxu0 0.0
  %3586 = vmatprep.subr.mxu0 0.0
  %3587 = vmatpush1.msra.mxu0 0.0
  %3588 = vmatprep.subr.mxu0 0.0
  %3589 = vmatpush1.msra.mxu0 0.0
  %3590 = vmatprep.subr.mxu0 0.0
  %3591 = vmatpush1.msra.mxu0 0.0
  %3592 = vmatprep.subr.mxu0 0.0
  %3593 = vmatpush1.msra.mxu0 0.0
  %3594 = vmatprep.subr.mxu0 0.0
  %3595 = vmatpush1.msra.mxu0 0.0
  %3596 = vmatprep.subr.mxu0 0.0
  %3597 = vmatpush1.msra.mxu0 0.0
  %3598 = vmatprep.subr.mxu0 0.0
  %3599 = vmatpush1.msra.mxu0 0.0
  %3600 = vmatprep.subr.mxu0 0.0
  %3601 = vmatpush1.msra.mxu0 0.0
  %3602 = vmatprep.subr.mxu0 0.0
  %3603 = vmatpush1.msra.mxu0 0.0
  %3604 = vmatprep.subr.mxu0 0.0
  %3605 = vmatpush1.msra.mxu0 0.0
  %3606 = vmatprep.subr.mxu0 0.0
  %3607 = vmatpush1.msra.mxu0 0.0
  %3608 = vmatprep.subr.mxu0 0.0
  %3609 = vmatpush1.msra.mxu0 0.0
  %3610 = vmatprep.subr.mxu0 0.0
  %3611 = vmatpush1.msra.mxu0 0.0
  %3612 = vmatprep.subr.mxu0 0.0
  %3613 = vmatpush1.msra.mxu0 0.0
  %3614 = vmatprep.subr.mxu0 0.0
  %3615 = vmatpush1.msra.mxu0 0.0
  %3616 = vmatprep.subr.mxu0 0.0
  %3617 = vmatpush1.msra.mxu0 0.0
  %3618 = vmatprep.subr.mxu0 0.0
  %3619 = vmatpush1.msra.mxu0 0.0
  %3620 = vmatprep.subr.mxu0 0.0
  %3621 = vmatpush1.msra.mxu0 0.0
  %3622 = vmatprep.subr.mxu0 0.0
  %3623 = vmatpush1.msra.mxu0 0.0
  %3624 = vmatprep.subr.mxu0 0.0
  %3625 = vmatpush1.msra.mxu0 0.0
  %3626 = vmatprep.subr.mxu0 0.0
  %3627 = vmatpush1.msra.mxu0 0.0
  %3628 = vmatprep.subr.mxu0 0.0
  %3629 = vmatpush1.msra.mxu0 0.0
  %3630 = vmatprep.subr.mxu0 0.0
  %3631 = vmatpush1.msra.mxu0 0.0
  %3632 = vmatprep.mubr.f32.mxu0 0.0
  %v3633 = vand.u32 %v373, 4294901760
  %v3634 = vsub.f32 %v373, %v3633
  %3635 = vmatmul.mubr.f32.gmra.mrb[0].mxu0 %v3634
  %v3636 = vpop.f32.mrb[0].mxu0
  %v3637 = vadd.f32 %v3541, %v3636
  %v3638 = vpop.f32.mrb[0].mxu0
  %v3639 = vadd.f32 %v3543, %v3638
  %3640 = vmatprep.mubr.f32.mxu0 0.0
  %v3641 = vand.u32 %v376, 4294901760
  %v3642 = vsub.f32 %v376, %v3641
  %3643 = vmatmul.mubr.f32.gmra.mrb[0].mxu0 %v3642
  %v3644 = vpop.f32.mrb[0].mxu0
  %v3645 = vadd.f32 %v3548, %v3644
  %v3646 = vpop.f32.mrb[0].mxu0
  %v3647 = vadd.f32 %v3550, %v3646
  %3648 = vdwg.mxu0
  %v3649 = vand.u32 %v304, 4294901760
  %3650 = vmatprep.subr.mxu0 %v3649
  %v3651 = vand.u32 %v303, 4294901760
  %3652 = vmatpush1.msra.mxu0 %v3651
  %v3653 = vand.u32 %v320, 4294901760
  %3654 = vmatprep.subr.mxu0 %v3653
  %v3655 = vand.u32 %v319, 4294901760
  %3656 = vmatpush1.msra.mxu0 %v3655
  %v3657 = vand.u32 %v336, 4294901760
  %3658 = vmatprep.subr.mxu0 %v3657
  %v3659 = vand.u32 %v335, 4294901760
  %3660 = vmatpush1.msra.mxu0 %v3659
  %v3661 = vand.u32 %v352, 4294901760
  %3662 = vmatprep.subr.mxu0 %v3661
  %v3663 = vand.u32 %v351, 4294901760
  %3664 = vmatpush1.msra.mxu0 %v3663
  %3665 = vmatprep.subr.mxu0 0.0
  %3666 = vmatpush1.msra.mxu0 0.0
  %3667 = vmatprep.subr.mxu0 0.0
  %3668 = vmatpush1.msra.mxu0 0.0
  %3669 = vmatprep.subr.mxu0 0.0
  %3670 = vmatpush1.msra.mxu0 0.0
  %3671 = vmatprep.subr.mxu0 0.0
  %3672 = vmatpush1.msra.mxu0 0.0
  %3673 = vmatprep.subr.mxu0 0.0
  %3674 = vmatpush1.msra.mxu0 0.0
  %3675 = vmatprep.subr.mxu0 0.0
  %3676 = vmatpush1.msra.mxu0 0.0
  %3677 = vmatprep.subr.mxu0 0.0
  %3678 = vmatpush1.msra.mxu0 0.0
  %3679 = vmatprep.subr.mxu0 0.0
  %3680 = vmatpush1.msra.mxu0 0.0
  %3681 = vmatprep.subr.mxu0 0.0
  %3682 = vmatpush1.msra.mxu0 0.0
  %3683 = vmatprep.subr.mxu0 0.0
  %3684 = vmatpush1.msra.mxu0 0.0
  %3685 = vmatprep.subr.mxu0 0.0
  %3686 = vmatpush1.msra.mxu0 0.0
  %3687 = vmatprep.subr.mxu0 0.0
  %3688 = vmatpush1.msra.mxu0 0.0
  %3689 = vmatprep.subr.mxu0 0.0
  %3690 = vmatpush1.msra.mxu0 0.0
  %3691 = vmatprep.subr.mxu0 0.0
  %3692 = vmatpush1.msra.mxu0 0.0
  %3693 = vmatprep.subr.mxu0 0.0
  %3694 = vmatpush1.msra.mxu0 0.0
  %3695 = vmatprep.subr.mxu0 0.0
  %3696 = vmatpush1.msra.mxu0 0.0
  %3697 = vmatprep.subr.mxu0 0.0
  %3698 = vmatpush1.msra.mxu0 0.0
  %3699 = vmatprep.subr.mxu0 0.0
  %3700 = vmatpush1.msra.mxu0 0.0
  %3701 = vmatprep.subr.mxu0 0.0
  %3702 = vmatpush1.msra.mxu0 0.0
  %3703 = vmatprep.subr.mxu0 0.0
  %3704 = vmatpush1.msra.mxu0 0.0
  %3705 = vmatprep.subr.mxu0 0.0
  %3706 = vmatpush1.msra.mxu0 0.0
  %3707 = vmatprep.subr.mxu0 0.0
  %3708 = vmatpush1.msra.mxu0 0.0
  %3709 = vmatprep.subr.mxu0 0.0
  %3710 = vmatpush1.msra.mxu0 0.0
  %3711 = vmatprep.subr.mxu0 0.0
  %3712 = vmatpush1.msra.mxu0 0.0
  %3713 = vmatprep.subr.mxu0 0.0
  %3714 = vmatpush1.msra.mxu0 0.0
  %3715 = vmatprep.subr.mxu0 0.0
  %3716 = vmatpush1.msra.mxu0 0.0
  %3717 = vmatprep.subr.mxu0 0.0
  %3718 = vmatpush1.msra.mxu0 0.0
  %3719 = vmatprep.subr.mxu0 0.0
  %3720 = vmatpush1.msra.mxu0 0.0
  %3721 = vmatprep.mubr.f32.mxu0 0.0
  %v3722 = vand.u32 %v373, 4294901760
  %v3723 = vsub.f32 %v373, %v3722
  %v3724 = vand.u32 %v3723, 4294901760
  %3725 = vmatmul.mubr.f32.gmra.mrb[0].mxu0 %v3724
  %v3726 = vpop.f32.mrb[0].mxu0
  %v3727 = vadd.f32 %v3637, %v3726
  %v3728 = vpop.f32.mrb[0].mxu0
  %v3729 = vadd.f32 %v3639, %v3728
  %3730 = vmatprep.mubr.f32.mxu0 0.0
  %v3731 = vand.u32 %v376, 4294901760
  %v3732 = vsub.f32 %v376, %v3731
  %v3733 = vand.u32 %v3732, 4294901760
  %3734 = vmatmul.mubr.f32.gmra.mrb[0].mxu0 %v3733
  %v3735 = vpop.f32.mrb[0].mxu0
  %v3736 = vadd.f32 %v3645, %v3735
  %v3737 = vpop.f32.mrb[0].mxu0
  %v3738 = vadd.f32 %v3647, %v3737
  %3739 = vdwg.mxu0
  %v3740 = vand.u32 %v304, 4294901760
  %v3741 = vsub.f32 %v304, %v3740
  %v3742 = vand.u32 %v3741, 4294901760
  %3743 = vmatprep.subr.mxu0 %v3742
  %v3744 = vand.u32 %v303, 4294901760
  %v3745 = vsub.f32 %v303, %v3744
  %v3746 = vand.u32 %v3745, 4294901760
  %3747 = vmatpush1.msra.mxu0 %v3746
  %v3748 = vand.u32 %v320, 4294901760
  %v3749 = vsub.f32 %v320, %v3748
  %v3750 = vand.u32 %v3749, 4294901760
  %3751 = vmatprep.subr.mxu0 %v3750
  %v3752 = vand.u32 %v319, 4294901760
  %v3753 = vsub.f32 %v319, %v3752
  %v3754 = vand.u32 %v3753, 4294901760
  %3755 = vmatpush1.msra.mxu0 %v3754
  %v3756 = vand.u32 %v336, 4294901760
  %v3757 = vsub.f32 %v336, %v3756
  %v3758 = vand.u32 %v3757, 4294901760
  %3759 = vmatprep.subr.mxu0 %v3758
  %v3760 = vand.u32 %v335, 4294901760
  %v3761 = vsub.f32 %v335, %v3760
  %v3762 = vand.u32 %v3761, 4294901760
  %3763 = vmatpush1.msra.mxu0 %v3762
  %v3764 = vand.u32 %v352, 4294901760
  %v3765 = vsub.f32 %v352, %v3764
  %v3766 = vand.u32 %v3765, 4294901760
  %3767 = vmatprep.subr.mxu0 %v3766
  %v3768 = vand.u32 %v351, 4294901760
  %v3769 = vsub.f32 %v351, %v3768
  %v3770 = vand.u32 %v3769, 4294901760
  %3771 = vmatpush1.msra.mxu0 %v3770
  %3772 = vmatprep.subr.mxu0 0.0
  %3773 = vmatpush1.msra.mxu0 0.0
  %3774 = vmatprep.subr.mxu0 0.0
  %3775 = vmatpush1.msra.mxu0 0.0
  %3776 = vmatprep.subr.mxu0 0.0
  %3777 = vmatpush1.msra.mxu0 0.0
  %3778 = vmatprep.subr.mxu0 0.0
  %3779 = vmatpush1.msra.mxu0 0.0
  %3780 = vmatprep.subr.mxu0 0.0
  %3781 = vmatpush1.msra.mxu0 0.0
  %3782 = vmatprep.subr.mxu0 0.0
  %3783 = vmatpush1.msra.mxu0 0.0
  %3784 = vmatprep.subr.mxu0 0.0
  %3785 = vmatpush1.msra.mxu0 0.0
  %3786 = vmatprep.subr.mxu0 0.0
  %3787 = vmatpush1.msra.mxu0 0.0
  %3788 = vmatprep.subr.mxu0 0.0
  %3789 = vmatpush1.msra.mxu0 0.0
  %3790 = vmatprep.subr.mxu0 0.0
  %3791 = vmatpush1.msra.mxu0 0.0
  %3792 = vmatprep.subr.mxu0 0.0
  %3793 = vmatpush1.msra.mxu0 0.0
  %3794 = vmatprep.subr.mxu0 0.0
  %3795 = vmatpush1.msra.mxu0 0.0
  %3796 = vmatprep.subr.mxu0 0.0
  %3797 = vmatpush1.msra.mxu0 0.0
  %3798 = vmatprep.subr.mxu0 0.0
  %3799 = vmatpush1.msra.mxu0 0.0
  %3800 = vmatprep.subr.mxu0 0.0
  %3801 = vmatpush1.msra.mxu0 0.0
  %3802 = vmatprep.subr.mxu0 0.0
  %3803 = vmatpush1.msra.mxu0 0.0
  %3804 = vmatprep.subr.mxu0 0.0
  %3805 = vmatpush1.msra.mxu0 0.0
  %3806 = vmatprep.subr.mxu0 0.0
  %3807 = vmatpush1.msra.mxu0 0.0
  %3808 = vmatprep.subr.mxu0 0.0
  %3809 = vmatpush1.msra.mxu0 0.0
  %3810 = vmatprep.subr.mxu0 0.0
  %3811 = vmatpush1.msra.mxu0 0.0
  %3812 = vmatprep.subr.mxu0 0.0
  %3813 = vmatpush1.msra.mxu0 0.0
  %3814 = vmatprep.subr.mxu0 0.0
  %3815 = vmatpush1.msra.mxu0 0.0
  %3816 = vmatprep.subr.mxu0 0.0
  %3817 = vmatpush1.msra.mxu0 0.0
  %3818 = vmatprep.subr.mxu0 0.0
  %3819 = vmatpush1.msra.mxu0 0.0
  %3820 = vmatprep.subr.mxu0 0.0
  %3821 = vmatpush1.msra.mxu0 0.0
  %3822 = vmatprep.subr.mxu0 0.0
  %3823 = vmatpush1.msra.mxu0 0.0
  %3824 = vmatprep.subr.mxu0 0.0
  %3825 = vmatpush1.msra.mxu0 0.0
  %3826 = vmatprep.subr.mxu0 0.0
  %3827 = vmatpush1.msra.mxu0 0.0
  %3828 = vmatprep.mubr.f32.mxu0 0.0
  %v3829 = vand.u32 %v373, 4294901760
  %3830 = vmatmul.mubr.f32.gmra.mrb[0].mxu0 %v3829
  %v3831 = vpop.f32.mrb[0].mxu0
  %v3832 = vadd.f32 %v3727, %v3831
  %v3833 = vpop.f32.mrb[0].mxu0
  %v3834 = vadd.f32 %v3729, %v3833
  %3835 = vmatprep.mubr.f32.mxu0 0.0
  %v3836 = vand.u32 %v376, 4294901760
  %3837 = vmatmul.mubr.f32.gmra.mrb[0].mxu0 %v3836
  %v3838 = vpop.f32.mrb[0].mxu0
  %v3839 = vadd.f32 %v3736, %v3838
  %v3840 = vpop.f32.mrb[0].mxu0
  %v3841 = vadd.f32 %v3738, %v3840
  %3842 = vdwg.mxu0
  %v3843 = vand.u32 %v304, 4294901760
  %3844 = vmatprep.subr.mxu0 %v3843
  %v3845 = vand.u32 %v303, 4294901760
  %3846 = vmatpush1.msra.mxu0 %v3845
  %v3847 = vand.u32 %v320, 4294901760
  %3848 = vmatprep.subr.mxu0 %v3847
  %v3849 = vand.u32 %v319, 4294901760
  %3850 = vmatpush1.msra.mxu0 %v3849
  %v3851 = vand.u32 %v336, 4294901760
  %3852 = vmatprep.subr.mxu0 %v3851
  %v3853 = vand.u32 %v335, 4294901760
  %3854 = vmatpush1.msra.mxu0 %v3853
  %v3855 = vand.u32 %v352, 4294901760
  %3856 = vmatprep.subr.mxu0 %v3855
  %v3857 = vand.u32 %v351, 4294901760
  %3858 = vmatpush1.msra.mxu0 %v3857
  %3859 = vmatprep.subr.mxu0 0.0
  %3860 = vmatpush1.msra.mxu0 0.0
  %3861 = vmatprep.subr.mxu0 0.0
  %3862 = vmatpush1.msra.mxu0 0.0
  %3863 = vmatprep.subr.mxu0 0.0
  %3864 = vmatpush1.msra.mxu0 0.0
  %3865 = vmatprep.subr.mxu0 0.0
  %3866 = vmatpush1.msra.mxu0 0.0
  %3867 = vmatprep.subr.mxu0 0.0
  %3868 = vmatpush1.msra.mxu0 0.0
  %3869 = vmatprep.subr.mxu0 0.0
  %3870 = vmatpush1.msra.mxu0 0.0
  %3871 = vmatprep.subr.mxu0 0.0
  %3872 = vmatpush1.msra.mxu0 0.0
  %3873 = vmatprep.subr.mxu0 0.0
  %3874 = vmatpush1.msra.mxu0 0.0
  %3875 = vmatprep.subr.mxu0 0.0
  %3876 = vmatpush1.msra.mxu0 0.0
  %3877 = vmatprep.subr.mxu0 0.0
  %3878 = vmatpush1.msra.mxu0 0.0
  %3879 = vmatprep.subr.mxu0 0.0
  %3880 = vmatpush1.msra.mxu0 0.0
  %3881 = vmatprep.subr.mxu0 0.0
  %3882 = vmatpush1.msra.mxu0 0.0
  %3883 = vmatprep.subr.mxu0 0.0
  %3884 = vmatpush1.msra.mxu0 0.0
  %3885 = vmatprep.subr.mxu0 0.0
  %3886 = vmatpush1.msra.mxu0 0.0
  %3887 = vmatprep.subr.mxu0 0.0
  %3888 = vmatpush1.msra.mxu0 0.0
  %3889 = vmatprep.subr.mxu0 0.0
  %3890 = vmatpush1.msra.mxu0 0.0
  %3891 = vmatprep.subr.mxu0 0.0
  %3892 = vmatpush1.msra.mxu0 0.0
  %3893 = vmatprep.subr.mxu0 0.0
  %3894 = vmatpush1.msra.mxu0 0.0
  %3895 = vmatprep.subr.mxu0 0.0
  %3896 = vmatpush1.msra.mxu0 0.0
  %3897 = vmatprep.subr.mxu0 0.0
  %3898 = vmatpush1.msra.mxu0 0.0
  %3899 = vmatprep.subr.mxu0 0.0
  %3900 = vmatpush1.msra.mxu0 0.0
  %3901 = vmatprep.subr.mxu0 0.0
  %3902 = vmatpush1.msra.mxu0 0.0
  %3903 = vmatprep.subr.mxu0 0.0
  %3904 = vmatpush1.msra.mxu0 0.0
  %3905 = vmatprep.subr.mxu0 0.0
  %3906 = vmatpush1.msra.mxu0 0.0
  %3907 = vmatprep.subr.mxu0 0.0
  %3908 = vmatpush1.msra.mxu0 0.0
  %3909 = vmatprep.subr.mxu0 0.0
  %3910 = vmatpush1.msra.mxu0 0.0
  %3911 = vmatprep.subr.mxu0 0.0
  %3912 = vmatpush1.msra.mxu0 0.0
  %3913 = vmatprep.subr.mxu0 0.0
  %3914 = vmatpush1.msra.mxu0 0.0
  %3915 = vmatprep.mubr.f32.mxu0 0.0
  %v3916 = vand.u32 %v373, 4294901760
  %3917 = vmatmul.mubr.f32.gmra.mrb[0].mxu0 %v3916
  %v3918 = vpop.f32.mrb[0].mxu0
  %v3919 = vadd.f32 %v3832, %v3918
  %v3920 = vpop.f32.mrb[0].mxu0
  %v3921 = vadd.f32 %v3834, %v3920
  %3922 = vmatprep.mubr.f32.mxu0 0.0
  %v3923 = vand.u32 %v376, 4294901760
  %3924 = vmatmul.mubr.f32.gmra.mrb[0].mxu0 %v3923
  %v3925 = vpop.f32.mrb[0].mxu0
  %v3926 = vadd.f32 %v3839, %v3925
  %v3927 = vpop.f32.mrb[0].mxu0
  %v3928 = vadd.f32 %v3841, %v3927
  %3929 = vdwg.mxu0
  %v3930 = vand.u32 %v306, 4294901760
  %3931 = vmatprep.subr.mxu0 %v3930
  %v3932 = vand.u32 %v305, 4294901760
  %3933 = vmatpush1.msra.mxu0 %v3932
  %v3934 = vand.u32 %v322, 4294901760
  %3935 = vmatprep.subr.mxu0 %v3934
  %v3936 = vand.u32 %v321, 4294901760
  %3937 = vmatpush1.msra.mxu0 %v3936
  %v3938 = vand.u32 %v338, 4294901760
  %3939 = vmatprep.subr.mxu0 %v3938
  %v3940 = vand.u32 %v337, 4294901760
  %3941 = vmatpush1.msra.mxu0 %v3940
  %v3942 = vand.u32 %v354, 4294901760
  %3943 = vmatprep.subr.mxu0 %v3942
  %v3944 = vand.u32 %v353, 4294901760
  %3945 = vmatpush1.msra.mxu0 %v3944
  %3946 = vmatprep.subr.mxu0 0.0
  %3947 = vmatpush1.msra.mxu0 0.0
  %3948 = vmatprep.subr.mxu0 0.0
  %3949 = vmatpush1.msra.mxu0 0.0
  %3950 = vmatprep.subr.mxu0 0.0
  %3951 = vmatpush1.msra.mxu0 0.0
  %3952 = vmatprep.subr.mxu0 0.0
  %3953 = vmatpush1.msra.mxu0 0.0
  %3954 = vmatprep.subr.mxu0 0.0
  %3955 = vmatpush1.msra.mxu0 0.0
  %3956 = vmatprep.subr.mxu0 0.0
  %3957 = vmatpush1.msra.mxu0 0.0
  %3958 = vmatprep.subr.mxu0 0.0
  %3959 = vmatpush1.msra.mxu0 0.0
  %3960 = vmatprep.subr.mxu0 0.0
  %3961 = vmatpush1.msra.mxu0 0.0
  %3962 = vmatprep.subr.mxu0 0.0
  %3963 = vmatpush1.msra.mxu0 0.0
  %3964 = vmatprep.subr.mxu0 0.0
  %3965 = vmatpush1.msra.mxu0 0.0
  %3966 = vmatprep.subr.mxu0 0.0
  %3967 = vmatpush1.msra.mxu0 0.0
  %3968 = vmatprep.subr.mxu0 0.0
  %3969 = vmatpush1.msra.mxu0 0.0
  %3970 = vmatprep.subr.mxu0 0.0
  %3971 = vmatpush1.msra.mxu0 0.0
  %3972 = vmatprep.subr.mxu0 0.0
  %3973 = vmatpush1.msra.mxu0 0.0
  %3974 = vmatprep.subr.mxu0 0.0
  %3975 = vmatpush1.msra.mxu0 0.0
  %3976 = vmatprep.subr.mxu0 0.0
  %3977 = vmatpush1.msra.mxu0 0.0
  %3978 = vmatprep.subr.mxu0 0.0
  %3979 = vmatpush1.msra.mxu0 0.0
  %3980 = vmatprep.subr.mxu0 0.0
  %3981 = vmatpush1.msra.mxu0 0.0
  %3982 = vmatprep.subr.mxu0 0.0
  %3983 = vmatpush1.msra.mxu0 0.0
  %3984 = vmatprep.subr.mxu0 0.0
  %3985 = vmatpush1.msra.mxu0 0.0
  %3986 = vmatprep.subr.mxu0 0.0
  %3987 = vmatpush1.msra.mxu0 0.0
  %3988 = vmatprep.subr.mxu0 0.0
  %3989 = vmatpush1.msra.mxu0 0.0
  %3990 = vmatprep.subr.mxu0 0.0
  %3991 = vmatpush1.msra.mxu0 0.0
  %3992 = vmatprep.subr.mxu0 0.0
  %3993 = vmatpush1.msra.mxu0 0.0
  %3994 = vmatprep.subr.mxu0 0.0
  %3995 = vmatpush1.msra.mxu0 0.0
  %3996 = vmatprep.subr.mxu0 0.0
  %3997 = vmatpush1.msra.mxu0 0.0
  %3998 = vmatprep.subr.mxu0 0.0
  %3999 = vmatpush1.msra.mxu0 0.0
  %4000 = vmatprep.subr.mxu0 0.0
  %4001 = vmatpush1.msra.mxu0 0.0
  %4002 = vmatprep.mubr.f32.mxu0 0.0
  %v4003 = vand.u32 %v373, 4294901760
  %v4004 = vsub.f32 %v373, %v4003
  %v4005 = vand.u32 %v4004, 4294901760
  %v4006 = vsub.f32 %v4004, %v4005
  %v4007 = vand.u32 %v4006, 4294901760
  %4008 = vmatmul.mubr.f32.gmra.mrb[0].mxu0 %v4007
  %v4009 = vpop.f32.mrb[0].mxu0
  %v4010 = vadd.f32 %v364, %v4009
  %v4011 = vpop.f32.mrb[0].mxu0
  %v4012 = vadd.f32 %v364, %v4011
  %4013 = vmatprep.mubr.f32.mxu0 0.0
  %v4014 = vand.u32 %v376, 4294901760
  %v4015 = vsub.f32 %v376, %v4014
  %v4016 = vand.u32 %v4015, 4294901760
  %v4017 = vsub.f32 %v4015, %v4016
  %v4018 = vand.u32 %v4017, 4294901760
  %4019 = vmatmul.mubr.f32.gmra.mrb[0].mxu0 %v4018
  %v4020 = vpop.f32.mrb[0].mxu0
  %v4021 = vadd.f32 %v369, %v4020
  %v4022 = vpop.f32.mrb[0].mxu0
  %v4023 = vadd.f32 %v369, %v4022
  %4024 = vdwg.mxu0
  %v4025 = vand.u32 %v306, 4294901760
  %v4026 = vsub.f32 %v306, %v4025
  %v4027 = vand.u32 %v4026, 4294901760
  %v4028 = vsub.f32 %v4026, %v4027
  %v4029 = vand.u32 %v4028, 4294901760
  %4030 = vmatprep.subr.mxu0 %v4029
  %v4031 = vand.u32 %v305, 4294901760
  %v4032 = vsub.f32 %v305, %v4031
  %v4033 = vand.u32 %v4032, 4294901760
  %v4034 = vsub.f32 %v4032, %v4033
  %v4035 = vand.u32 %v4034, 4294901760
  %4036 = vmatpush1.msra.mxu0 %v4035
  %v4037 = vand.u32 %v322, 4294901760
  %v4038 = vsub.f32 %v322, %v4037
  %v4039 = vand.u32 %v4038, 4294901760
  %v4040 = vsub.f32 %v4038, %v4039
  %v4041 = vand.u32 %v4040, 4294901760
  %4042 = vmatprep.subr.mxu0 %v4041
  %v4043 = vand.u32 %v321, 4294901760
  %v4044 = vsub.f32 %v321, %v4043
  %v4045 = vand.u32 %v4044, 4294901760
  %v4046 = vsub.f32 %v4044, %v4045
  %v4047 = vand.u32 %v4046, 4294901760
  %4048 = vmatpush1.msra.mxu0 %v4047
  %v4049 = vand.u32 %v338, 4294901760
  %v4050 = vsub.f32 %v338, %v4049
  %v4051 = vand.u32 %v4050, 4294901760
  %v4052 = vsub.f32 %v4050, %v4051
  %v4053 = vand.u32 %v4052, 4294901760
  %4054 = vmatprep.subr.mxu0 %v4053
  %v4055 = vand.u32 %v337, 4294901760
  %v4056 = vsub.f32 %v337, %v4055
  %v4057 = vand.u32 %v4056, 4294901760
  %v4058 = vsub.f32 %v4056, %v4057
  %v4059 = vand.u32 %v4058, 4294901760
  %4060 = vmatpush1.msra.mxu0 %v4059
  %v4061 = vand.u32 %v354, 4294901760
  %v4062 = vsub.f32 %v354, %v4061
  %v4063 = vand.u32 %v4062, 4294901760
  %v4064 = vsub.f32 %v4062, %v4063
  %v4065 = vand.u32 %v4064, 4294901760
  %4066 = vmatprep.subr.mxu0 %v4065
  %v4067 = vand.u32 %v353, 4294901760
  %v4068 = vsub.f32 %v353, %v4067
  %v4069 = vand.u32 %v4068, 4294901760
  %v4070 = vsub.f32 %v4068, %v4069
  %v4071 = vand.u32 %v4070, 4294901760
  %4072 = vmatpush1.msra.mxu0 %v4071
  %4073 = vmatprep.subr.mxu0 0.0
  %4074 = vmatpush1.msra.mxu0 0.0
  %4075 = vmatprep.subr.mxu0 0.0
  %4076 = vmatpush1.msra.mxu0 0.0
  %4077 = vmatprep.subr.mxu0 0.0
  %4078 = vmatpush1.msra.mxu0 0.0
  %4079 = vmatprep.subr.mxu0 0.0
  %4080 = vmatpush1.msra.mxu0 0.0
  %4081 = vmatprep.subr.mxu0 0.0
  %4082 = vmatpush1.msra.mxu0 0.0
  %4083 = vmatprep.subr.mxu0 0.0
  %4084 = vmatpush1.msra.mxu0 0.0
  %4085 = vmatprep.subr.mxu0 0.0
  %4086 = vmatpush1.msra.mxu0 0.0
  %4087 = vmatprep.subr.mxu0 0.0
  %4088 = vmatpush1.msra.mxu0 0.0
  %4089 = vmatprep.subr.mxu0 0.0
  %4090 = vmatpush1.msra.mxu0 0.0
  %4091 = vmatprep.subr.mxu0 0.0
  %4092 = vmatpush1.msra.mxu0 0.0
  %4093 = vmatprep.subr.mxu0 0.0
  %4094 = vmatpush1.msra.mxu0 0.0
  %4095 = vmatprep.subr.mxu0 0.0
  %4096 = vmatpush1.msra.mxu0 0.0
  %4097 = vmatprep.subr.mxu0 0.0
  %4098 = vmatpush1.msra.mxu0 0.0
  %4099 = vmatprep.subr.mxu0 0.0
  %4100 = vmatpush1.msra.mxu0 0.0
  %4101 = vmatprep.subr.mxu0 0.0
  %4102 = vmatpush1.msra.mxu0 0.0
  %4103 = vmatprep.subr.mxu0 0.0
  %4104 = vmatpush1.msra.mxu0 0.0
  %4105 = vmatprep.subr.mxu0 0.0
  %4106 = vmatpush1.msra.mxu0 0.0
  %4107 = vmatprep.subr.mxu0 0.0
  %4108 = vmatpush1.msra.mxu0 0.0
  %4109 = vmatprep.subr.mxu0 0.0
  %4110 = vmatpush1.msra.mxu0 0.0
  %4111 = vmatprep.subr.mxu0 0.0
  %4112 = vmatpush1.msra.mxu0 0.0
  %4113 = vmatprep.subr.mxu0 0.0
  %4114 = vmatpush1.msra.mxu0 0.0
  %4115 = vmatprep.subr.mxu0 0.0
  %4116 = vmatpush1.msra.mxu0 0.0
  %4117 = vmatprep.subr.mxu0 0.0
  %4118 = vmatpush1.msra.mxu0 0.0
  %4119 = vmatprep.subr.mxu0 0.0
  %4120 = vmatpush1.msra.mxu0 0.0
  %4121 = vmatprep.subr.mxu0 0.0
  %4122 = vmatpush1.msra.mxu0 0.0
  %4123 = vmatprep.subr.mxu0 0.0
  %4124 = vmatpush1.msra.mxu0 0.0
  %4125 = vmatprep.subr.mxu0 0.0
  %4126 = vmatpush1.msra.mxu0 0.0
  %4127 = vmatprep.subr.mxu0 0.0
  %4128 = vmatpush1.msra.mxu0 0.0
  %4129 = vmatprep.mubr.f32.mxu0 0.0
  %v4130 = vand.u32 %v373, 4294901760
  %4131 = vmatmul.mubr.f32.gmra.mrb[0].mxu0 %v4130
  %v4132 = vpop.f32.mrb[0].mxu0
  %v4133 = vadd.f32 %v4010, %v4132
  %v4134 = vpop.f32.mrb[0].mxu0
  %v4135 = vadd.f32 %v4012, %v4134
  %4136 = vmatprep.mubr.f32.mxu0 0.0
  %v4137 = vand.u32 %v376, 4294901760
  %4138 = vmatmul.mubr.f32.gmra.mrb[0].mxu0 %v4137
  %v4139 = vpop.f32.mrb[0].mxu0
  %v4140 = vadd.f32 %v4021, %v4139
  %v4141 = vpop.f32.mrb[0].mxu0
  %v4142 = vadd.f32 %v4023, %v4141
  %4143 = vdwg.mxu0
  %v4144 = vand.u32 %v306, 4294901760
  %v4145 = vsub.f32 %v306, %v4144
  %4146 = vmatprep.subr.mxu0 %v4145
  %v4147 = vand.u32 %v305, 4294901760
  %v4148 = vsub.f32 %v305, %v4147
  %4149 = vmatpush1.msra.mxu0 %v4148
  %v4150 = vand.u32 %v322, 4294901760
  %v4151 = vsub.f32 %v322, %v4150
  %4152 = vmatprep.subr.mxu0 %v4151
  %v4153 = vand.u32 %v321, 4294901760
  %v4154 = vsub.f32 %v321, %v4153
  %4155 = vmatpush1.msra.mxu0 %v4154
  %v4156 = vand.u32 %v338, 4294901760
  %v4157 = vsub.f32 %v338, %v4156
  %4158 = vmatprep.subr.mxu0 %v4157
  %v4159 = vand.u32 %v337, 4294901760
  %v4160 = vsub.f32 %v337, %v4159
  %4161 = vmatpush1.msra.mxu0 %v4160
  %v4162 = vand.u32 %v354, 4294901760
  %v4163 = vsub.f32 %v354, %v4162
  %4164 = vmatprep.subr.mxu0 %v4163
  %v4165 = vand.u32 %v353, 4294901760
  %v4166 = vsub.f32 %v353, %v4165
  %4167 = vmatpush1.msra.mxu0 %v4166
  %4168 = vmatprep.subr.mxu0 0.0
  %4169 = vmatpush1.msra.mxu0 0.0
  %4170 = vmatprep.subr.mxu0 0.0
  %4171 = vmatpush1.msra.mxu0 0.0
  %4172 = vmatprep.subr.mxu0 0.0
  %4173 = vmatpush1.msra.mxu0 0.0
  %4174 = vmatprep.subr.mxu0 0.0
  %4175 = vmatpush1.msra.mxu0 0.0
  %4176 = vmatprep.subr.mxu0 0.0
  %4177 = vmatpush1.msra.mxu0 0.0
  %4178 = vmatprep.subr.mxu0 0.0
  %4179 = vmatpush1.msra.mxu0 0.0
  %4180 = vmatprep.subr.mxu0 0.0
  %4181 = vmatpush1.msra.mxu0 0.0
  %4182 = vmatprep.subr.mxu0 0.0
  %4183 = vmatpush1.msra.mxu0 0.0
  %4184 = vmatprep.subr.mxu0 0.0
  %4185 = vmatpush1.msra.mxu0 0.0
  %4186 = vmatprep.subr.mxu0 0.0
  %4187 = vmatpush1.msra.mxu0 0.0
  %4188 = vmatprep.subr.mxu0 0.0
  %4189 = vmatpush1.msra.mxu0 0.0
  %4190 = vmatprep.subr.mxu0 0.0
  %4191 = vmatpush1.msra.mxu0 0.0
  %4192 = vmatprep.subr.mxu0 0.0
  %4193 = vmatpush1.msra.mxu0 0.0
  %4194 = vmatprep.subr.mxu0 0.0
  %4195 = vmatpush1.msra.mxu0 0.0
  %4196 = vmatprep.subr.mxu0 0.0
  %4197 = vmatpush1.msra.mxu0 0.0
  %4198 = vmatprep.subr.mxu0 0.0
  %4199 = vmatpush1.msra.mxu0 0.0
  %4200 = vmatprep.subr.mxu0 0.0
  %4201 = vmatpush1.msra.mxu0 0.0
  %4202 = vmatprep.subr.mxu0 0.0
  %4203 = vmatpush1.msra.mxu0 0.0
  %4204 = vmatprep.subr.mxu0 0.0
  %4205 = vmatpush1.msra.mxu0 0.0
  %4206 = vmatprep.subr.mxu0 0.0
  %4207 = vmatpush1.msra.mxu0 0.0
  %4208 = vmatprep.subr.mxu0 0.0
  %4209 = vmatpush1.msra.mxu0 0.0
  %4210 = vmatprep.subr.mxu0 0.0
  %4211 = vmatpush1.msra.mxu0 0.0
  %4212 = vmatprep.subr.mxu0 0.0
  %4213 = vmatpush1.msra.mxu0 0.0
  %4214 = vmatprep.subr.mxu0 0.0
  %4215 = vmatpush1.msra.mxu0 0.0
  %4216 = vmatprep.subr.mxu0 0.0
  %4217 = vmatpush1.msra.mxu0 0.0
  %4218 = vmatprep.subr.mxu0 0.0
  %4219 = vmatpush1.msra.mxu0 0.0
  %4220 = vmatprep.subr.mxu0 0.0
  %4221 = vmatpush1.msra.mxu0 0.0
  %4222 = vmatprep.subr.mxu0 0.0
  %4223 = vmatpush1.msra.mxu0 0.0
  %4224 = vmatprep.mubr.f32.mxu0 0.0
  %v4225 = vand.u32 %v373, 4294901760
  %v4226 = vsub.f32 %v373, %v4225
  %4227 = vmatmul.mubr.f32.gmra.mrb[0].mxu0 %v4226
  %v4228 = vpop.f32.mrb[0].mxu0
  %v4229 = vadd.f32 %v4133, %v4228
  %v4230 = vpop.f32.mrb[0].mxu0
  %v4231 = vadd.f32 %v4135, %v4230
  %4232 = vmatprep.mubr.f32.mxu0 0.0
  %v4233 = vand.u32 %v376, 4294901760
  %v4234 = vsub.f32 %v376, %v4233
  %4235 = vmatmul.mubr.f32.gmra.mrb[0].mxu0 %v4234
  %v4236 = vpop.f32.mrb[0].mxu0
  %v4237 = vadd.f32 %v4140, %v4236
  %v4238 = vpop.f32.mrb[0].mxu0
  %v4239 = vadd.f32 %v4142, %v4238
  %4240 = vdwg.mxu0
  %v4241 = vand.u32 %v306, 4294901760
  %4242 = vmatprep.subr.mxu0 %v4241
  %v4243 = vand.u32 %v305, 4294901760
  %4244 = vmatpush1.msra.mxu0 %v4243
  %v4245 = vand.u32 %v322, 4294901760
  %4246 = vmatprep.subr.mxu0 %v4245
  %v4247 = vand.u32 %v321, 4294901760
  %4248 = vmatpush1.msra.mxu0 %v4247
  %v4249 = vand.u32 %v338, 4294901760
  %4250 = vmatprep.subr.mxu0 %v4249
  %v4251 = vand.u32 %v337, 4294901760
  %4252 = vmatpush1.msra.mxu0 %v4251
  %v4253 = vand.u32 %v354, 4294901760
  %4254 = vmatprep.subr.mxu0 %v4253
  %v4255 = vand.u32 %v353, 4294901760
  %4256 = vmatpush1.msra.mxu0 %v4255
  %4257 = vmatprep.subr.mxu0 0.0
  %4258 = vmatpush1.msra.mxu0 0.0
  %4259 = vmatprep.subr.mxu0 0.0
  %4260 = vmatpush1.msra.mxu0 0.0
  %4261 = vmatprep.subr.mxu0 0.0
  %4262 = vmatpush1.msra.mxu0 0.0
  %4263 = vmatprep.subr.mxu0 0.0
  %4264 = vmatpush1.msra.mxu0 0.0
  %4265 = vmatprep.subr.mxu0 0.0
  %4266 = vmatpush1.msra.mxu0 0.0
  %4267 = vmatprep.subr.mxu0 0.0
  %4268 = vmatpush1.msra.mxu0 0.0
  %4269 = vmatprep.subr.mxu0 0.0
  %4270 = vmatpush1.msra.mxu0 0.0
  %4271 = vmatprep.subr.mxu0 0.0
  %4272 = vmatpush1.msra.mxu0 0.0
  %4273 = vmatprep.subr.mxu0 0.0
  %4274 = vmatpush1.msra.mxu0 0.0
  %4275 = vmatprep.subr.mxu0 0.0
  %4276 = vmatpush1.msra.mxu0 0.0
  %4277 = vmatprep.subr.mxu0 0.0
  %4278 = vmatpush1.msra.mxu0 0.0
  %4279 = vmatprep.subr.mxu0 0.0
  %4280 = vmatpush1.msra.mxu0 0.0
  %4281 = vmatprep.subr.mxu0 0.0
  %4282 = vmatpush1.msra.mxu0 0.0
  %4283 = vmatprep.subr.mxu0 0.0
  %4284 = vmatpush1.msra.mxu0 0.0
  %4285 = vmatprep.subr.mxu0 0.0
  %4286 = vmatpush1.msra.mxu0 0.0
  %4287 = vmatprep.subr.mxu0 0.0
  %4288 = vmatpush1.msra.mxu0 0.0
  %4289 = vmatprep.subr.mxu0 0.0
  %4290 = vmatpush1.msra.mxu0 0.0
  %4291 = vmatprep.subr.mxu0 0.0
  %4292 = vmatpush1.msra.mxu0 0.0
  %4293 = vmatprep.subr.mxu0 0.0
  %4294 = vmatpush1.msra.mxu0 0.0
  %4295 = vmatprep.subr.mxu0 0.0
  %4296 = vmatpush1.msra.mxu0 0.0
  %4297 = vmatprep.subr.mxu0 0.0
  %4298 = vmatpush1.msra.mxu0 0.0
  %4299 = vmatprep.subr.mxu0 0.0
  %4300 = vmatpush1.msra.mxu0 0.0
  %4301 = vmatprep.subr.mxu0 0.0
  %4302 = vmatpush1.msra.mxu0 0.0
  %4303 = vmatprep.subr.mxu0 0.0
  %4304 = vmatpush1.msra.mxu0 0.0
  %4305 = vmatprep.subr.mxu0 0.0
  %4306 = vmatpush1.msra.mxu0 0.0
  %4307 = vmatprep.subr.mxu0 0.0
  %4308 = vmatpush1.msra.mxu0 0.0
  %4309 = vmatprep.subr.mxu0 0.0
  %4310 = vmatpush1.msra.mxu0 0.0
  %4311 = vmatprep.subr.mxu0 0.0
  %4312 = vmatpush1.msra.mxu0 0.0
  %4313 = vmatprep.mubr.f32.mxu0 0.0
  %v4314 = vand.u32 %v373, 4294901760
  %v4315 = vsub.f32 %v373, %v4314
  %v4316 = vand.u32 %v4315, 4294901760
  %4317 = vmatmul.mubr.f32.gmra.mrb[0].mxu0 %v4316
  %v4318 = vpop.f32.mrb[0].mxu0
  %v4319 = vadd.f32 %v4229, %v4318
  %v4320 = vpop.f32.mrb[0].mxu0
  %v4321 = vadd.f32 %v4231, %v4320
  %4322 = vmatprep.mubr.f32.mxu0 0.0
  %v4323 = vand.u32 %v376, 4294901760
  %v4324 = vsub.f32 %v376, %v4323
  %v4325 = vand.u32 %v4324, 4294901760
  %4326 = vmatmul.mubr.f32.gmra.mrb[0].mxu0 %v4325
  %v4327 = vpop.f32.mrb[0].mxu0
  %v4328 = vadd.f32 %v4237, %v4327
  %v4329 = vpop.f32.mrb[0].mxu0
  %v4330 = vadd.f32 %v4239, %v4329
  %4331 = vdwg.mxu0
  %v4332 = vand.u32 %v306, 4294901760
  %v4333 = vsub.f32 %v306, %v4332
  %v4334 = vand.u32 %v4333, 4294901760
  %4335 = vmatprep.subr.mxu0 %v4334
  %v4336 = vand.u32 %v305, 4294901760
  %v4337 = vsub.f32 %v305, %v4336
  %v4338 = vand.u32 %v4337, 4294901760
  %4339 = vmatpush1.msra.mxu0 %v4338
  %v4340 = vand.u32 %v322, 4294901760
  %v4341 = vsub.f32 %v322, %v4340
  %v4342 = vand.u32 %v4341, 4294901760
  %4343 = vmatprep.subr.mxu0 %v4342
  %v4344 = vand.u32 %v321, 4294901760
  %v4345 = vsub.f32 %v321, %v4344
  %v4346 = vand.u32 %v4345, 4294901760
  %4347 = vmatpush1.msra.mxu0 %v4346
  %v4348 = vand.u32 %v338, 4294901760
  %v4349 = vsub.f32 %v338, %v4348
  %v4350 = vand.u32 %v4349, 4294901760
  %4351 = vmatprep.subr.mxu0 %v4350
  %v4352 = vand.u32 %v337, 4294901760
  %v4353 = vsub.f32 %v337, %v4352
  %v4354 = vand.u32 %v4353, 4294901760
  %4355 = vmatpush1.msra.mxu0 %v4354
  %v4356 = vand.u32 %v354, 4294901760
  %v4357 = vsub.f32 %v354, %v4356
  %v4358 = vand.u32 %v4357, 4294901760
  %4359 = vmatprep.subr.mxu0 %v4358
  %v4360 = vand.u32 %v353, 4294901760
  %v4361 = vsub.f32 %v353, %v4360
  %v4362 = vand.u32 %v4361, 4294901760
  %4363 = vmatpush1.msra.mxu0 %v4362
  %4364 = vmatprep.subr.mxu0 0.0
  %4365 = vmatpush1.msra.mxu0 0.0
  %4366 = vmatprep.subr.mxu0 0.0
  %4367 = vmatpush1.msra.mxu0 0.0
  %4368 = vmatprep.subr.mxu0 0.0
  %4369 = vmatpush1.msra.mxu0 0.0
  %4370 = vmatprep.subr.mxu0 0.0
  %4371 = vmatpush1.msra.mxu0 0.0
  %4372 = vmatprep.subr.mxu0 0.0
  %4373 = vmatpush1.msra.mxu0 0.0
  %4374 = vmatprep.subr.mxu0 0.0
  %4375 = vmatpush1.msra.mxu0 0.0
  %4376 = vmatprep.subr.mxu0 0.0
  %4377 = vmatpush1.msra.mxu0 0.0
  %4378 = vmatprep.subr.mxu0 0.0
  %4379 = vmatpush1.msra.mxu0 0.0
  %4380 = vmatprep.subr.mxu0 0.0
  %4381 = vmatpush1.msra.mxu0 0.0
  %4382 = vmatprep.subr.mxu0 0.0
  %4383 = vmatpush1.msra.mxu0 0.0
  %4384 = vmatprep.subr.mxu0 0.0
  %4385 = vmatpush1.msra.mxu0 0.0
  %4386 = vmatprep.subr.mxu0 0.0
  %4387 = vmatpush1.msra.mxu0 0.0
  %4388 = vmatprep.subr.mxu0 0.0
  %4389 = vmatpush1.msra.mxu0 0.0
  %4390 = vmatprep.subr.mxu0 0.0
  %4391 = vmatpush1.msra.mxu0 0.0
  %4392 = vmatprep.subr.mxu0 0.0
  %4393 = vmatpush1.msra.mxu0 0.0
  %4394 = vmatprep.subr.mxu0 0.0
  %4395 = vmatpush1.msra.mxu0 0.0
  %4396 = vmatprep.subr.mxu0 0.0
  %4397 = vmatpush1.msra.mxu0 0.0
  %4398 = vmatprep.subr.mxu0 0.0
  %4399 = vmatpush1.msra.mxu0 0.0
  %4400 = vmatprep.subr.mxu0 0.0
  %4401 = vmatpush1.msra.mxu0 0.0
  %4402 = vmatprep.subr.mxu0 0.0
  %4403 = vmatpush1.msra.mxu0 0.0
  %4404 = vmatprep.subr.mxu0 0.0
  %4405 = vmatpush1.msra.mxu0 0.0
  %4406 = vmatprep.subr.mxu0 0.0
  %4407 = vmatpush1.msra.mxu0 0.0
  %4408 = vmatprep.subr.mxu0 0.0
  %4409 = vmatpush1.msra.mxu0 0.0
  %4410 = vmatprep.subr.mxu0 0.0
  %4411 = vmatpush1.msra.mxu0 0.0
  %4412 = vmatprep.subr.mxu0 0.0
  %4413 = vmatpush1.msra.mxu0 0.0
  %4414 = vmatprep.subr.mxu0 0.0
  %4415 = vmatpush1.msra.mxu0 0.0
  %4416 = vmatprep.subr.mxu0 0.0
  %4417 = vmatpush1.msra.mxu0 0.0
  %4418 = vmatprep.subr.mxu0 0.0
  %4419 = vmatpush1.msra.mxu0 0.0
  %4420 = vmatprep.mubr.f32.mxu0 0.0
  %v4421 = vand.u32 %v373, 4294901760
  %4422 = vmatmul.mubr.f32.gmra.mrb[0].mxu0 %v4421
  %v4423 = vpop.f32.mrb[0].mxu0
  %v4424 = vadd.f32 %v4319, %v4423
  %v4425 = vpop.f32.mrb[0].mxu0
  %v4426 = vadd.f32 %v4321, %v4425
  %4427 = vmatprep.mubr.f32.mxu0 0.0
  %v4428 = vand.u32 %v376, 4294901760
  %4429 = vmatmul.mubr.f32.gmra.mrb[0].mxu0 %v4428
  %v4430 = vpop.f32.mrb[0].mxu0
  %v4431 = vadd.f32 %v4328, %v4430
  %v4432 = vpop.f32.mrb[0].mxu0
  %v4433 = vadd.f32 %v4330, %v4432
  %4434 = vdwg.mxu0
  %v4435 = vand.u32 %v306, 4294901760
  %4436 = vmatprep.subr.mxu0 %v4435
  %v4437 = vand.u32 %v305, 4294901760
  %4438 = vmatpush1.msra.mxu0 %v4437
  %v4439 = vand.u32 %v322, 4294901760
  %4440 = vmatprep.subr.mxu0 %v4439
  %v4441 = vand.u32 %v321, 4294901760
  %4442 = vmatpush1.msra.mxu0 %v4441
  %v4443 = vand.u32 %v338, 4294901760
  %4444 = vmatprep.subr.mxu0 %v4443
  %v4445 = vand.u32 %v337, 4294901760
  %4446 = vmatpush1.msra.mxu0 %v4445
  %v4447 = vand.u32 %v354, 4294901760
  %4448 = vmatprep.subr.mxu0 %v4447
  %v4449 = vand.u32 %v353, 4294901760
  %4450 = vmatpush1.msra.mxu0 %v4449
  %4451 = vmatprep.subr.mxu0 0.0
  %4452 = vmatpush1.msra.mxu0 0.0
  %4453 = vmatprep.subr.mxu0 0.0
  %4454 = vmatpush1.msra.mxu0 0.0
  %4455 = vmatprep.subr.mxu0 0.0
  %4456 = vmatpush1.msra.mxu0 0.0
  %4457 = vmatprep.subr.mxu0 0.0
  %4458 = vmatpush1.msra.mxu0 0.0
  %4459 = vmatprep.subr.mxu0 0.0
  %4460 = vmatpush1.msra.mxu0 0.0
  %4461 = vmatprep.subr.mxu0 0.0
  %4462 = vmatpush1.msra.mxu0 0.0
  %4463 = vmatprep.subr.mxu0 0.0
  %4464 = vmatpush1.msra.mxu0 0.0
  %4465 = vmatprep.subr.mxu0 0.0
  %4466 = vmatpush1.msra.mxu0 0.0
  %4467 = vmatprep.subr.mxu0 0.0
  %4468 = vmatpush1.msra.mxu0 0.0
  %4469 = vmatprep.subr.mxu0 0.0
  %4470 = vmatpush1.msra.mxu0 0.0
  %4471 = vmatprep.subr.mxu0 0.0
  %4472 = vmatpush1.msra.mxu0 0.0
  %4473 = vmatprep.subr.mxu0 0.0
  %4474 = vmatpush1.msra.mxu0 0.0
  %4475 = vmatprep.subr.mxu0 0.0
  %4476 = vmatpush1.msra.mxu0 0.0
  %4477 = vmatprep.subr.mxu0 0.0
  %4478 = vmatpush1.msra.mxu0 0.0
  %4479 = vmatprep.subr.mxu0 0.0
  %4480 = vmatpush1.msra.mxu0 0.0
  %4481 = vmatprep.subr.mxu0 0.0
  %4482 = vmatpush1.msra.mxu0 0.0
  %4483 = vmatprep.subr.mxu0 0.0
  %4484 = vmatpush1.msra.mxu0 0.0
  %4485 = vmatprep.subr.mxu0 0.0
  %4486 = vmatpush1.msra.mxu0 0.0
  %4487 = vmatprep.subr.mxu0 0.0
  %4488 = vmatpush1.msra.mxu0 0.0
  %4489 = vmatprep.subr.mxu0 0.0
  %4490 = vmatpush1.msra.mxu0 0.0
  %4491 = vmatprep.subr.mxu0 0.0
  %4492 = vmatpush1.msra.mxu0 0.0
  %4493 = vmatprep.subr.mxu0 0.0
  %4494 = vmatpush1.msra.mxu0 0.0
  %4495 = vmatprep.subr.mxu0 0.0
  %4496 = vmatpush1.msra.mxu0 0.0
  %4497 = vmatprep.subr.mxu0 0.0
  %4498 = vmatpush1.msra.mxu0 0.0
  %4499 = vmatprep.subr.mxu0 0.0
  %4500 = vmatpush1.msra.mxu0 0.0
  %4501 = vmatprep.subr.mxu0 0.0
  %4502 = vmatpush1.msra.mxu0 0.0
  %4503 = vmatprep.subr.mxu0 0.0
  %4504 = vmatpush1.msra.mxu0 0.0
  %4505 = vmatprep.subr.mxu0 0.0
  %4506 = vmatpush1.msra.mxu0 0.0
  %4507 = vmatprep.mubr.f32.mxu0 0.0
  %v4508 = vand.u32 %v373, 4294901760
  %4509 = vmatmul.mubr.f32.gmra.mrb[0].mxu0 %v4508
  %v4510 = vpop.f32.mrb[0].mxu0
  %v4511 = vadd.f32 %v4424, %v4510
  %v4512 = vpop.f32.mrb[0].mxu0
  %v4513 = vadd.f32 %v4426, %v4512
  %4514 = vmatprep.mubr.f32.mxu0 0.0
  %v4515 = vand.u32 %v376, 4294901760
  %4516 = vmatmul.mubr.f32.gmra.mrb[0].mxu0 %v4515
  %v4517 = vpop.f32.mrb[0].mxu0
  %v4518 = vadd.f32 %v4431, %v4517
  %v4519 = vpop.f32.mrb[0].mxu0
  %v4520 = vadd.f32 %v4433, %v4519
  %4521 = vdwg.mxu0
  %v4522 = vand.u32 %v308, 4294901760
  %4523 = vmatprep.subr.mxu0 %v4522
  %v4524 = vand.u32 %v307, 4294901760
  %4525 = vmatpush1.msra.mxu0 %v4524
  %v4526 = vand.u32 %v324, 4294901760
  %4527 = vmatprep.subr.mxu0 %v4526
  %v4528 = vand.u32 %v323, 4294901760
  %4529 = vmatpush1.msra.mxu0 %v4528
  %v4530 = vand.u32 %v340, 4294901760
  %4531 = vmatprep.subr.mxu0 %v4530
  %v4532 = vand.u32 %v339, 4294901760
  %4533 = vmatpush1.msra.mxu0 %v4532
  %v4534 = vand.u32 %v356, 4294901760
  %4535 = vmatprep.subr.mxu0 %v4534
  %v4536 = vand.u32 %v355, 4294901760
  %4537 = vmatpush1.msra.mxu0 %v4536
  %4538 = vmatprep.subr.mxu0 0.0
  %4539 = vmatpush1.msra.mxu0 0.0
  %4540 = vmatprep.subr.mxu0 0.0
  %4541 = vmatpush1.msra.mxu0 0.0
  %4542 = vmatprep.subr.mxu0 0.0
  %4543 = vmatpush1.msra.mxu0 0.0
  %4544 = vmatprep.subr.mxu0 0.0
  %4545 = vmatpush1.msra.mxu0 0.0
  %4546 = vmatprep.subr.mxu0 0.0
  %4547 = vmatpush1.msra.mxu0 0.0
  %4548 = vmatprep.subr.mxu0 0.0
  %4549 = vmatpush1.msra.mxu0 0.0
  %4550 = vmatprep.subr.mxu0 0.0
  %4551 = vmatpush1.msra.mxu0 0.0
  %4552 = vmatprep.subr.mxu0 0.0
  %4553 = vmatpush1.msra.mxu0 0.0
  %4554 = vmatprep.subr.mxu0 0.0
  %4555 = vmatpush1.msra.mxu0 0.0
  %4556 = vmatprep.subr.mxu0 0.0
  %4557 = vmatpush1.msra.mxu0 0.0
  %4558 = vmatprep.subr.mxu0 0.0
  %4559 = vmatpush1.msra.mxu0 0.0
  %4560 = vmatprep.subr.mxu0 0.0
  %4561 = vmatpush1.msra.mxu0 0.0
  %4562 = vmatprep.subr.mxu0 0.0
  %4563 = vmatpush1.msra.mxu0 0.0
  %4564 = vmatprep.subr.mxu0 0.0
  %4565 = vmatpush1.msra.mxu0 0.0
  %4566 = vmatprep.subr.mxu0 0.0
  %4567 = vmatpush1.msra.mxu0 0.0
  %4568 = vmatprep.subr.mxu0 0.0
  %4569 = vmatpush1.msra.mxu0 0.0
  %4570 = vmatprep.subr.mxu0 0.0
  %4571 = vmatpush1.msra.mxu0 0.0
  %4572 = vmatprep.subr.mxu0 0.0
  %4573 = vmatpush1.msra.mxu0 0.0
  %4574 = vmatprep.subr.mxu0 0.0
  %4575 = vmatpush1.msra.mxu0 0.0
  %4576 = vmatprep.subr.mxu0 0.0
  %4577 = vmatpush1.msra.mxu0 0.0
  %4578 = vmatprep.subr.mxu0 0.0
  %4579 = vmatpush1.msra.mxu0 0.0
  %4580 = vmatprep.subr.mxu0 0.0
  %4581 = vmatpush1.msra.mxu0 0.0
  %4582 = vmatprep.subr.mxu0 0.0
  %4583 = vmatpush1.msra.mxu0 0.0
  %4584 = vmatprep.subr.mxu0 0.0
  %4585 = vmatpush1.msra.mxu0 0.0
  %4586 = vmatprep.subr.mxu0 0.0
  %4587 = vmatpush1.msra.mxu0 0.0
  %4588 = vmatprep.subr.mxu0 0.0
  %4589 = vmatpush1.msra.mxu0 0.0
  %4590 = vmatprep.subr.mxu0 0.0
  %4591 = vmatpush1.msra.mxu0 0.0
  %4592 = vmatprep.subr.mxu0 0.0
  %4593 = vmatpush1.msra.mxu0 0.0
  %4594 = vmatprep.mubr.f32.mxu0 0.0
  %v4595 = vand.u32 %v373, 4294901760
  %v4596 = vsub.f32 %v373, %v4595
  %v4597 = vand.u32 %v4596, 4294901760
  %v4598 = vsub.f32 %v4596, %v4597
  %v4599 = vand.u32 %v4598, 4294901760
  %4600 = vmatmul.mubr.f32.gmra.mrb[0].mxu0 %v4599
  %v4601 = vpop.f32.mrb[0].mxu0
  %v4602 = vadd.f32 %v364, %v4601
  %v4603 = vpop.f32.mrb[0].mxu0
  %v4604 = vadd.f32 %v364, %v4603
  %4605 = vmatprep.mubr.f32.mxu0 0.0
  %v4606 = vand.u32 %v376, 4294901760
  %v4607 = vsub.f32 %v376, %v4606
  %v4608 = vand.u32 %v4607, 4294901760
  %v4609 = vsub.f32 %v4607, %v4608
  %v4610 = vand.u32 %v4609, 4294901760
  %4611 = vmatmul.mubr.f32.gmra.mrb[0].mxu0 %v4610
  %v4612 = vpop.f32.mrb[0].mxu0
  %v4613 = vadd.f32 %v369, %v4612
  %v4614 = vpop.f32.mrb[0].mxu0
  %v4615 = vadd.f32 %v369, %v4614
  %4616 = vdwg.mxu0
  %v4617 = vand.u32 %v308, 4294901760
  %v4618 = vsub.f32 %v308, %v4617
  %v4619 = vand.u32 %v4618, 4294901760
  %v4620 = vsub.f32 %v4618, %v4619
  %v4621 = vand.u32 %v4620, 4294901760
  %4622 = vmatprep.subr.mxu0 %v4621
  %v4623 = vand.u32 %v307, 4294901760
  %v4624 = vsub.f32 %v307, %v4623
  %v4625 = vand.u32 %v4624, 4294901760
  %v4626 = vsub.f32 %v4624, %v4625
  %v4627 = vand.u32 %v4626, 4294901760
  %4628 = vmatpush1.msra.mxu0 %v4627
  %v4629 = vand.u32 %v324, 4294901760
  %v4630 = vsub.f32 %v324, %v4629
  %v4631 = vand.u32 %v4630, 4294901760
  %v4632 = vsub.f32 %v4630, %v4631
  %v4633 = vand.u32 %v4632, 4294901760
  %4634 = vmatprep.subr.mxu0 %v4633
  %v4635 = vand.u32 %v323, 4294901760
  %v4636 = vsub.f32 %v323, %v4635
  %v4637 = vand.u32 %v4636, 4294901760
  %v4638 = vsub.f32 %v4636, %v4637
  %v4639 = vand.u32 %v4638, 4294901760
  %4640 = vmatpush1.msra.mxu0 %v4639
  %v4641 = vand.u32 %v340, 4294901760
  %v4642 = vsub.f32 %v340, %v4641
  %v4643 = vand.u32 %v4642, 4294901760
  %v4644 = vsub.f32 %v4642, %v4643
  %v4645 = vand.u32 %v4644, 4294901760
  %4646 = vmatprep.subr.mxu0 %v4645
  %v4647 = vand.u32 %v339, 4294901760
  %v4648 = vsub.f32 %v339, %v4647
  %v4649 = vand.u32 %v4648, 4294901760
  %v4650 = vsub.f32 %v4648, %v4649
  %v4651 = vand.u32 %v4650, 4294901760
  %4652 = vmatpush1.msra.mxu0 %v4651
  %v4653 = vand.u32 %v356, 4294901760
  %v4654 = vsub.f32 %v356, %v4653
  %v4655 = vand.u32 %v4654, 4294901760
  %v4656 = vsub.f32 %v4654, %v4655
  %v4657 = vand.u32 %v4656, 4294901760
  %4658 = vmatprep.subr.mxu0 %v4657
  %v4659 = vand.u32 %v355, 4294901760
  %v4660 = vsub.f32 %v355, %v4659
  %v4661 = vand.u32 %v4660, 4294901760
  %v4662 = vsub.f32 %v4660, %v4661
  %v4663 = vand.u32 %v4662, 4294901760
  %4664 = vmatpush1.msra.mxu0 %v4663
  %4665 = vmatprep.subr.mxu0 0.0
  %4666 = vmatpush1.msra.mxu0 0.0
  %4667 = vmatprep.subr.mxu0 0.0
  %4668 = vmatpush1.msra.mxu0 0.0
  %4669 = vmatprep.subr.mxu0 0.0
  %4670 = vmatpush1.msra.mxu0 0.0
  %4671 = vmatprep.subr.mxu0 0.0
  %4672 = vmatpush1.msra.mxu0 0.0
  %4673 = vmatprep.subr.mxu0 0.0
  %4674 = vmatpush1.msra.mxu0 0.0
  %4675 = vmatprep.subr.mxu0 0.0
  %4676 = vmatpush1.msra.mxu0 0.0
  %4677 = vmatprep.subr.mxu0 0.0
  %4678 = vmatpush1.msra.mxu0 0.0
  %4679 = vmatprep.subr.mxu0 0.0
  %4680 = vmatpush1.msra.mxu0 0.0
  %4681 = vmatprep.subr.mxu0 0.0
  %4682 = vmatpush1.msra.mxu0 0.0
  %4683 = vmatprep.subr.mxu0 0.0
  %4684 = vmatpush1.msra.mxu0 0.0
  %4685 = vmatprep.subr.mxu0 0.0
  %4686 = vmatpush1.msra.mxu0 0.0
  %4687 = vmatprep.subr.mxu0 0.0
  %4688 = vmatpush1.msra.mxu0 0.0
  %4689 = vmatprep.subr.mxu0 0.0
  %4690 = vmatpush1.msra.mxu0 0.0
  %4691 = vmatprep.subr.mxu0 0.0
  %4692 = vmatpush1.msra.mxu0 0.0
  %4693 = vmatprep.subr.mxu0 0.0
  %4694 = vmatpush1.msra.mxu0 0.0
  %4695 = vmatprep.subr.mxu0 0.0
  %4696 = vmatpush1.msra.mxu0 0.0
  %4697 = vmatprep.subr.mxu0 0.0
  %4698 = vmatpush1.msra.mxu0 0.0
  %4699 = vmatprep.subr.mxu0 0.0
  %4700 = vmatpush1.msra.mxu0 0.0
  %4701 = vmatprep.subr.mxu0 0.0
  %4702 = vmatpush1.msra.mxu0 0.0
  %4703 = vmatprep.subr.mxu0 0.0
  %4704 = vmatpush1.msra.mxu0 0.0
  %4705 = vmatprep.subr.mxu0 0.0
  %4706 = vmatpush1.msra.mxu0 0.0
  %4707 = vmatprep.subr.mxu0 0.0
  %4708 = vmatpush1.msra.mxu0 0.0
  %4709 = vmatprep.subr.mxu0 0.0
  %4710 = vmatpush1.msra.mxu0 0.0
  %4711 = vmatprep.subr.mxu0 0.0
  %4712 = vmatpush1.msra.mxu0 0.0
  %4713 = vmatprep.subr.mxu0 0.0
  %4714 = vmatpush1.msra.mxu0 0.0
  %4715 = vmatprep.subr.mxu0 0.0
  %4716 = vmatpush1.msra.mxu0 0.0
  %4717 = vmatprep.subr.mxu0 0.0
  %4718 = vmatpush1.msra.mxu0 0.0
  %4719 = vmatprep.subr.mxu0 0.0
  %4720 = vmatpush1.msra.mxu0 0.0
  %4721 = vmatprep.mubr.f32.mxu0 0.0
  %v4722 = vand.u32 %v373, 4294901760
  %4723 = vmatmul.mubr.f32.gmra.mrb[0].mxu0 %v4722
  %v4724 = vpop.f32.mrb[0].mxu0
  %v4725 = vadd.f32 %v4602, %v4724
  %v4726 = vpop.f32.mrb[0].mxu0
  %v4727 = vadd.f32 %v4604, %v4726
  %4728 = vmatprep.mubr.f32.mxu0 0.0
  %v4729 = vand.u32 %v376, 4294901760
  %4730 = vmatmul.mubr.f32.gmra.mrb[0].mxu0 %v4729
  %v4731 = vpop.f32.mrb[0].mxu0
  %v4732 = vadd.f32 %v4613, %v4731
  %v4733 = vpop.f32.mrb[0].mxu0
  %v4734 = vadd.f32 %v4615, %v4733
  %4735 = vdwg.mxu0
  %v4736 = vand.u32 %v308, 4294901760
  %v4737 = vsub.f32 %v308, %v4736
  %4738 = vmatprep.subr.mxu0 %v4737
  %v4739 = vand.u32 %v307, 4294901760
  %v4740 = vsub.f32 %v307, %v4739
  %4741 = vmatpush1.msra.mxu0 %v4740
  %v4742 = vand.u32 %v324, 4294901760
  %v4743 = vsub.f32 %v324, %v4742
  %4744 = vmatprep.subr.mxu0 %v4743
  %v4745 = vand.u32 %v323, 4294901760
  %v4746 = vsub.f32 %v323, %v4745
  %4747 = vmatpush1.msra.mxu0 %v4746
  %v4748 = vand.u32 %v340, 4294901760
  %v4749 = vsub.f32 %v340, %v4748
  %4750 = vmatprep.subr.mxu0 %v4749
  %v4751 = vand.u32 %v339, 4294901760
  %v4752 = vsub.f32 %v339, %v4751
  %4753 = vmatpush1.msra.mxu0 %v4752
  %v4754 = vand.u32 %v356, 4294901760
  %v4755 = vsub.f32 %v356, %v4754
  %4756 = vmatprep.subr.mxu0 %v4755
  %v4757 = vand.u32 %v355, 4294901760
  %v4758 = vsub.f32 %v355, %v4757
  %4759 = vmatpush1.msra.mxu0 %v4758
  %4760 = vmatprep.subr.mxu0 0.0
  %4761 = vmatpush1.msra.mxu0 0.0
  %4762 = vmatprep.subr.mxu0 0.0
  %4763 = vmatpush1.msra.mxu0 0.0
  %4764 = vmatprep.subr.mxu0 0.0
  %4765 = vmatpush1.msra.mxu0 0.0
  %4766 = vmatprep.subr.mxu0 0.0
  %4767 = vmatpush1.msra.mxu0 0.0
  %4768 = vmatprep.subr.mxu0 0.0
  %4769 = vmatpush1.msra.mxu0 0.0
  %4770 = vmatprep.subr.mxu0 0.0
  %4771 = vmatpush1.msra.mxu0 0.0
  %4772 = vmatprep.subr.mxu0 0.0
  %4773 = vmatpush1.msra.mxu0 0.0
  %4774 = vmatprep.subr.mxu0 0.0
  %4775 = vmatpush1.msra.mxu0 0.0
  %4776 = vmatprep.subr.mxu0 0.0
  %4777 = vmatpush1.msra.mxu0 0.0
  %4778 = vmatprep.subr.mxu0 0.0
  %4779 = vmatpush1.msra.mxu0 0.0
  %4780 = vmatprep.subr.mxu0 0.0
  %4781 = vmatpush1.msra.mxu0 0.0
  %4782 = vmatprep.subr.mxu0 0.0
  %4783 = vmatpush1.msra.mxu0 0.0
  %4784 = vmatprep.subr.mxu0 0.0
  %4785 = vmatpush1.msra.mxu0 0.0
  %4786 = vmatprep.subr.mxu0 0.0
  %4787 = vmatpush1.msra.mxu0 0.0
  %4788 = vmatprep.subr.mxu0 0.0
  %4789 = vmatpush1.msra.mxu0 0.0
  %4790 = vmatprep.subr.mxu0 0.0
  %4791 = vmatpush1.msra.mxu0 0.0
  %4792 = vmatprep.subr.mxu0 0.0
  %4793 = vmatpush1.msra.mxu0 0.0
  %4794 = vmatprep.subr.mxu0 0.0
  %4795 = vmatpush1.msra.mxu0 0.0
  %4796 = vmatprep.subr.mxu0 0.0
  %4797 = vmatpush1.msra.mxu0 0.0
  %4798 = vmatprep.subr.mxu0 0.0
  %4799 = vmatpush1.msra.mxu0 0.0
  %4800 = vmatprep.subr.mxu0 0.0
  %4801 = vmatpush1.msra.mxu0 0.0
  %4802 = vmatprep.subr.mxu0 0.0
  %4803 = vmatpush1.msra.mxu0 0.0
  %4804 = vmatprep.subr.mxu0 0.0
  %4805 = vmatpush1.msra.mxu0 0.0
  %4806 = vmatprep.subr.mxu0 0.0
  %4807 = vmatpush1.msra.mxu0 0.0
  %4808 = vmatprep.subr.mxu0 0.0
  %4809 = vmatpush1.msra.mxu0 0.0
  %4810 = vmatprep.subr.mxu0 0.0
  %4811 = vmatpush1.msra.mxu0 0.0
  %4812 = vmatprep.subr.mxu0 0.0
  %4813 = vmatpush1.msra.mxu0 0.0
  %4814 = vmatprep.subr.mxu0 0.0
  %4815 = vmatpush1.msra.mxu0 0.0
  %4816 = vmatprep.mubr.f32.mxu0 0.0
  %v4817 = vand.u32 %v373, 4294901760
  %v4818 = vsub.f32 %v373, %v4817
  %4819 = vmatmul.mubr.f32.gmra.mrb[0].mxu0 %v4818
  %v4820 = vpop.f32.mrb[0].mxu0
  %v4821 = vadd.f32 %v4725, %v4820
  %v4822 = vpop.f32.mrb[0].mxu0
  %v4823 = vadd.f32 %v4727, %v4822
  %4824 = vmatprep.mubr.f32.mxu0 0.0
  %v4825 = vand.u32 %v376, 4294901760
  %v4826 = vsub.f32 %v376, %v4825
  %4827 = vmatmul.mubr.f32.gmra.mrb[0].mxu0 %v4826
  %v4828 = vpop.f32.mrb[0].mxu0
  %v4829 = vadd.f32 %v4732, %v4828
  %v4830 = vpop.f32.mrb[0].mxu0
  %v4831 = vadd.f32 %v4734, %v4830
  %4832 = vdwg.mxu0
  %v4833 = vand.u32 %v308, 4294901760
  %4834 = vmatprep.subr.mxu0 %v4833
  %v4835 = vand.u32 %v307, 4294901760
  %4836 = vmatpush1.msra.mxu0 %v4835
  %v4837 = vand.u32 %v324, 4294901760
  %4838 = vmatprep.subr.mxu0 %v4837
  %v4839 = vand.u32 %v323, 4294901760
  %4840 = vmatpush1.msra.mxu0 %v4839
  %v4841 = vand.u32 %v340, 4294901760
  %4842 = vmatprep.subr.mxu0 %v4841
  %v4843 = vand.u32 %v339, 4294901760
  %4844 = vmatpush1.msra.mxu0 %v4843
  %v4845 = vand.u32 %v356, 4294901760
  %4846 = vmatprep.subr.mxu0 %v4845
  %v4847 = vand.u32 %v355, 4294901760
  %4848 = vmatpush1.msra.mxu0 %v4847
  %4849 = vmatprep.subr.mxu0 0.0
  %4850 = vmatpush1.msra.mxu0 0.0
  %4851 = vmatprep.subr.mxu0 0.0
  %4852 = vmatpush1.msra.mxu0 0.0
  %4853 = vmatprep.subr.mxu0 0.0
  %4854 = vmatpush1.msra.mxu0 0.0
  %4855 = vmatprep.subr.mxu0 0.0
  %4856 = vmatpush1.msra.mxu0 0.0
  %4857 = vmatprep.subr.mxu0 0.0
  %4858 = vmatpush1.msra.mxu0 0.0
  %4859 = vmatprep.subr.mxu0 0.0
  %4860 = vmatpush1.msra.mxu0 0.0
  %4861 = vmatprep.subr.mxu0 0.0
  %4862 = vmatpush1.msra.mxu0 0.0
  %4863 = vmatprep.subr.mxu0 0.0
  %4864 = vmatpush1.msra.mxu0 0.0
  %4865 = vmatprep.subr.mxu0 0.0
  %4866 = vmatpush1.msra.mxu0 0.0
  %4867 = vmatprep.subr.mxu0 0.0
  %4868 = vmatpush1.msra.mxu0 0.0
  %4869 = vmatprep.subr.mxu0 0.0
  %4870 = vmatpush1.msra.mxu0 0.0
  %4871 = vmatprep.subr.mxu0 0.0
  %4872 = vmatpush1.msra.mxu0 0.0
  %4873 = vmatprep.subr.mxu0 0.0
  %4874 = vmatpush1.msra.mxu0 0.0
  %4875 = vmatprep.subr.mxu0 0.0
  %4876 = vmatpush1.msra.mxu0 0.0
  %4877 = vmatprep.subr.mxu0 0.0
  %4878 = vmatpush1.msra.mxu0 0.0
  %4879 = vmatprep.subr.mxu0 0.0
  %4880 = vmatpush1.msra.mxu0 0.0
  %4881 = vmatprep.subr.mxu0 0.0
  %4882 = vmatpush1.msra.mxu0 0.0
  %4883 = vmatprep.subr.mxu0 0.0
  %4884 = vmatpush1.msra.mxu0 0.0
  %4885 = vmatprep.subr.mxu0 0.0
  %4886 = vmatpush1.msra.mxu0 0.0
  %4887 = vmatprep.subr.mxu0 0.0
  %4888 = vmatpush1.msra.mxu0 0.0
  %4889 = vmatprep.subr.mxu0 0.0
  %4890 = vmatpush1.msra.mxu0 0.0
  %4891 = vmatprep.subr.mxu0 0.0
  %4892 = vmatpush1.msra.mxu0 0.0
  %4893 = vmatprep.subr.mxu0 0.0
  %4894 = vmatpush1.msra.mxu0 0.0
  %4895 = vmatprep.subr.mxu0 0.0
  %4896 = vmatpush1.msra.mxu0 0.0
  %4897 = vmatprep.subr.mxu0 0.0
  %4898 = vmatpush1.msra.mxu0 0.0
  %4899 = vmatprep.subr.mxu0 0.0
  %4900 = vmatpush1.msra.mxu0 0.0
  %4901 = vmatprep.subr.mxu0 0.0
  %4902 = vmatpush1.msra.mxu0 0.0
  %4903 = vmatprep.subr.mxu0 0.0
  %4904 = vmatpush1.msra.mxu0 0.0
  %4905 = vmatprep.mubr.f32.mxu0 0.0
  %v4906 = vand.u32 %v373, 4294901760
  %v4907 = vsub.f32 %v373, %v4906
  %v4908 = vand.u32 %v4907, 4294901760
  %4909 = vmatmul.mubr.f32.gmra.mrb[0].mxu0 %v4908
  %v4910 = vpop.f32.mrb[0].mxu0
  %v4911 = vadd.f32 %v4821, %v4910
  %v4912 = vpop.f32.mrb[0].mxu0
  %v4913 = vadd.f32 %v4823, %v4912
  %4914 = vmatprep.mubr.f32.mxu0 0.0
  %v4915 = vand.u32 %v376, 4294901760
  %v4916 = vsub.f32 %v376, %v4915
  %v4917 = vand.u32 %v4916, 4294901760
  %4918 = vmatmul.mubr.f32.gmra.mrb[0].mxu0 %v4917
  %v4919 = vpop.f32.mrb[0].mxu0
  %v4920 = vadd.f32 %v4829, %v4919
  %v4921 = vpop.f32.mrb[0].mxu0
  %v4922 = vadd.f32 %v4831, %v4921
  %4923 = vdwg.mxu0
  %v4924 = vand.u32 %v308, 4294901760
  %v4925 = vsub.f32 %v308, %v4924
  %v4926 = vand.u32 %v4925, 4294901760
  %4927 = vmatprep.subr.mxu0 %v4926
  %v4928 = vand.u32 %v307, 4294901760
  %v4929 = vsub.f32 %v307, %v4928
  %v4930 = vand.u32 %v4929, 4294901760
  %4931 = vmatpush1.msra.mxu0 %v4930
  %v4932 = vand.u32 %v324, 4294901760
  %v4933 = vsub.f32 %v324, %v4932
  %v4934 = vand.u32 %v4933, 4294901760
  %4935 = vmatprep.subr.mxu0 %v4934
  %v4936 = vand.u32 %v323, 4294901760
  %v4937 = vsub.f32 %v323, %v4936
  %v4938 = vand.u32 %v4937, 4294901760
  %4939 = vmatpush1.msra.mxu0 %v4938
  %v4940 = vand.u32 %v340, 4294901760
  %v4941 = vsub.f32 %v340, %v4940
  %v4942 = vand.u32 %v4941, 4294901760
  %4943 = vmatprep.subr.mxu0 %v4942
  %v4944 = vand.u32 %v339, 4294901760
  %v4945 = vsub.f32 %v339, %v4944
  %v4946 = vand.u32 %v4945, 4294901760
  %4947 = vmatpush1.msra.mxu0 %v4946
  %v4948 = vand.u32 %v356, 4294901760
  %v4949 = vsub.f32 %v356, %v4948
  %v4950 = vand.u32 %v4949, 4294901760
  %4951 = vmatprep.subr.mxu0 %v4950
  %v4952 = vand.u32 %v355, 4294901760
  %v4953 = vsub.f32 %v355, %v4952
  %v4954 = vand.u32 %v4953, 4294901760
  %4955 = vmatpush1.msra.mxu0 %v4954
  %4956 = vmatprep.subr.mxu0 0.0
  %4957 = vmatpush1.msra.mxu0 0.0
  %4958 = vmatprep.subr.mxu0 0.0
  %4959 = vmatpush1.msra.mxu0 0.0
  %4960 = vmatprep.subr.mxu0 0.0
  %4961 = vmatpush1.msra.mxu0 0.0
  %4962 = vmatprep.subr.mxu0 0.0
  %4963 = vmatpush1.msra.mxu0 0.0
  %4964 = vmatprep.subr.mxu0 0.0
  %4965 = vmatpush1.msra.mxu0 0.0
  %4966 = vmatprep.subr.mxu0 0.0
  %4967 = vmatpush1.msra.mxu0 0.0
  %4968 = vmatprep.subr.mxu0 0.0
  %4969 = vmatpush1.msra.mxu0 0.0
  %4970 = vmatprep.subr.mxu0 0.0
  %4971 = vmatpush1.msra.mxu0 0.0
  %4972 = vmatprep.subr.mxu0 0.0
  %4973 = vmatpush1.msra.mxu0 0.0
  %4974 = vmatprep.subr.mxu0 0.0
  %4975 = vmatpush1.msra.mxu0 0.0
  %4976 = vmatprep.subr.mxu0 0.0
  %4977 = vmatpush1.msra.mxu0 0.0
  %4978 = vmatprep.subr.mxu0 0.0
  %4979 = vmatpush1.msra.mxu0 0.0
  %4980 = vmatprep.subr.mxu0 0.0
  %4981 = vmatpush1.msra.mxu0 0.0
  %4982 = vmatprep.subr.mxu0 0.0
  %4983 = vmatpush1.msra.mxu0 0.0
  %4984 = vmatprep.subr.mxu0 0.0
  %4985 = vmatpush1.msra.mxu0 0.0
  %4986 = vmatprep.subr.mxu0 0.0
  %4987 = vmatpush1.msra.mxu0 0.0
  %4988 = vmatprep.subr.mxu0 0.0
  %4989 = vmatpush1.msra.mxu0 0.0
  %4990 = vmatprep.subr.mxu0 0.0
  %4991 = vmatpush1.msra.mxu0 0.0
  %4992 = vmatprep.subr.mxu0 0.0
  %4993 = vmatpush1.msra.mxu0 0.0
  %4994 = vmatprep.subr.mxu0 0.0
  %4995 = vmatpush1.msra.mxu0 0.0
  %4996 = vmatprep.subr.mxu0 0.0
  %4997 = vmatpush1.msra.mxu0 0.0
  %4998 = vmatprep.subr.mxu0 0.0
  %4999 = vmatpush1.msra.mxu0 0.0
  %5000 = vmatprep.subr.mxu0 0.0
  %5001 = vmatpush1.msra.mxu0 0.0
  %5002 = vmatprep.subr.mxu0 0.0
  %5003 = vmatpush1.msra.mxu0 0.0
  %5004 = vmatprep.subr.mxu0 0.0
  %5005 = vmatpush1.msra.mxu0 0.0
  %5006 = vmatprep.subr.mxu0 0.0
  %5007 = vmatpush1.msra.mxu0 0.0
  %5008 = vmatprep.subr.mxu0 0.0
  %5009 = vmatpush1.msra.mxu0 0.0
  %5010 = vmatprep.subr.mxu0 0.0
  %5011 = vmatpush1.msra.mxu0 0.0
  %5012 = vmatprep.mubr.f32.mxu0 0.0
  %v5013 = vand.u32 %v373, 4294901760
  %5014 = vmatmul.mubr.f32.gmra.mrb[0].mxu0 %v5013
  %v5015 = vpop.f32.mrb[0].mxu0
  %v5016 = vadd.f32 %v4911, %v5015
  %v5017 = vpop.f32.mrb[0].mxu0
  %v5018 = vadd.f32 %v4913, %v5017
  %5019 = vmatprep.mubr.f32.mxu0 0.0
  %v5020 = vand.u32 %v376, 4294901760
  %5021 = vmatmul.mubr.f32.gmra.mrb[0].mxu0 %v5020
  %v5022 = vpop.f32.mrb[0].mxu0
  %v5023 = vadd.f32 %v4920, %v5022
  %v5024 = vpop.f32.mrb[0].mxu0
  %v5025 = vadd.f32 %v4922, %v5024
  %5026 = vdwg.mxu0
  %v5027 = vand.u32 %v308, 4294901760
  %5028 = vmatprep.subr.mxu0 %v5027
  %v5029 = vand.u32 %v307, 4294901760
  %5030 = vmatpush1.msra.mxu0 %v5029
  %v5031 = vand.u32 %v324, 4294901760
  %5032 = vmatprep.subr.mxu0 %v5031
  %v5033 = vand.u32 %v323, 4294901760
  %5034 = vmatpush1.msra.mxu0 %v5033
  %v5035 = vand.u32 %v340, 4294901760
  %5036 = vmatprep.subr.mxu0 %v5035
  %v5037 = vand.u32 %v339, 4294901760
  %5038 = vmatpush1.msra.mxu0 %v5037
  %v5039 = vand.u32 %v356, 4294901760
  %5040 = vmatprep.subr.mxu0 %v5039
  %v5041 = vand.u32 %v355, 4294901760
  %5042 = vmatpush1.msra.mxu0 %v5041
  %5043 = vmatprep.subr.mxu0 0.0
  %5044 = vmatpush1.msra.mxu0 0.0
  %5045 = vmatprep.subr.mxu0 0.0
  %5046 = vmatpush1.msra.mxu0 0.0
  %5047 = vmatprep.subr.mxu0 0.0
  %5048 = vmatpush1.msra.mxu0 0.0
  %5049 = vmatprep.subr.mxu0 0.0
  %5050 = vmatpush1.msra.mxu0 0.0
  %5051 = vmatprep.subr.mxu0 0.0
  %5052 = vmatpush1.msra.mxu0 0.0
  %5053 = vmatprep.subr.mxu0 0.0
  %5054 = vmatpush1.msra.mxu0 0.0
  %5055 = vmatprep.subr.mxu0 0.0
  %5056 = vmatpush1.msra.mxu0 0.0
  %5057 = vmatprep.subr.mxu0 0.0
  %5058 = vmatpush1.msra.mxu0 0.0
  %5059 = vmatprep.subr.mxu0 0.0
  %5060 = vmatpush1.msra.mxu0 0.0
  %5061 = vmatprep.subr.mxu0 0.0
  %5062 = vmatpush1.msra.mxu0 0.0
  %5063 = vmatprep.subr.mxu0 0.0
  %5064 = vmatpush1.msra.mxu0 0.0
  %5065 = vmatprep.subr.mxu0 0.0
  %5066 = vmatpush1.msra.mxu0 0.0
  %5067 = vmatprep.subr.mxu0 0.0
  %5068 = vmatpush1.msra.mxu0 0.0
  %5069 = vmatprep.subr.mxu0 0.0
  %5070 = vmatpush1.msra.mxu0 0.0
  %5071 = vmatprep.subr.mxu0 0.0
  %5072 = vmatpush1.msra.mxu0 0.0
  %5073 = vmatprep.subr.mxu0 0.0
  %5074 = vmatpush1.msra.mxu0 0.0
  %5075 = vmatprep.subr.mxu0 0.0
  %5076 = vmatpush1.msra.mxu0 0.0
  %5077 = vmatprep.subr.mxu0 0.0
  %5078 = vmatpush1.msra.mxu0 0.0
  %5079 = vmatprep.subr.mxu0 0.0
  %5080 = vmatpush1.msra.mxu0 0.0
  %5081 = vmatprep.subr.mxu0 0.0
  %5082 = vmatpush1.msra.mxu0 0.0
  %5083 = vmatprep.subr.mxu0 0.0
  %5084 = vmatpush1.msra.mxu0 0.0
  %5085 = vmatprep.subr.mxu0 0.0
  %5086 = vmatpush1.msra.mxu0 0.0
  %5087 = vmatprep.subr.mxu0 0.0
  %5088 = vmatpush1.msra.mxu0 0.0
  %5089 = vmatprep.subr.mxu0 0.0
  %5090 = vmatpush1.msra.mxu0 0.0
  %5091 = vmatprep.subr.mxu0 0.0
  %5092 = vmatpush1.msra.mxu0 0.0
  %5093 = vmatprep.subr.mxu0 0.0
  %5094 = vmatpush1.msra.mxu0 0.0
  %5095 = vmatprep.subr.mxu0 0.0
  %5096 = vmatpush1.msra.mxu0 0.0
  %5097 = vmatprep.subr.mxu0 0.0
  %5098 = vmatpush1.msra.mxu0 0.0
  %5099 = vmatprep.mubr.f32.mxu0 0.0
  %v5100 = vand.u32 %v373, 4294901760
  %5101 = vmatmul.mubr.f32.gmra.mrb[0].mxu0 %v5100
  %v5102 = vpop.f32.mrb[0].mxu0
  %v5103 = vadd.f32 %v5016, %v5102
  %v5104 = vpop.f32.mrb[0].mxu0
  %v5105 = vadd.f32 %v5018, %v5104
  %5106 = vmatprep.mubr.f32.mxu0 0.0
  %v5107 = vand.u32 %v376, 4294901760
  %5108 = vmatmul.mubr.f32.gmra.mrb[0].mxu0 %v5107
  %v5109 = vpop.f32.mrb[0].mxu0
  %v5110 = vadd.f32 %v5023, %v5109
  %v5111 = vpop.f32.mrb[0].mxu0
  %v5112 = vadd.f32 %v5025, %v5111
  %5113 = vdwg.mxu0
  %v5114 = vmax.f32 %v959, 0.0
  %v5115 = vmax.f32 %v961, 0.0
  %v5116 = vmax.f32 %v1551, 0.0
  %v5117 = vmax.f32 %v1553, 0.0
  %v5118 = vmax.f32 %v2143, 0.0
  %v5119 = vmax.f32 %v2145, 0.0
  %v5120 = vmax.f32 %v2735, 0.0
  %v5121 = vmax.f32 %v2737, 0.0
  %v5122 = vmax.f32 %v3327, 0.0
  %v5123 = vmax.f32 %v3329, 0.0
  %v5124 = vmax.f32 %v3919, 0.0
  %v5125 = vmax.f32 %v3921, 0.0
  %v5126 = vmax.f32 %v4511, 0.0
  %v5127 = vmax.f32 %v4513, 0.0
  %v5128 = vmax.f32 %v5103, 0.0
  %v5129 = vmax.f32 %v5105, 0.0
  %v5130 = vmax.f32 %v966, 0.0
  %v5131 = vmax.f32 %v968, 0.0
  %v5132 = vmax.f32 %v1558, 0.0
  %v5133 = vmax.f32 %v1560, 0.0
  %v5134 = vmax.f32 %v2150, 0.0
  %v5135 = vmax.f32 %v2152, 0.0
  %v5136 = vmax.f32 %v2742, 0.0
  %v5137 = vmax.f32 %v2744, 0.0
  %v5138 = vmax.f32 %v3334, 0.0
  %v5139 = vmax.f32 %v3336, 0.0
  %v5140 = vmax.f32 %v3926, 0.0
  %v5141 = vmax.f32 %v3928, 0.0
  %v5142 = vmax.f32 %v4518, 0.0
  %v5143 = vmax.f32 %v4520, 0.0
  %v5144 = vmax.f32 %v5110, 0.0
  %v5145 = vmax.f32 %v5112, 0.0
  %v5146 = vld [vmem:[%s5] sm:$0xff]
  %v5147 = vld [vmem:[%s6] sm:$0xff]
  %5149 = vset.pattern.permute.xlu0 0
  %5150 = vperm.xlu0 %5149, %v5147
  %v5151 = vpop.permute.xlu0 %5150
  %vm5153 = vcmask 130048
  %v5155 = vsel %vm5153, %v5146, 0
  %v5157 = vand.u32 %v5115, 4294901760
  %5158 = vmatprep.subr.mxu0 %v5157
  %v5159 = vand.u32 %v5114, 4294901760
  %5160 = vmatpush1.msra.mxu0 %v5159
  %v5161 = vand.u32 %v5131, 4294901760
  %5162 = vmatprep.subr.mxu0 %v5161
  %v5163 = vand.u32 %v5130, 4294901760
  %5164 = vmatpush1.msra.mxu0 %v5163
  %5165 = vmatprep.subr.mxu0 0.0
  %5166 = vmatpush1.msra.mxu0 0.0
  %5167 = vmatprep.subr.mxu0 0.0
  %5168 = vmatpush1.msra.mxu0 0.0
  %5169 = vmatprep.subr.mxu0 0.0
  %5170 = vmatpush1.msra.mxu0 0.0
  %5171 = vmatprep.subr.mxu0 0.0
  %5172 = vmatpush1.msra.mxu0 0.0
  %5173 = vmatprep.subr.mxu0 0.0
  %5174 = vmatpush1.msra.mxu0 0.0
  %5175 = vmatprep.subr.mxu0 0.0
  %5176 = vmatpush1.msra.mxu0 0.0
  %5177 = vmatprep.subr.mxu0 0.0
  %5178 = vmatpush1.msra.mxu0 0.0
  %5179 = vmatprep.subr.mxu0 0.0
  %5180 = vmatpush1.msra.mxu0 0.0
  %5181 = vmatprep.subr.mxu0 0.0
  %5182 = vmatpush1.msra.mxu0 0.0
  %5183 = vmatprep.subr.mxu0 0.0
  %5184 = vmatpush1.msra.mxu0 0.0
  %5185 = vmatprep.subr.mxu0 0.0
  %5186 = vmatpush1.msra.mxu0 0.0
  %5187 = vmatprep.subr.mxu0 0.0
  %5188 = vmatpush1.msra.mxu0 0.0
  %5189 = vmatprep.subr.mxu0 0.0
  %5190 = vmatpush1.msra.mxu0 0.0
  %5191 = vmatprep.subr.mxu0 0.0
  %5192 = vmatpush1.msra.mxu0 0.0
  %5193 = vmatprep.subr.mxu0 0.0
  %5194 = vmatpush1.msra.mxu0 0.0
  %5195 = vmatprep.subr.mxu0 0.0
  %5196 = vmatpush1.msra.mxu0 0.0
  %5197 = vmatprep.subr.mxu0 0.0
  %5198 = vmatpush1.msra.mxu0 0.0
  %5199 = vmatprep.subr.mxu0 0.0
  %5200 = vmatpush1.msra.mxu0 0.0
  %5201 = vmatprep.subr.mxu0 0.0
  %5202 = vmatpush1.msra.mxu0 0.0
  %5203 = vmatprep.subr.mxu0 0.0
  %5204 = vmatpush1.msra.mxu0 0.0
  %5205 = vmatprep.subr.mxu0 0.0
  %5206 = vmatpush1.msra.mxu0 0.0
  %5207 = vmatprep.subr.mxu0 0.0
  %5208 = vmatpush1.msra.mxu0 0.0
  %5209 = vmatprep.subr.mxu0 0.0
  %5210 = vmatpush1.msra.mxu0 0.0
  %5211 = vmatprep.subr.mxu0 0.0
  %5212 = vmatpush1.msra.mxu0 0.0
  %5213 = vmatprep.subr.mxu0 0.0
  %5214 = vmatpush1.msra.mxu0 0.0
  %5215 = vmatprep.subr.mxu0 0.0
  %5216 = vmatpush1.msra.mxu0 0.0
  %5217 = vmatprep.subr.mxu0 0.0
  %5218 = vmatpush1.msra.mxu0 0.0
  %5219 = vmatprep.subr.mxu0 0.0
  %5220 = vmatpush1.msra.mxu0 0.0
  %5221 = vmatprep.subr.mxu0 0.0
  %5222 = vmatpush1.msra.mxu0 0.0
  %5223 = vmatprep.subr.mxu0 0.0
  %5224 = vmatpush1.msra.mxu0 0.0
  %5225 = vmatprep.mubr.f32.mxu0 0.0
  %v5226 = vand.u32 %v5155, 4294901760
  %v5227 = vsub.f32 %v5155, %v5226
  %v5228 = vand.u32 %v5227, 4294901760
  %v5229 = vsub.f32 %v5227, %v5228
  %v5230 = vand.u32 %v5229, 4294901760
  %5231 = vmatmul.mubr.f32.gmra.mrb[0].mxu0 %v5230
  %v5232 = vpop.f32.mrb[0].mxu0
  %v5233 = vadd.f32 %v5151, %v5232
  %v5234 = vpop.f32.mrb[0].mxu0
  %v5235 = vadd.f32 %v5151, %v5234
  %5236 = vdwg.mxu0
  %v5237 = vand.u32 %v5115, 4294901760
  %v5238 = vsub.f32 %v5115, %v5237
  %v5239 = vand.u32 %v5238, 4294901760
  %v5240 = vsub.f32 %v5238, %v5239
  %v5241 = vand.u32 %v5240, 4294901760
  %5242 = vmatprep.subr.mxu0 %v5241
  %v5243 = vand.u32 %v5114, 4294901760
  %v5244 = vsub.f32 %v5114, %v5243
  %v5245 = vand.u32 %v5244, 4294901760
  %v5246 = vsub.f32 %v5244, %v5245
  %v5247 = vand.u32 %v5246, 4294901760
  %5248 = vmatpush1.msra.mxu0 %v5247
  %v5249 = vand.u32 %v5131, 4294901760
  %v5250 = vsub.f32 %v5131, %v5249
  %v5251 = vand.u32 %v5250, 4294901760
  %v5252 = vsub.f32 %v5250, %v5251
  %v5253 = vand.u32 %v5252, 4294901760
  %5254 = vmatprep.subr.mxu0 %v5253
  %v5255 = vand.u32 %v5130, 4294901760
  %v5256 = vsub.f32 %v5130, %v5255
  %v5257 = vand.u32 %v5256, 4294901760
  %v5258 = vsub.f32 %v5256, %v5257
  %v5259 = vand.u32 %v5258, 4294901760
  %5260 = vmatpush1.msra.mxu0 %v5259
  %5261 = vmatprep.subr.mxu0 0.0
  %5262 = vmatpush1.msra.mxu0 0.0
  %5263 = vmatprep.subr.mxu0 0.0
  %5264 = vmatpush1.msra.mxu0 0.0
  %5265 = vmatprep.subr.mxu0 0.0
  %5266 = vmatpush1.msra.mxu0 0.0
  %5267 = vmatprep.subr.mxu0 0.0
  %5268 = vmatpush1.msra.mxu0 0.0
  %5269 = vmatprep.subr.mxu0 0.0
  %5270 = vmatpush1.msra.mxu0 0.0
  %5271 = vmatprep.subr.mxu0 0.0
  %5272 = vmatpush1.msra.mxu0 0.0
  %5273 = vmatprep.subr.mxu0 0.0
  %5274 = vmatpush1.msra.mxu0 0.0
  %5275 = vmatprep.subr.mxu0 0.0
  %5276 = vmatpush1.msra.mxu0 0.0
  %5277 = vmatprep.subr.mxu0 0.0
  %5278 = vmatpush1.msra.mxu0 0.0
  %5279 = vmatprep.subr.mxu0 0.0
  %5280 = vmatpush1.msra.mxu0 0.0
  %5281 = vmatprep.subr.mxu0 0.0
  %5282 = vmatpush1.msra.mxu0 0.0
  %5283 = vmatprep.subr.mxu0 0.0
  %5284 = vmatpush1.msra.mxu0 0.0
  %5285 = vmatprep.subr.mxu0 0.0
  %5286 = vmatpush1.msra.mxu0 0.0
  %5287 = vmatprep.subr.mxu0 0.0
  %5288 = vmatpush1.msra.mxu0 0.0
  %5289 = vmatprep.subr.mxu0 0.0
  %5290 = vmatpush1.msra.mxu0 0.0
  %5291 = vmatprep.subr.mxu0 0.0
  %5292 = vmatpush1.msra.mxu0 0.0
  %5293 = vmatprep.subr.mxu0 0.0
  %5294 = vmatpush1.msra.mxu0 0.0
  %5295 = vmatprep.subr.mxu0 0.0
  %5296 = vmatpush1.msra.mxu0 0.0
  %5297 = vmatprep.subr.mxu0 0.0
  %5298 = vmatpush1.msra.mxu0 0.0
  %5299 = vmatprep.subr.mxu0 0.0
  %5300 = vmatpush1.msra.mxu0 0.0
  %5301 = vmatprep.subr.mxu0 0.0
  %5302 = vmatpush1.msra.mxu0 0.0
  %5303 = vmatprep.subr.mxu0 0.0
  %5304 = vmatpush1.msra.mxu0 0.0
  %5305 = vmatprep.subr.mxu0 0.0
  %5306 = vmatpush1.msra.mxu0 0.0
  %5307 = vmatprep.subr.mxu0 0.0
  %5308 = vmatpush1.msra.mxu0 0.0
  %5309 = vmatprep.subr.mxu0 0.0
  %5310 = vmatpush1.msra.mxu0 0.0
  %5311 = vmatprep.subr.mxu0 0.0
  %5312 = vmatpush1.msra.mxu0 0.0
  %5313 = vmatprep.subr.mxu0 0.0
  %5314 = vmatpush1.msra.mxu0 0.0
  %5315 = vmatprep.subr.mxu0 0.0
  %5316 = vmatpush1.msra.mxu0 0.0
  %5317 = vmatprep.subr.mxu0 0.0
  %5318 = vmatpush1.msra.mxu0 0.0
  %5319 = vmatprep.subr.mxu0 0.0
  %5320 = vmatpush1.msra.mxu0 0.0
  %5321 = vmatprep.mubr.f32.mxu0 0.0
  %v5322 = vand.u32 %v5155, 4294901760
  %5323 = vmatmul.mubr.f32.gmra.mrb[0].mxu0 %v5322
  %v5324 = vpop.f32.mrb[0].mxu0
  %v5325 = vadd.f32 %v5233, %v5324
  %v5326 = vpop.f32.mrb[0].mxu0
  %v5327 = vadd.f32 %v5235, %v5326
  %5328 = vdwg.mxu0
  %v5329 = vand.u32 %v5115, 4294901760
  %v5330 = vsub.f32 %v5115, %v5329
  %5331 = vmatprep.subr.mxu0 %v5330
  %v5332 = vand.u32 %v5114, 4294901760
  %v5333 = vsub.f32 %v5114, %v5332
  %5334 = vmatpush1.msra.mxu0 %v5333
  %v5335 = vand.u32 %v5131, 4294901760
  %v5336 = vsub.f32 %v5131, %v5335
  %5337 = vmatprep.subr.mxu0 %v5336
  %v5338 = vand.u32 %v5130, 4294901760
  %v5339 = vsub.f32 %v5130, %v5338
  %5340 = vmatpush1.msra.mxu0 %v5339
  %5341 = vmatprep.subr.mxu0 0.0
  %5342 = vmatpush1.msra.mxu0 0.0
  %5343 = vmatprep.subr.mxu0 0.0
  %5344 = vmatpush1.msra.mxu0 0.0
  %5345 = vmatprep.subr.mxu0 0.0
  %5346 = vmatpush1.msra.mxu0 0.0
  %5347 = vmatprep.subr.mxu0 0.0
  %5348 = vmatpush1.msra.mxu0 0.0
  %5349 = vmatprep.subr.mxu0 0.0
  %5350 = vmatpush1.msra.mxu0 0.0
  %5351 = vmatprep.subr.mxu0 0.0
  %5352 = vmatpush1.msra.mxu0 0.0
  %5353 = vmatprep.subr.mxu0 0.0
  %5354 = vmatpush1.msra.mxu0 0.0
  %5355 = vmatprep.subr.mxu0 0.0
  %5356 = vmatpush1.msra.mxu0 0.0
  %5357 = vmatprep.subr.mxu0 0.0
  %5358 = vmatpush1.msra.mxu0 0.0
  %5359 = vmatprep.subr.mxu0 0.0
  %5360 = vmatpush1.msra.mxu0 0.0
  %5361 = vmatprep.subr.mxu0 0.0
  %5362 = vmatpush1.msra.mxu0 0.0
  %5363 = vmatprep.subr.mxu0 0.0
  %5364 = vmatpush1.msra.mxu0 0.0
  %5365 = vmatprep.subr.mxu0 0.0
  %5366 = vmatpush1.msra.mxu0 0.0
  %5367 = vmatprep.subr.mxu0 0.0
  %5368 = vmatpush1.msra.mxu0 0.0
  %5369 = vmatprep.subr.mxu0 0.0
  %5370 = vmatpush1.msra.mxu0 0.0
  %5371 = vmatprep.subr.mxu0 0.0
  %5372 = vmatpush1.msra.mxu0 0.0
  %5373 = vmatprep.subr.mxu0 0.0
  %5374 = vmatpush1.msra.mxu0 0.0
  %5375 = vmatprep.subr.mxu0 0.0
  %5376 = vmatpush1.msra.mxu0 0.0
  %5377 = vmatprep.subr.mxu0 0.0
  %5378 = vmatpush1.msra.mxu0 0.0
  %5379 = vmatprep.subr.mxu0 0.0
  %5380 = vmatpush1.msra.mxu0 0.0
  %5381 = vmatprep.subr.mxu0 0.0
  %5382 = vmatpush1.msra.mxu0 0.0
  %5383 = vmatprep.subr.mxu0 0.0
  %5384 = vmatpush1.msra.mxu0 0.0
  %5385 = vmatprep.subr.mxu0 0.0
  %5386 = vmatpush1.msra.mxu0 0.0
  %5387 = vmatprep.subr.mxu0 0.0
  %5388 = vmatpush1.msra.mxu0 0.0
  %5389 = vmatprep.subr.mxu0 0.0
  %5390 = vmatpush1.msra.mxu0 0.0
  %5391 = vmatprep.subr.mxu0 0.0
  %5392 = vmatpush1.msra.mxu0 0.0
  %5393 = vmatprep.subr.mxu0 0.0
  %5394 = vmatpush1.msra.mxu0 0.0
  %5395 = vmatprep.subr.mxu0 0.0
  %5396 = vmatpush1.msra.mxu0 0.0
  %5397 = vmatprep.subr.mxu0 0.0
  %5398 = vmatpush1.msra.mxu0 0.0
  %5399 = vmatprep.subr.mxu0 0.0
  %5400 = vmatpush1.msra.mxu0 0.0
  %5401 = vmatprep.mubr.f32.mxu0 0.0
  %v5402 = vand.u32 %v5155, 4294901760
  %v5403 = vsub.f32 %v5155, %v5402
  %5404 = vmatmul.mubr.f32.gmra.mrb[0].mxu0 %v5403
  %v5405 = vpop.f32.mrb[0].mxu0
  %v5406 = vadd.f32 %v5325, %v5405
  %v5407 = vpop.f32.mrb[0].mxu0
  %v5408 = vadd.f32 %v5327, %v5407
  %5409 = vdwg.mxu0
  %v5410 = vand.u32 %v5115, 4294901760
  %5411 = vmatprep.subr.mxu0 %v5410
  %v5412 = vand.u32 %v5114, 4294901760
  %5413 = vmatpush1.msra.mxu0 %v5412
  %v5414 = vand.u32 %v5131, 4294901760
  %5415 = vmatprep.subr.mxu0 %v5414
  %v5416 = vand.u32 %v5130, 4294901760
  %5417 = vmatpush1.msra.mxu0 %v5416
  %5418 = vmatprep.subr.mxu0 0.0
  %5419 = vmatpush1.msra.mxu0 0.0
  %5420 = vmatprep.subr.mxu0 0.0
  %5421 = vmatpush1.msra.mxu0 0.0
  %5422 = vmatprep.subr.mxu0 0.0
  %5423 = vmatpush1.msra.mxu0 0.0
  %5424 = vmatprep.subr.mxu0 0.0
  %5425 = vmatpush1.msra.mxu0 0.0
  %5426 = vmatprep.subr.mxu0 0.0
  %5427 = vmatpush1.msra.mxu0 0.0
  %5428 = vmatprep.subr.mxu0 0.0
  %5429 = vmatpush1.msra.mxu0 0.0
  %5430 = vmatprep.subr.mxu0 0.0
  %5431 = vmatpush1.msra.mxu0 0.0
  %5432 = vmatprep.subr.mxu0 0.0
  %5433 = vmatpush1.msra.mxu0 0.0
  %5434 = vmatprep.subr.mxu0 0.0
  %5435 = vmatpush1.msra.mxu0 0.0
  %5436 = vmatprep.subr.mxu0 0.0
  %5437 = vmatpush1.msra.mxu0 0.0
  %5438 = vmatprep.subr.mxu0 0.0
  %5439 = vmatpush1.msra.mxu0 0.0
  %5440 = vmatprep.subr.mxu0 0.0
  %5441 = vmatpush1.msra.mxu0 0.0
  %5442 = vmatprep.subr.mxu0 0.0
  %5443 = vmatpush1.msra.mxu0 0.0
  %5444 = vmatprep.subr.mxu0 0.0
  %5445 = vmatpush1.msra.mxu0 0.0
  %5446 = vmatprep.subr.mxu0 0.0
  %5447 = vmatpush1.msra.mxu0 0.0
  %5448 = vmatprep.subr.mxu0 0.0
  %5449 = vmatpush1.msra.mxu0 0.0
  %5450 = vmatprep.subr.mxu0 0.0
  %5451 = vmatpush1.msra.mxu0 0.0
  %5452 = vmatprep.subr.mxu0 0.0
  %5453 = vmatpush1.msra.mxu0 0.0
  %5454 = vmatprep.subr.mxu0 0.0
  %5455 = vmatpush1.msra.mxu0 0.0
  %5456 = vmatprep.subr.mxu0 0.0
  %5457 = vmatpush1.msra.mxu0 0.0
  %5458 = vmatprep.subr.mxu0 0.0
  %5459 = vmatpush1.msra.mxu0 0.0
  %5460 = vmatprep.subr.mxu0 0.0
  %5461 = vmatpush1.msra.mxu0 0.0
  %5462 = vmatprep.subr.mxu0 0.0
  %5463 = vmatpush1.msra.mxu0 0.0
  %5464 = vmatprep.subr.mxu0 0.0
  %5465 = vmatpush1.msra.mxu0 0.0
  %5466 = vmatprep.subr.mxu0 0.0
  %5467 = vmatpush1.msra.mxu0 0.0
  %5468 = vmatprep.subr.mxu0 0.0
  %5469 = vmatpush1.msra.mxu0 0.0
  %5470 = vmatprep.subr.mxu0 0.0
  %5471 = vmatpush1.msra.mxu0 0.0
  %5472 = vmatprep.subr.mxu0 0.0
  %5473 = vmatpush1.msra.mxu0 0.0
  %5474 = vmatprep.subr.mxu0 0.0
  %5475 = vmatpush1.msra.mxu0 0.0
  %5476 = vmatprep.subr.mxu0 0.0
  %5477 = vmatpush1.msra.mxu0 0.0
  %5478 = vmatprep.mubr.f32.mxu0 0.0
  %v5479 = vand.u32 %v5155, 4294901760
  %v5480 = vsub.f32 %v5155, %v5479
  %v5481 = vand.u32 %v5480, 4294901760
  %5482 = vmatmul.mubr.f32.gmra.mrb[0].mxu0 %v5481
  %v5483 = vpop.f32.mrb[0].mxu0
  %v5484 = vadd.f32 %v5406, %v5483
  %v5485 = vpop.f32.mrb[0].mxu0
  %v5486 = vadd.f32 %v5408, %v5485
  %5487 = vdwg.mxu0
  %v5488 = vand.u32 %v5115, 4294901760
  %v5489 = vsub.f32 %v5115, %v5488
  %v5490 = vand.u32 %v5489, 4294901760
  %5491 = vmatprep.subr.mxu0 %v5490
  %v5492 = vand.u32 %v5114, 4294901760
  %v5493 = vsub.f32 %v5114, %v5492
  %v5494 = vand.u32 %v5493, 4294901760
  %5495 = vmatpush1.msra.mxu0 %v5494
  %v5496 = vand.u32 %v5131, 4294901760
  %v5497 = vsub.f32 %v5131, %v5496
  %v5498 = vand.u32 %v5497, 4294901760
  %5499 = vmatprep.subr.mxu0 %v5498
  %v5500 = vand.u32 %v5130, 4294901760
  %v5501 = vsub.f32 %v5130, %v5500
  %v5502 = vand.u32 %v5501, 4294901760
  %5503 = vmatpush1.msra.mxu0 %v5502
  %5504 = vmatprep.subr.mxu0 0.0
  %5505 = vmatpush1.msra.mxu0 0.0
  %5506 = vmatprep.subr.mxu0 0.0
  %5507 = vmatpush1.msra.mxu0 0.0
  %5508 = vmatprep.subr.mxu0 0.0
  %5509 = vmatpush1.msra.mxu0 0.0
  %5510 = vmatprep.subr.mxu0 0.0
  %5511 = vmatpush1.msra.mxu0 0.0
  %5512 = vmatprep.subr.mxu0 0.0
  %5513 = vmatpush1.msra.mxu0 0.0
  %5514 = vmatprep.subr.mxu0 0.0
  %5515 = vmatpush1.msra.mxu0 0.0
  %5516 = vmatprep.subr.mxu0 0.0
  %5517 = vmatpush1.msra.mxu0 0.0
  %5518 = vmatprep.subr.mxu0 0.0
  %5519 = vmatpush1.msra.mxu0 0.0
  %5520 = vmatprep.subr.mxu0 0.0
  %5521 = vmatpush1.msra.mxu0 0.0
  %5522 = vmatprep.subr.mxu0 0.0
  %5523 = vmatpush1.msra.mxu0 0.0
  %5524 = vmatprep.subr.mxu0 0.0
  %5525 = vmatpush1.msra.mxu0 0.0
  %5526 = vmatprep.subr.mxu0 0.0
  %5527 = vmatpush1.msra.mxu0 0.0
  %5528 = vmatprep.subr.mxu0 0.0
  %5529 = vmatpush1.msra.mxu0 0.0
  %5530 = vmatprep.subr.mxu0 0.0
  %5531 = vmatpush1.msra.mxu0 0.0
  %5532 = vmatprep.subr.mxu0 0.0
  %5533 = vmatpush1.msra.mxu0 0.0
  %5534 = vmatprep.subr.mxu0 0.0
  %5535 = vmatpush1.msra.mxu0 0.0
  %5536 = vmatprep.subr.mxu0 0.0
  %5537 = vmatpush1.msra.mxu0 0.0
  %5538 = vmatprep.subr.mxu0 0.0
  %5539 = vmatpush1.msra.mxu0 0.0
  %5540 = vmatprep.subr.mxu0 0.0
  %5541 = vmatpush1.msra.mxu0 0.0
  %5542 = vmatprep.subr.mxu0 0.0
  %5543 = vmatpush1.msra.mxu0 0.0
  %5544 = vmatprep.subr.mxu0 0.0
  %5545 = vmatpush1.msra.mxu0 0.0
  %5546 = vmatprep.subr.mxu0 0.0
  %5547 = vmatpush1.msra.mxu0 0.0
  %5548 = vmatprep.subr.mxu0 0.0
  %5549 = vmatpush1.msra.mxu0 0.0
  %5550 = vmatprep.subr.mxu0 0.0
  %5551 = vmatpush1.msra.mxu0 0.0
  %5552 = vmatprep.subr.mxu0 0.0
  %5553 = vmatpush1.msra.mxu0 0.0
  %5554 = vmatprep.subr.mxu0 0.0
  %5555 = vmatpush1.msra.mxu0 0.0
  %5556 = vmatprep.subr.mxu0 0.0
  %5557 = vmatpush1.msra.mxu0 0.0
  %5558 = vmatprep.subr.mxu0 0.0
  %5559 = vmatpush1.msra.mxu0 0.0
  %5560 = vmatprep.subr.mxu0 0.0
  %5561 = vmatpush1.msra.mxu0 0.0
  %5562 = vmatprep.subr.mxu0 0.0
  %5563 = vmatpush1.msra.mxu0 0.0
  %5564 = vmatprep.mubr.f32.mxu0 0.0
  %v5565 = vand.u32 %v5155, 4294901760
  %5566 = vmatmul.mubr.f32.gmra.mrb[0].mxu0 %v5565
  %v5567 = vpop.f32.mrb[0].mxu0
  %v5568 = vadd.f32 %v5484, %v5567
  %v5569 = vpop.f32.mrb[0].mxu0
  %v5570 = vadd.f32 %v5486, %v5569
  %5571 = vdwg.mxu0
  %v5572 = vand.u32 %v5115, 4294901760
  %5573 = vmatprep.subr.mxu0 %v5572
  %v5574 = vand.u32 %v5114, 4294901760
  %5575 = vmatpush1.msra.mxu0 %v5574
  %v5576 = vand.u32 %v5131, 4294901760
  %5577 = vmatprep.subr.mxu0 %v5576
  %v5578 = vand.u32 %v5130, 4294901760
  %5579 = vmatpush1.msra.mxu0 %v5578
  %5580 = vmatprep.subr.mxu0 0.0
  %5581 = vmatpush1.msra.mxu0 0.0
  %5582 = vmatprep.subr.mxu0 0.0
  %5583 = vmatpush1.msra.mxu0 0.0
  %5584 = vmatprep.subr.mxu0 0.0
  %5585 = vmatpush1.msra.mxu0 0.0
  %5586 = vmatprep.subr.mxu0 0.0
  %5587 = vmatpush1.msra.mxu0 0.0
  %5588 = vmatprep.subr.mxu0 0.0
  %5589 = vmatpush1.msra.mxu0 0.0
  %5590 = vmatprep.subr.mxu0 0.0
  %5591 = vmatpush1.msra.mxu0 0.0
  %5592 = vmatprep.subr.mxu0 0.0
  %5593 = vmatpush1.msra.mxu0 0.0
  %5594 = vmatprep.subr.mxu0 0.0
  %5595 = vmatpush1.msra.mxu0 0.0
  %5596 = vmatprep.subr.mxu0 0.0
  %5597 = vmatpush1.msra.mxu0 0.0
  %5598 = vmatprep.subr.mxu0 0.0
  %5599 = vmatpush1.msra.mxu0 0.0
  %5600 = vmatprep.subr.mxu0 0.0
  %5601 = vmatpush1.msra.mxu0 0.0
  %5602 = vmatprep.subr.mxu0 0.0
  %5603 = vmatpush1.msra.mxu0 0.0
  %5604 = vmatprep.subr.mxu0 0.0
  %5605 = vmatpush1.msra.mxu0 0.0
  %5606 = vmatprep.subr.mxu0 0.0
  %5607 = vmatpush1.msra.mxu0 0.0
  %5608 = vmatprep.subr.mxu0 0.0
  %5609 = vmatpush1.msra.mxu0 0.0
  %5610 = vmatprep.subr.mxu0 0.0
  %5611 = vmatpush1.msra.mxu0 0.0
  %5612 = vmatprep.subr.mxu0 0.0
  %5613 = vmatpush1.msra.mxu0 0.0
  %5614 = vmatprep.subr.mxu0 0.0
  %5615 = vmatpush1.msra.mxu0 0.0
  %5616 = vmatprep.subr.mxu0 0.0
  %5617 = vmatpush1.msra.mxu0 0.0
  %5618 = vmatprep.subr.mxu0 0.0
  %5619 = vmatpush1.msra.mxu0 0.0
  %5620 = vmatprep.subr.mxu0 0.0
  %5621 = vmatpush1.msra.mxu0 0.0
  %5622 = vmatprep.subr.mxu0 0.0
  %5623 = vmatpush1.msra.mxu0 0.0
  %5624 = vmatprep.subr.mxu0 0.0
  %5625 = vmatpush1.msra.mxu0 0.0
  %5626 = vmatprep.subr.mxu0 0.0
  %5627 = vmatpush1.msra.mxu0 0.0
  %5628 = vmatprep.subr.mxu0 0.0
  %5629 = vmatpush1.msra.mxu0 0.0
  %5630 = vmatprep.subr.mxu0 0.0
  %5631 = vmatpush1.msra.mxu0 0.0
  %5632 = vmatprep.subr.mxu0 0.0
  %5633 = vmatpush1.msra.mxu0 0.0
  %5634 = vmatprep.subr.mxu0 0.0
  %5635 = vmatpush1.msra.mxu0 0.0
  %5636 = vmatprep.subr.mxu0 0.0
  %5637 = vmatpush1.msra.mxu0 0.0
  %5638 = vmatprep.subr.mxu0 0.0
  %5639 = vmatpush1.msra.mxu0 0.0
  %5640 = vmatprep.mubr.f32.mxu0 0.0
  %v5641 = vand.u32 %v5155, 4294901760
  %5642 = vmatmul.mubr.f32.gmra.mrb[0].mxu0 %v5641
  %v5643 = vpop.f32.mrb[0].mxu0
  %v5644 = vadd.f32 %v5568, %v5643
  %v5645 = vpop.f32.mrb[0].mxu0
  %v5646 = vadd.f32 %v5570, %v5645
  %5647 = vdwg.mxu0
  %v5648 = vand.u32 %v5117, 4294901760
  %5649 = vmatprep.subr.mxu0 %v5648
  %v5650 = vand.u32 %v5116, 4294901760
  %5651 = vmatpush1.msra.mxu0 %v5650
  %v5652 = vand.u32 %v5133, 4294901760
  %5653 = vmatprep.subr.mxu0 %v5652
  %v5654 = vand.u32 %v5132, 4294901760
  %5655 = vmatpush1.msra.mxu0 %v5654
  %5656 = vmatprep.subr.mxu0 0.0
  %5657 = vmatpush1.msra.mxu0 0.0
  %5658 = vmatprep.subr.mxu0 0.0
  %5659 = vmatpush1.msra.mxu0 0.0
  %5660 = vmatprep.subr.mxu0 0.0
  %5661 = vmatpush1.msra.mxu0 0.0
  %5662 = vmatprep.subr.mxu0 0.0
  %5663 = vmatpush1.msra.mxu0 0.0
  %5664 = vmatprep.subr.mxu0 0.0
  %5665 = vmatpush1.msra.mxu0 0.0
  %5666 = vmatprep.subr.mxu0 0.0
  %5667 = vmatpush1.msra.mxu0 0.0
  %5668 = vmatprep.subr.mxu0 0.0
  %5669 = vmatpush1.msra.mxu0 0.0
  %5670 = vmatprep.subr.mxu0 0.0
  %5671 = vmatpush1.msra.mxu0 0.0
  %5672 = vmatprep.subr.mxu0 0.0
  %5673 = vmatpush1.msra.mxu0 0.0
  %5674 = vmatprep.subr.mxu0 0.0
  %5675 = vmatpush1.msra.mxu0 0.0
  %5676 = vmatprep.subr.mxu0 0.0
  %5677 = vmatpush1.msra.mxu0 0.0
  %5678 = vmatprep.subr.mxu0 0.0
  %5679 = vmatpush1.msra.mxu0 0.0
  %5680 = vmatprep.subr.mxu0 0.0
  %5681 = vmatpush1.msra.mxu0 0.0
  %5682 = vmatprep.subr.mxu0 0.0
  %5683 = vmatpush1.msra.mxu0 0.0
  %5684 = vmatprep.subr.mxu0 0.0
  %5685 = vmatpush1.msra.mxu0 0.0
  %5686 = vmatprep.subr.mxu0 0.0
  %5687 = vmatpush1.msra.mxu0 0.0
  %5688 = vmatprep.subr.mxu0 0.0
  %5689 = vmatpush1.msra.mxu0 0.0
  %5690 = vmatprep.subr.mxu0 0.0
  %5691 = vmatpush1.msra.mxu0 0.0
  %5692 = vmatprep.subr.mxu0 0.0
  %5693 = vmatpush1.msra.mxu0 0.0
  %5694 = vmatprep.subr.mxu0 0.0
  %5695 = vmatpush1.msra.mxu0 0.0
  %5696 = vmatprep.subr.mxu0 0.0
  %5697 = vmatpush1.msra.mxu0 0.0
  %5698 = vmatprep.subr.mxu0 0.0
  %5699 = vmatpush1.msra.mxu0 0.0
  %5700 = vmatprep.subr.mxu0 0.0
  %5701 = vmatpush1.msra.mxu0 0.0
  %5702 = vmatprep.subr.mxu0 0.0
  %5703 = vmatpush1.msra.mxu0 0.0
  %5704 = vmatprep.subr.mxu0 0.0
  %5705 = vmatpush1.msra.mxu0 0.0
  %5706 = vmatprep.subr.mxu0 0.0
  %5707 = vmatpush1.msra.mxu0 0.0
  %5708 = vmatprep.subr.mxu0 0.0
  %5709 = vmatpush1.msra.mxu0 0.0
  %5710 = vmatprep.subr.mxu0 0.0
  %5711 = vmatpush1.msra.mxu0 0.0
  %5712 = vmatprep.subr.mxu0 0.0
  %5713 = vmatpush1.msra.mxu0 0.0
  %5714 = vmatprep.subr.mxu0 0.0
  %5715 = vmatpush1.msra.mxu0 0.0
  %5716 = vmatprep.mubr.f32.mxu0 0.0
  %v5717 = vand.u32 %v5155, 4294901760
  %v5718 = vsub.f32 %v5155, %v5717
  %v5719 = vand.u32 %v5718, 4294901760
  %v5720 = vsub.f32 %v5718, %v5719
  %v5721 = vand.u32 %v5720, 4294901760
  %5722 = vmatmul.mubr.f32.gmra.mrb[0].mxu0 %v5721
  %v5723 = vpop.f32.mrb[0].mxu0
  %v5724 = vadd.f32 %v5151, %v5723
  %v5725 = vpop.f32.mrb[0].mxu0
  %v5726 = vadd.f32 %v5151, %v5725
  %5727 = vdwg.mxu0
  %v5728 = vand.u32 %v5117, 4294901760
  %v5729 = vsub.f32 %v5117, %v5728
  %v5730 = vand.u32 %v5729, 4294901760
  %v5731 = vsub.f32 %v5729, %v5730
  %v5732 = vand.u32 %v5731, 4294901760
  %5733 = vmatprep.subr.mxu0 %v5732
  %v5734 = vand.u32 %v5116, 4294901760
  %v5735 = vsub.f32 %v5116, %v5734
  %v5736 = vand.u32 %v5735, 4294901760
  %v5737 = vsub.f32 %v5735, %v5736
  %v5738 = vand.u32 %v5737, 4294901760
  %5739 = vmatpush1.msra.mxu0 %v5738
  %v5740 = vand.u32 %v5133, 4294901760
  %v5741 = vsub.f32 %v5133, %v5740
  %v5742 = vand.u32 %v5741, 4294901760
  %v5743 = vsub.f32 %v5741, %v5742
  %v5744 = vand.u32 %v5743, 4294901760
  %5745 = vmatprep.subr.mxu0 %v5744
  %v5746 = vand.u32 %v5132, 4294901760
  %v5747 = vsub.f32 %v5132, %v5746
  %v5748 = vand.u32 %v5747, 4294901760
  %v5749 = vsub.f32 %v5747, %v5748
  %v5750 = vand.u32 %v5749, 4294901760
  %5751 = vmatpush1.msra.mxu0 %v5750
  %5752 = vmatprep.subr.mxu0 0.0
  %5753 = vmatpush1.msra.mxu0 0.0
  %5754 = vmatprep.subr.mxu0 0.0
  %5755 = vmatpush1.msra.mxu0 0.0
  %5756 = vmatprep.subr.mxu0 0.0
  %5757 = vmatpush1.msra.mxu0 0.0
  %5758 = vmatprep.subr.mxu0 0.0
  %5759 = vmatpush1.msra.mxu0 0.0
  %5760 = vmatprep.subr.mxu0 0.0
  %5761 = vmatpush1.msra.mxu0 0.0
  %5762 = vmatprep.subr.mxu0 0.0
  %5763 = vmatpush1.msra.mxu0 0.0
  %5764 = vmatprep.subr.mxu0 0.0
  %5765 = vmatpush1.msra.mxu0 0.0
  %5766 = vmatprep.subr.mxu0 0.0
  %5767 = vmatpush1.msra.mxu0 0.0
  %5768 = vmatprep.subr.mxu0 0.0
  %5769 = vmatpush1.msra.mxu0 0.0
  %5770 = vmatprep.subr.mxu0 0.0
  %5771 = vmatpush1.msra.mxu0 0.0
  %5772 = vmatprep.subr.mxu0 0.0
  %5773 = vmatpush1.msra.mxu0 0.0
  %5774 = vmatprep.subr.mxu0 0.0
  %5775 = vmatpush1.msra.mxu0 0.0
  %5776 = vmatprep.subr.mxu0 0.0
  %5777 = vmatpush1.msra.mxu0 0.0
  %5778 = vmatprep.subr.mxu0 0.0
  %5779 = vmatpush1.msra.mxu0 0.0
  %5780 = vmatprep.subr.mxu0 0.0
  %5781 = vmatpush1.msra.mxu0 0.0
  %5782 = vmatprep.subr.mxu0 0.0
  %5783 = vmatpush1.msra.mxu0 0.0
  %5784 = vmatprep.subr.mxu0 0.0
  %5785 = vmatpush1.msra.mxu0 0.0
  %5786 = vmatprep.subr.mxu0 0.0
  %5787 = vmatpush1.msra.mxu0 0.0
  %5788 = vmatprep.subr.mxu0 0.0
  %5789 = vmatpush1.msra.mxu0 0.0
  %5790 = vmatprep.subr.mxu0 0.0
  %5791 = vmatpush1.msra.mxu0 0.0
  %5792 = vmatprep.subr.mxu0 0.0
  %5793 = vmatpush1.msra.mxu0 0.0
  %5794 = vmatprep.subr.mxu0 0.0
  %5795 = vmatpush1.msra.mxu0 0.0
  %5796 = vmatprep.subr.mxu0 0.0
  %5797 = vmatpush1.msra.mxu0 0.0
  %5798 = vmatprep.subr.mxu0 0.0
  %5799 = vmatpush1.msra.mxu0 0.0
  %5800 = vmatprep.subr.mxu0 0.0
  %5801 = vmatpush1.msra.mxu0 0.0
  %5802 = vmatprep.subr.mxu0 0.0
  %5803 = vmatpush1.msra.mxu0 0.0
  %5804 = vmatprep.subr.mxu0 0.0
  %5805 = vmatpush1.msra.mxu0 0.0
  %5806 = vmatprep.subr.mxu0 0.0
  %5807 = vmatpush1.msra.mxu0 0.0
  %5808 = vmatprep.subr.mxu0 0.0
  %5809 = vmatpush1.msra.mxu0 0.0
  %5810 = vmatprep.subr.mxu0 0.0
  %5811 = vmatpush1.msra.mxu0 0.0
  %5812 = vmatprep.mubr.f32.mxu0 0.0
  %v5813 = vand.u32 %v5155, 4294901760
  %5814 = vmatmul.mubr.f32.gmra.mrb[0].mxu0 %v5813
  %v5815 = vpop.f32.mrb[0].mxu0
  %v5816 = vadd.f32 %v5724, %v5815
  %v5817 = vpop.f32.mrb[0].mxu0
  %v5818 = vadd.f32 %v5726, %v5817
  %5819 = vdwg.mxu0
  %v5820 = vand.u32 %v5117, 4294901760
  %v5821 = vsub.f32 %v5117, %v5820
  %5822 = vmatprep.subr.mxu0 %v5821
  %v5823 = vand.u32 %v5116, 4294901760
  %v5824 = vsub.f32 %v5116, %v5823
  %5825 = vmatpush1.msra.mxu0 %v5824
  %v5826 = vand.u32 %v5133, 4294901760
  %v5827 = vsub.f32 %v5133, %v5826
  %5828 = vmatprep.subr.mxu0 %v5827
  %v5829 = vand.u32 %v5132, 4294901760
  %v5830 = vsub.f32 %v5132, %v5829
  %5831 = vmatpush1.msra.mxu0 %v5830
  %5832 = vmatprep.subr.mxu0 0.0
  %5833 = vmatpush1.msra.mxu0 0.0
  %5834 = vmatprep.subr.mxu0 0.0
  %5835 = vmatpush1.msra.mxu0 0.0
  %5836 = vmatprep.subr.mxu0 0.0
  %5837 = vmatpush1.msra.mxu0 0.0
  %5838 = vmatprep.subr.mxu0 0.0
  %5839 = vmatpush1.msra.mxu0 0.0
  %5840 = vmatprep.subr.mxu0 0.0
  %5841 = vmatpush1.msra.mxu0 0.0
  %5842 = vmatprep.subr.mxu0 0.0
  %5843 = vmatpush1.msra.mxu0 0.0
  %5844 = vmatprep.subr.mxu0 0.0
  %5845 = vmatpush1.msra.mxu0 0.0
  %5846 = vmatprep.subr.mxu0 0.0
  %5847 = vmatpush1.msra.mxu0 0.0
  %5848 = vmatprep.subr.mxu0 0.0
  %5849 = vmatpush1.msra.mxu0 0.0
  %5850 = vmatprep.subr.mxu0 0.0
  %5851 = vmatpush1.msra.mxu0 0.0
  %5852 = vmatprep.subr.mxu0 0.0
  %5853 = vmatpush1.msra.mxu0 0.0
  %5854 = vmatprep.subr.mxu0 0.0
  %5855 = vmatpush1.msra.mxu0 0.0
  %5856 = vmatprep.subr.mxu0 0.0
  %5857 = vmatpush1.msra.mxu0 0.0
  %5858 = vmatprep.subr.mxu0 0.0
  %5859 = vmatpush1.msra.mxu0 0.0
  %5860 = vmatprep.subr.mxu0 0.0
  %5861 = vmatpush1.msra.mxu0 0.0
  %5862 = vmatprep.subr.mxu0 0.0
  %5863 = vmatpush1.msra.mxu0 0.0
  %5864 = vmatprep.subr.mxu0 0.0
  %5865 = vmatpush1.msra.mxu0 0.0
  %5866 = vmatprep.subr.mxu0 0.0
  %5867 = vmatpush1.msra.mxu0 0.0
  %5868 = vmatprep.subr.mxu0 0.0
  %5869 = vmatpush1.msra.mxu0 0.0
  %5870 = vmatprep.subr.mxu0 0.0
  %5871 = vmatpush1.msra.mxu0 0.0
  %5872 = vmatprep.subr.mxu0 0.0
  %5873 = vmatpush1.msra.mxu0 0.0
  %5874 = vmatprep.subr.mxu0 0.0
  %5875 = vmatpush1.msra.mxu0 0.0
  %5876 = vmatprep.subr.mxu0 0.0
  %5877 = vmatpush1.msra.mxu0 0.0
  %5878 = vmatprep.subr.mxu0 0.0
  %5879 = vmatpush1.msra.mxu0 0.0
  %5880 = vmatprep.subr.mxu0 0.0
  %5881 = vmatpush1.msra.mxu0 0.0
  %5882 = vmatprep.subr.mxu0 0.0
  %5883 = vmatpush1.msra.mxu0 0.0
  %5884 = vmatprep.subr.mxu0 0.0
  %5885 = vmatpush1.msra.mxu0 0.0
  %5886 = vmatprep.subr.mxu0 0.0
  %5887 = vmatpush1.msra.mxu0 0.0
  %5888 = vmatprep.subr.mxu0 0.0
  %5889 = vmatpush1.msra.mxu0 0.0
  %5890 = vmatprep.subr.mxu0 0.0
  %5891 = vmatpush1.msra.mxu0 0.0
  %5892 = vmatprep.mubr.f32.mxu0 0.0
  %v5893 = vand.u32 %v5155, 4294901760
  %v5894 = vsub.f32 %v5155, %v5893
  %5895 = vmatmul.mubr.f32.gmra.mrb[0].mxu0 %v5894
  %v5896 = vpop.f32.mrb[0].mxu0
  %v5897 = vadd.f32 %v5816, %v5896
  %v5898 = vpop.f32.mrb[0].mxu0
  %v5899 = vadd.f32 %v5818, %v5898
  %5900 = vdwg.mxu0
  %v5901 = vand.u32 %v5117, 4294901760
  %5902 = vmatprep.subr.mxu0 %v5901
  %v5903 = vand.u32 %v5116, 4294901760
  %5904 = vmatpush1.msra.mxu0 %v5903
  %v5905 = vand.u32 %v5133, 4294901760
  %5906 = vmatprep.subr.mxu0 %v5905
  %v5907 = vand.u32 %v5132, 4294901760
  %5908 = vmatpush1.msra.mxu0 %v5907
  %5909 = vmatprep.subr.mxu0 0.0
  %5910 = vmatpush1.msra.mxu0 0.0
  %5911 = vmatprep.subr.mxu0 0.0
  %5912 = vmatpush1.msra.mxu0 0.0
  %5913 = vmatprep.subr.mxu0 0.0
  %5914 = vmatpush1.msra.mxu0 0.0
  %5915 = vmatprep.subr.mxu0 0.0
  %5916 = vmatpush1.msra.mxu0 0.0
  %5917 = vmatprep.subr.mxu0 0.0
  %5918 = vmatpush1.msra.mxu0 0.0
  %5919 = vmatprep.subr.mxu0 0.0
  %5920 = vmatpush1.msra.mxu0 0.0
  %5921 = vmatprep.subr.mxu0 0.0
  %5922 = vmatpush1.msra.mxu0 0.0
  %5923 = vmatprep.subr.mxu0 0.0
  %5924 = vmatpush1.msra.mxu0 0.0
  %5925 = vmatprep.subr.mxu0 0.0
  %5926 = vmatpush1.msra.mxu0 0.0
  %5927 = vmatprep.subr.mxu0 0.0
  %5928 = vmatpush1.msra.mxu0 0.0
  %5929 = vmatprep.subr.mxu0 0.0
  %5930 = vmatpush1.msra.mxu0 0.0
  %5931 = vmatprep.subr.mxu0 0.0
  %5932 = vmatpush1.msra.mxu0 0.0
  %5933 = vmatprep.subr.mxu0 0.0
  %5934 = vmatpush1.msra.mxu0 0.0
  %5935 = vmatprep.subr.mxu0 0.0
  %5936 = vmatpush1.msra.mxu0 0.0
  %5937 = vmatprep.subr.mxu0 0.0
  %5938 = vmatpush1.msra.mxu0 0.0
  %5939 = vmatprep.subr.mxu0 0.0
  %5940 = vmatpush1.msra.mxu0 0.0
  %5941 = vmatprep.subr.mxu0 0.0
  %5942 = vmatpush1.msra.mxu0 0.0
  %5943 = vmatprep.subr.mxu0 0.0
  %5944 = vmatpush1.msra.mxu0 0.0
  %5945 = vmatprep.subr.mxu0 0.0
  %5946 = vmatpush1.msra.mxu0 0.0
  %5947 = vmatprep.subr.mxu0 0.0
  %5948 = vmatpush1.msra.mxu0 0.0
  %5949 = vmatprep.subr.mxu0 0.0
  %5950 = vmatpush1.msra.mxu0 0.0
  %5951 = vmatprep.subr.mxu0 0.0
  %5952 = vmatpush1.msra.mxu0 0.0
  %5953 = vmatprep.subr.mxu0 0.0
  %5954 = vmatpush1.msra.mxu0 0.0
  %5955 = vmatprep.subr.mxu0 0.0
  %5956 = vmatpush1.msra.mxu0 0.0
  %5957 = vmatprep.subr.mxu0 0.0
  %5958 = vmatpush1.msra.mxu0 0.0
  %5959 = vmatprep.subr.mxu0 0.0
  %5960 = vmatpush1.msra.mxu0 0.0
  %5961 = vmatprep.subr.mxu0 0.0
  %5962 = vmatpush1.msra.mxu0 0.0
  %5963 = vmatprep.subr.mxu0 0.0
  %5964 = vmatpush1.msra.mxu0 0.0
  %5965 = vmatprep.subr.mxu0 0.0
  %5966 = vmatpush1.msra.mxu0 0.0
  %5967 = vmatprep.subr.mxu0 0.0
  %5968 = vmatpush1.msra.mxu0 0.0
  %5969 = vmatprep.mubr.f32.mxu0 0.0
  %v5970 = vand.u32 %v5155, 4294901760
  %v5971 = vsub.f32 %v5155, %v5970
  %v5972 = vand.u32 %v5971, 4294901760
  %5973 = vmatmul.mubr.f32.gmra.mrb[0].mxu0 %v5972
  %v5974 = vpop.f32.mrb[0].mxu0
  %v5975 = vadd.f32 %v5897, %v5974
  %v5976 = vpop.f32.mrb[0].mxu0
  %v5977 = vadd.f32 %v5899, %v5976
  %5978 = vdwg.mxu0
  %v5979 = vand.u32 %v5117, 4294901760
  %v5980 = vsub.f32 %v5117, %v5979
  %v5981 = vand.u32 %v5980, 4294901760
  %5982 = vmatprep.subr.mxu0 %v5981
  %v5983 = vand.u32 %v5116, 4294901760
  %v5984 = vsub.f32 %v5116, %v5983
  %v5985 = vand.u32 %v5984, 4294901760
  %5986 = vmatpush1.msra.mxu0 %v5985
  %v5987 = vand.u32 %v5133, 4294901760
  %v5988 = vsub.f32 %v5133, %v5987
  %v5989 = vand.u32 %v5988, 4294901760
  %5990 = vmatprep.subr.mxu0 %v5989
  %v5991 = vand.u32 %v5132, 4294901760
  %v5992 = vsub.f32 %v5132, %v5991
  %v5993 = vand.u32 %v5992, 4294901760
  %5994 = vmatpush1.msra.mxu0 %v5993
  %5995 = vmatprep.subr.mxu0 0.0
  %5996 = vmatpush1.msra.mxu0 0.0
  %5997 = vmatprep.subr.mxu0 0.0
  %5998 = vmatpush1.msra.mxu0 0.0
  %5999 = vmatprep.subr.mxu0 0.0
  %6000 = vmatpush1.msra.mxu0 0.0
  %6001 = vmatprep.subr.mxu0 0.0
  %6002 = vmatpush1.msra.mxu0 0.0
  %6003 = vmatprep.subr.mxu0 0.0
  %6004 = vmatpush1.msra.mxu0 0.0
  %6005 = vmatprep.subr.mxu0 0.0
  %6006 = vmatpush1.msra.mxu0 0.0
  %6007 = vmatprep.subr.mxu0 0.0
  %6008 = vmatpush1.msra.mxu0 0.0
  %6009 = vmatprep.subr.mxu0 0.0
  %6010 = vmatpush1.msra.mxu0 0.0
  %6011 = vmatprep.subr.mxu0 0.0
  %6012 = vmatpush1.msra.mxu0 0.0
  %6013 = vmatprep.subr.mxu0 0.0
  %6014 = vmatpush1.msra.mxu0 0.0
  %6015 = vmatprep.subr.mxu0 0.0
  %6016 = vmatpush1.msra.mxu0 0.0
  %6017 = vmatprep.subr.mxu0 0.0
  %6018 = vmatpush1.msra.mxu0 0.0
  %6019 = vmatprep.subr.mxu0 0.0
  %6020 = vmatpush1.msra.mxu0 0.0
  %6021 = vmatprep.subr.mxu0 0.0
  %6022 = vmatpush1.msra.mxu0 0.0
  %6023 = vmatprep.subr.mxu0 0.0
  %6024 = vmatpush1.msra.mxu0 0.0
  %6025 = vmatprep.subr.mxu0 0.0
  %6026 = vmatpush1.msra.mxu0 0.0
  %6027 = vmatprep.subr.mxu0 0.0
  %6028 = vmatpush1.msra.mxu0 0.0
  %6029 = vmatprep.subr.mxu0 0.0
  %6030 = vmatpush1.msra.mxu0 0.0
  %6031 = vmatprep.subr.mxu0 0.0
  %6032 = vmatpush1.msra.mxu0 0.0
  %6033 = vmatprep.subr.mxu0 0.0
  %6034 = vmatpush1.msra.mxu0 0.0
  %6035 = vmatprep.subr.mxu0 0.0
  %6036 = vmatpush1.msra.mxu0 0.0
  %6037 = vmatprep.subr.mxu0 0.0
  %6038 = vmatpush1.msra.mxu0 0.0
  %6039 = vmatprep.subr.mxu0 0.0
  %6040 = vmatpush1.msra.mxu0 0.0
  %6041 = vmatprep.subr.mxu0 0.0
  %6042 = vmatpush1.msra.mxu0 0.0
  %6043 = vmatprep.subr.mxu0 0.0
  %6044 = vmatpush1.msra.mxu0 0.0
  %6045 = vmatprep.subr.mxu0 0.0
  %6046 = vmatpush1.msra.mxu0 0.0
  %6047 = vmatprep.subr.mxu0 0.0
  %6048 = vmatpush1.msra.mxu0 0.0
  %6049 = vmatprep.subr.mxu0 0.0
  %6050 = vmatpush1.msra.mxu0 0.0
  %6051 = vmatprep.subr.mxu0 0.0
  %6052 = vmatpush1.msra.mxu0 0.0
  %6053 = vmatprep.subr.mxu0 0.0
  %6054 = vmatpush1.msra.mxu0 0.0
  %6055 = vmatprep.mubr.f32.mxu0 0.0
  %v6056 = vand.u32 %v5155, 4294901760
  %6057 = vmatmul.mubr.f32.gmra.mrb[0].mxu0 %v6056
  %v6058 = vpop.f32.mrb[0].mxu0
  %v6059 = vadd.f32 %v5975, %v6058
  %v6060 = vpop.f32.mrb[0].mxu0
  %v6061 = vadd.f32 %v5977, %v6060
  %6062 = vdwg.mxu0
  %v6063 = vand.u32 %v5117, 4294901760
  %6064 = vmatprep.subr.mxu0 %v6063
  %v6065 = vand.u32 %v5116, 4294901760
  %6066 = vmatpush1.msra.mxu0 %v6065
  %v6067 = vand.u32 %v5133, 4294901760
  %6068 = vmatprep.subr.mxu0 %v6067
  %v6069 = vand.u32 %v5132, 4294901760
  %6070 = vmatpush1.msra.mxu0 %v6069
  %6071 = vmatprep.subr.mxu0 0.0
  %6072 = vmatpush1.msra.mxu0 0.0
  %6073 = vmatprep.subr.mxu0 0.0
  %6074 = vmatpush1.msra.mxu0 0.0
  %6075 = vmatprep.subr.mxu0 0.0
  %6076 = vmatpush1.msra.mxu0 0.0
  %6077 = vmatprep.subr.mxu0 0.0
  %6078 = vmatpush1.msra.mxu0 0.0
  %6079 = vmatprep.subr.mxu0 0.0
  %6080 = vmatpush1.msra.mxu0 0.0
  %6081 = vmatprep.subr.mxu0 0.0
  %6082 = vmatpush1.msra.mxu0 0.0
  %6083 = vmatprep.subr.mxu0 0.0
  %6084 = vmatpush1.msra.mxu0 0.0
  %6085 = vmatprep.subr.mxu0 0.0
  %6086 = vmatpush1.msra.mxu0 0.0
  %6087 = vmatprep.subr.mxu0 0.0
  %6088 = vmatpush1.msra.mxu0 0.0
  %6089 = vmatprep.subr.mxu0 0.0
  %6090 = vmatpush1.msra.mxu0 0.0
  %6091 = vmatprep.subr.mxu0 0.0
  %6092 = vmatpush1.msra.mxu0 0.0
  %6093 = vmatprep.subr.mxu0 0.0
  %6094 = vmatpush1.msra.mxu0 0.0
  %6095 = vmatprep.subr.mxu0 0.0
  %6096 = vmatpush1.msra.mxu0 0.0
  %6097 = vmatprep.subr.mxu0 0.0
  %6098 = vmatpush1.msra.mxu0 0.0
  %6099 = vmatprep.subr.mxu0 0.0
  %6100 = vmatpush1.msra.mxu0 0.0
  %6101 = vmatprep.subr.mxu0 0.0
  %6102 = vmatpush1.msra.mxu0 0.0
  %6103 = vmatprep.subr.mxu0 0.0
  %6104 = vmatpush1.msra.mxu0 0.0
  %6105 = vmatprep.subr.mxu0 0.0
  %6106 = vmatpush1.msra.mxu0 0.0
  %6107 = vmatprep.subr.mxu0 0.0
  %6108 = vmatpush1.msra.mxu0 0.0
  %6109 = vmatprep.subr.mxu0 0.0
  %6110 = vmatpush1.msra.mxu0 0.0
  %6111 = vmatprep.subr.mxu0 0.0
  %6112 = vmatpush1.msra.mxu0 0.0
  %6113 = vmatprep.subr.mxu0 0.0
  %6114 = vmatpush1.msra.mxu0 0.0
  %6115 = vmatprep.subr.mxu0 0.0
  %6116 = vmatpush1.msra.mxu0 0.0
  %6117 = vmatprep.subr.mxu0 0.0
  %6118 = vmatpush1.msra.mxu0 0.0
  %6119 = vmatprep.subr.mxu0 0.0
  %6120 = vmatpush1.msra.mxu0 0.0
  %6121 = vmatprep.subr.mxu0 0.0
  %6122 = vmatpush1.msra.mxu0 0.0
  %6123 = vmatprep.subr.mxu0 0.0
  %6124 = vmatpush1.msra.mxu0 0.0
  %6125 = vmatprep.subr.mxu0 0.0
  %6126 = vmatpush1.msra.mxu0 0.0
  %6127 = vmatprep.subr.mxu0 0.0
  %6128 = vmatpush1.msra.mxu0 0.0
  %6129 = vmatprep.subr.mxu0 0.0
  %6130 = vmatpush1.msra.mxu0 0.0
  %6131 = vmatprep.mubr.f32.mxu0 0.0
  %v6132 = vand.u32 %v5155, 4294901760
  %6133 = vmatmul.mubr.f32.gmra.mrb[0].mxu0 %v6132
  %v6134 = vpop.f32.mrb[0].mxu0
  %v6135 = vadd.f32 %v6059, %v6134
  %v6136 = vpop.f32.mrb[0].mxu0
  %v6137 = vadd.f32 %v6061, %v6136
  %6138 = vdwg.mxu0
  %v6139 = vand.u32 %v5119, 4294901760
  %6140 = vmatprep.subr.mxu0 %v6139
  %v6141 = vand.u32 %v5118, 4294901760
  %6142 = vmatpush1.msra.mxu0 %v6141
  %v6143 = vand.u32 %v5135, 4294901760
  %6144 = vmatprep.subr.mxu0 %v6143
  %v6145 = vand.u32 %v5134, 4294901760
  %6146 = vmatpush1.msra.mxu0 %v6145
  %6147 = vmatprep.subr.mxu0 0.0
  %6148 = vmatpush1.msra.mxu0 0.0
  %6149 = vmatprep.subr.mxu0 0.0
  %6150 = vmatpush1.msra.mxu0 0.0
  %6151 = vmatprep.subr.mxu0 0.0
  %6152 = vmatpush1.msra.mxu0 0.0
  %6153 = vmatprep.subr.mxu0 0.0
  %6154 = vmatpush1.msra.mxu0 0.0
  %6155 = vmatprep.subr.mxu0 0.0
  %6156 = vmatpush1.msra.mxu0 0.0
  %6157 = vmatprep.subr.mxu0 0.0
  %6158 = vmatpush1.msra.mxu0 0.0
  %6159 = vmatprep.subr.mxu0 0.0
  %6160 = vmatpush1.msra.mxu0 0.0
  %6161 = vmatprep.subr.mxu0 0.0
  %6162 = vmatpush1.msra.mxu0 0.0
  %6163 = vmatprep.subr.mxu0 0.0
  %6164 = vmatpush1.msra.mxu0 0.0
  %6165 = vmatprep.subr.mxu0 0.0
  %6166 = vmatpush1.msra.mxu0 0.0
  %6167 = vmatprep.subr.mxu0 0.0
  %6168 = vmatpush1.msra.mxu0 0.0
  %6169 = vmatprep.subr.mxu0 0.0
  %6170 = vmatpush1.msra.mxu0 0.0
  %6171 = vmatprep.subr.mxu0 0.0
  %6172 = vmatpush1.msra.mxu0 0.0
  %6173 = vmatprep.subr.mxu0 0.0
  %6174 = vmatpush1.msra.mxu0 0.0
  %6175 = vmatprep.subr.mxu0 0.0
  %6176 = vmatpush1.msra.mxu0 0.0
  %6177 = vmatprep.subr.mxu0 0.0
  %6178 = vmatpush1.msra.mxu0 0.0
  %6179 = vmatprep.subr.mxu0 0.0
  %6180 = vmatpush1.msra.mxu0 0.0
  %6181 = vmatprep.subr.mxu0 0.0
  %6182 = vmatpush1.msra.mxu0 0.0
  %6183 = vmatprep.subr.mxu0 0.0
  %6184 = vmatpush1.msra.mxu0 0.0
  %6185 = vmatprep.subr.mxu0 0.0
  %6186 = vmatpush1.msra.mxu0 0.0
  %6187 = vmatprep.subr.mxu0 0.0
  %6188 = vmatpush1.msra.mxu0 0.0
  %6189 = vmatprep.subr.mxu0 0.0
  %6190 = vmatpush1.msra.mxu0 0.0
  %6191 = vmatprep.subr.mxu0 0.0
  %6192 = vmatpush1.msra.mxu0 0.0
  %6193 = vmatprep.subr.mxu0 0.0
  %6194 = vmatpush1.msra.mxu0 0.0
  %6195 = vmatprep.subr.mxu0 0.0
  %6196 = vmatpush1.msra.mxu0 0.0
  %6197 = vmatprep.subr.mxu0 0.0
  %6198 = vmatpush1.msra.mxu0 0.0
  %6199 = vmatprep.subr.mxu0 0.0
  %6200 = vmatpush1.msra.mxu0 0.0
  %6201 = vmatprep.subr.mxu0 0.0
  %6202 = vmatpush1.msra.mxu0 0.0
  %6203 = vmatprep.subr.mxu0 0.0
  %6204 = vmatpush1.msra.mxu0 0.0
  %6205 = vmatprep.subr.mxu0 0.0
  %6206 = vmatpush1.msra.mxu0 0.0
  %6207 = vmatprep.mubr.f32.mxu0 0.0
  %v6208 = vand.u32 %v5155, 4294901760
  %v6209 = vsub.f32 %v5155, %v6208
  %v6210 = vand.u32 %v6209, 4294901760
  %v6211 = vsub.f32 %v6209, %v6210
  %v6212 = vand.u32 %v6211, 4294901760
  %6213 = vmatmul.mubr.f32.gmra.mrb[0].mxu0 %v6212
  %v6214 = vpop.f32.mrb[0].mxu0
  %v6215 = vadd.f32 %v5151, %v6214
  %v6216 = vpop.f32.mrb[0].mxu0
  %v6217 = vadd.f32 %v5151, %v6216
  %6218 = vdwg.mxu0
  %v6219 = vand.u32 %v5119, 4294901760
  %v6220 = vsub.f32 %v5119, %v6219
  %v6221 = vand.u32 %v6220, 4294901760
  %v6222 = vsub.f32 %v6220, %v6221
  %v6223 = vand.u32 %v6222, 4294901760
  %6224 = vmatprep.subr.mxu0 %v6223
  %v6225 = vand.u32 %v5118, 4294901760
  %v6226 = vsub.f32 %v5118, %v6225
  %v6227 = vand.u32 %v6226, 4294901760
  %v6228 = vsub.f32 %v6226, %v6227
  %v6229 = vand.u32 %v6228, 4294901760
  %6230 = vmatpush1.msra.mxu0 %v6229
  %v6231 = vand.u32 %v5135, 4294901760
  %v6232 = vsub.f32 %v5135, %v6231
  %v6233 = vand.u32 %v6232, 4294901760
  %v6234 = vsub.f32 %v6232, %v6233
  %v6235 = vand.u32 %v6234, 4294901760
  %6236 = vmatprep.subr.mxu0 %v6235
  %v6237 = vand.u32 %v5134, 4294901760
  %v6238 = vsub.f32 %v5134, %v6237
  %v6239 = vand.u32 %v6238, 4294901760
  %v6240 = vsub.f32 %v6238, %v6239
  %v6241 = vand.u32 %v6240, 4294901760
  %6242 = vmatpush1.msra.mxu0 %v6241
  %6243 = vmatprep.subr.mxu0 0.0
  %6244 = vmatpush1.msra.mxu0 0.0
  %6245 = vmatprep.subr.mxu0 0.0
  %6246 = vmatpush1.msra.mxu0 0.0
  %6247 = vmatprep.subr.mxu0 0.0
  %6248 = vmatpush1.msra.mxu0 0.0
  %6249 = vmatprep.subr.mxu0 0.0
  %6250 = vmatpush1.msra.mxu0 0.0
  %6251 = vmatprep.subr.mxu0 0.0
  %6252 = vmatpush1.msra.mxu0 0.0
  %6253 = vmatprep.subr.mxu0 0.0
  %6254 = vmatpush1.msra.mxu0 0.0
  %6255 = vmatprep.subr.mxu0 0.0
  %6256 = vmatpush1.msra.mxu0 0.0
  %6257 = vmatprep.subr.mxu0 0.0
  %6258 = vmatpush1.msra.mxu0 0.0
  %6259 = vmatprep.subr.mxu0 0.0
  %6260 = vmatpush1.msra.mxu0 0.0
  %6261 = vmatprep.subr.mxu0 0.0
  %6262 = vmatpush1.msra.mxu0 0.0
  %6263 = vmatprep.subr.mxu0 0.0
  %6264 = vmatpush1.msra.mxu0 0.0
  %6265 = vmatprep.subr.mxu0 0.0
  %6266 = vmatpush1.msra.mxu0 0.0
  %6267 = vmatprep.subr.mxu0 0.0
  %6268 = vmatpush1.msra.mxu0 0.0
  %6269 = vmatprep.subr.mxu0 0.0
  %6270 = vmatpush1.msra.mxu0 0.0
  %6271 = vmatprep.subr.mxu0 0.0
  %6272 = vmatpush1.msra.mxu0 0.0
  %6273 = vmatprep.subr.mxu0 0.0
  %6274 = vmatpush1.msra.mxu0 0.0
  %6275 = vmatprep.subr.mxu0 0.0
  %6276 = vmatpush1.msra.mxu0 0.0
  %6277 = vmatprep.subr.mxu0 0.0
  %6278 = vmatpush1.msra.mxu0 0.0
  %6279 = vmatprep.subr.mxu0 0.0
  %6280 = vmatpush1.msra.mxu0 0.0
  %6281 = vmatprep.subr.mxu0 0.0
  %6282 = vmatpush1.msra.mxu0 0.0
  %6283 = vmatprep.subr.mxu0 0.0
  %6284 = vmatpush1.msra.mxu0 0.0
  %6285 = vmatprep.subr.mxu0 0.0
  %6286 = vmatpush1.msra.mxu0 0.0
  %6287 = vmatprep.subr.mxu0 0.0
  %6288 = vmatpush1.msra.mxu0 0.0
  %6289 = vmatprep.subr.mxu0 0.0
  %6290 = vmatpush1.msra.mxu0 0.0
  %6291 = vmatprep.subr.mxu0 0.0
  %6292 = vmatpush1.msra.mxu0 0.0
  %6293 = vmatprep.subr.mxu0 0.0
  %6294 = vmatpush1.msra.mxu0 0.0
  %6295 = vmatprep.subr.mxu0 0.0
  %6296 = vmatpush1.msra.mxu0 0.0
  %6297 = vmatprep.subr.mxu0 0.0
  %6298 = vmatpush1.msra.mxu0 0.0
  %6299 = vmatprep.subr.mxu0 0.0
  %6300 = vmatpush1.msra.mxu0 0.0
  %6301 = vmatprep.subr.mxu0 0.0
  %6302 = vmatpush1.msra.mxu0 0.0
  %6303 = vmatprep.mubr.f32.mxu0 0.0
  %v6304 = vand.u32 %v5155, 4294901760
  %6305 = vmatmul.mubr.f32.gmra.mrb[0].mxu0 %v6304
  %v6306 = vpop.f32.mrb[0].mxu0
  %v6307 = vadd.f32 %v6215, %v6306
  %v6308 = vpop.f32.mrb[0].mxu0
  %v6309 = vadd.f32 %v6217, %v6308
  %6310 = vdwg.mxu0
  %v6311 = vand.u32 %v5119, 4294901760
  %v6312 = vsub.f32 %v5119, %v6311
  %6313 = vmatprep.subr.mxu0 %v6312
  %v6314 = vand.u32 %v5118, 4294901760
  %v6315 = vsub.f32 %v5118, %v6314
  %6316 = vmatpush1.msra.mxu0 %v6315
  %v6317 = vand.u32 %v5135, 4294901760
  %v6318 = vsub.f32 %v5135, %v6317
  %6319 = vmatprep.subr.mxu0 %v6318
  %v6320 = vand.u32 %v5134, 4294901760
  %v6321 = vsub.f32 %v5134, %v6320
  %6322 = vmatpush1.msra.mxu0 %v6321
  %6323 = vmatprep.subr.mxu0 0.0
  %6324 = vmatpush1.msra.mxu0 0.0
  %6325 = vmatprep.subr.mxu0 0.0
  %6326 = vmatpush1.msra.mxu0 0.0
  %6327 = vmatprep.subr.mxu0 0.0
  %6328 = vmatpush1.msra.mxu0 0.0
  %6329 = vmatprep.subr.mxu0 0.0
  %6330 = vmatpush1.msra.mxu0 0.0
  %6331 = vmatprep.subr.mxu0 0.0
  %6332 = vmatpush1.msra.mxu0 0.0
  %6333 = vmatprep.subr.mxu0 0.0
  %6334 = vmatpush1.msra.mxu0 0.0
  %6335 = vmatprep.subr.mxu0 0.0
  %6336 = vmatpush1.msra.mxu0 0.0
  %6337 = vmatprep.subr.mxu0 0.0
  %6338 = vmatpush1.msra.mxu0 0.0
  %6339 = vmatprep.subr.mxu0 0.0
  %6340 = vmatpush1.msra.mxu0 0.0
  %6341 = vmatprep.subr.mxu0 0.0
  %6342 = vmatpush1.msra.mxu0 0.0
  %6343 = vmatprep.subr.mxu0 0.0
  %6344 = vmatpush1.msra.mxu0 0.0
  %6345 = vmatprep.subr.mxu0 0.0
  %6346 = vmatpush1.msra.mxu0 0.0
  %6347 = vmatprep.subr.mxu0 0.0
  %6348 = vmatpush1.msra.mxu0 0.0
  %6349 = vmatprep.subr.mxu0 0.0
  %6350 = vmatpush1.msra.mxu0 0.0
  %6351 = vmatprep.subr.mxu0 0.0
  %6352 = vmatpush1.msra.mxu0 0.0
  %6353 = vmatprep.subr.mxu0 0.0
  %6354 = vmatpush1.msra.mxu0 0.0
  %6355 = vmatprep.subr.mxu0 0.0
  %6356 = vmatpush1.msra.mxu0 0.0
  %6357 = vmatprep.subr.mxu0 0.0
  %6358 = vmatpush1.msra.mxu0 0.0
  %6359 = vmatprep.subr.mxu0 0.0
  %6360 = vmatpush1.msra.mxu0 0.0
  %6361 = vmatprep.subr.mxu0 0.0
  %6362 = vmatpush1.msra.mxu0 0.0
  %6363 = vmatprep.subr.mxu0 0.0
  %6364 = vmatpush1.msra.mxu0 0.0
  %6365 = vmatprep.subr.mxu0 0.0
  %6366 = vmatpush1.msra.mxu0 0.0
  %6367 = vmatprep.subr.mxu0 0.0
  %6368 = vmatpush1.msra.mxu0 0.0
  %6369 = vmatprep.subr.mxu0 0.0
  %6370 = vmatpush1.msra.mxu0 0.0
  %6371 = vmatprep.subr.mxu0 0.0
  %6372 = vmatpush1.msra.mxu0 0.0
  %6373 = vmatprep.subr.mxu0 0.0
  %6374 = vmatpush1.msra.mxu0 0.0
  %6375 = vmatprep.subr.mxu0 0.0
  %6376 = vmatpush1.msra.mxu0 0.0
  %6377 = vmatprep.subr.mxu0 0.0
  %6378 = vmatpush1.msra.mxu0 0.0
  %6379 = vmatprep.subr.mxu0 0.0
  %6380 = vmatpush1.msra.mxu0 0.0
  %6381 = vmatprep.subr.mxu0 0.0
  %6382 = vmatpush1.msra.mxu0 0.0
  %6383 = vmatprep.mubr.f32.mxu0 0.0
  %v6384 = vand.u32 %v5155, 4294901760
  %v6385 = vsub.f32 %v5155, %v6384
  %6386 = vmatmul.mubr.f32.gmra.mrb[0].mxu0 %v6385
  %v6387 = vpop.f32.mrb[0].mxu0
  %v6388 = vadd.f32 %v6307, %v6387
  %v6389 = vpop.f32.mrb[0].mxu0
  %v6390 = vadd.f32 %v6309, %v6389
  %6391 = vdwg.mxu0
  %v6392 = vand.u32 %v5119, 4294901760
  %6393 = vmatprep.subr.mxu0 %v6392
  %v6394 = vand.u32 %v5118, 4294901760
  %6395 = vmatpush1.msra.mxu0 %v6394
  %v6396 = vand.u32 %v5135, 4294901760
  %6397 = vmatprep.subr.mxu0 %v6396
  %v6398 = vand.u32 %v5134, 4294901760
  %6399 = vmatpush1.msra.mxu0 %v6398
  %6400 = vmatprep.subr.mxu0 0.0
  %6401 = vmatpush1.msra.mxu0 0.0
  %6402 = vmatprep.subr.mxu0 0.0
  %6403 = vmatpush1.msra.mxu0 0.0
  %6404 = vmatprep.subr.mxu0 0.0
  %6405 = vmatpush1.msra.mxu0 0.0
  %6406 = vmatprep.subr.mxu0 0.0
  %6407 = vmatpush1.msra.mxu0 0.0
  %6408 = vmatprep.subr.mxu0 0.0
  %6409 = vmatpush1.msra.mxu0 0.0
  %6410 = vmatprep.subr.mxu0 0.0
  %6411 = vmatpush1.msra.mxu0 0.0
  %6412 = vmatprep.subr.mxu0 0.0
  %6413 = vmatpush1.msra.mxu0 0.0
  %6414 = vmatprep.subr.mxu0 0.0
  %6415 = vmatpush1.msra.mxu0 0.0
  %6416 = vmatprep.subr.mxu0 0.0
  %6417 = vmatpush1.msra.mxu0 0.0
  %6418 = vmatprep.subr.mxu0 0.0
  %6419 = vmatpush1.msra.mxu0 0.0
  %6420 = vmatprep.subr.mxu0 0.0
  %6421 = vmatpush1.msra.mxu0 0.0
  %6422 = vmatprep.subr.mxu0 0.0
  %6423 = vmatpush1.msra.mxu0 0.0
  %6424 = vmatprep.subr.mxu0 0.0
  %6425 = vmatpush1.msra.mxu0 0.0
  %6426 = vmatprep.subr.mxu0 0.0
  %6427 = vmatpush1.msra.mxu0 0.0
  %6428 = vmatprep.subr.mxu0 0.0
  %6429 = vmatpush1.msra.mxu0 0.0
  %6430 = vmatprep.subr.mxu0 0.0
  %6431 = vmatpush1.msra.mxu0 0.0
  %6432 = vmatprep.subr.mxu0 0.0
  %6433 = vmatpush1.msra.mxu0 0.0
  %6434 = vmatprep.subr.mxu0 0.0
  %6435 = vmatpush1.msra.mxu0 0.0
  %6436 = vmatprep.subr.mxu0 0.0
  %6437 = vmatpush1.msra.mxu0 0.0
  %6438 = vmatprep.subr.mxu0 0.0
  %6439 = vmatpush1.msra.mxu0 0.0
  %6440 = vmatprep.subr.mxu0 0.0
  %6441 = vmatpush1.msra.mxu0 0.0
  %6442 = vmatprep.subr.mxu0 0.0
  %6443 = vmatpush1.msra.mxu0 0.0
  %6444 = vmatprep.subr.mxu0 0.0
  %6445 = vmatpush1.msra.mxu0 0.0
  %6446 = vmatprep.subr.mxu0 0.0
  %6447 = vmatpush1.msra.mxu0 0.0
  %6448 = vmatprep.subr.mxu0 0.0
  %6449 = vmatpush1.msra.mxu0 0.0
  %6450 = vmatprep.subr.mxu0 0.0
  %6451 = vmatpush1.msra.mxu0 0.0
  %6452 = vmatprep.subr.mxu0 0.0
  %6453 = vmatpush1.msra.mxu0 0.0
  %6454 = vmatprep.subr.mxu0 0.0
  %6455 = vmatpush1.msra.mxu0 0.0
  %6456 = vmatprep.subr.mxu0 0.0
  %6457 = vmatpush1.msra.mxu0 0.0
  %6458 = vmatprep.subr.mxu0 0.0
  %6459 = vmatpush1.msra.mxu0 0.0
  %6460 = vmatprep.mubr.f32.mxu0 0.0
  %v6461 = vand.u32 %v5155, 4294901760
  %v6462 = vsub.f32 %v5155, %v6461
  %v6463 = vand.u32 %v6462, 4294901760
  %6464 = vmatmul.mubr.f32.gmra.mrb[0].mxu0 %v6463
  %v6465 = vpop.f32.mrb[0].mxu0
  %v6466 = vadd.f32 %v6388, %v6465
  %v6467 = vpop.f32.mrb[0].mxu0
  %v6468 = vadd.f32 %v6390, %v6467
  %6469 = vdwg.mxu0
  %v6470 = vand.u32 %v5119, 4294901760
  %v6471 = vsub.f32 %v5119, %v6470
  %v6472 = vand.u32 %v6471, 4294901760
  %6473 = vmatprep.subr.mxu0 %v6472
  %v6474 = vand.u32 %v5118, 4294901760
  %v6475 = vsub.f32 %v5118, %v6474
  %v6476 = vand.u32 %v6475, 4294901760
  %6477 = vmatpush1.msra.mxu0 %v6476
  %v6478 = vand.u32 %v5135, 4294901760
  %v6479 = vsub.f32 %v5135, %v6478
  %v6480 = vand.u32 %v6479, 4294901760
  %6481 = vmatprep.subr.mxu0 %v6480
  %v6482 = vand.u32 %v5134, 4294901760
  %v6483 = vsub.f32 %v5134, %v6482
  %v6484 = vand.u32 %v6483, 4294901760
  %6485 = vmatpush1.msra.mxu0 %v6484
  %6486 = vmatprep.subr.mxu0 0.0
  %6487 = vmatpush1.msra.mxu0 0.0
  %6488 = vmatprep.subr.mxu0 0.0
  %6489 = vmatpush1.msra.mxu0 0.0
  %6490 = vmatprep.subr.mxu0 0.0
  %6491 = vmatpush1.msra.mxu0 0.0
  %6492 = vmatprep.subr.mxu0 0.0
  %6493 = vmatpush1.msra.mxu0 0.0
  %6494 = vmatprep.subr.mxu0 0.0
  %6495 = vmatpush1.msra.mxu0 0.0
  %6496 = vmatprep.subr.mxu0 0.0
  %6497 = vmatpush1.msra.mxu0 0.0
  %6498 = vmatprep.subr.mxu0 0.0
  %6499 = vmatpush1.msra.mxu0 0.0
  %6500 = vmatprep.subr.mxu0 0.0
  %6501 = vmatpush1.msra.mxu0 0.0
  %6502 = vmatprep.subr.mxu0 0.0
  %6503 = vmatpush1.msra.mxu0 0.0
  %6504 = vmatprep.subr.mxu0 0.0
  %6505 = vmatpush1.msra.mxu0 0.0
  %6506 = vmatprep.subr.mxu0 0.0
  %6507 = vmatpush1.msra.mxu0 0.0
  %6508 = vmatprep.subr.mxu0 0.0
  %6509 = vmatpush1.msra.mxu0 0.0
  %6510 = vmatprep.subr.mxu0 0.0
  %6511 = vmatpush1.msra.mxu0 0.0
  %6512 = vmatprep.subr.mxu0 0.0
  %6513 = vmatpush1.msra.mxu0 0.0
  %6514 = vmatprep.subr.mxu0 0.0
  %6515 = vmatpush1.msra.mxu0 0.0
  %6516 = vmatprep.subr.mxu0 0.0
  %6517 = vmatpush1.msra.mxu0 0.0
  %6518 = vmatprep.subr.mxu0 0.0
  %6519 = vmatpush1.msra.mxu0 0.0
  %6520 = vmatprep.subr.mxu0 0.0
  %6521 = vmatpush1.msra.mxu0 0.0
  %6522 = vmatprep.subr.mxu0 0.0
  %6523 = vmatpush1.msra.mxu0 0.0
  %6524 = vmatprep.subr.mxu0 0.0
  %6525 = vmatpush1.msra.mxu0 0.0
  %6526 = vmatprep.subr.mxu0 0.0
  %6527 = vmatpush1.msra.mxu0 0.0
  %6528 = vmatprep.subr.mxu0 0.0
  %6529 = vmatpush1.msra.mxu0 0.0
  %6530 = vmatprep.subr.mxu0 0.0
  %6531 = vmatpush1.msra.mxu0 0.0
  %6532 = vmatprep.subr.mxu0 0.0
  %6533 = vmatpush1.msra.mxu0 0.0
  %6534 = vmatprep.subr.mxu0 0.0
  %6535 = vmatpush1.msra.mxu0 0.0
  %6536 = vmatprep.subr.mxu0 0.0
  %6537 = vmatpush1.msra.mxu0 0.0
  %6538 = vmatprep.subr.mxu0 0.0
  %6539 = vmatpush1.msra.mxu0 0.0
  %6540 = vmatprep.subr.mxu0 0.0
  %6541 = vmatpush1.msra.mxu0 0.0
  %6542 = vmatprep.subr.mxu0 0.0
  %6543 = vmatpush1.msra.mxu0 0.0
  %6544 = vmatprep.subr.mxu0 0.0
  %6545 = vmatpush1.msra.mxu0 0.0
  %6546 = vmatprep.mubr.f32.mxu0 0.0
  %v6547 = vand.u32 %v5155, 4294901760
  %6548 = vmatmul.mubr.f32.gmra.mrb[0].mxu0 %v6547
  %v6549 = vpop.f32.mrb[0].mxu0
  %v6550 = vadd.f32 %v6466, %v6549
  %v6551 = vpop.f32.mrb[0].mxu0
  %v6552 = vadd.f32 %v6468, %v6551
  %6553 = vdwg.mxu0
  %v6554 = vand.u32 %v5119, 4294901760
  %6555 = vmatprep.subr.mxu0 %v6554
  %v6556 = vand.u32 %v5118, 4294901760
  %6557 = vmatpush1.msra.mxu0 %v6556
  %v6558 = vand.u32 %v5135, 4294901760
  %6559 = vmatprep.subr.mxu0 %v6558
  %v6560 = vand.u32 %v5134, 4294901760
  %6561 = vmatpush1.msra.mxu0 %v6560
  %6562 = vmatprep.subr.mxu0 0.0
  %6563 = vmatpush1.msra.mxu0 0.0
  %6564 = vmatprep.subr.mxu0 0.0
  %6565 = vmatpush1.msra.mxu0 0.0
  %6566 = vmatprep.subr.mxu0 0.0
  %6567 = vmatpush1.msra.mxu0 0.0
  %6568 = vmatprep.subr.mxu0 0.0
  %6569 = vmatpush1.msra.mxu0 0.0
  %6570 = vmatprep.subr.mxu0 0.0
  %6571 = vmatpush1.msra.mxu0 0.0
  %6572 = vmatprep.subr.mxu0 0.0
  %6573 = vmatpush1.msra.mxu0 0.0
  %6574 = vmatprep.subr.mxu0 0.0
  %6575 = vmatpush1.msra.mxu0 0.0
  %6576 = vmatprep.subr.mxu0 0.0
  %6577 = vmatpush1.msra.mxu0 0.0
  %6578 = vmatprep.subr.mxu0 0.0
  %6579 = vmatpush1.msra.mxu0 0.0
  %6580 = vmatprep.subr.mxu0 0.0
  %6581 = vmatpush1.msra.mxu0 0.0
  %6582 = vmatprep.subr.mxu0 0.0
  %6583 = vmatpush1.msra.mxu0 0.0
  %6584 = vmatprep.subr.mxu0 0.0
  %6585 = vmatpush1.msra.mxu0 0.0
  %6586 = vmatprep.subr.mxu0 0.0
  %6587 = vmatpush1.msra.mxu0 0.0
  %6588 = vmatprep.subr.mxu0 0.0
  %6589 = vmatpush1.msra.mxu0 0.0
  %6590 = vmatprep.subr.mxu0 0.0
  %6591 = vmatpush1.msra.mxu0 0.0
  %6592 = vmatprep.subr.mxu0 0.0
  %6593 = vmatpush1.msra.mxu0 0.0
  %6594 = vmatprep.subr.mxu0 0.0
  %6595 = vmatpush1.msra.mxu0 0.0
  %6596 = vmatprep.subr.mxu0 0.0
  %6597 = vmatpush1.msra.mxu0 0.0
  %6598 = vmatprep.subr.mxu0 0.0
  %6599 = vmatpush1.msra.mxu0 0.0
  %6600 = vmatprep.subr.mxu0 0.0
  %6601 = vmatpush1.msra.mxu0 0.0
  %6602 = vmatprep.subr.mxu0 0.0
  %6603 = vmatpush1.msra.mxu0 0.0
  %6604 = vmatprep.subr.mxu0 0.0
  %6605 = vmatpush1.msra.mxu0 0.0
  %6606 = vmatprep.subr.mxu0 0.0
  %6607 = vmatpush1.msra.mxu0 0.0
  %6608 = vmatprep.subr.mxu0 0.0
  %6609 = vmatpush1.msra.mxu0 0.0
  %6610 = vmatprep.subr.mxu0 0.0
  %6611 = vmatpush1.msra.mxu0 0.0
  %6612 = vmatprep.subr.mxu0 0.0
  %6613 = vmatpush1.msra.mxu0 0.0
  %6614 = vmatprep.subr.mxu0 0.0
  %6615 = vmatpush1.msra.mxu0 0.0
  %6616 = vmatprep.subr.mxu0 0.0
  %6617 = vmatpush1.msra.mxu0 0.0
  %6618 = vmatprep.subr.mxu0 0.0
  %6619 = vmatpush1.msra.mxu0 0.0
  %6620 = vmatprep.subr.mxu0 0.0
  %6621 = vmatpush1.msra.mxu0 0.0
  %6622 = vmatprep.mubr.f32.mxu0 0.0
  %v6623 = vand.u32 %v5155, 4294901760
  %6624 = vmatmul.mubr.f32.gmra.mrb[0].mxu0 %v6623
  %v6625 = vpop.f32.mrb[0].mxu0
  %v6626 = vadd.f32 %v6550, %v6625
  %v6627 = vpop.f32.mrb[0].mxu0
  %v6628 = vadd.f32 %v6552, %v6627
  %6629 = vdwg.mxu0
  %v6630 = vand.u32 %v5121, 4294901760
  %6631 = vmatprep.subr.mxu0 %v6630
  %v6632 = vand.u32 %v5120, 4294901760
  %6633 = vmatpush1.msra.mxu0 %v6632
  %v6634 = vand.u32 %v5137, 4294901760
  %6635 = vmatprep.subr.mxu0 %v6634
  %v6636 = vand.u32 %v5136, 4294901760
  %6637 = vmatpush1.msra.mxu0 %v6636
  %6638 = vmatprep.subr.mxu0 0.0
  %6639 = vmatpush1.msra.mxu0 0.0
  %6640 = vmatprep.subr.mxu0 0.0
  %6641 = vmatpush1.msra.mxu0 0.0
  %6642 = vmatprep.subr.mxu0 0.0
  %6643 = vmatpush1.msra.mxu0 0.0
  %6644 = vmatprep.subr.mxu0 0.0
  %6645 = vmatpush1.msra.mxu0 0.0
  %6646 = vmatprep.subr.mxu0 0.0
  %6647 = vmatpush1.msra.mxu0 0.0
  %6648 = vmatprep.subr.mxu0 0.0
  %6649 = vmatpush1.msra.mxu0 0.0
  %6650 = vmatprep.subr.mxu0 0.0
  %6651 = vmatpush1.msra.mxu0 0.0
  %6652 = vmatprep.subr.mxu0 0.0
  %6653 = vmatpush1.msra.mxu0 0.0
  %6654 = vmatprep.subr.mxu0 0.0
  %6655 = vmatpush1.msra.mxu0 0.0
  %6656 = vmatprep.subr.mxu0 0.0
  %6657 = vmatpush1.msra.mxu0 0.0
  %6658 = vmatprep.subr.mxu0 0.0
  %6659 = vmatpush1.msra.mxu0 0.0
  %6660 = vmatprep.subr.mxu0 0.0
  %6661 = vmatpush1.msra.mxu0 0.0
  %6662 = vmatprep.subr.mxu0 0.0
  %6663 = vmatpush1.msra.mxu0 0.0
  %6664 = vmatprep.subr.mxu0 0.0
  %6665 = vmatpush1.msra.mxu0 0.0
  %6666 = vmatprep.subr.mxu0 0.0
  %6667 = vmatpush1.msra.mxu0 0.0
  %6668 = vmatprep.subr.mxu0 0.0
  %6669 = vmatpush1.msra.mxu0 0.0
  %6670 = vmatprep.subr.mxu0 0.0
  %6671 = vmatpush1.msra.mxu0 0.0
  %6672 = vmatprep.subr.mxu0 0.0
  %6673 = vmatpush1.msra.mxu0 0.0
  %6674 = vmatprep.subr.mxu0 0.0
  %6675 = vmatpush1.msra.mxu0 0.0
  %6676 = vmatprep.subr.mxu0 0.0
  %6677 = vmatpush1.msra.mxu0 0.0
  %6678 = vmatprep.subr.mxu0 0.0
  %6679 = vmatpush1.msra.mxu0 0.0
  %6680 = vmatprep.subr.mxu0 0.0
  %6681 = vmatpush1.msra.mxu0 0.0
  %6682 = vmatprep.subr.mxu0 0.0
  %6683 = vmatpush1.msra.mxu0 0.0
  %6684 = vmatprep.subr.mxu0 0.0
  %6685 = vmatpush1.msra.mxu0 0.0
  %6686 = vmatprep.subr.mxu0 0.0
  %6687 = vmatpush1.msra.mxu0 0.0
  %6688 = vmatprep.subr.mxu0 0.0
  %6689 = vmatpush1.msra.mxu0 0.0
  %6690 = vmatprep.subr.mxu0 0.0
  %6691 = vmatpush1.msra.mxu0 0.0
  %6692 = vmatprep.subr.mxu0 0.0
  %6693 = vmatpush1.msra.mxu0 0.0
  %6694 = vmatprep.subr.mxu0 0.0
  %6695 = vmatpush1.msra.mxu0 0.0
  %6696 = vmatprep.subr.mxu0 0.0
  %6697 = vmatpush1.msra.mxu0 0.0
  %6698 = vmatprep.mubr.f32.mxu0 0.0
  %v6699 = vand.u32 %v5155, 4294901760
  %v6700 = vsub.f32 %v5155, %v6699
  %v6701 = vand.u32 %v6700, 4294901760
  %v6702 = vsub.f32 %v6700, %v6701
  %v6703 = vand.u32 %v6702, 4294901760
  %6704 = vmatmul.mubr.f32.gmra.mrb[0].mxu0 %v6703
  %v6705 = vpop.f32.mrb[0].mxu0
  %v6706 = vadd.f32 %v5151, %v6705
  %v6707 = vpop.f32.mrb[0].mxu0
  %v6708 = vadd.f32 %v5151, %v6707
  %6709 = vdwg.mxu0
  %v6710 = vand.u32 %v5121, 4294901760
  %v6711 = vsub.f32 %v5121, %v6710
  %v6712 = vand.u32 %v6711, 4294901760
  %v6713 = vsub.f32 %v6711, %v6712
  %v6714 = vand.u32 %v6713, 4294901760
  %6715 = vmatprep.subr.mxu0 %v6714
  %v6716 = vand.u32 %v5120, 4294901760
  %v6717 = vsub.f32 %v5120, %v6716
  %v6718 = vand.u32 %v6717, 4294901760
  %v6719 = vsub.f32 %v6717, %v6718
  %v6720 = vand.u32 %v6719, 4294901760
  %6721 = vmatpush1.msra.mxu0 %v6720
  %v6722 = vand.u32 %v5137, 4294901760
  %v6723 = vsub.f32 %v5137, %v6722
  %v6724 = vand.u32 %v6723, 4294901760
  %v6725 = vsub.f32 %v6723, %v6724
  %v6726 = vand.u32 %v6725, 4294901760
  %6727 = vmatprep.subr.mxu0 %v6726
  %v6728 = vand.u32 %v5136, 4294901760
  %v6729 = vsub.f32 %v5136, %v6728
  %v6730 = vand.u32 %v6729, 4294901760
  %v6731 = vsub.f32 %v6729, %v6730
  %v6732 = vand.u32 %v6731, 4294901760
  %6733 = vmatpush1.msra.mxu0 %v6732
  %6734 = vmatprep.subr.mxu0 0.0
  %6735 = vmatpush1.msra.mxu0 0.0
  %6736 = vmatprep.subr.mxu0 0.0
  %6737 = vmatpush1.msra.mxu0 0.0
  %6738 = vmatprep.subr.mxu0 0.0
  %6739 = vmatpush1.msra.mxu0 0.0
  %6740 = vmatprep.subr.mxu0 0.0
  %6741 = vmatpush1.msra.mxu0 0.0
  %6742 = vmatprep.subr.mxu0 0.0
  %6743 = vmatpush1.msra.mxu0 0.0
  %6744 = vmatprep.subr.mxu0 0.0
  %6745 = vmatpush1.msra.mxu0 0.0
  %6746 = vmatprep.subr.mxu0 0.0
  %6747 = vmatpush1.msra.mxu0 0.0
  %6748 = vmatprep.subr.mxu0 0.0
  %6749 = vmatpush1.msra.mxu0 0.0
  %6750 = vmatprep.subr.mxu0 0.0
  %6751 = vmatpush1.msra.mxu0 0.0
  %6752 = vmatprep.subr.mxu0 0.0
  %6753 = vmatpush1.msra.mxu0 0.0
  %6754 = vmatprep.subr.mxu0 0.0
  %6755 = vmatpush1.msra.mxu0 0.0
  %6756 = vmatprep.subr.mxu0 0.0
  %6757 = vmatpush1.msra.mxu0 0.0
  %6758 = vmatprep.subr.mxu0 0.0
  %6759 = vmatpush1.msra.mxu0 0.0
  %6760 = vmatprep.subr.mxu0 0.0
  %6761 = vmatpush1.msra.mxu0 0.0
  %6762 = vmatprep.subr.mxu0 0.0
  %6763 = vmatpush1.msra.mxu0 0.0
  %6764 = vmatprep.subr.mxu0 0.0
  %6765 = vmatpush1.msra.mxu0 0.0
  %6766 = vmatprep.subr.mxu0 0.0
  %6767 = vmatpush1.msra.mxu0 0.0
  %6768 = vmatprep.subr.mxu0 0.0
  %6769 = vmatpush1.msra.mxu0 0.0
  %6770 = vmatprep.subr.mxu0 0.0
  %6771 = vmatpush1.msra.mxu0 0.0
  %6772 = vmatprep.subr.mxu0 0.0
  %6773 = vmatpush1.msra.mxu0 0.0
  %6774 = vmatprep.subr.mxu0 0.0
  %6775 = vmatpush1.msra.mxu0 0.0
  %6776 = vmatprep.subr.mxu0 0.0
  %6777 = vmatpush1.msra.mxu0 0.0
  %6778 = vmatprep.subr.mxu0 0.0
  %6779 = vmatpush1.msra.mxu0 0.0
  %6780 = vmatprep.subr.mxu0 0.0
  %6781 = vmatpush1.msra.mxu0 0.0
  %6782 = vmatprep.subr.mxu0 0.0
  %6783 = vmatpush1.msra.mxu0 0.0
  %6784 = vmatprep.subr.mxu0 0.0
  %6785 = vmatpush1.msra.mxu0 0.0
  %6786 = vmatprep.subr.mxu0 0.0
  %6787 = vmatpush1.msra.mxu0 0.0
  %6788 = vmatprep.subr.mxu0 0.0
  %6789 = vmatpush1.msra.mxu0 0.0
  %6790 = vmatprep.subr.mxu0 0.0
  %6791 = vmatpush1.msra.mxu0 0.0
  %6792 = vmatprep.subr.mxu0 0.0
  %6793 = vmatpush1.msra.mxu0 0.0
  %6794 = vmatprep.mubr.f32.mxu0 0.0
  %v6795 = vand.u32 %v5155, 4294901760
  %6796 = vmatmul.mubr.f32.gmra.mrb[0].mxu0 %v6795
  %v6797 = vpop.f32.mrb[0].mxu0
  %v6798 = vadd.f32 %v6706, %v6797
  %v6799 = vpop.f32.mrb[0].mxu0
  %v6800 = vadd.f32 %v6708, %v6799
  %6801 = vdwg.mxu0
  %v6802 = vand.u32 %v5121, 4294901760
  %v6803 = vsub.f32 %v5121, %v6802
  %6804 = vmatprep.subr.mxu0 %v6803
  %v6805 = vand.u32 %v5120, 4294901760
  %v6806 = vsub.f32 %v5120, %v6805
  %6807 = vmatpush1.msra.mxu0 %v6806
  %v6808 = vand.u32 %v5137, 4294901760
  %v6809 = vsub.f32 %v5137, %v6808
  %6810 = vmatprep.subr.mxu0 %v6809
  %v6811 = vand.u32 %v5136, 4294901760
  %v6812 = vsub.f32 %v5136, %v6811
  %6813 = vmatpush1.msra.mxu0 %v6812
  %6814 = vmatprep.subr.mxu0 0.0
  %6815 = vmatpush1.msra.mxu0 0.0
  %6816 = vmatprep.subr.mxu0 0.0
  %6817 = vmatpush1.msra.mxu0 0.0
  %6818 = vmatprep.subr.mxu0 0.0
  %6819 = vmatpush1.msra.mxu0 0.0
  %6820 = vmatprep.subr.mxu0 0.0
  %6821 = vmatpush1.msra.mxu0 0.0
  %6822 = vmatprep.subr.mxu0 0.0
  %6823 = vmatpush1.msra.mxu0 0.0
  %6824 = vmatprep.subr.mxu0 0.0
  %6825 = vmatpush1.msra.mxu0 0.0
  %6826 = vmatprep.subr.mxu0 0.0
  %6827 = vmatpush1.msra.mxu0 0.0
  %6828 = vmatprep.subr.mxu0 0.0
  %6829 = vmatpush1.msra.mxu0 0.0
  %6830 = vmatprep.subr.mxu0 0.0
  %6831 = vmatpush1.msra.mxu0 0.0
  %6832 = vmatprep.subr.mxu0 0.0
  %6833 = vmatpush1.msra.mxu0 0.0
  %6834 = vmatprep.subr.mxu0 0.0
  %6835 = vmatpush1.msra.mxu0 0.0
  %6836 = vmatprep.subr.mxu0 0.0
  %6837 = vmatpush1.msra.mxu0 0.0
  %6838 = vmatprep.subr.mxu0 0.0
  %6839 = vmatpush1.msra.mxu0 0.0
  %6840 = vmatprep.subr.mxu0 0.0
  %6841 = vmatpush1.msra.mxu0 0.0
  %6842 = vmatprep.subr.mxu0 0.0
  %6843 = vmatpush1.msra.mxu0 0.0
  %6844 = vmatprep.subr.mxu0 0.0
  %6845 = vmatpush1.msra.mxu0 0.0
  %6846 = vmatprep.subr.mxu0 0.0
  %6847 = vmatpush1.msra.mxu0 0.0
  %6848 = vmatprep.subr.mxu0 0.0
  %6849 = vmatpush1.msra.mxu0 0.0
  %6850 = vmatprep.subr.mxu0 0.0
  %6851 = vmatpush1.msra.mxu0 0.0
  %6852 = vmatprep.subr.mxu0 0.0
  %6853 = vmatpush1.msra.mxu0 0.0
  %6854 = vmatprep.subr.mxu0 0.0
  %6855 = vmatpush1.msra.mxu0 0.0
  %6856 = vmatprep.subr.mxu0 0.0
  %6857 = vmatpush1.msra.mxu0 0.0
  %6858 = vmatprep.subr.mxu0 0.0
  %6859 = vmatpush1.msra.mxu0 0.0
  %6860 = vmatprep.subr.mxu0 0.0
  %6861 = vmatpush1.msra.mxu0 0.0
  %6862 = vmatprep.subr.mxu0 0.0
  %6863 = vmatpush1.msra.mxu0 0.0
  %6864 = vmatprep.subr.mxu0 0.0
  %6865 = vmatpush1.msra.mxu0 0.0
  %6866 = vmatprep.subr.mxu0 0.0
  %6867 = vmatpush1.msra.mxu0 0.0
  %6868 = vmatprep.subr.mxu0 0.0
  %6869 = vmatpush1.msra.mxu0 0.0
  %6870 = vmatprep.subr.mxu0 0.0
  %6871 = vmatpush1.msra.mxu0 0.0
  %6872 = vmatprep.subr.mxu0 0.0
  %6873 = vmatpush1.msra.mxu0 0.0
  %6874 = vmatprep.mubr.f32.mxu0 0.0
  %v6875 = vand.u32 %v5155, 4294901760
  %v6876 = vsub.f32 %v5155, %v6875
  %6877 = vmatmul.mubr.f32.gmra.mrb[0].mxu0 %v6876
  %v6878 = vpop.f32.mrb[0].mxu0
  %v6879 = vadd.f32 %v6798, %v6878
  %v6880 = vpop.f32.mrb[0].mxu0
  %v6881 = vadd.f32 %v6800, %v6880
  %6882 = vdwg.mxu0
  %v6883 = vand.u32 %v5121, 4294901760
  %6884 = vmatprep.subr.mxu0 %v6883
  %v6885 = vand.u32 %v5120, 4294901760
  %6886 = vmatpush1.msra.mxu0 %v6885
  %v6887 = vand.u32 %v5137, 4294901760
  %6888 = vmatprep.subr.mxu0 %v6887
  %v6889 = vand.u32 %v5136, 4294901760
  %6890 = vmatpush1.msra.mxu0 %v6889
  %6891 = vmatprep.subr.mxu0 0.0
  %6892 = vmatpush1.msra.mxu0 0.0
  %6893 = vmatprep.subr.mxu0 0.0
  %6894 = vmatpush1.msra.mxu0 0.0
  %6895 = vmatprep.subr.mxu0 0.0
  %6896 = vmatpush1.msra.mxu0 0.0
  %6897 = vmatprep.subr.mxu0 0.0
  %6898 = vmatpush1.msra.mxu0 0.0
  %6899 = vmatprep.subr.mxu0 0.0
  %6900 = vmatpush1.msra.mxu0 0.0
  %6901 = vmatprep.subr.mxu0 0.0
  %6902 = vmatpush1.msra.mxu0 0.0
  %6903 = vmatprep.subr.mxu0 0.0
  %6904 = vmatpush1.msra.mxu0 0.0
  %6905 = vmatprep.subr.mxu0 0.0
  %6906 = vmatpush1.msra.mxu0 0.0
  %6907 = vmatprep.subr.mxu0 0.0
  %6908 = vmatpush1.msra.mxu0 0.0
  %6909 = vmatprep.subr.mxu0 0.0
  %6910 = vmatpush1.msra.mxu0 0.0
  %6911 = vmatprep.subr.mxu0 0.0
  %6912 = vmatpush1.msra.mxu0 0.0
  %6913 = vmatprep.subr.mxu0 0.0
  %6914 = vmatpush1.msra.mxu0 0.0
  %6915 = vmatprep.subr.mxu0 0.0
  %6916 = vmatpush1.msra.mxu0 0.0
  %6917 = vmatprep.subr.mxu0 0.0
  %6918 = vmatpush1.msra.mxu0 0.0
  %6919 = vmatprep.subr.mxu0 0.0
  %6920 = vmatpush1.msra.mxu0 0.0
  %6921 = vmatprep.subr.mxu0 0.0
  %6922 = vmatpush1.msra.mxu0 0.0
  %6923 = vmatprep.subr.mxu0 0.0
  %6924 = vmatpush1.msra.mxu0 0.0
  %6925 = vmatprep.subr.mxu0 0.0
  %6926 = vmatpush1.msra.mxu0 0.0
  %6927 = vmatprep.subr.mxu0 0.0
  %6928 = vmatpush1.msra.mxu0 0.0
  %6929 = vmatprep.subr.mxu0 0.0
  %6930 = vmatpush1.msra.mxu0 0.0
  %6931 = vmatprep.subr.mxu0 0.0
  %6932 = vmatpush1.msra.mxu0 0.0
  %6933 = vmatprep.subr.mxu0 0.0
  %6934 = vmatpush1.msra.mxu0 0.0
  %6935 = vmatprep.subr.mxu0 0.0
  %6936 = vmatpush1.msra.mxu0 0.0
  %6937 = vmatprep.subr.mxu0 0.0
  %6938 = vmatpush1.msra.mxu0 0.0
  %6939 = vmatprep.subr.mxu0 0.0
  %6940 = vmatpush1.msra.mxu0 0.0
  %6941 = vmatprep.subr.mxu0 0.0
  %6942 = vmatpush1.msra.mxu0 0.0
  %6943 = vmatprep.subr.mxu0 0.0
  %6944 = vmatpush1.msra.mxu0 0.0
  %6945 = vmatprep.subr.mxu0 0.0
  %6946 = vmatpush1.msra.mxu0 0.0
  %6947 = vmatprep.subr.mxu0 0.0
  %6948 = vmatpush1.msra.mxu0 0.0
  %6949 = vmatprep.subr.mxu0 0.0
  %6950 = vmatpush1.msra.mxu0 0.0
  %6951 = vmatprep.mubr.f32.mxu0 0.0
  %v6952 = vand.u32 %v5155, 4294901760
  %v6953 = vsub.f32 %v5155, %v6952
  %v6954 = vand.u32 %v6953, 4294901760
  %6955 = vmatmul.mubr.f32.gmra.mrb[0].mxu0 %v6954
  %v6956 = vpop.f32.mrb[0].mxu0
  %v6957 = vadd.f32 %v6879, %v6956
  %v6958 = vpop.f32.mrb[0].mxu0
  %v6959 = vadd.f32 %v6881, %v6958
  %6960 = vdwg.mxu0
  %v6961 = vand.u32 %v5121, 4294901760
  %v6962 = vsub.f32 %v5121, %v6961
  %v6963 = vand.u32 %v6962, 4294901760
  %6964 = vmatprep.subr.mxu0 %v6963
  %v6965 = vand.u32 %v5120, 4294901760
  %v6966 = vsub.f32 %v5120, %v6965
  %v6967 = vand.u32 %v6966, 4294901760
  %6968 = vmatpush1.msra.mxu0 %v6967
  %v6969 = vand.u32 %v5137, 4294901760
  %v6970 = vsub.f32 %v5137, %v6969
  %v6971 = vand.u32 %v6970, 4294901760
  %6972 = vmatprep.subr.mxu0 %v6971
  %v6973 = vand.u32 %v5136, 4294901760
  %v6974 = vsub.f32 %v5136, %v6973
  %v6975 = vand.u32 %v6974, 4294901760
  %6976 = vmatpush1.msra.mxu0 %v6975
  %6977 = vmatprep.subr.mxu0 0.0
  %6978 = vmatpush1.msra.mxu0 0.0
  %6979 = vmatprep.subr.mxu0 0.0
  %6980 = vmatpush1.msra.mxu0 0.0
  %6981 = vmatprep.subr.mxu0 0.0
  %6982 = vmatpush1.msra.mxu0 0.0
  %6983 = vmatprep.subr.mxu0 0.0
  %6984 = vmatpush1.msra.mxu0 0.0
  %6985 = vmatprep.subr.mxu0 0.0
  %6986 = vmatpush1.msra.mxu0 0.0
  %6987 = vmatprep.subr.mxu0 0.0
  %6988 = vmatpush1.msra.mxu0 0.0
  %6989 = vmatprep.subr.mxu0 0.0
  %6990 = vmatpush1.msra.mxu0 0.0
  %6991 = vmatprep.subr.mxu0 0.0
  %6992 = vmatpush1.msra.mxu0 0.0
  %6993 = vmatprep.subr.mxu0 0.0
  %6994 = vmatpush1.msra.mxu0 0.0
  %6995 = vmatprep.subr.mxu0 0.0
  %6996 = vmatpush1.msra.mxu0 0.0
  %6997 = vmatprep.subr.mxu0 0.0
  %6998 = vmatpush1.msra.mxu0 0.0
  %6999 = vmatprep.subr.mxu0 0.0
  %7000 = vmatpush1.msra.mxu0 0.0
  %7001 = vmatprep.subr.mxu0 0.0
  %7002 = vmatpush1.msra.mxu0 0.0
  %7003 = vmatprep.subr.mxu0 0.0
  %7004 = vmatpush1.msra.mxu0 0.0
  %7005 = vmatprep.subr.mxu0 0.0
  %7006 = vmatpush1.msra.mxu0 0.0
  %7007 = vmatprep.subr.mxu0 0.0
  %7008 = vmatpush1.msra.mxu0 0.0
  %7009 = vmatprep.subr.mxu0 0.0
  %7010 = vmatpush1.msra.mxu0 0.0
  %7011 = vmatprep.subr.mxu0 0.0
  %7012 = vmatpush1.msra.mxu0 0.0
  %7013 = vmatprep.subr.mxu0 0.0
  %7014 = vmatpush1.msra.mxu0 0.0
  %7015 = vmatprep.subr.mxu0 0.0
  %7016 = vmatpush1.msra.mxu0 0.0
  %7017 = vmatprep.subr.mxu0 0.0
  %7018 = vmatpush1.msra.mxu0 0.0
  %7019 = vmatprep.subr.mxu0 0.0
  %7020 = vmatpush1.msra.mxu0 0.0
  %7021 = vmatprep.subr.mxu0 0.0
  %7022 = vmatpush1.msra.mxu0 0.0
  %7023 = vmatprep.subr.mxu0 0.0
  %7024 = vmatpush1.msra.mxu0 0.0
  %7025 = vmatprep.subr.mxu0 0.0
  %7026 = vmatpush1.msra.mxu0 0.0
  %7027 = vmatprep.subr.mxu0 0.0
  %7028 = vmatpush1.msra.mxu0 0.0
  %7029 = vmatprep.subr.mxu0 0.0
  %7030 = vmatpush1.msra.mxu0 0.0
  %7031 = vmatprep.subr.mxu0 0.0
  %7032 = vmatpush1.msra.mxu0 0.0
  %7033 = vmatprep.subr.mxu0 0.0
  %7034 = vmatpush1.msra.mxu0 0.0
  %7035 = vmatprep.subr.mxu0 0.0
  %7036 = vmatpush1.msra.mxu0 0.0
  %7037 = vmatprep.mubr.f32.mxu0 0.0
  %v7038 = vand.u32 %v5155, 4294901760
  %7039 = vmatmul.mubr.f32.gmra.mrb[0].mxu0 %v7038
  %v7040 = vpop.f32.mrb[0].mxu0
  %v7041 = vadd.f32 %v6957, %v7040
  %v7042 = vpop.f32.mrb[0].mxu0
  %v7043 = vadd.f32 %v6959, %v7042
  %7044 = vdwg.mxu0
  %v7045 = vand.u32 %v5121, 4294901760
  %7046 = vmatprep.subr.mxu0 %v7045
  %v7047 = vand.u32 %v5120, 4294901760
  %7048 = vmatpush1.msra.mxu0 %v7047
  %v7049 = vand.u32 %v5137, 4294901760
  %7050 = vmatprep.subr.mxu0 %v7049
  %v7051 = vand.u32 %v5136, 4294901760
  %7052 = vmatpush1.msra.mxu0 %v7051
  %7053 = vmatprep.subr.mxu0 0.0
  %7054 = vmatpush1.msra.mxu0 0.0
  %7055 = vmatprep.subr.mxu0 0.0
  %7056 = vmatpush1.msra.mxu0 0.0
  %7057 = vmatprep.subr.mxu0 0.0
  %7058 = vmatpush1.msra.mxu0 0.0
  %7059 = vmatprep.subr.mxu0 0.0
  %7060 = vmatpush1.msra.mxu0 0.0
  %7061 = vmatprep.subr.mxu0 0.0
  %7062 = vmatpush1.msra.mxu0 0.0
  %7063 = vmatprep.subr.mxu0 0.0
  %7064 = vmatpush1.msra.mxu0 0.0
  %7065 = vmatprep.subr.mxu0 0.0
  %7066 = vmatpush1.msra.mxu0 0.0
  %7067 = vmatprep.subr.mxu0 0.0
  %7068 = vmatpush1.msra.mxu0 0.0
  %7069 = vmatprep.subr.mxu0 0.0
  %7070 = vmatpush1.msra.mxu0 0.0
  %7071 = vmatprep.subr.mxu0 0.0
  %7072 = vmatpush1.msra.mxu0 0.0
  %7073 = vmatprep.subr.mxu0 0.0
  %7074 = vmatpush1.msra.mxu0 0.0
  %7075 = vmatprep.subr.mxu0 0.0
  %7076 = vmatpush1.msra.mxu0 0.0
  %7077 = vmatprep.subr.mxu0 0.0
  %7078 = vmatpush1.msra.mxu0 0.0
  %7079 = vmatprep.subr.mxu0 0.0
  %7080 = vmatpush1.msra.mxu0 0.0
  %7081 = vmatprep.subr.mxu0 0.0
  %7082 = vmatpush1.msra.mxu0 0.0
  %7083 = vmatprep.subr.mxu0 0.0
  %7084 = vmatpush1.msra.mxu0 0.0
  %7085 = vmatprep.subr.mxu0 0.0
  %7086 = vmatpush1.msra.mxu0 0.0
  %7087 = vmatprep.subr.mxu0 0.0
  %7088 = vmatpush1.msra.mxu0 0.0
  %7089 = vmatprep.subr.mxu0 0.0
  %7090 = vmatpush1.msra.mxu0 0.0
  %7091 = vmatprep.subr.mxu0 0.0
  %7092 = vmatpush1.msra.mxu0 0.0
  %7093 = vmatprep.subr.mxu0 0.0
  %7094 = vmatpush1.msra.mxu0 0.0
  %7095 = vmatprep.subr.mxu0 0.0
  %7096 = vmatpush1.msra.mxu0 0.0
  %7097 = vmatprep.subr.mxu0 0.0
  %7098 = vmatpush1.msra.mxu0 0.0
  %7099 = vmatprep.subr.mxu0 0.0
  %7100 = vmatpush1.msra.mxu0 0.0
  %7101 = vmatprep.subr.mxu0 0.0
  %7102 = vmatpush1.msra.mxu0 0.0
  %7103 = vmatprep.subr.mxu0 0.0
  %7104 = vmatpush1.msra.mxu0 0.0
  %7105 = vmatprep.subr.mxu0 0.0
  %7106 = vmatpush1.msra.mxu0 0.0
  %7107 = vmatprep.subr.mxu0 0.0
  %7108 = vmatpush1.msra.mxu0 0.0
  %7109 = vmatprep.subr.mxu0 0.0
  %7110 = vmatpush1.msra.mxu0 0.0
  %7111 = vmatprep.subr.mxu0 0.0
  %7112 = vmatpush1.msra.mxu0 0.0
  %7113 = vmatprep.mubr.f32.mxu0 0.0
  %v7114 = vand.u32 %v5155, 4294901760
  %7115 = vmatmul.mubr.f32.gmra.mrb[0].mxu0 %v7114
  %v7116 = vpop.f32.mrb[0].mxu0
  %v7117 = vadd.f32 %v7041, %v7116
  %v7118 = vpop.f32.mrb[0].mxu0
  %v7119 = vadd.f32 %v7043, %v7118
  %7120 = vdwg.mxu0
  %v7121 = vand.u32 %v5123, 4294901760
  %7122 = vmatprep.subr.mxu0 %v7121
  %v7123 = vand.u32 %v5122, 4294901760
  %7124 = vmatpush1.msra.mxu0 %v7123
  %v7125 = vand.u32 %v5139, 4294901760
  %7126 = vmatprep.subr.mxu0 %v7125
  %v7127 = vand.u32 %v5138, 4294901760
  %7128 = vmatpush1.msra.mxu0 %v7127
  %7129 = vmatprep.subr.mxu0 0.0
  %7130 = vmatpush1.msra.mxu0 0.0
  %7131 = vmatprep.subr.mxu0 0.0
  %7132 = vmatpush1.msra.mxu0 0.0
  %7133 = vmatprep.subr.mxu0 0.0
  %7134 = vmatpush1.msra.mxu0 0.0
  %7135 = vmatprep.subr.mxu0 0.0
  %7136 = vmatpush1.msra.mxu0 0.0
  %7137 = vmatprep.subr.mxu0 0.0
  %7138 = vmatpush1.msra.mxu0 0.0
  %7139 = vmatprep.subr.mxu0 0.0
  %7140 = vmatpush1.msra.mxu0 0.0
  %7141 = vmatprep.subr.mxu0 0.0
  %7142 = vmatpush1.msra.mxu0 0.0
  %7143 = vmatprep.subr.mxu0 0.0
  %7144 = vmatpush1.msra.mxu0 0.0
  %7145 = vmatprep.subr.mxu0 0.0
  %7146 = vmatpush1.msra.mxu0 0.0
  %7147 = vmatprep.subr.mxu0 0.0
  %7148 = vmatpush1.msra.mxu0 0.0
  %7149 = vmatprep.subr.mxu0 0.0
  %7150 = vmatpush1.msra.mxu0 0.0
  %7151 = vmatprep.subr.mxu0 0.0
  %7152 = vmatpush1.msra.mxu0 0.0
  %7153 = vmatprep.subr.mxu0 0.0
  %7154 = vmatpush1.msra.mxu0 0.0
  %7155 = vmatprep.subr.mxu0 0.0
  %7156 = vmatpush1.msra.mxu0 0.0
  %7157 = vmatprep.subr.mxu0 0.0
  %7158 = vmatpush1.msra.mxu0 0.0
  %7159 = vmatprep.subr.mxu0 0.0
  %7160 = vmatpush1.msra.mxu0 0.0
  %7161 = vmatprep.subr.mxu0 0.0
  %7162 = vmatpush1.msra.mxu0 0.0
  %7163 = vmatprep.subr.mxu0 0.0
  %7164 = vmatpush1.msra.mxu0 0.0
  %7165 = vmatprep.subr.mxu0 0.0
  %7166 = vmatpush1.msra.mxu0 0.0
  %7167 = vmatprep.subr.mxu0 0.0
  %7168 = vmatpush1.msra.mxu0 0.0
  %7169 = vmatprep.subr.mxu0 0.0
  %7170 = vmatpush1.msra.mxu0 0.0
  %7171 = vmatprep.subr.mxu0 0.0
  %7172 = vmatpush1.msra.mxu0 0.0
  %7173 = vmatprep.subr.mxu0 0.0
  %7174 = vmatpush1.msra.mxu0 0.0
  %7175 = vmatprep.subr.mxu0 0.0
  %7176 = vmatpush1.msra.mxu0 0.0
  %7177 = vmatprep.subr.mxu0 0.0
  %7178 = vmatpush1.msra.mxu0 0.0
  %7179 = vmatprep.subr.mxu0 0.0
  %7180 = vmatpush1.msra.mxu0 0.0
  %7181 = vmatprep.subr.mxu0 0.0
  %7182 = vmatpush1.msra.mxu0 0.0
  %7183 = vmatprep.subr.mxu0 0.0
  %7184 = vmatpush1.msra.mxu0 0.0
  %7185 = vmatprep.subr.mxu0 0.0
  %7186 = vmatpush1.msra.mxu0 0.0
  %7187 = vmatprep.subr.mxu0 0.0
  %7188 = vmatpush1.msra.mxu0 0.0
  %7189 = vmatprep.mubr.f32.mxu0 0.0
  %v7190 = vand.u32 %v5155, 4294901760
  %v7191 = vsub.f32 %v5155, %v7190
  %v7192 = vand.u32 %v7191, 4294901760
  %v7193 = vsub.f32 %v7191, %v7192
  %v7194 = vand.u32 %v7193, 4294901760
  %7195 = vmatmul.mubr.f32.gmra.mrb[0].mxu0 %v7194
  %v7196 = vpop.f32.mrb[0].mxu0
  %v7197 = vadd.f32 %v5151, %v7196
  %v7198 = vpop.f32.mrb[0].mxu0
  %v7199 = vadd.f32 %v5151, %v7198
  %7200 = vdwg.mxu0
  %v7201 = vand.u32 %v5123, 4294901760
  %v7202 = vsub.f32 %v5123, %v7201
  %v7203 = vand.u32 %v7202, 4294901760
  %v7204 = vsub.f32 %v7202, %v7203
  %v7205 = vand.u32 %v7204, 4294901760
  %7206 = vmatprep.subr.mxu0 %v7205
  %v7207 = vand.u32 %v5122, 4294901760
  %v7208 = vsub.f32 %v5122, %v7207
  %v7209 = vand.u32 %v7208, 4294901760
  %v7210 = vsub.f32 %v7208, %v7209
  %v7211 = vand.u32 %v7210, 4294901760
  %7212 = vmatpush1.msra.mxu0 %v7211
  %v7213 = vand.u32 %v5139, 4294901760
  %v7214 = vsub.f32 %v5139, %v7213
  %v7215 = vand.u32 %v7214, 4294901760
  %v7216 = vsub.f32 %v7214, %v7215
  %v7217 = vand.u32 %v7216, 4294901760
  %7218 = vmatprep.subr.mxu0 %v7217
  %v7219 = vand.u32 %v5138, 4294901760
  %v7220 = vsub.f32 %v5138, %v7219
  %v7221 = vand.u32 %v7220, 4294901760
  %v7222 = vsub.f32 %v7220, %v7221
  %v7223 = vand.u32 %v7222, 4294901760
  %7224 = vmatpush1.msra.mxu0 %v7223
  %7225 = vmatprep.subr.mxu0 0.0
  %7226 = vmatpush1.msra.mxu0 0.0
  %7227 = vmatprep.subr.mxu0 0.0
  %7228 = vmatpush1.msra.mxu0 0.0
  %7229 = vmatprep.subr.mxu0 0.0
  %7230 = vmatpush1.msra.mxu0 0.0
  %7231 = vmatprep.subr.mxu0 0.0
  %7232 = vmatpush1.msra.mxu0 0.0
  %7233 = vmatprep.subr.mxu0 0.0
  %7234 = vmatpush1.msra.mxu0 0.0
  %7235 = vmatprep.subr.mxu0 0.0
  %7236 = vmatpush1.msra.mxu0 0.0
  %7237 = vmatprep.subr.mxu0 0.0
  %7238 = vmatpush1.msra.mxu0 0.0
  %7239 = vmatprep.subr.mxu0 0.0
  %7240 = vmatpush1.msra.mxu0 0.0
  %7241 = vmatprep.subr.mxu0 0.0
  %7242 = vmatpush1.msra.mxu0 0.0
  %7243 = vmatprep.subr.mxu0 0.0
  %7244 = vmatpush1.msra.mxu0 0.0
  %7245 = vmatprep.subr.mxu0 0.0
  %7246 = vmatpush1.msra.mxu0 0.0
  %7247 = vmatprep.subr.mxu0 0.0
  %7248 = vmatpush1.msra.mxu0 0.0
  %7249 = vmatprep.subr.mxu0 0.0
  %7250 = vmatpush1.msra.mxu0 0.0
  %7251 = vmatprep.subr.mxu0 0.0
  %7252 = vmatpush1.msra.mxu0 0.0
  %7253 = vmatprep.subr.mxu0 0.0
  %7254 = vmatpush1.msra.mxu0 0.0
  %7255 = vmatprep.subr.mxu0 0.0
  %7256 = vmatpush1.msra.mxu0 0.0
  %7257 = vmatprep.subr.mxu0 0.0
  %7258 = vmatpush1.msra.mxu0 0.0
  %7259 = vmatprep.subr.mxu0 0.0
  %7260 = vmatpush1.msra.mxu0 0.0
  %7261 = vmatprep.subr.mxu0 0.0
  %7262 = vmatpush1.msra.mxu0 0.0
  %7263 = vmatprep.subr.mxu0 0.0
  %7264 = vmatpush1.msra.mxu0 0.0
  %7265 = vmatprep.subr.mxu0 0.0
  %7266 = vmatpush1.msra.mxu0 0.0
  %7267 = vmatprep.subr.mxu0 0.0
  %7268 = vmatpush1.msra.mxu0 0.0
  %7269 = vmatprep.subr.mxu0 0.0
  %7270 = vmatpush1.msra.mxu0 0.0
  %7271 = vmatprep.subr.mxu0 0.0
  %7272 = vmatpush1.msra.mxu0 0.0
  %7273 = vmatprep.subr.mxu0 0.0
  %7274 = vmatpush1.msra.mxu0 0.0
  %7275 = vmatprep.subr.mxu0 0.0
  %7276 = vmatpush1.msra.mxu0 0.0
  %7277 = vmatprep.subr.mxu0 0.0
  %7278 = vmatpush1.msra.mxu0 0.0
  %7279 = vmatprep.subr.mxu0 0.0
  %7280 = vmatpush1.msra.mxu0 0.0
  %7281 = vmatprep.subr.mxu0 0.0
  %7282 = vmatpush1.msra.mxu0 0.0
  %7283 = vmatprep.subr.mxu0 0.0
  %7284 = vmatpush1.msra.mxu0 0.0
  %7285 = vmatprep.mubr.f32.mxu0 0.0
  %v7286 = vand.u32 %v5155, 4294901760
  %7287 = vmatmul.mubr.f32.gmra.mrb[0].mxu0 %v7286
  %v7288 = vpop.f32.mrb[0].mxu0
  %v7289 = vadd.f32 %v7197, %v7288
  %v7290 = vpop.f32.mrb[0].mxu0
  %v7291 = vadd.f32 %v7199, %v7290
  %7292 = vdwg.mxu0
  %v7293 = vand.u32 %v5123, 4294901760
  %v7294 = vsub.f32 %v5123, %v7293
  %7295 = vmatprep.subr.mxu0 %v7294
  %v7296 = vand.u32 %v5122, 4294901760
  %v7297 = vsub.f32 %v5122, %v7296
  %7298 = vmatpush1.msra.mxu0 %v7297
  %v7299 = vand.u32 %v5139, 4294901760
  %v7300 = vsub.f32 %v5139, %v7299
  %7301 = vmatprep.subr.mxu0 %v7300
  %v7302 = vand.u32 %v5138, 4294901760
  %v7303 = vsub.f32 %v5138, %v7302
  %7304 = vmatpush1.msra.mxu0 %v7303
  %7305 = vmatprep.subr.mxu0 0.0
  %7306 = vmatpush1.msra.mxu0 0.0
  %7307 = vmatprep.subr.mxu0 0.0
  %7308 = vmatpush1.msra.mxu0 0.0
  %7309 = vmatprep.subr.mxu0 0.0
  %7310 = vmatpush1.msra.mxu0 0.0
  %7311 = vmatprep.subr.mxu0 0.0
  %7312 = vmatpush1.msra.mxu0 0.0
  %7313 = vmatprep.subr.mxu0 0.0
  %7314 = vmatpush1.msra.mxu0 0.0
  %7315 = vmatprep.subr.mxu0 0.0
  %7316 = vmatpush1.msra.mxu0 0.0
  %7317 = vmatprep.subr.mxu0 0.0
  %7318 = vmatpush1.msra.mxu0 0.0
  %7319 = vmatprep.subr.mxu0 0.0
  %7320 = vmatpush1.msra.mxu0 0.0
  %7321 = vmatprep.subr.mxu0 0.0
  %7322 = vmatpush1.msra.mxu0 0.0
  %7323 = vmatprep.subr.mxu0 0.0
  %7324 = vmatpush1.msra.mxu0 0.0
  %7325 = vmatprep.subr.mxu0 0.0
  %7326 = vmatpush1.msra.mxu0 0.0
  %7327 = vmatprep.subr.mxu0 0.0
  %7328 = vmatpush1.msra.mxu0 0.0
  %7329 = vmatprep.subr.mxu0 0.0
  %7330 = vmatpush1.msra.mxu0 0.0
  %7331 = vmatprep.subr.mxu0 0.0
  %7332 = vmatpush1.msra.mxu0 0.0
  %7333 = vmatprep.subr.mxu0 0.0
  %7334 = vmatpush1.msra.mxu0 0.0
  %7335 = vmatprep.subr.mxu0 0.0
  %7336 = vmatpush1.msra.mxu0 0.0
  %7337 = vmatprep.subr.mxu0 0.0
  %7338 = vmatpush1.msra.mxu0 0.0
  %7339 = vmatprep.subr.mxu0 0.0
  %7340 = vmatpush1.msra.mxu0 0.0
  %7341 = vmatprep.subr.mxu0 0.0
  %7342 = vmatpush1.msra.mxu0 0.0
  %7343 = vmatprep.subr.mxu0 0.0
  %7344 = vmatpush1.msra.mxu0 0.0
  %7345 = vmatprep.subr.mxu0 0.0
  %7346 = vmatpush1.msra.mxu0 0.0
  %7347 = vmatprep.subr.mxu0 0.0
  %7348 = vmatpush1.msra.mxu0 0.0
  %7349 = vmatprep.subr.mxu0 0.0
  %7350 = vmatpush1.msra.mxu0 0.0
  %7351 = vmatprep.subr.mxu0 0.0
  %7352 = vmatpush1.msra.mxu0 0.0
  %7353 = vmatprep.subr.mxu0 0.0
  %7354 = vmatpush1.msra.mxu0 0.0
  %7355 = vmatprep.subr.mxu0 0.0
  %7356 = vmatpush1.msra.mxu0 0.0
  %7357 = vmatprep.subr.mxu0 0.0
  %7358 = vmatpush1.msra.mxu0 0.0
  %7359 = vmatprep.subr.mxu0 0.0
  %7360 = vmatpush1.msra.mxu0 0.0
  %7361 = vmatprep.subr.mxu0 0.0
  %7362 = vmatpush1.msra.mxu0 0.0
  %7363 = vmatprep.subr.mxu0 0.0
  %7364 = vmatpush1.msra.mxu0 0.0
  %7365 = vmatprep.mubr.f32.mxu0 0.0
  %v7366 = vand.u32 %v5155, 4294901760
  %v7367 = vsub.f32 %v5155, %v7366
  %7368 = vmatmul.mubr.f32.gmra.mrb[0].mxu0 %v7367
  %v7369 = vpop.f32.mrb[0].mxu0
  %v7370 = vadd.f32 %v7289, %v7369
  %v7371 = vpop.f32.mrb[0].mxu0
  %v7372 = vadd.f32 %v7291, %v7371
  %7373 = vdwg.mxu0
  %v7374 = vand.u32 %v5123, 4294901760
  %7375 = vmatprep.subr.mxu0 %v7374
  %v7376 = vand.u32 %v5122, 4294901760
  %7377 = vmatpush1.msra.mxu0 %v7376
  %v7378 = vand.u32 %v5139, 4294901760
  %7379 = vmatprep.subr.mxu0 %v7378
  %v7380 = vand.u32 %v5138, 4294901760
  %7381 = vmatpush1.msra.mxu0 %v7380
  %7382 = vmatprep.subr.mxu0 0.0
  %7383 = vmatpush1.msra.mxu0 0.0
  %7384 = vmatprep.subr.mxu0 0.0
  %7385 = vmatpush1.msra.mxu0 0.0
  %7386 = vmatprep.subr.mxu0 0.0
  %7387 = vmatpush1.msra.mxu0 0.0
  %7388 = vmatprep.subr.mxu0 0.0
  %7389 = vmatpush1.msra.mxu0 0.0
  %7390 = vmatprep.subr.mxu0 0.0
  %7391 = vmatpush1.msra.mxu0 0.0
  %7392 = vmatprep.subr.mxu0 0.0
  %7393 = vmatpush1.msra.mxu0 0.0
  %7394 = vmatprep.subr.mxu0 0.0
  %7395 = vmatpush1.msra.mxu0 0.0
  %7396 = vmatprep.subr.mxu0 0.0
  %7397 = vmatpush1.msra.mxu0 0.0
  %7398 = vmatprep.subr.mxu0 0.0
  %7399 = vmatpush1.msra.mxu0 0.0
  %7400 = vmatprep.subr.mxu0 0.0
  %7401 = vmatpush1.msra.mxu0 0.0
  %7402 = vmatprep.subr.mxu0 0.0
  %7403 = vmatpush1.msra.mxu0 0.0
  %7404 = vmatprep.subr.mxu0 0.0
  %7405 = vmatpush1.msra.mxu0 0.0
  %7406 = vmatprep.subr.mxu0 0.0
  %7407 = vmatpush1.msra.mxu0 0.0
  %7408 = vmatprep.subr.mxu0 0.0
  %7409 = vmatpush1.msra.mxu0 0.0
  %7410 = vmatprep.subr.mxu0 0.0
  %7411 = vmatpush1.msra.mxu0 0.0
  %7412 = vmatprep.subr.mxu0 0.0
  %7413 = vmatpush1.msra.mxu0 0.0
  %7414 = vmatprep.subr.mxu0 0.0
  %7415 = vmatpush1.msra.mxu0 0.0
  %7416 = vmatprep.subr.mxu0 0.0
  %7417 = vmatpush1.msra.mxu0 0.0
  %7418 = vmatprep.subr.mxu0 0.0
  %7419 = vmatpush1.msra.mxu0 0.0
  %7420 = vmatprep.subr.mxu0 0.0
  %7421 = vmatpush1.msra.mxu0 0.0
  %7422 = vmatprep.subr.mxu0 0.0
  %7423 = vmatpush1.msra.mxu0 0.0
  %7424 = vmatprep.subr.mxu0 0.0
  %7425 = vmatpush1.msra.mxu0 0.0
  %7426 = vmatprep.subr.mxu0 0.0
  %7427 = vmatpush1.msra.mxu0 0.0
  %7428 = vmatprep.subr.mxu0 0.0
  %7429 = vmatpush1.msra.mxu0 0.0
  %7430 = vmatprep.subr.mxu0 0.0
  %7431 = vmatpush1.msra.mxu0 0.0
  %7432 = vmatprep.subr.mxu0 0.0
  %7433 = vmatpush1.msra.mxu0 0.0
  %7434 = vmatprep.subr.mxu0 0.0
  %7435 = vmatpush1.msra.mxu0 0.0
  %7436 = vmatprep.subr.mxu0 0.0
  %7437 = vmatpush1.msra.mxu0 0.0
  %7438 = vmatprep.subr.mxu0 0.0
  %7439 = vmatpush1.msra.mxu0 0.0
  %7440 = vmatprep.subr.mxu0 0.0
  %7441 = vmatpush1.msra.mxu0 0.0
  %7442 = vmatprep.mubr.f32.mxu0 0.0
  %v7443 = vand.u32 %v5155, 4294901760
  %v7444 = vsub.f32 %v5155, %v7443
  %v7445 = vand.u32 %v7444, 4294901760
  %7446 = vmatmul.mubr.f32.gmra.mrb[0].mxu0 %v7445
  %v7447 = vpop.f32.mrb[0].mxu0
  %v7448 = vadd.f32 %v7370, %v7447
  %v7449 = vpop.f32.mrb[0].mxu0
  %v7450 = vadd.f32 %v7372, %v7449
  %7451 = vdwg.mxu0
  %v7452 = vand.u32 %v5123, 4294901760
  %v7453 = vsub.f32 %v5123, %v7452
  %v7454 = vand.u32 %v7453, 4294901760
  %7455 = vmatprep.subr.mxu0 %v7454
  %v7456 = vand.u32 %v5122, 4294901760
  %v7457 = vsub.f32 %v5122, %v7456
  %v7458 = vand.u32 %v7457, 4294901760
  %7459 = vmatpush1.msra.mxu0 %v7458
  %v7460 = vand.u32 %v5139, 4294901760
  %v7461 = vsub.f32 %v5139, %v7460
  %v7462 = vand.u32 %v7461, 4294901760
  %7463 = vmatprep.subr.mxu0 %v7462
  %v7464 = vand.u32 %v5138, 4294901760
  %v7465 = vsub.f32 %v5138, %v7464
  %v7466 = vand.u32 %v7465, 4294901760
  %7467 = vmatpush1.msra.mxu0 %v7466
  %7468 = vmatprep.subr.mxu0 0.0
  %7469 = vmatpush1.msra.mxu0 0.0
  %7470 = vmatprep.subr.mxu0 0.0
  %7471 = vmatpush1.msra.mxu0 0.0
  %7472 = vmatprep.subr.mxu0 0.0
  %7473 = vmatpush1.msra.mxu0 0.0
  %7474 = vmatprep.subr.mxu0 0.0
  %7475 = vmatpush1.msra.mxu0 0.0
  %7476 = vmatprep.subr.mxu0 0.0
  %7477 = vmatpush1.msra.mxu0 0.0
  %7478 = vmatprep.subr.mxu0 0.0
  %7479 = vmatpush1.msra.mxu0 0.0
  %7480 = vmatprep.subr.mxu0 0.0
  %7481 = vmatpush1.msra.mxu0 0.0
  %7482 = vmatprep.subr.mxu0 0.0
  %7483 = vmatpush1.msra.mxu0 0.0
  %7484 = vmatprep.subr.mxu0 0.0
  %7485 = vmatpush1.msra.mxu0 0.0
  %7486 = vmatprep.subr.mxu0 0.0
  %7487 = vmatpush1.msra.mxu0 0.0
  %7488 = vmatprep.subr.mxu0 0.0
  %7489 = vmatpush1.msra.mxu0 0.0
  %7490 = vmatprep.subr.mxu0 0.0
  %7491 = vmatpush1.msra.mxu0 0.0
  %7492 = vmatprep.subr.mxu0 0.0
  %7493 = vmatpush1.msra.mxu0 0.0
  %7494 = vmatprep.subr.mxu0 0.0
  %7495 = vmatpush1.msra.mxu0 0.0
  %7496 = vmatprep.subr.mxu0 0.0
  %7497 = vmatpush1.msra.mxu0 0.0
  %7498 = vmatprep.subr.mxu0 0.0
  %7499 = vmatpush1.msra.mxu0 0.0
  %7500 = vmatprep.subr.mxu0 0.0
  %7501 = vmatpush1.msra.mxu0 0.0
  %7502 = vmatprep.subr.mxu0 0.0
  %7503 = vmatpush1.msra.mxu0 0.0
  %7504 = vmatprep.subr.mxu0 0.0
  %7505 = vmatpush1.msra.mxu0 0.0
  %7506 = vmatprep.subr.mxu0 0.0
  %7507 = vmatpush1.msra.mxu0 0.0
  %7508 = vmatprep.subr.mxu0 0.0
  %7509 = vmatpush1.msra.mxu0 0.0
  %7510 = vmatprep.subr.mxu0 0.0
  %7511 = vmatpush1.msra.mxu0 0.0
  %7512 = vmatprep.subr.mxu0 0.0
  %7513 = vmatpush1.msra.mxu0 0.0
  %7514 = vmatprep.subr.mxu0 0.0
  %7515 = vmatpush1.msra.mxu0 0.0
  %7516 = vmatprep.subr.mxu0 0.0
  %7517 = vmatpush1.msra.mxu0 0.0
  %7518 = vmatprep.subr.mxu0 0.0
  %7519 = vmatpush1.msra.mxu0 0.0
  %7520 = vmatprep.subr.mxu0 0.0
  %7521 = vmatpush1.msra.mxu0 0.0
  %7522 = vmatprep.subr.mxu0 0.0
  %7523 = vmatpush1.msra.mxu0 0.0
  %7524 = vmatprep.subr.mxu0 0.0
  %7525 = vmatpush1.msra.mxu0 0.0
  %7526 = vmatprep.subr.mxu0 0.0
  %7527 = vmatpush1.msra.mxu0 0.0
  %7528 = vmatprep.mubr.f32.mxu0 0.0
  %v7529 = vand.u32 %v5155, 4294901760
  %7530 = vmatmul.mubr.f32.gmra.mrb[0].mxu0 %v7529
  %v7531 = vpop.f32.mrb[0].mxu0
  %v7532 = vadd.f32 %v7448, %v7531
  %v7533 = vpop.f32.mrb[0].mxu0
  %v7534 = vadd.f32 %v7450, %v7533
  %7535 = vdwg.mxu0
  %v7536 = vand.u32 %v5123, 4294901760
  %7537 = vmatprep.subr.mxu0 %v7536
  %v7538 = vand.u32 %v5122, 4294901760
  %7539 = vmatpush1.msra.mxu0 %v7538
  %v7540 = vand.u32 %v5139, 4294901760
  %7541 = vmatprep.subr.mxu0 %v7540
  %v7542 = vand.u32 %v5138, 4294901760
  %7543 = vmatpush1.msra.mxu0 %v7542
  %7544 = vmatprep.subr.mxu0 0.0
  %7545 = vmatpush1.msra.mxu0 0.0
  %7546 = vmatprep.subr.mxu0 0.0
  %7547 = vmatpush1.msra.mxu0 0.0
  %7548 = vmatprep.subr.mxu0 0.0
  %7549 = vmatpush1.msra.mxu0 0.0
  %7550 = vmatprep.subr.mxu0 0.0
  %7551 = vmatpush1.msra.mxu0 0.0
  %7552 = vmatprep.subr.mxu0 0.0
  %7553 = vmatpush1.msra.mxu0 0.0
  %7554 = vmatprep.subr.mxu0 0.0
  %7555 = vmatpush1.msra.mxu0 0.0
  %7556 = vmatprep.subr.mxu0 0.0
  %7557 = vmatpush1.msra.mxu0 0.0
  %7558 = vmatprep.subr.mxu0 0.0
  %7559 = vmatpush1.msra.mxu0 0.0
  %7560 = vmatprep.subr.mxu0 0.0
  %7561 = vmatpush1.msra.mxu0 0.0
  %7562 = vmatprep.subr.mxu0 0.0
  %7563 = vmatpush1.msra.mxu0 0.0
  %7564 = vmatprep.subr.mxu0 0.0
  %7565 = vmatpush1.msra.mxu0 0.0
  %7566 = vmatprep.subr.mxu0 0.0
  %7567 = vmatpush1.msra.mxu0 0.0
  %7568 = vmatprep.subr.mxu0 0.0
  %7569 = vmatpush1.msra.mxu0 0.0
  %7570 = vmatprep.subr.mxu0 0.0
  %7571 = vmatpush1.msra.mxu0 0.0
  %7572 = vmatprep.subr.mxu0 0.0
  %7573 = vmatpush1.msra.mxu0 0.0
  %7574 = vmatprep.subr.mxu0 0.0
  %7575 = vmatpush1.msra.mxu0 0.0
  %7576 = vmatprep.subr.mxu0 0.0
  %7577 = vmatpush1.msra.mxu0 0.0
  %7578 = vmatprep.subr.mxu0 0.0
  %7579 = vmatpush1.msra.mxu0 0.0
  %7580 = vmatprep.subr.mxu0 0.0
  %7581 = vmatpush1.msra.mxu0 0.0
  %7582 = vmatprep.subr.mxu0 0.0
  %7583 = vmatpush1.msra.mxu0 0.0
  %7584 = vmatprep.subr.mxu0 0.0
  %7585 = vmatpush1.msra.mxu0 0.0
  %7586 = vmatprep.subr.mxu0 0.0
  %7587 = vmatpush1.msra.mxu0 0.0
  %7588 = vmatprep.subr.mxu0 0.0
  %7589 = vmatpush1.msra.mxu0 0.0
  %7590 = vmatprep.subr.mxu0 0.0
  %7591 = vmatpush1.msra.mxu0 0.0
  %7592 = vmatprep.subr.mxu0 0.0
  %7593 = vmatpush1.msra.mxu0 0.0
  %7594 = vmatprep.subr.mxu0 0.0
  %7595 = vmatpush1.msra.mxu0 0.0
  %7596 = vmatprep.subr.mxu0 0.0
  %7597 = vmatpush1.msra.mxu0 0.0
  %7598 = vmatprep.subr.mxu0 0.0
  %7599 = vmatpush1.msra.mxu0 0.0
  %7600 = vmatprep.subr.mxu0 0.0
  %7601 = vmatpush1.msra.mxu0 0.0
  %7602 = vmatprep.subr.mxu0 0.0
  %7603 = vmatpush1.msra.mxu0 0.0
  %7604 = vmatprep.mubr.f32.mxu0 0.0
  %v7605 = vand.u32 %v5155, 4294901760
  %7606 = vmatmul.mubr.f32.gmra.mrb[0].mxu0 %v7605
  %v7607 = vpop.f32.mrb[0].mxu0
  %v7608 = vadd.f32 %v7532, %v7607
  %v7609 = vpop.f32.mrb[0].mxu0
  %v7610 = vadd.f32 %v7534, %v7609
  %7611 = vdwg.mxu0
  %v7612 = vand.u32 %v5125, 4294901760
  %7613 = vmatprep.subr.mxu0 %v7612
  %v7614 = vand.u32 %v5124, 4294901760
  %7615 = vmatpush1.msra.mxu0 %v7614
  %v7616 = vand.u32 %v5141, 4294901760
  %7617 = vmatprep.subr.mxu0 %v7616
  %v7618 = vand.u32 %v5140, 4294901760
  %7619 = vmatpush1.msra.mxu0 %v7618
  %7620 = vmatprep.subr.mxu0 0.0
  %7621 = vmatpush1.msra.mxu0 0.0
  %7622 = vmatprep.subr.mxu0 0.0
  %7623 = vmatpush1.msra.mxu0 0.0
  %7624 = vmatprep.subr.mxu0 0.0
  %7625 = vmatpush1.msra.mxu0 0.0
  %7626 = vmatprep.subr.mxu0 0.0
  %7627 = vmatpush1.msra.mxu0 0.0
  %7628 = vmatprep.subr.mxu0 0.0
  %7629 = vmatpush1.msra.mxu0 0.0
  %7630 = vmatprep.subr.mxu0 0.0
  %7631 = vmatpush1.msra.mxu0 0.0
  %7632 = vmatprep.subr.mxu0 0.0
  %7633 = vmatpush1.msra.mxu0 0.0
  %7634 = vmatprep.subr.mxu0 0.0
  %7635 = vmatpush1.msra.mxu0 0.0
  %7636 = vmatprep.subr.mxu0 0.0
  %7637 = vmatpush1.msra.mxu0 0.0
  %7638 = vmatprep.subr.mxu0 0.0
  %7639 = vmatpush1.msra.mxu0 0.0
  %7640 = vmatprep.subr.mxu0 0.0
  %7641 = vmatpush1.msra.mxu0 0.0
  %7642 = vmatprep.subr.mxu0 0.0
  %7643 = vmatpush1.msra.mxu0 0.0
  %7644 = vmatprep.subr.mxu0 0.0
  %7645 = vmatpush1.msra.mxu0 0.0
  %7646 = vmatprep.subr.mxu0 0.0
  %7647 = vmatpush1.msra.mxu0 0.0
  %7648 = vmatprep.subr.mxu0 0.0
  %7649 = vmatpush1.msra.mxu0 0.0
  %7650 = vmatprep.subr.mxu0 0.0
  %7651 = vmatpush1.msra.mxu0 0.0
  %7652 = vmatprep.subr.mxu0 0.0
  %7653 = vmatpush1.msra.mxu0 0.0
  %7654 = vmatprep.subr.mxu0 0.0
  %7655 = vmatpush1.msra.mxu0 0.0
  %7656 = vmatprep.subr.mxu0 0.0
  %7657 = vmatpush1.msra.mxu0 0.0
  %7658 = vmatprep.subr.mxu0 0.0
  %7659 = vmatpush1.msra.mxu0 0.0
  %7660 = vmatprep.subr.mxu0 0.0
  %7661 = vmatpush1.msra.mxu0 0.0
  %7662 = vmatprep.subr.mxu0 0.0
  %7663 = vmatpush1.msra.mxu0 0.0
  %7664 = vmatprep.subr.mxu0 0.0
  %7665 = vmatpush1.msra.mxu0 0.0
  %7666 = vmatprep.subr.mxu0 0.0
  %7667 = vmatpush1.msra.mxu0 0.0
  %7668 = vmatprep.subr.mxu0 0.0
  %7669 = vmatpush1.msra.mxu0 0.0
  %7670 = vmatprep.subr.mxu0 0.0
  %7671 = vmatpush1.msra.mxu0 0.0
  %7672 = vmatprep.subr.mxu0 0.0
  %7673 = vmatpush1.msra.mxu0 0.0
  %7674 = vmatprep.subr.mxu0 0.0
  %7675 = vmatpush1.msra.mxu0 0.0
  %7676 = vmatprep.subr.mxu0 0.0
  %7677 = vmatpush1.msra.mxu0 0.0
  %7678 = vmatprep.subr.mxu0 0.0
  %7679 = vmatpush1.msra.mxu0 0.0
  %7680 = vmatprep.mubr.f32.mxu0 0.0
  %v7681 = vand.u32 %v5155, 4294901760
  %v7682 = vsub.f32 %v5155, %v7681
  %v7683 = vand.u32 %v7682, 4294901760
  %v7684 = vsub.f32 %v7682, %v7683
  %v7685 = vand.u32 %v7684, 4294901760
  %7686 = vmatmul.mubr.f32.gmra.mrb[0].mxu0 %v7685
  %v7687 = vpop.f32.mrb[0].mxu0
  %v7688 = vadd.f32 %v5151, %v7687
  %v7689 = vpop.f32.mrb[0].mxu0
  %v7690 = vadd.f32 %v5151, %v7689
  %7691 = vdwg.mxu0
  %v7692 = vand.u32 %v5125, 4294901760
  %v7693 = vsub.f32 %v5125, %v7692
  %v7694 = vand.u32 %v7693, 4294901760
  %v7695 = vsub.f32 %v7693, %v7694
  %v7696 = vand.u32 %v7695, 4294901760
  %7697 = vmatprep.subr.mxu0 %v7696
  %v7698 = vand.u32 %v5124, 4294901760
  %v7699 = vsub.f32 %v5124, %v7698
  %v7700 = vand.u32 %v7699, 4294901760
  %v7701 = vsub.f32 %v7699, %v7700
  %v7702 = vand.u32 %v7701, 4294901760
  %7703 = vmatpush1.msra.mxu0 %v7702
  %v7704 = vand.u32 %v5141, 4294901760
  %v7705 = vsub.f32 %v5141, %v7704
  %v7706 = vand.u32 %v7705, 4294901760
  %v7707 = vsub.f32 %v7705, %v7706
  %v7708 = vand.u32 %v7707, 4294901760
  %7709 = vmatprep.subr.mxu0 %v7708
  %v7710 = vand.u32 %v5140, 4294901760
  %v7711 = vsub.f32 %v5140, %v7710
  %v7712 = vand.u32 %v7711, 4294901760
  %v7713 = vsub.f32 %v7711, %v7712
  %v7714 = vand.u32 %v7713, 4294901760
  %7715 = vmatpush1.msra.mxu0 %v7714
  %7716 = vmatprep.subr.mxu0 0.0
  %7717 = vmatpush1.msra.mxu0 0.0
  %7718 = vmatprep.subr.mxu0 0.0
  %7719 = vmatpush1.msra.mxu0 0.0
  %7720 = vmatprep.subr.mxu0 0.0
  %7721 = vmatpush1.msra.mxu0 0.0
  %7722 = vmatprep.subr.mxu0 0.0
  %7723 = vmatpush1.msra.mxu0 0.0
  %7724 = vmatprep.subr.mxu0 0.0
  %7725 = vmatpush1.msra.mxu0 0.0
  %7726 = vmatprep.subr.mxu0 0.0
  %7727 = vmatpush1.msra.mxu0 0.0
  %7728 = vmatprep.subr.mxu0 0.0
  %7729 = vmatpush1.msra.mxu0 0.0
  %7730 = vmatprep.subr.mxu0 0.0
  %7731 = vmatpush1.msra.mxu0 0.0
  %7732 = vmatprep.subr.mxu0 0.0
  %7733 = vmatpush1.msra.mxu0 0.0
  %7734 = vmatprep.subr.mxu0 0.0
  %7735 = vmatpush1.msra.mxu0 0.0
  %7736 = vmatprep.subr.mxu0 0.0
  %7737 = vmatpush1.msra.mxu0 0.0
  %7738 = vmatprep.subr.mxu0 0.0
  %7739 = vmatpush1.msra.mxu0 0.0
  %7740 = vmatprep.subr.mxu0 0.0
  %7741 = vmatpush1.msra.mxu0 0.0
  %7742 = vmatprep.subr.mxu0 0.0
  %7743 = vmatpush1.msra.mxu0 0.0
  %7744 = vmatprep.subr.mxu0 0.0
  %7745 = vmatpush1.msra.mxu0 0.0
  %7746 = vmatprep.subr.mxu0 0.0
  %7747 = vmatpush1.msra.mxu0 0.0
  %7748 = vmatprep.subr.mxu0 0.0
  %7749 = vmatpush1.msra.mxu0 0.0
  %7750 = vmatprep.subr.mxu0 0.0
  %7751 = vmatpush1.msra.mxu0 0.0
  %7752 = vmatprep.subr.mxu0 0.0
  %7753 = vmatpush1.msra.mxu0 0.0
  %7754 = vmatprep.subr.mxu0 0.0
  %7755 = vmatpush1.msra.mxu0 0.0
  %7756 = vmatprep.subr.mxu0 0.0
  %7757 = vmatpush1.msra.mxu0 0.0
  %7758 = vmatprep.subr.mxu0 0.0
  %7759 = vmatpush1.msra.mxu0 0.0
  %7760 = vmatprep.subr.mxu0 0.0
  %7761 = vmatpush1.msra.mxu0 0.0
  %7762 = vmatprep.subr.mxu0 0.0
  %7763 = vmatpush1.msra.mxu0 0.0
  %7764 = vmatprep.subr.mxu0 0.0
  %7765 = vmatpush1.msra.mxu0 0.0
  %7766 = vmatprep.subr.mxu0 0.0
  %7767 = vmatpush1.msra.mxu0 0.0
  %7768 = vmatprep.subr.mxu0 0.0
  %7769 = vmatpush1.msra.mxu0 0.0
  %7770 = vmatprep.subr.mxu0 0.0
  %7771 = vmatpush1.msra.mxu0 0.0
  %7772 = vmatprep.subr.mxu0 0.0
  %7773 = vmatpush1.msra.mxu0 0.0
  %7774 = vmatprep.subr.mxu0 0.0
  %7775 = vmatpush1.msra.mxu0 0.0
  %7776 = vmatprep.mubr.f32.mxu0 0.0
  %v7777 = vand.u32 %v5155, 4294901760
  %7778 = vmatmul.mubr.f32.gmra.mrb[0].mxu0 %v7777
  %v7779 = vpop.f32.mrb[0].mxu0
  %v7780 = vadd.f32 %v7688, %v7779
  %v7781 = vpop.f32.mrb[0].mxu0
  %v7782 = vadd.f32 %v7690, %v7781
  %7783 = vdwg.mxu0
  %v7784 = vand.u32 %v5125, 4294901760
  %v7785 = vsub.f32 %v5125, %v7784
  %7786 = vmatprep.subr.mxu0 %v7785
  %v7787 = vand.u32 %v5124, 4294901760
  %v7788 = vsub.f32 %v5124, %v7787
  %7789 = vmatpush1.msra.mxu0 %v7788
  %v7790 = vand.u32 %v5141, 4294901760
  %v7791 = vsub.f32 %v5141, %v7790
  %7792 = vmatprep.subr.mxu0 %v7791
  %v7793 = vand.u32 %v5140, 4294901760
  %v7794 = vsub.f32 %v5140, %v7793
  %7795 = vmatpush1.msra.mxu0 %v7794
  %7796 = vmatprep.subr.mxu0 0.0
  %7797 = vmatpush1.msra.mxu0 0.0
  %7798 = vmatprep.subr.mxu0 0.0
  %7799 = vmatpush1.msra.mxu0 0.0
  %7800 = vmatprep.subr.mxu0 0.0
  %7801 = vmatpush1.msra.mxu0 0.0
  %7802 = vmatprep.subr.mxu0 0.0
  %7803 = vmatpush1.msra.mxu0 0.0
  %7804 = vmatprep.subr.mxu0 0.0
  %7805 = vmatpush1.msra.mxu0 0.0
  %7806 = vmatprep.subr.mxu0 0.0
  %7807 = vmatpush1.msra.mxu0 0.0
  %7808 = vmatprep.subr.mxu0 0.0
  %7809 = vmatpush1.msra.mxu0 0.0
  %7810 = vmatprep.subr.mxu0 0.0
  %7811 = vmatpush1.msra.mxu0 0.0
  %7812 = vmatprep.subr.mxu0 0.0
  %7813 = vmatpush1.msra.mxu0 0.0
  %7814 = vmatprep.subr.mxu0 0.0
  %7815 = vmatpush1.msra.mxu0 0.0
  %7816 = vmatprep.subr.mxu0 0.0
  %7817 = vmatpush1.msra.mxu0 0.0
  %7818 = vmatprep.subr.mxu0 0.0
  %7819 = vmatpush1.msra.mxu0 0.0
  %7820 = vmatprep.subr.mxu0 0.0
  %7821 = vmatpush1.msra.mxu0 0.0
  %7822 = vmatprep.subr.mxu0 0.0
  %7823 = vmatpush1.msra.mxu0 0.0
  %7824 = vmatprep.subr.mxu0 0.0
  %7825 = vmatpush1.msra.mxu0 0.0
  %7826 = vmatprep.subr.mxu0 0.0
  %7827 = vmatpush1.msra.mxu0 0.0
  %7828 = vmatprep.subr.mxu0 0.0
  %7829 = vmatpush1.msra.mxu0 0.0
  %7830 = vmatprep.subr.mxu0 0.0
  %7831 = vmatpush1.msra.mxu0 0.0
  %7832 = vmatprep.subr.mxu0 0.0
  %7833 = vmatpush1.msra.mxu0 0.0
  %7834 = vmatprep.subr.mxu0 0.0
  %7835 = vmatpush1.msra.mxu0 0.0
  %7836 = vmatprep.subr.mxu0 0.0
  %7837 = vmatpush1.msra.mxu0 0.0
  %7838 = vmatprep.subr.mxu0 0.0
  %7839 = vmatpush1.msra.mxu0 0.0
  %7840 = vmatprep.subr.mxu0 0.0
  %7841 = vmatpush1.msra.mxu0 0.0
  %7842 = vmatprep.subr.mxu0 0.0
  %7843 = vmatpush1.msra.mxu0 0.0
  %7844 = vmatprep.subr.mxu0 0.0
  %7845 = vmatpush1.msra.mxu0 0.0
  %7846 = vmatprep.subr.mxu0 0.0
  %7847 = vmatpush1.msra.mxu0 0.0
  %7848 = vmatprep.subr.mxu0 0.0
  %7849 = vmatpush1.msra.mxu0 0.0
  %7850 = vmatprep.subr.mxu0 0.0
  %7851 = vmatpush1.msra.mxu0 0.0
  %7852 = vmatprep.subr.mxu0 0.0
  %7853 = vmatpush1.msra.mxu0 0.0
  %7854 = vmatprep.subr.mxu0 0.0
  %7855 = vmatpush1.msra.mxu0 0.0
  %7856 = vmatprep.mubr.f32.mxu0 0.0
  %v7857 = vand.u32 %v5155, 4294901760
  %v7858 = vsub.f32 %v5155, %v7857
  %7859 = vmatmul.mubr.f32.gmra.mrb[0].mxu0 %v7858
  %v7860 = vpop.f32.mrb[0].mxu0
  %v7861 = vadd.f32 %v7780, %v7860
  %v7862 = vpop.f32.mrb[0].mxu0
  %v7863 = vadd.f32 %v7782, %v7862
  %7864 = vdwg.mxu0
  %v7865 = vand.u32 %v5125, 4294901760
  %7866 = vmatprep.subr.mxu0 %v7865
  %v7867 = vand.u32 %v5124, 4294901760
  %7868 = vmatpush1.msra.mxu0 %v7867
  %v7869 = vand.u32 %v5141, 4294901760
  %7870 = vmatprep.subr.mxu0 %v7869
  %v7871 = vand.u32 %v5140, 4294901760
  %7872 = vmatpush1.msra.mxu0 %v7871
  %7873 = vmatprep.subr.mxu0 0.0
  %7874 = vmatpush1.msra.mxu0 0.0
  %7875 = vmatprep.subr.mxu0 0.0
  %7876 = vmatpush1.msra.mxu0 0.0
  %7877 = vmatprep.subr.mxu0 0.0
  %7878 = vmatpush1.msra.mxu0 0.0
  %7879 = vmatprep.subr.mxu0 0.0
  %7880 = vmatpush1.msra.mxu0 0.0
  %7881 = vmatprep.subr.mxu0 0.0
  %7882 = vmatpush1.msra.mxu0 0.0
  %7883 = vmatprep.subr.mxu0 0.0
  %7884 = vmatpush1.msra.mxu0 0.0
  %7885 = vmatprep.subr.mxu0 0.0
  %7886 = vmatpush1.msra.mxu0 0.0
  %7887 = vmatprep.subr.mxu0 0.0
  %7888 = vmatpush1.msra.mxu0 0.0
  %7889 = vmatprep.subr.mxu0 0.0
  %7890 = vmatpush1.msra.mxu0 0.0
  %7891 = vmatprep.subr.mxu0 0.0
  %7892 = vmatpush1.msra.mxu0 0.0
  %7893 = vmatprep.subr.mxu0 0.0
  %7894 = vmatpush1.msra.mxu0 0.0
  %7895 = vmatprep.subr.mxu0 0.0
  %7896 = vmatpush1.msra.mxu0 0.0
  %7897 = vmatprep.subr.mxu0 0.0
  %7898 = vmatpush1.msra.mxu0 0.0
  %7899 = vmatprep.subr.mxu0 0.0
  %7900 = vmatpush1.msra.mxu0 0.0
  %7901 = vmatprep.subr.mxu0 0.0
  %7902 = vmatpush1.msra.mxu0 0.0
  %7903 = vmatprep.subr.mxu0 0.0
  %7904 = vmatpush1.msra.mxu0 0.0
  %7905 = vmatprep.subr.mxu0 0.0
  %7906 = vmatpush1.msra.mxu0 0.0
  %7907 = vmatprep.subr.mxu0 0.0
  %7908 = vmatpush1.msra.mxu0 0.0
  %7909 = vmatprep.subr.mxu0 0.0
  %7910 = vmatpush1.msra.mxu0 0.0
  %7911 = vmatprep.subr.mxu0 0.0
  %7912 = vmatpush1.msra.mxu0 0.0
  %7913 = vmatprep.subr.mxu0 0.0
  %7914 = vmatpush1.msra.mxu0 0.0
  %7915 = vmatprep.subr.mxu0 0.0
  %7916 = vmatpush1.msra.mxu0 0.0
  %7917 = vmatprep.subr.mxu0 0.0
  %7918 = vmatpush1.msra.mxu0 0.0
  %7919 = vmatprep.subr.mxu0 0.0
  %7920 = vmatpush1.msra.mxu0 0.0
  %7921 = vmatprep.subr.mxu0 0.0
  %7922 = vmatpush1.msra.mxu0 0.0
  %7923 = vmatprep.subr.mxu0 0.0
  %7924 = vmatpush1.msra.mxu0 0.0
  %7925 = vmatprep.subr.mxu0 0.0
  %7926 = vmatpush1.msra.mxu0 0.0
  %7927 = vmatprep.subr.mxu0 0.0
  %7928 = vmatpush1.msra.mxu0 0.0
  %7929 = vmatprep.subr.mxu0 0.0
  %7930 = vmatpush1.msra.mxu0 0.0
  %7931 = vmatprep.subr.mxu0 0.0
  %7932 = vmatpush1.msra.mxu0 0.0
  %7933 = vmatprep.mubr.f32.mxu0 0.0
  %v7934 = vand.u32 %v5155, 4294901760
  %v7935 = vsub.f32 %v5155, %v7934
  %v7936 = vand.u32 %v7935, 4294901760
  %7937 = vmatmul.mubr.f32.gmra.mrb[0].mxu0 %v7936
  %v7938 = vpop.f32.mrb[0].mxu0
  %v7939 = vadd.f32 %v7861, %v7938
  %v7940 = vpop.f32.mrb[0].mxu0
  %v7941 = vadd.f32 %v7863, %v7940
  %7942 = vdwg.mxu0
  %v7943 = vand.u32 %v5125, 4294901760
  %v7944 = vsub.f32 %v5125, %v7943
  %v7945 = vand.u32 %v7944, 4294901760
  %7946 = vmatprep.subr.mxu0 %v7945
  %v7947 = vand.u32 %v5124, 4294901760
  %v7948 = vsub.f32 %v5124, %v7947
  %v7949 = vand.u32 %v7948, 4294901760
  %7950 = vmatpush1.msra.mxu0 %v7949
  %v7951 = vand.u32 %v5141, 4294901760
  %v7952 = vsub.f32 %v5141, %v7951
  %v7953 = vand.u32 %v7952, 4294901760
  %7954 = vmatprep.subr.mxu0 %v7953
  %v7955 = vand.u32 %v5140, 4294901760
  %v7956 = vsub.f32 %v5140, %v7955
  %v7957 = vand.u32 %v7956, 4294901760
  %7958 = vmatpush1.msra.mxu0 %v7957
  %7959 = vmatprep.subr.mxu0 0.0
  %7960 = vmatpush1.msra.mxu0 0.0
  %7961 = vmatprep.subr.mxu0 0.0
  %7962 = vmatpush1.msra.mxu0 0.0
  %7963 = vmatprep.subr.mxu0 0.0
  %7964 = vmatpush1.msra.mxu0 0.0
  %7965 = vmatprep.subr.mxu0 0.0
  %7966 = vmatpush1.msra.mxu0 0.0
  %7967 = vmatprep.subr.mxu0 0.0
  %7968 = vmatpush1.msra.mxu0 0.0
  %7969 = vmatprep.subr.mxu0 0.0
  %7970 = vmatpush1.msra.mxu0 0.0
  %7971 = vmatprep.subr.mxu0 0.0
  %7972 = vmatpush1.msra.mxu0 0.0
  %7973 = vmatprep.subr.mxu0 0.0
  %7974 = vmatpush1.msra.mxu0 0.0
  %7975 = vmatprep.subr.mxu0 0.0
  %7976 = vmatpush1.msra.mxu0 0.0
  %7977 = vmatprep.subr.mxu0 0.0
  %7978 = vmatpush1.msra.mxu0 0.0
  %7979 = vmatprep.subr.mxu0 0.0
  %7980 = vmatpush1.msra.mxu0 0.0
  %7981 = vmatprep.subr.mxu0 0.0
  %7982 = vmatpush1.msra.mxu0 0.0
  %7983 = vmatprep.subr.mxu0 0.0
  %7984 = vmatpush1.msra.mxu0 0.0
  %7985 = vmatprep.subr.mxu0 0.0
  %7986 = vmatpush1.msra.mxu0 0.0
  %7987 = vmatprep.subr.mxu0 0.0
  %7988 = vmatpush1.msra.mxu0 0.0
  %7989 = vmatprep.subr.mxu0 0.0
  %7990 = vmatpush1.msra.mxu0 0.0
  %7991 = vmatprep.subr.mxu0 0.0
  %7992 = vmatpush1.msra.mxu0 0.0
  %7993 = vmatprep.subr.mxu0 0.0
  %7994 = vmatpush1.msra.mxu0 0.0
  %7995 = vmatprep.subr.mxu0 0.0
  %7996 = vmatpush1.msra.mxu0 0.0
  %7997 = vmatprep.subr.mxu0 0.0
  %7998 = vmatpush1.msra.mxu0 0.0
  %7999 = vmatprep.subr.mxu0 0.0
  %8000 = vmatpush1.msra.mxu0 0.0
  %8001 = vmatprep.subr.mxu0 0.0
  %8002 = vmatpush1.msra.mxu0 0.0
  %8003 = vmatprep.subr.mxu0 0.0
  %8004 = vmatpush1.msra.mxu0 0.0
  %8005 = vmatprep.subr.mxu0 0.0
  %8006 = vmatpush1.msra.mxu0 0.0
  %8007 = vmatprep.subr.mxu0 0.0
  %8008 = vmatpush1.msra.mxu0 0.0
  %8009 = vmatprep.subr.mxu0 0.0
  %8010 = vmatpush1.msra.mxu0 0.0
  %8011 = vmatprep.subr.mxu0 0.0
  %8012 = vmatpush1.msra.mxu0 0.0
  %8013 = vmatprep.subr.mxu0 0.0
  %8014 = vmatpush1.msra.mxu0 0.0
  %8015 = vmatprep.subr.mxu0 0.0
  %8016 = vmatpush1.msra.mxu0 0.0
  %8017 = vmatprep.subr.mxu0 0.0
  %8018 = vmatpush1.msra.mxu0 0.0
  %8019 = vmatprep.mubr.f32.mxu0 0.0
  %v8020 = vand.u32 %v5155, 4294901760
  %8021 = vmatmul.mubr.f32.gmra.mrb[0].mxu0 %v8020
  %v8022 = vpop.f32.mrb[0].mxu0
  %v8023 = vadd.f32 %v7939, %v8022
  %v8024 = vpop.f32.mrb[0].mxu0
  %v8025 = vadd.f32 %v7941, %v8024
  %8026 = vdwg.mxu0
  %v8027 = vand.u32 %v5125, 4294901760
  %8028 = vmatprep.subr.mxu0 %v8027
  %v8029 = vand.u32 %v5124, 4294901760
  %8030 = vmatpush1.msra.mxu0 %v8029
  %v8031 = vand.u32 %v5141, 4294901760
  %8032 = vmatprep.subr.mxu0 %v8031
  %v8033 = vand.u32 %v5140, 4294901760
  %8034 = vmatpush1.msra.mxu0 %v8033
  %8035 = vmatprep.subr.mxu0 0.0
  %8036 = vmatpush1.msra.mxu0 0.0
  %8037 = vmatprep.subr.mxu0 0.0
  %8038 = vmatpush1.msra.mxu0 0.0
  %8039 = vmatprep.subr.mxu0 0.0
  %8040 = vmatpush1.msra.mxu0 0.0
  %8041 = vmatprep.subr.mxu0 0.0
  %8042 = vmatpush1.msra.mxu0 0.0
  %8043 = vmatprep.subr.mxu0 0.0
  %8044 = vmatpush1.msra.mxu0 0.0
  %8045 = vmatprep.subr.mxu0 0.0
  %8046 = vmatpush1.msra.mxu0 0.0
  %8047 = vmatprep.subr.mxu0 0.0
  %8048 = vmatpush1.msra.mxu0 0.0
  %8049 = vmatprep.subr.mxu0 0.0
  %8050 = vmatpush1.msra.mxu0 0.0
  %8051 = vmatprep.subr.mxu0 0.0
  %8052 = vmatpush1.msra.mxu0 0.0
  %8053 = vmatprep.subr.mxu0 0.0
  %8054 = vmatpush1.msra.mxu0 0.0
  %8055 = vmatprep.subr.mxu0 0.0
  %8056 = vmatpush1.msra.mxu0 0.0
  %8057 = vmatprep.subr.mxu0 0.0
  %8058 = vmatpush1.msra.mxu0 0.0
  %8059 = vmatprep.subr.mxu0 0.0
  %8060 = vmatpush1.msra.mxu0 0.0
  %8061 = vmatprep.subr.mxu0 0.0
  %8062 = vmatpush1.msra.mxu0 0.0
  %8063 = vmatprep.subr.mxu0 0.0
  %8064 = vmatpush1.msra.mxu0 0.0
  %8065 = vmatprep.subr.mxu0 0.0
  %8066 = vmatpush1.msra.mxu0 0.0
  %8067 = vmatprep.subr.mxu0 0.0
  %8068 = vmatpush1.msra.mxu0 0.0
  %8069 = vmatprep.subr.mxu0 0.0
  %8070 = vmatpush1.msra.mxu0 0.0
  %8071 = vmatprep.subr.mxu0 0.0
  %8072 = vmatpush1.msra.mxu0 0.0
  %8073 = vmatprep.subr.mxu0 0.0
  %8074 = vmatpush1.msra.mxu0 0.0
  %8075 = vmatprep.subr.mxu0 0.0
  %8076 = vmatpush1.msra.mxu0 0.0
  %8077 = vmatprep.subr.mxu0 0.0
  %8078 = vmatpush1.msra.mxu0 0.0
  %8079 = vmatprep.subr.mxu0 0.0
  %8080 = vmatpush1.msra.mxu0 0.0
  %8081 = vmatprep.subr.mxu0 0.0
  %8082 = vmatpush1.msra.mxu0 0.0
  %8083 = vmatprep.subr.mxu0 0.0
  %8084 = vmatpush1.msra.mxu0 0.0
  %8085 = vmatprep.subr.mxu0 0.0
  %8086 = vmatpush1.msra.mxu0 0.0
  %8087 = vmatprep.subr.mxu0 0.0
  %8088 = vmatpush1.msra.mxu0 0.0
  %8089 = vmatprep.subr.mxu0 0.0
  %8090 = vmatpush1.msra.mxu0 0.0
  %8091 = vmatprep.subr.mxu0 0.0
  %8092 = vmatpush1.msra.mxu0 0.0
  %8093 = vmatprep.subr.mxu0 0.0
  %8094 = vmatpush1.msra.mxu0 0.0
  %8095 = vmatprep.mubr.f32.mxu0 0.0
  %v8096 = vand.u32 %v5155, 4294901760
  %8097 = vmatmul.mubr.f32.gmra.mrb[0].mxu0 %v8096
  %v8098 = vpop.f32.mrb[0].mxu0
  %v8099 = vadd.f32 %v8023, %v8098
  %v8100 = vpop.f32.mrb[0].mxu0
  %v8101 = vadd.f32 %v8025, %v8100
  %8102 = vdwg.mxu0
  %v8103 = vand.u32 %v5127, 4294901760
  %8104 = vmatprep.subr.mxu0 %v8103
  %v8105 = vand.u32 %v5126, 4294901760
  %8106 = vmatpush1.msra.mxu0 %v8105
  %v8107 = vand.u32 %v5143, 4294901760
  %8108 = vmatprep.subr.mxu0 %v8107
  %v8109 = vand.u32 %v5142, 4294901760
  %8110 = vmatpush1.msra.mxu0 %v8109
  %8111 = vmatprep.subr.mxu0 0.0
  %8112 = vmatpush1.msra.mxu0 0.0
  %8113 = vmatprep.subr.mxu0 0.0
  %8114 = vmatpush1.msra.mxu0 0.0
  %8115 = vmatprep.subr.mxu0 0.0
  %8116 = vmatpush1.msra.mxu0 0.0
  %8117 = vmatprep.subr.mxu0 0.0
  %8118 = vmatpush1.msra.mxu0 0.0
  %8119 = vmatprep.subr.mxu0 0.0
  %8120 = vmatpush1.msra.mxu0 0.0
  %8121 = vmatprep.subr.mxu0 0.0
  %8122 = vmatpush1.msra.mxu0 0.0
  %8123 = vmatprep.subr.mxu0 0.0
  %8124 = vmatpush1.msra.mxu0 0.0
  %8125 = vmatprep.subr.mxu0 0.0
  %8126 = vmatpush1.msra.mxu0 0.0
  %8127 = vmatprep.subr.mxu0 0.0
  %8128 = vmatpush1.msra.mxu0 0.0
  %8129 = vmatprep.subr.mxu0 0.0
  %8130 = vmatpush1.msra.mxu0 0.0
  %8131 = vmatprep.subr.mxu0 0.0
  %8132 = vmatpush1.msra.mxu0 0.0
  %8133 = vmatprep.subr.mxu0 0.0
  %8134 = vmatpush1.msra.mxu0 0.0
  %8135 = vmatprep.subr.mxu0 0.0
  %8136 = vmatpush1.msra.mxu0 0.0
  %8137 = vmatprep.subr.mxu0 0.0
  %8138 = vmatpush1.msra.mxu0 0.0
  %8139 = vmatprep.subr.mxu0 0.0
  %8140 = vmatpush1.msra.mxu0 0.0
  %8141 = vmatprep.subr.mxu0 0.0
  %8142 = vmatpush1.msra.mxu0 0.0
  %8143 = vmatprep.subr.mxu0 0.0
  %8144 = vmatpush1.msra.mxu0 0.0
  %8145 = vmatprep.subr.mxu0 0.0
  %8146 = vmatpush1.msra.mxu0 0.0
  %8147 = vmatprep.subr.mxu0 0.0
  %8148 = vmatpush1.msra.mxu0 0.0
  %8149 = vmatprep.subr.mxu0 0.0
  %8150 = vmatpush1.msra.mxu0 0.0
  %8151 = vmatprep.subr.mxu0 0.0
  %8152 = vmatpush1.msra.mxu0 0.0
  %8153 = vmatprep.subr.mxu0 0.0
  %8154 = vmatpush1.msra.mxu0 0.0
  %8155 = vmatprep.subr.mxu0 0.0
  %8156 = vmatpush1.msra.mxu0 0.0
  %8157 = vmatprep.subr.mxu0 0.0
  %8158 = vmatpush1.msra.mxu0 0.0
  %8159 = vmatprep.subr.mxu0 0.0
  %8160 = vmatpush1.msra.mxu0 0.0
  %8161 = vmatprep.subr.mxu0 0.0
  %8162 = vmatpush1.msra.mxu0 0.0
  %8163 = vmatprep.subr.mxu0 0.0
  %8164 = vmatpush1.msra.mxu0 0.0
  %8165 = vmatprep.subr.mxu0 0.0
  %8166 = vmatpush1.msra.mxu0 0.0
  %8167 = vmatprep.subr.mxu0 0.0
  %8168 = vmatpush1.msra.mxu0 0.0
  %8169 = vmatprep.subr.mxu0 0.0
  %8170 = vmatpush1.msra.mxu0 0.0
  %8171 = vmatprep.mubr.f32.mxu0 0.0
  %v8172 = vand.u32 %v5155, 4294901760
  %v8173 = vsub.f32 %v5155, %v8172
  %v8174 = vand.u32 %v8173, 4294901760
  %v8175 = vsub.f32 %v8173, %v8174
  %v8176 = vand.u32 %v8175, 4294901760
  %8177 = vmatmul.mubr.f32.gmra.mrb[0].mxu0 %v8176
  %v8178 = vpop.f32.mrb[0].mxu0
  %v8179 = vadd.f32 %v5151, %v8178
  %v8180 = vpop.f32.mrb[0].mxu0
  %v8181 = vadd.f32 %v5151, %v8180
  %8182 = vdwg.mxu0
  %v8183 = vand.u32 %v5127, 4294901760
  %v8184 = vsub.f32 %v5127, %v8183
  %v8185 = vand.u32 %v8184, 4294901760
  %v8186 = vsub.f32 %v8184, %v8185
  %v8187 = vand.u32 %v8186, 4294901760
  %8188 = vmatprep.subr.mxu0 %v8187
  %v8189 = vand.u32 %v5126, 4294901760
  %v8190 = vsub.f32 %v5126, %v8189
  %v8191 = vand.u32 %v8190, 4294901760
  %v8192 = vsub.f32 %v8190, %v8191
  %v8193 = vand.u32 %v8192, 4294901760
  %8194 = vmatpush1.msra.mxu0 %v8193
  %v8195 = vand.u32 %v5143, 4294901760
  %v8196 = vsub.f32 %v5143, %v8195
  %v8197 = vand.u32 %v8196, 4294901760
  %v8198 = vsub.f32 %v8196, %v8197
  %v8199 = vand.u32 %v8198, 4294901760
  %8200 = vmatprep.subr.mxu0 %v8199
  %v8201 = vand.u32 %v5142, 4294901760
  %v8202 = vsub.f32 %v5142, %v8201
  %v8203 = vand.u32 %v8202, 4294901760
  %v8204 = vsub.f32 %v8202, %v8203
  %v8205 = vand.u32 %v8204, 4294901760
  %8206 = vmatpush1.msra.mxu0 %v8205
  %8207 = vmatprep.subr.mxu0 0.0
  %8208 = vmatpush1.msra.mxu0 0.0
  %8209 = vmatprep.subr.mxu0 0.0
  %8210 = vmatpush1.msra.mxu0 0.0
  %8211 = vmatprep.subr.mxu0 0.0
  %8212 = vmatpush1.msra.mxu0 0.0
  %8213 = vmatprep.subr.mxu0 0.0
  %8214 = vmatpush1.msra.mxu0 0.0
  %8215 = vmatprep.subr.mxu0 0.0
  %8216 = vmatpush1.msra.mxu0 0.0
  %8217 = vmatprep.subr.mxu0 0.0
  %8218 = vmatpush1.msra.mxu0 0.0
  %8219 = vmatprep.subr.mxu0 0.0
  %8220 = vmatpush1.msra.mxu0 0.0
  %8221 = vmatprep.subr.mxu0 0.0
  %8222 = vmatpush1.msra.mxu0 0.0
  %8223 = vmatprep.subr.mxu0 0.0
  %8224 = vmatpush1.msra.mxu0 0.0
  %8225 = vmatprep.subr.mxu0 0.0
  %8226 = vmatpush1.msra.mxu0 0.0
  %8227 = vmatprep.subr.mxu0 0.0
  %8228 = vmatpush1.msra.mxu0 0.0
  %8229 = vmatprep.subr.mxu0 0.0
  %8230 = vmatpush1.msra.mxu0 0.0
  %8231 = vmatprep.subr.mxu0 0.0
  %8232 = vmatpush1.msra.mxu0 0.0
  %8233 = vmatprep.subr.mxu0 0.0
  %8234 = vmatpush1.msra.mxu0 0.0
  %8235 = vmatprep.subr.mxu0 0.0
  %8236 = vmatpush1.msra.mxu0 0.0
  %8237 = vmatprep.subr.mxu0 0.0
  %8238 = vmatpush1.msra.mxu0 0.0
  %8239 = vmatprep.subr.mxu0 0.0
  %8240 = vmatpush1.msra.mxu0 0.0
  %8241 = vmatprep.subr.mxu0 0.0
  %8242 = vmatpush1.msra.mxu0 0.0
  %8243 = vmatprep.subr.mxu0 0.0
  %8244 = vmatpush1.msra.mxu0 0.0
  %8245 = vmatprep.subr.mxu0 0.0
  %8246 = vmatpush1.msra.mxu0 0.0
  %8247 = vmatprep.subr.mxu0 0.0
  %8248 = vmatpush1.msra.mxu0 0.0
  %8249 = vmatprep.subr.mxu0 0.0
  %8250 = vmatpush1.msra.mxu0 0.0
  %8251 = vmatprep.subr.mxu0 0.0
  %8252 = vmatpush1.msra.mxu0 0.0
  %8253 = vmatprep.subr.mxu0 0.0
  %8254 = vmatpush1.msra.mxu0 0.0
  %8255 = vmatprep.subr.mxu0 0.0
  %8256 = vmatpush1.msra.mxu0 0.0
  %8257 = vmatprep.subr.mxu0 0.0
  %8258 = vmatpush1.msra.mxu0 0.0
  %8259 = vmatprep.subr.mxu0 0.0
  %8260 = vmatpush1.msra.mxu0 0.0
  %8261 = vmatprep.subr.mxu0 0.0
  %8262 = vmatpush1.msra.mxu0 0.0
  %8263 = vmatprep.subr.mxu0 0.0
  %8264 = vmatpush1.msra.mxu0 0.0
  %8265 = vmatprep.subr.mxu0 0.0
  %8266 = vmatpush1.msra.mxu0 0.0
  %8267 = vmatprep.mubr.f32.mxu0 0.0
  %v8268 = vand.u32 %v5155, 4294901760
  %8269 = vmatmul.mubr.f32.gmra.mrb[0].mxu0 %v8268
  %v8270 = vpop.f32.mrb[0].mxu0
  %v8271 = vadd.f32 %v8179, %v8270
  %v8272 = vpop.f32.mrb[0].mxu0
  %v8273 = vadd.f32 %v8181, %v8272
  %8274 = vdwg.mxu0
  %v8275 = vand.u32 %v5127, 4294901760
  %v8276 = vsub.f32 %v5127, %v8275
  %8277 = vmatprep.subr.mxu0 %v8276
  %v8278 = vand.u32 %v5126, 4294901760
  %v8279 = vsub.f32 %v5126, %v8278
  %8280 = vmatpush1.msra.mxu0 %v8279
  %v8281 = vand.u32 %v5143, 4294901760
  %v8282 = vsub.f32 %v5143, %v8281
  %8283 = vmatprep.subr.mxu0 %v8282
  %v8284 = vand.u32 %v5142, 4294901760
  %v8285 = vsub.f32 %v5142, %v8284
  %8286 = vmatpush1.msra.mxu0 %v8285
  %8287 = vmatprep.subr.mxu0 0.0
  %8288 = vmatpush1.msra.mxu0 0.0
  %8289 = vmatprep.subr.mxu0 0.0
  %8290 = vmatpush1.msra.mxu0 0.0
  %8291 = vmatprep.subr.mxu0 0.0
  %8292 = vmatpush1.msra.mxu0 0.0
  %8293 = vmatprep.subr.mxu0 0.0
  %8294 = vmatpush1.msra.mxu0 0.0
  %8295 = vmatprep.subr.mxu0 0.0
  %8296 = vmatpush1.msra.mxu0 0.0
  %8297 = vmatprep.subr.mxu0 0.0
  %8298 = vmatpush1.msra.mxu0 0.0
  %8299 = vmatprep.subr.mxu0 0.0
  %8300 = vmatpush1.msra.mxu0 0.0
  %8301 = vmatprep.subr.mxu0 0.0
  %8302 = vmatpush1.msra.mxu0 0.0
  %8303 = vmatprep.subr.mxu0 0.0
  %8304 = vmatpush1.msra.mxu0 0.0
  %8305 = vmatprep.subr.mxu0 0.0
  %8306 = vmatpush1.msra.mxu0 0.0
  %8307 = vmatprep.subr.mxu0 0.0
  %8308 = vmatpush1.msra.mxu0 0.0
  %8309 = vmatprep.subr.mxu0 0.0
  %8310 = vmatpush1.msra.mxu0 0.0
  %8311 = vmatprep.subr.mxu0 0.0
  %8312 = vmatpush1.msra.mxu0 0.0
  %8313 = vmatprep.subr.mxu0 0.0
  %8314 = vmatpush1.msra.mxu0 0.0
  %8315 = vmatprep.subr.mxu0 0.0
  %8316 = vmatpush1.msra.mxu0 0.0
  %8317 = vmatprep.subr.mxu0 0.0
  %8318 = vmatpush1.msra.mxu0 0.0
  %8319 = vmatprep.subr.mxu0 0.0
  %8320 = vmatpush1.msra.mxu0 0.0
  %8321 = vmatprep.subr.mxu0 0.0
  %8322 = vmatpush1.msra.mxu0 0.0
  %8323 = vmatprep.subr.mxu0 0.0
  %8324 = vmatpush1.msra.mxu0 0.0
  %8325 = vmatprep.subr.mxu0 0.0
  %8326 = vmatpush1.msra.mxu0 0.0
  %8327 = vmatprep.subr.mxu0 0.0
  %8328 = vmatpush1.msra.mxu0 0.0
  %8329 = vmatprep.subr.mxu0 0.0
  %8330 = vmatpush1.msra.mxu0 0.0
  %8331 = vmatprep.subr.mxu0 0.0
  %8332 = vmatpush1.msra.mxu0 0.0
  %8333 = vmatprep.subr.mxu0 0.0
  %8334 = vmatpush1.msra.mxu0 0.0
  %8335 = vmatprep.subr.mxu0 0.0
  %8336 = vmatpush1.msra.mxu0 0.0
  %8337 = vmatprep.subr.mxu0 0.0
  %8338 = vmatpush1.msra.mxu0 0.0
  %8339 = vmatprep.subr.mxu0 0.0
  %8340 = vmatpush1.msra.mxu0 0.0
  %8341 = vmatprep.subr.mxu0 0.0
  %8342 = vmatpush1.msra.mxu0 0.0
  %8343 = vmatprep.subr.mxu0 0.0
  %8344 = vmatpush1.msra.mxu0 0.0
  %8345 = vmatprep.subr.mxu0 0.0
  %8346 = vmatpush1.msra.mxu0 0.0
  %8347 = vmatprep.mubr.f32.mxu0 0.0
  %v8348 = vand.u32 %v5155, 4294901760
  %v8349 = vsub.f32 %v5155, %v8348
  %8350 = vmatmul.mubr.f32.gmra.mrb[0].mxu0 %v8349
  %v8351 = vpop.f32.mrb[0].mxu0
  %v8352 = vadd.f32 %v8271, %v8351
  %v8353 = vpop.f32.mrb[0].mxu0
  %v8354 = vadd.f32 %v8273, %v8353
  %8355 = vdwg.mxu0
  %v8356 = vand.u32 %v5127, 4294901760
  %8357 = vmatprep.subr.mxu0 %v8356
  %v8358 = vand.u32 %v5126, 4294901760
  %8359 = vmatpush1.msra.mxu0 %v8358
  %v8360 = vand.u32 %v5143, 4294901760
  %8361 = vmatprep.subr.mxu0 %v8360
  %v8362 = vand.u32 %v5142, 4294901760
  %8363 = vmatpush1.msra.mxu0 %v8362
  %8364 = vmatprep.subr.mxu0 0.0
  %8365 = vmatpush1.msra.mxu0 0.0
  %8366 = vmatprep.subr.mxu0 0.0
  %8367 = vmatpush1.msra.mxu0 0.0
  %8368 = vmatprep.subr.mxu0 0.0
  %8369 = vmatpush1.msra.mxu0 0.0
  %8370 = vmatprep.subr.mxu0 0.0
  %8371 = vmatpush1.msra.mxu0 0.0
  %8372 = vmatprep.subr.mxu0 0.0
  %8373 = vmatpush1.msra.mxu0 0.0
  %8374 = vmatprep.subr.mxu0 0.0
  %8375 = vmatpush1.msra.mxu0 0.0
  %8376 = vmatprep.subr.mxu0 0.0
  %8377 = vmatpush1.msra.mxu0 0.0
  %8378 = vmatprep.subr.mxu0 0.0
  %8379 = vmatpush1.msra.mxu0 0.0
  %8380 = vmatprep.subr.mxu0 0.0
  %8381 = vmatpush1.msra.mxu0 0.0
  %8382 = vmatprep.subr.mxu0 0.0
  %8383 = vmatpush1.msra.mxu0 0.0
  %8384 = vmatprep.subr.mxu0 0.0
  %8385 = vmatpush1.msra.mxu0 0.0
  %8386 = vmatprep.subr.mxu0 0.0
  %8387 = vmatpush1.msra.mxu0 0.0
  %8388 = vmatprep.subr.mxu0 0.0
  %8389 = vmatpush1.msra.mxu0 0.0
  %8390 = vmatprep.subr.mxu0 0.0
  %8391 = vmatpush1.msra.mxu0 0.0
  %8392 = vmatprep.subr.mxu0 0.0
  %8393 = vmatpush1.msra.mxu0 0.0
  %8394 = vmatprep.subr.mxu0 0.0
  %8395 = vmatpush1.msra.mxu0 0.0
  %8396 = vmatprep.subr.mxu0 0.0
  %8397 = vmatpush1.msra.mxu0 0.0
  %8398 = vmatprep.subr.mxu0 0.0
  %8399 = vmatpush1.msra.mxu0 0.0
  %8400 = vmatprep.subr.mxu0 0.0
  %8401 = vmatpush1.msra.mxu0 0.0
  %8402 = vmatprep.subr.mxu0 0.0
  %8403 = vmatpush1.msra.mxu0 0.0
  %8404 = vmatprep.subr.mxu0 0.0
  %8405 = vmatpush1.msra.mxu0 0.0
  %8406 = vmatprep.subr.mxu0 0.0
  %8407 = vmatpush1.msra.mxu0 0.0
  %8408 = vmatprep.subr.mxu0 0.0
  %8409 = vmatpush1.msra.mxu0 0.0
  %8410 = vmatprep.subr.mxu0 0.0
  %8411 = vmatpush1.msra.mxu0 0.0
  %8412 = vmatprep.subr.mxu0 0.0
  %8413 = vmatpush1.msra.mxu0 0.0
  %8414 = vmatprep.subr.mxu0 0.0
  %8415 = vmatpush1.msra.mxu0 0.0
  %8416 = vmatprep.subr.mxu0 0.0
  %8417 = vmatpush1.msra.mxu0 0.0
  %8418 = vmatprep.subr.mxu0 0.0
  %8419 = vmatpush1.msra.mxu0 0.0
  %8420 = vmatprep.subr.mxu0 0.0
  %8421 = vmatpush1.msra.mxu0 0.0
  %8422 = vmatprep.subr.mxu0 0.0
  %8423 = vmatpush1.msra.mxu0 0.0
  %8424 = vmatprep.mubr.f32.mxu0 0.0
  %v8425 = vand.u32 %v5155, 4294901760
  %v8426 = vsub.f32 %v5155, %v8425
  %v8427 = vand.u32 %v8426, 4294901760
  %8428 = vmatmul.mubr.f32.gmra.mrb[0].mxu0 %v8427
  %v8429 = vpop.f32.mrb[0].mxu0
  %v8430 = vadd.f32 %v8352, %v8429
  %v8431 = vpop.f32.mrb[0].mxu0
  %v8432 = vadd.f32 %v8354, %v8431
  %8433 = vdwg.mxu0
  %v8434 = vand.u32 %v5127, 4294901760
  %v8435 = vsub.f32 %v5127, %v8434
  %v8436 = vand.u32 %v8435, 4294901760
  %8437 = vmatprep.subr.mxu0 %v8436
  %v8438 = vand.u32 %v5126, 4294901760
  %v8439 = vsub.f32 %v5126, %v8438
  %v8440 = vand.u32 %v8439, 4294901760
  %8441 = vmatpush1.msra.mxu0 %v8440
  %v8442 = vand.u32 %v5143, 4294901760
  %v8443 = vsub.f32 %v5143, %v8442
  %v8444 = vand.u32 %v8443, 4294901760
  %8445 = vmatprep.subr.mxu0 %v8444
  %v8446 = vand.u32 %v5142, 4294901760
  %v8447 = vsub.f32 %v5142, %v8446
  %v8448 = vand.u32 %v8447, 4294901760
  %8449 = vmatpush1.msra.mxu0 %v8448
  %8450 = vmatprep.subr.mxu0 0.0
  %8451 = vmatpush1.msra.mxu0 0.0
  %8452 = vmatprep.subr.mxu0 0.0
  %8453 = vmatpush1.msra.mxu0 0.0
  %8454 = vmatprep.subr.mxu0 0.0
  %8455 = vmatpush1.msra.mxu0 0.0
  %8456 = vmatprep.subr.mxu0 0.0
  %8457 = vmatpush1.msra.mxu0 0.0
  %8458 = vmatprep.subr.mxu0 0.0
  %8459 = vmatpush1.msra.mxu0 0.0
  %8460 = vmatprep.subr.mxu0 0.0
  %8461 = vmatpush1.msra.mxu0 0.0
  %8462 = vmatprep.subr.mxu0 0.0
  %8463 = vmatpush1.msra.mxu0 0.0
  %8464 = vmatprep.subr.mxu0 0.0
  %8465 = vmatpush1.msra.mxu0 0.0
  %8466 = vmatprep.subr.mxu0 0.0
  %8467 = vmatpush1.msra.mxu0 0.0
  %8468 = vmatprep.subr.mxu0 0.0
  %8469 = vmatpush1.msra.mxu0 0.0
  %8470 = vmatprep.subr.mxu0 0.0
  %8471 = vmatpush1.msra.mxu0 0.0
  %8472 = vmatprep.subr.mxu0 0.0
  %8473 = vmatpush1.msra.mxu0 0.0
  %8474 = vmatprep.subr.mxu0 0.0
  %8475 = vmatpush1.msra.mxu0 0.0
  %8476 = vmatprep.subr.mxu0 0.0
  %8477 = vmatpush1.msra.mxu0 0.0
  %8478 = vmatprep.subr.mxu0 0.0
  %8479 = vmatpush1.msra.mxu0 0.0
  %8480 = vmatprep.subr.mxu0 0.0
  %8481 = vmatpush1.msra.mxu0 0.0
  %8482 = vmatprep.subr.mxu0 0.0
  %8483 = vmatpush1.msra.mxu0 0.0
  %8484 = vmatprep.subr.mxu0 0.0
  %8485 = vmatpush1.msra.mxu0 0.0
  %8486 = vmatprep.subr.mxu0 0.0
  %8487 = vmatpush1.msra.mxu0 0.0
  %8488 = vmatprep.subr.mxu0 0.0
  %8489 = vmatpush1.msra.mxu0 0.0
  %8490 = vmatprep.subr.mxu0 0.0
  %8491 = vmatpush1.msra.mxu0 0.0
  %8492 = vmatprep.subr.mxu0 0.0
  %8493 = vmatpush1.msra.mxu0 0.0
  %8494 = vmatprep.subr.mxu0 0.0
  %8495 = vmatpush1.msra.mxu0 0.0
  %8496 = vmatprep.subr.mxu0 0.0
  %8497 = vmatpush1.msra.mxu0 0.0
  %8498 = vmatprep.subr.mxu0 0.0
  %8499 = vmatpush1.msra.mxu0 0.0
  %8500 = vmatprep.subr.mxu0 0.0
  %8501 = vmatpush1.msra.mxu0 0.0
  %8502 = vmatprep.subr.mxu0 0.0
  %8503 = vmatpush1.msra.mxu0 0.0
  %8504 = vmatprep.subr.mxu0 0.0
  %8505 = vmatpush1.msra.mxu0 0.0
  %8506 = vmatprep.subr.mxu0 0.0
  %8507 = vmatpush1.msra.mxu0 0.0
  %8508 = vmatprep.subr.mxu0 0.0
  %8509 = vmatpush1.msra.mxu0 0.0
  %8510 = vmatprep.mubr.f32.mxu0 0.0
  %v8511 = vand.u32 %v5155, 4294901760
  %8512 = vmatmul.mubr.f32.gmra.mrb[0].mxu0 %v8511
  %v8513 = vpop.f32.mrb[0].mxu0
  %v8514 = vadd.f32 %v8430, %v8513
  %v8515 = vpop.f32.mrb[0].mxu0
  %v8516 = vadd.f32 %v8432, %v8515
  %8517 = vdwg.mxu0
  %v8518 = vand.u32 %v5127, 4294901760
  %8519 = vmatprep.subr.mxu0 %v8518
  %v8520 = vand.u32 %v5126, 4294901760
  %8521 = vmatpush1.msra.mxu0 %v8520
  %v8522 = vand.u32 %v5143, 4294901760
  %8523 = vmatprep.subr.mxu0 %v8522
  %v8524 = vand.u32 %v5142, 4294901760
  %8525 = vmatpush1.msra.mxu0 %v8524
  %8526 = vmatprep.subr.mxu0 0.0
  %8527 = vmatpush1.msra.mxu0 0.0
  %8528 = vmatprep.subr.mxu0 0.0
  %8529 = vmatpush1.msra.mxu0 0.0
  %8530 = vmatprep.subr.mxu0 0.0
  %8531 = vmatpush1.msra.mxu0 0.0
  %8532 = vmatprep.subr.mxu0 0.0
  %8533 = vmatpush1.msra.mxu0 0.0
  %8534 = vmatprep.subr.mxu0 0.0
  %8535 = vmatpush1.msra.mxu0 0.0
  %8536 = vmatprep.subr.mxu0 0.0
  %8537 = vmatpush1.msra.mxu0 0.0
  %8538 = vmatprep.subr.mxu0 0.0
  %8539 = vmatpush1.msra.mxu0 0.0
  %8540 = vmatprep.subr.mxu0 0.0
  %8541 = vmatpush1.msra.mxu0 0.0
  %8542 = vmatprep.subr.mxu0 0.0
  %8543 = vmatpush1.msra.mxu0 0.0
  %8544 = vmatprep.subr.mxu0 0.0
  %8545 = vmatpush1.msra.mxu0 0.0
  %8546 = vmatprep.subr.mxu0 0.0
  %8547 = vmatpush1.msra.mxu0 0.0
  %8548 = vmatprep.subr.mxu0 0.0
  %8549 = vmatpush1.msra.mxu0 0.0
  %8550 = vmatprep.subr.mxu0 0.0
  %8551 = vmatpush1.msra.mxu0 0.0
  %8552 = vmatprep.subr.mxu0 0.0
  %8553 = vmatpush1.msra.mxu0 0.0
  %8554 = vmatprep.subr.mxu0 0.0
  %8555 = vmatpush1.msra.mxu0 0.0
  %8556 = vmatprep.subr.mxu0 0.0
  %8557 = vmatpush1.msra.mxu0 0.0
  %8558 = vmatprep.subr.mxu0 0.0
  %8559 = vmatpush1.msra.mxu0 0.0
  %8560 = vmatprep.subr.mxu0 0.0
  %8561 = vmatpush1.msra.mxu0 0.0
  %8562 = vmatprep.subr.mxu0 0.0
  %8563 = vmatpush1.msra.mxu0 0.0
  %8564 = vmatprep.subr.mxu0 0.0
  %8565 = vmatpush1.msra.mxu0 0.0
  %8566 = vmatprep.subr.mxu0 0.0
  %8567 = vmatpush1.msra.mxu0 0.0
  %8568 = vmatprep.subr.mxu0 0.0
  %8569 = vmatpush1.msra.mxu0 0.0
  %8570 = vmatprep.subr.mxu0 0.0
  %8571 = vmatpush1.msra.mxu0 0.0
  %8572 = vmatprep.subr.mxu0 0.0
  %8573 = vmatpush1.msra.mxu0 0.0
  %8574 = vmatprep.subr.mxu0 0.0
  %8575 = vmatpush1.msra.mxu0 0.0
  %8576 = vmatprep.subr.mxu0 0.0
  %8577 = vmatpush1.msra.mxu0 0.0
  %8578 = vmatprep.subr.mxu0 0.0
  %8579 = vmatpush1.msra.mxu0 0.0
  %8580 = vmatprep.subr.mxu0 0.0
  %8581 = vmatpush1.msra.mxu0 0.0
  %8582 = vmatprep.subr.mxu0 0.0
  %8583 = vmatpush1.msra.mxu0 0.0
  %8584 = vmatprep.subr.mxu0 0.0
  %8585 = vmatpush1.msra.mxu0 0.0
  %8586 = vmatprep.mubr.f32.mxu0 0.0
  %v8587 = vand.u32 %v5155, 4294901760
  %8588 = vmatmul.mubr.f32.gmra.mrb[0].mxu0 %v8587
  %v8589 = vpop.f32.mrb[0].mxu0
  %v8590 = vadd.f32 %v8514, %v8589
  %v8591 = vpop.f32.mrb[0].mxu0
  %v8592 = vadd.f32 %v8516, %v8591
  %8593 = vdwg.mxu0
  %v8594 = vand.u32 %v5129, 4294901760
  %8595 = vmatprep.subr.mxu0 %v8594
  %v8596 = vand.u32 %v5128, 4294901760
  %8597 = vmatpush1.msra.mxu0 %v8596
  %v8598 = vand.u32 %v5145, 4294901760
  %8599 = vmatprep.subr.mxu0 %v8598
  %v8600 = vand.u32 %v5144, 4294901760
  %8601 = vmatpush1.msra.mxu0 %v8600
  %8602 = vmatprep.subr.mxu0 0.0
  %8603 = vmatpush1.msra.mxu0 0.0
  %8604 = vmatprep.subr.mxu0 0.0
  %8605 = vmatpush1.msra.mxu0 0.0
  %8606 = vmatprep.subr.mxu0 0.0
  %8607 = vmatpush1.msra.mxu0 0.0
  %8608 = vmatprep.subr.mxu0 0.0
  %8609 = vmatpush1.msra.mxu0 0.0
  %8610 = vmatprep.subr.mxu0 0.0
  %8611 = vmatpush1.msra.mxu0 0.0
  %8612 = vmatprep.subr.mxu0 0.0
  %8613 = vmatpush1.msra.mxu0 0.0
  %8614 = vmatprep.subr.mxu0 0.0
  %8615 = vmatpush1.msra.mxu0 0.0
  %8616 = vmatprep.subr.mxu0 0.0
  %8617 = vmatpush1.msra.mxu0 0.0
  %8618 = vmatprep.subr.mxu0 0.0
  %8619 = vmatpush1.msra.mxu0 0.0
  %8620 = vmatprep.subr.mxu0 0.0
  %8621 = vmatpush1.msra.mxu0 0.0
  %8622 = vmatprep.subr.mxu0 0.0
  %8623 = vmatpush1.msra.mxu0 0.0
  %8624 = vmatprep.subr.mxu0 0.0
  %8625 = vmatpush1.msra.mxu0 0.0
  %8626 = vmatprep.subr.mxu0 0.0
  %8627 = vmatpush1.msra.mxu0 0.0
  %8628 = vmatprep.subr.mxu0 0.0
  %8629 = vmatpush1.msra.mxu0 0.0
  %8630 = vmatprep.subr.mxu0 0.0
  %8631 = vmatpush1.msra.mxu0 0.0
  %8632 = vmatprep.subr.mxu0 0.0
  %8633 = vmatpush1.msra.mxu0 0.0
  %8634 = vmatprep.subr.mxu0 0.0
  %8635 = vmatpush1.msra.mxu0 0.0
  %8636 = vmatprep.subr.mxu0 0.0
  %8637 = vmatpush1.msra.mxu0 0.0
  %8638 = vmatprep.subr.mxu0 0.0
  %8639 = vmatpush1.msra.mxu0 0.0
  %8640 = vmatprep.subr.mxu0 0.0
  %8641 = vmatpush1.msra.mxu0 0.0
  %8642 = vmatprep.subr.mxu0 0.0
  %8643 = vmatpush1.msra.mxu0 0.0
  %8644 = vmatprep.subr.mxu0 0.0
  %8645 = vmatpush1.msra.mxu0 0.0
  %8646 = vmatprep.subr.mxu0 0.0
  %8647 = vmatpush1.msra.mxu0 0.0
  %8648 = vmatprep.subr.mxu0 0.0
  %8649 = vmatpush1.msra.mxu0 0.0
  %8650 = vmatprep.subr.mxu0 0.0
  %8651 = vmatpush1.msra.mxu0 0.0
  %8652 = vmatprep.subr.mxu0 0.0
  %8653 = vmatpush1.msra.mxu0 0.0
  %8654 = vmatprep.subr.mxu0 0.0
  %8655 = vmatpush1.msra.mxu0 0.0
  %8656 = vmatprep.subr.mxu0 0.0
  %8657 = vmatpush1.msra.mxu0 0.0
  %8658 = vmatprep.subr.mxu0 0.0
  %8659 = vmatpush1.msra.mxu0 0.0
  %8660 = vmatprep.subr.mxu0 0.0
  %8661 = vmatpush1.msra.mxu0 0.0
  %8662 = vmatprep.mubr.f32.mxu0 0.0
  %v8663 = vand.u32 %v5155, 4294901760
  %v8664 = vsub.f32 %v5155, %v8663
  %v8665 = vand.u32 %v8664, 4294901760
  %v8666 = vsub.f32 %v8664, %v8665
  %v8667 = vand.u32 %v8666, 4294901760
  %8668 = vmatmul.mubr.f32.gmra.mrb[0].mxu0 %v8667
  %v8669 = vpop.f32.mrb[0].mxu0
  %v8670 = vadd.f32 %v5151, %v8669
  %v8671 = vpop.f32.mrb[0].mxu0
  %v8672 = vadd.f32 %v5151, %v8671
  %8673 = vdwg.mxu0
  %v8674 = vand.u32 %v5129, 4294901760
  %v8675 = vsub.f32 %v5129, %v8674
  %v8676 = vand.u32 %v8675, 4294901760
  %v8677 = vsub.f32 %v8675, %v8676
  %v8678 = vand.u32 %v8677, 4294901760
  %8679 = vmatprep.subr.mxu0 %v8678
  %v8680 = vand.u32 %v5128, 4294901760
  %v8681 = vsub.f32 %v5128, %v8680
  %v8682 = vand.u32 %v8681, 4294901760
  %v8683 = vsub.f32 %v8681, %v8682
  %v8684 = vand.u32 %v8683, 4294901760
  %8685 = vmatpush1.msra.mxu0 %v8684
  %v8686 = vand.u32 %v5145, 4294901760
  %v8687 = vsub.f32 %v5145, %v8686
  %v8688 = vand.u32 %v8687, 4294901760
  %v8689 = vsub.f32 %v8687, %v8688
  %v8690 = vand.u32 %v8689, 4294901760
  %8691 = vmatprep.subr.mxu0 %v8690
  %v8692 = vand.u32 %v5144, 4294901760
  %v8693 = vsub.f32 %v5144, %v8692
  %v8694 = vand.u32 %v8693, 4294901760
  %v8695 = vsub.f32 %v8693, %v8694
  %v8696 = vand.u32 %v8695, 4294901760
  %8697 = vmatpush1.msra.mxu0 %v8696
  %8698 = vmatprep.subr.mxu0 0.0
  %8699 = vmatpush1.msra.mxu0 0.0
  %8700 = vmatprep.subr.mxu0 0.0
  %8701 = vmatpush1.msra.mxu0 0.0
  %8702 = vmatprep.subr.mxu0 0.0
  %8703 = vmatpush1.msra.mxu0 0.0
  %8704 = vmatprep.subr.mxu0 0.0
  %8705 = vmatpush1.msra.mxu0 0.0
  %8706 = vmatprep.subr.mxu0 0.0
  %8707 = vmatpush1.msra.mxu0 0.0
  %8708 = vmatprep.subr.mxu0 0.0
  %8709 = vmatpush1.msra.mxu0 0.0
  %8710 = vmatprep.subr.mxu0 0.0
  %8711 = vmatpush1.msra.mxu0 0.0
  %8712 = vmatprep.subr.mxu0 0.0
  %8713 = vmatpush1.msra.mxu0 0.0
  %8714 = vmatprep.subr.mxu0 0.0
  %8715 = vmatpush1.msra.mxu0 0.0
  %8716 = vmatprep.subr.mxu0 0.0
  %8717 = vmatpush1.msra.mxu0 0.0
  %8718 = vmatprep.subr.mxu0 0.0
  %8719 = vmatpush1.msra.mxu0 0.0
  %8720 = vmatprep.subr.mxu0 0.0
  %8721 = vmatpush1.msra.mxu0 0.0
  %8722 = vmatprep.subr.mxu0 0.0
  %8723 = vmatpush1.msra.mxu0 0.0
  %8724 = vmatprep.subr.mxu0 0.0
  %8725 = vmatpush1.msra.mxu0 0.0
  %8726 = vmatprep.subr.mxu0 0.0
  %8727 = vmatpush1.msra.mxu0 0.0
  %8728 = vmatprep.subr.mxu0 0.0
  %8729 = vmatpush1.msra.mxu0 0.0
  %8730 = vmatprep.subr.mxu0 0.0
  %8731 = vmatpush1.msra.mxu0 0.0
  %8732 = vmatprep.subr.mxu0 0.0
  %8733 = vmatpush1.msra.mxu0 0.0
  %8734 = vmatprep.subr.mxu0 0.0
  %8735 = vmatpush1.msra.mxu0 0.0
  %8736 = vmatprep.subr.mxu0 0.0
  %8737 = vmatpush1.msra.mxu0 0.0
  %8738 = vmatprep.subr.mxu0 0.0
  %8739 = vmatpush1.msra.mxu0 0.0
  %8740 = vmatprep.subr.mxu0 0.0
  %8741 = vmatpush1.msra.mxu0 0.0
  %8742 = vmatprep.subr.mxu0 0.0
  %8743 = vmatpush1.msra.mxu0 0.0
  %8744 = vmatprep.subr.mxu0 0.0
  %8745 = vmatpush1.msra.mxu0 0.0
  %8746 = vmatprep.subr.mxu0 0.0
  %8747 = vmatpush1.msra.mxu0 0.0
  %8748 = vmatprep.subr.mxu0 0.0
  %8749 = vmatpush1.msra.mxu0 0.0
  %8750 = vmatprep.subr.mxu0 0.0
  %8751 = vmatpush1.msra.mxu0 0.0
  %8752 = vmatprep.subr.mxu0 0.0
  %8753 = vmatpush1.msra.mxu0 0.0
  %8754 = vmatprep.subr.mxu0 0.0
  %8755 = vmatpush1.msra.mxu0 0.0
  %8756 = vmatprep.subr.mxu0 0.0
  %8757 = vmatpush1.msra.mxu0 0.0
  %8758 = vmatprep.mubr.f32.mxu0 0.0
  %v8759 = vand.u32 %v5155, 4294901760
  %8760 = vmatmul.mubr.f32.gmra.mrb[0].mxu0 %v8759
  %v8761 = vpop.f32.mrb[0].mxu0
  %v8762 = vadd.f32 %v8670, %v8761
  %v8763 = vpop.f32.mrb[0].mxu0
  %v8764 = vadd.f32 %v8672, %v8763
  %8765 = vdwg.mxu0
  %v8766 = vand.u32 %v5129, 4294901760
  %v8767 = vsub.f32 %v5129, %v8766
  %8768 = vmatprep.subr.mxu0 %v8767
  %v8769 = vand.u32 %v5128, 4294901760
  %v8770 = vsub.f32 %v5128, %v8769
  %8771 = vmatpush1.msra.mxu0 %v8770
  %v8772 = vand.u32 %v5145, 4294901760
  %v8773 = vsub.f32 %v5145, %v8772
  %8774 = vmatprep.subr.mxu0 %v8773
  %v8775 = vand.u32 %v5144, 4294901760
  %v8776 = vsub.f32 %v5144, %v8775
  %8777 = vmatpush1.msra.mxu0 %v8776
  %8778 = vmatprep.subr.mxu0 0.0
  %8779 = vmatpush1.msra.mxu0 0.0
  %8780 = vmatprep.subr.mxu0 0.0
  %8781 = vmatpush1.msra.mxu0 0.0
  %8782 = vmatprep.subr.mxu0 0.0
  %8783 = vmatpush1.msra.mxu0 0.0
  %8784 = vmatprep.subr.mxu0 0.0
  %8785 = vmatpush1.msra.mxu0 0.0
  %8786 = vmatprep.subr.mxu0 0.0
  %8787 = vmatpush1.msra.mxu0 0.0
  %8788 = vmatprep.subr.mxu0 0.0
  %8789 = vmatpush1.msra.mxu0 0.0
  %8790 = vmatprep.subr.mxu0 0.0
  %8791 = vmatpush1.msra.mxu0 0.0
  %8792 = vmatprep.subr.mxu0 0.0
  %8793 = vmatpush1.msra.mxu0 0.0
  %8794 = vmatprep.subr.mxu0 0.0
  %8795 = vmatpush1.msra.mxu0 0.0
  %8796 = vmatprep.subr.mxu0 0.0
  %8797 = vmatpush1.msra.mxu0 0.0
  %8798 = vmatprep.subr.mxu0 0.0
  %8799 = vmatpush1.msra.mxu0 0.0
  %8800 = vmatprep.subr.mxu0 0.0
  %8801 = vmatpush1.msra.mxu0 0.0
  %8802 = vmatprep.subr.mxu0 0.0
  %8803 = vmatpush1.msra.mxu0 0.0
  %8804 = vmatprep.subr.mxu0 0.0
  %8805 = vmatpush1.msra.mxu0 0.0
  %8806 = vmatprep.subr.mxu0 0.0
  %8807 = vmatpush1.msra.mxu0 0.0
  %8808 = vmatprep.subr.mxu0 0.0
  %8809 = vmatpush1.msra.mxu0 0.0
  %8810 = vmatprep.subr.mxu0 0.0
  %8811 = vmatpush1.msra.mxu0 0.0
  %8812 = vmatprep.subr.mxu0 0.0
  %8813 = vmatpush1.msra.mxu0 0.0
  %8814 = vmatprep.subr.mxu0 0.0
  %8815 = vmatpush1.msra.mxu0 0.0
  %8816 = vmatprep.subr.mxu0 0.0
  %8817 = vmatpush1.msra.mxu0 0.0
  %8818 = vmatprep.subr.mxu0 0.0
  %8819 = vmatpush1.msra.mxu0 0.0
  %8820 = vmatprep.subr.mxu0 0.0
  %8821 = vmatpush1.msra.mxu0 0.0
  %8822 = vmatprep.subr.mxu0 0.0
  %8823 = vmatpush1.msra.mxu0 0.0
  %8824 = vmatprep.subr.mxu0 0.0
  %8825 = vmatpush1.msra.mxu0 0.0
  %8826 = vmatprep.subr.mxu0 0.0
  %8827 = vmatpush1.msra.mxu0 0.0
  %8828 = vmatprep.subr.mxu0 0.0
  %8829 = vmatpush1.msra.mxu0 0.0
  %8830 = vmatprep.subr.mxu0 0.0
  %8831 = vmatpush1.msra.mxu0 0.0
  %8832 = vmatprep.subr.mxu0 0.0
  %8833 = vmatpush1.msra.mxu0 0.0
  %8834 = vmatprep.subr.mxu0 0.0
  %8835 = vmatpush1.msra.mxu0 0.0
  %8836 = vmatprep.subr.mxu0 0.0
  %8837 = vmatpush1.msra.mxu0 0.0
  %8838 = vmatprep.mubr.f32.mxu0 0.0
  %v8839 = vand.u32 %v5155, 4294901760
  %v8840 = vsub.f32 %v5155, %v8839
  %8841 = vmatmul.mubr.f32.gmra.mrb[0].mxu0 %v8840
  %v8842 = vpop.f32.mrb[0].mxu0
  %v8843 = vadd.f32 %v8762, %v8842
  %v8844 = vpop.f32.mrb[0].mxu0
  %v8845 = vadd.f32 %v8764, %v8844
  %8846 = vdwg.mxu0
  %v8847 = vand.u32 %v5129, 4294901760
  %8848 = vmatprep.subr.mxu0 %v8847
  %v8849 = vand.u32 %v5128, 4294901760
  %8850 = vmatpush1.msra.mxu0 %v8849
  %v8851 = vand.u32 %v5145, 4294901760
  %8852 = vmatprep.subr.mxu0 %v8851
  %v8853 = vand.u32 %v5144, 4294901760
  %8854 = vmatpush1.msra.mxu0 %v8853
  %8855 = vmatprep.subr.mxu0 0.0
  %8856 = vmatpush1.msra.mxu0 0.0
  %8857 = vmatprep.subr.mxu0 0.0
  %8858 = vmatpush1.msra.mxu0 0.0
  %8859 = vmatprep.subr.mxu0 0.0
  %8860 = vmatpush1.msra.mxu0 0.0
  %8861 = vmatprep.subr.mxu0 0.0
  %8862 = vmatpush1.msra.mxu0 0.0
  %8863 = vmatprep.subr.mxu0 0.0
  %8864 = vmatpush1.msra.mxu0 0.0
  %8865 = vmatprep.subr.mxu0 0.0
  %8866 = vmatpush1.msra.mxu0 0.0
  %8867 = vmatprep.subr.mxu0 0.0
  %8868 = vmatpush1.msra.mxu0 0.0
  %8869 = vmatprep.subr.mxu0 0.0
  %8870 = vmatpush1.msra.mxu0 0.0
  %8871 = vmatprep.subr.mxu0 0.0
  %8872 = vmatpush1.msra.mxu0 0.0
  %8873 = vmatprep.subr.mxu0 0.0
  %8874 = vmatpush1.msra.mxu0 0.0
  %8875 = vmatprep.subr.mxu0 0.0
  %8876 = vmatpush1.msra.mxu0 0.0
  %8877 = vmatprep.subr.mxu0 0.0
  %8878 = vmatpush1.msra.mxu0 0.0
  %8879 = vmatprep.subr.mxu0 0.0
  %8880 = vmatpush1.msra.mxu0 0.0
  %8881 = vmatprep.subr.mxu0 0.0
  %8882 = vmatpush1.msra.mxu0 0.0
  %8883 = vmatprep.subr.mxu0 0.0
  %8884 = vmatpush1.msra.mxu0 0.0
  %8885 = vmatprep.subr.mxu0 0.0
  %8886 = vmatpush1.msra.mxu0 0.0
  %8887 = vmatprep.subr.mxu0 0.0
  %8888 = vmatpush1.msra.mxu0 0.0
  %8889 = vmatprep.subr.mxu0 0.0
  %8890 = vmatpush1.msra.mxu0 0.0
  %8891 = vmatprep.subr.mxu0 0.0
  %8892 = vmatpush1.msra.mxu0 0.0
  %8893 = vmatprep.subr.mxu0 0.0
  %8894 = vmatpush1.msra.mxu0 0.0
  %8895 = vmatprep.subr.mxu0 0.0
  %8896 = vmatpush1.msra.mxu0 0.0
  %8897 = vmatprep.subr.mxu0 0.0
  %8898 = vmatpush1.msra.mxu0 0.0
  %8899 = vmatprep.subr.mxu0 0.0
  %8900 = vmatpush1.msra.mxu0 0.0
  %8901 = vmatprep.subr.mxu0 0.0
  %8902 = vmatpush1.msra.mxu0 0.0
  %8903 = vmatprep.subr.mxu0 0.0
  %8904 = vmatpush1.msra.mxu0 0.0
  %8905 = vmatprep.subr.mxu0 0.0
  %8906 = vmatpush1.msra.mxu0 0.0
  %8907 = vmatprep.subr.mxu0 0.0
  %8908 = vmatpush1.msra.mxu0 0.0
  %8909 = vmatprep.subr.mxu0 0.0
  %8910 = vmatpush1.msra.mxu0 0.0
  %8911 = vmatprep.subr.mxu0 0.0
  %8912 = vmatpush1.msra.mxu0 0.0
  %8913 = vmatprep.subr.mxu0 0.0
  %8914 = vmatpush1.msra.mxu0 0.0
  %8915 = vmatprep.mubr.f32.mxu0 0.0
  %v8916 = vand.u32 %v5155, 4294901760
  %v8917 = vsub.f32 %v5155, %v8916
  %v8918 = vand.u32 %v8917, 4294901760
  %8919 = vmatmul.mubr.f32.gmra.mrb[0].mxu0 %v8918
  %v8920 = vpop.f32.mrb[0].mxu0
  %v8921 = vadd.f32 %v8843, %v8920
  %v8922 = vpop.f32.mrb[0].mxu0
  %v8923 = vadd.f32 %v8845, %v8922
  %8924 = vdwg.mxu0
  %v8925 = vand.u32 %v5129, 4294901760
  %v8926 = vsub.f32 %v5129, %v8925
  %v8927 = vand.u32 %v8926, 4294901760
  %8928 = vmatprep.subr.mxu0 %v8927
  %v8929 = vand.u32 %v5128, 4294901760
  %v8930 = vsub.f32 %v5128, %v8929
  %v8931 = vand.u32 %v8930, 4294901760
  %8932 = vmatpush1.msra.mxu0 %v8931
  %v8933 = vand.u32 %v5145, 4294901760
  %v8934 = vsub.f32 %v5145, %v8933
  %v8935 = vand.u32 %v8934, 4294901760
  %8936 = vmatprep.subr.mxu0 %v8935
  %v8937 = vand.u32 %v5144, 4294901760
  %v8938 = vsub.f32 %v5144, %v8937
  %v8939 = vand.u32 %v8938, 4294901760
  %8940 = vmatpush1.msra.mxu0 %v8939
  %8941 = vmatprep.subr.mxu0 0.0
  %8942 = vmatpush1.msra.mxu0 0.0
  %8943 = vmatprep.subr.mxu0 0.0
  %8944 = vmatpush1.msra.mxu0 0.0
  %8945 = vmatprep.subr.mxu0 0.0
  %8946 = vmatpush1.msra.mxu0 0.0
  %8947 = vmatprep.subr.mxu0 0.0
  %8948 = vmatpush1.msra.mxu0 0.0
  %8949 = vmatprep.subr.mxu0 0.0
  %8950 = vmatpush1.msra.mxu0 0.0
  %8951 = vmatprep.subr.mxu0 0.0
  %8952 = vmatpush1.msra.mxu0 0.0
  %8953 = vmatprep.subr.mxu0 0.0
  %8954 = vmatpush1.msra.mxu0 0.0
  %8955 = vmatprep.subr.mxu0 0.0
  %8956 = vmatpush1.msra.mxu0 0.0
  %8957 = vmatprep.subr.mxu0 0.0
  %8958 = vmatpush1.msra.mxu0 0.0
  %8959 = vmatprep.subr.mxu0 0.0
  %8960 = vmatpush1.msra.mxu0 0.0
  %8961 = vmatprep.subr.mxu0 0.0
  %8962 = vmatpush1.msra.mxu0 0.0
  %8963 = vmatprep.subr.mxu0 0.0
  %8964 = vmatpush1.msra.mxu0 0.0
  %8965 = vmatprep.subr.mxu0 0.0
  %8966 = vmatpush1.msra.mxu0 0.0
  %8967 = vmatprep.subr.mxu0 0.0
  %8968 = vmatpush1.msra.mxu0 0.0
  %8969 = vmatprep.subr.mxu0 0.0
  %8970 = vmatpush1.msra.mxu0 0.0
  %8971 = vmatprep.subr.mxu0 0.0
  %8972 = vmatpush1.msra.mxu0 0.0
  %8973 = vmatprep.subr.mxu0 0.0
  %8974 = vmatpush1.msra.mxu0 0.0
  %8975 = vmatprep.subr.mxu0 0.0
  %8976 = vmatpush1.msra.mxu0 0.0
  %8977 = vmatprep.subr.mxu0 0.0
  %8978 = vmatpush1.msra.mxu0 0.0
  %8979 = vmatprep.subr.mxu0 0.0
  %8980 = vmatpush1.msra.mxu0 0.0
  %8981 = vmatprep.subr.mxu0 0.0
  %8982 = vmatpush1.msra.mxu0 0.0
  %8983 = vmatprep.subr.mxu0 0.0
  %8984 = vmatpush1.msra.mxu0 0.0
  %8985 = vmatprep.subr.mxu0 0.0
  %8986 = vmatpush1.msra.mxu0 0.0
  %8987 = vmatprep.subr.mxu0 0.0
  %8988 = vmatpush1.msra.mxu0 0.0
  %8989 = vmatprep.subr.mxu0 0.0
  %8990 = vmatpush1.msra.mxu0 0.0
  %8991 = vmatprep.subr.mxu0 0.0
  %8992 = vmatpush1.msra.mxu0 0.0
  %8993 = vmatprep.subr.mxu0 0.0
  %8994 = vmatpush1.msra.mxu0 0.0
  %8995 = vmatprep.subr.mxu0 0.0
  %8996 = vmatpush1.msra.mxu0 0.0
  %8997 = vmatprep.subr.mxu0 0.0
  %8998 = vmatpush1.msra.mxu0 0.0
  %8999 = vmatprep.subr.mxu0 0.0
  %9000 = vmatpush1.msra.mxu0 0.0
  %9001 = vmatprep.mubr.f32.mxu0 0.0
  %v9002 = vand.u32 %v5155, 4294901760
  %9003 = vmatmul.mubr.f32.gmra.mrb[0].mxu0 %v9002
  %v9004 = vpop.f32.mrb[0].mxu0
  %v9005 = vadd.f32 %v8921, %v9004
  %v9006 = vpop.f32.mrb[0].mxu0
  %v9007 = vadd.f32 %v8923, %v9006
  %9008 = vdwg.mxu0
  %v9009 = vand.u32 %v5129, 4294901760
  %9010 = vmatprep.subr.mxu0 %v9009
  %v9011 = vand.u32 %v5128, 4294901760
  %9012 = vmatpush1.msra.mxu0 %v9011
  %v9013 = vand.u32 %v5145, 4294901760
  %9014 = vmatprep.subr.mxu0 %v9013
  %v9015 = vand.u32 %v5144, 4294901760
  %9016 = vmatpush1.msra.mxu0 %v9015
  %9017 = vmatprep.subr.mxu0 0.0
  %9018 = vmatpush1.msra.mxu0 0.0
  %9019 = vmatprep.subr.mxu0 0.0
  %9020 = vmatpush1.msra.mxu0 0.0
  %9021 = vmatprep.subr.mxu0 0.0
  %9022 = vmatpush1.msra.mxu0 0.0
  %9023 = vmatprep.subr.mxu0 0.0
  %9024 = vmatpush1.msra.mxu0 0.0
  %9025 = vmatprep.subr.mxu0 0.0
  %9026 = vmatpush1.msra.mxu0 0.0
  %9027 = vmatprep.subr.mxu0 0.0
  %9028 = vmatpush1.msra.mxu0 0.0
  %9029 = vmatprep.subr.mxu0 0.0
  %9030 = vmatpush1.msra.mxu0 0.0
  %9031 = vmatprep.subr.mxu0 0.0
  %9032 = vmatpush1.msra.mxu0 0.0
  %9033 = vmatprep.subr.mxu0 0.0
  %9034 = vmatpush1.msra.mxu0 0.0
  %9035 = vmatprep.subr.mxu0 0.0
  %9036 = vmatpush1.msra.mxu0 0.0
  %9037 = vmatprep.subr.mxu0 0.0
  %9038 = vmatpush1.msra.mxu0 0.0
  %9039 = vmatprep.subr.mxu0 0.0
  %9040 = vmatpush1.msra.mxu0 0.0
  %9041 = vmatprep.subr.mxu0 0.0
  %9042 = vmatpush1.msra.mxu0 0.0
  %9043 = vmatprep.subr.mxu0 0.0
  %9044 = vmatpush1.msra.mxu0 0.0
  %9045 = vmatprep.subr.mxu0 0.0
  %9046 = vmatpush1.msra.mxu0 0.0
  %9047 = vmatprep.subr.mxu0 0.0
  %9048 = vmatpush1.msra.mxu0 0.0
  %9049 = vmatprep.subr.mxu0 0.0
  %9050 = vmatpush1.msra.mxu0 0.0
  %9051 = vmatprep.subr.mxu0 0.0
  %9052 = vmatpush1.msra.mxu0 0.0
  %9053 = vmatprep.subr.mxu0 0.0
  %9054 = vmatpush1.msra.mxu0 0.0
  %9055 = vmatprep.subr.mxu0 0.0
  %9056 = vmatpush1.msra.mxu0 0.0
  %9057 = vmatprep.subr.mxu0 0.0
  %9058 = vmatpush1.msra.mxu0 0.0
  %9059 = vmatprep.subr.mxu0 0.0
  %9060 = vmatpush1.msra.mxu0 0.0
  %9061 = vmatprep.subr.mxu0 0.0
  %9062 = vmatpush1.msra.mxu0 0.0
  %9063 = vmatprep.subr.mxu0 0.0
  %9064 = vmatpush1.msra.mxu0 0.0
  %9065 = vmatprep.subr.mxu0 0.0
  %9066 = vmatpush1.msra.mxu0 0.0
  %9067 = vmatprep.subr.mxu0 0.0
  %9068 = vmatpush1.msra.mxu0 0.0
  %9069 = vmatprep.subr.mxu0 0.0
  %9070 = vmatpush1.msra.mxu0 0.0
  %9071 = vmatprep.subr.mxu0 0.0
  %9072 = vmatpush1.msra.mxu0 0.0
  %9073 = vmatprep.subr.mxu0 0.0
  %9074 = vmatpush1.msra.mxu0 0.0
  %9075 = vmatprep.subr.mxu0 0.0
  %9076 = vmatpush1.msra.mxu0 0.0
  %9077 = vmatprep.mubr.f32.mxu0 0.0
  %v9078 = vand.u32 %v5155, 4294901760
  %9079 = vmatmul.mubr.f32.gmra.mrb[0].mxu0 %v9078
  %v9080 = vpop.f32.mrb[0].mxu0
  %v9081 = vadd.f32 %v9005, %v9080
  %v9082 = vpop.f32.mrb[0].mxu0
  %v9083 = vadd.f32 %v9007, %v9082
  %9084 = vdwg.mxu0
  %v9085 = vmax.f32 %v5644, 0.0
  %v9086 = vmax.f32 %v5646, 0.0
  %v9087 = vmax.f32 %v6135, 0.0
  %v9088 = vmax.f32 %v6137, 0.0
  %v9089 = vmax.f32 %v6626, 0.0
  %v9090 = vmax.f32 %v6628, 0.0
  %v9091 = vmax.f32 %v7117, 0.0
  %v9092 = vmax.f32 %v7119, 0.0
  %v9093 = vmax.f32 %v7608, 0.0
  %v9094 = vmax.f32 %v7610, 0.0
  %v9095 = vmax.f32 %v8099, 0.0
  %v9096 = vmax.f32 %v8101, 0.0
  %v9097 = vmax.f32 %v8590, 0.0
  %v9098 = vmax.f32 %v8592, 0.0
  %v9099 = vmax.f32 %v9081, 0.0
  %v9100 = vmax.f32 %v9083, 0.0
  %v9101 = vld [vmem:[%s7] sm:$0xff]
  %9103 = vset.pattern.permute.xlu0 0
  %9104 = vperm.xlu0 %9103, %v9101
  %v9105 = vpop.permute.xlu0 %9104
  %v9107 = vmul.f32 %v9105, %v9085
  %v9108 = vmul.f32 %v9105, %v9086
  %v9109 = vmul.f32 %v9105, %v9087
  %v9110 = vmul.f32 %v9105, %v9088
  %v9111 = vmul.f32 %v9105, %v9089
  %v9112 = vmul.f32 %v9105, %v9090
  %v9113 = vmul.f32 %v9105, %v9091
  %v9114 = vmul.f32 %v9105, %v9092
  %v9115 = vmul.f32 %v9105, %v9093
  %v9116 = vmul.f32 %v9105, %v9094
  %v9117 = vmul.f32 %v9105, %v9095
  %v9118 = vmul.f32 %v9105, %v9096
  %v9119 = vmul.f32 %v9105, %v9097
  %v9120 = vmul.f32 %v9105, %v9098
  %v9121 = vmul.f32 %v9105, %v9099
  %v9122 = vmul.f32 %v9105, %v9100
  %v9123 = vrot.slane %v9107, 4
  %v9124 = vadd.f32 %v9107, %v9123
  %v9125 = vrot.slane %v9124, 2
  %v9126 = vadd.f32 %v9124, %v9125
  %v9127 = vrot.slane %v9126, 1
  %v9128 = vadd.f32 %v9126, %v9127
  %v9129 = vrot.slane %v9108, 4
  %v9130 = vadd.f32 %v9108, %v9129
  %v9131 = vrot.slane %v9130, 2
  %v9132 = vadd.f32 %v9130, %v9131
  %v9133 = vrot.slane %v9132, 1
  %v9134 = vadd.f32 %v9132, %v9133
  %v9135 = vrot.slane %v9109, 4
  %v9136 = vadd.f32 %v9109, %v9135
  %v9137 = vrot.slane %v9136, 2
  %v9138 = vadd.f32 %v9136, %v9137
  %v9139 = vrot.slane %v9138, 1
  %v9140 = vadd.f32 %v9138, %v9139
  %v9141 = vrot.slane %v9110, 4
  %v9142 = vadd.f32 %v9110, %v9141
  %v9143 = vrot.slane %v9142, 2
  %v9144 = vadd.f32 %v9142, %v9143
  %v9145 = vrot.slane %v9144, 1
  %v9146 = vadd.f32 %v9144, %v9145
  %v9147 = vrot.slane %v9111, 4
  %v9148 = vadd.f32 %v9111, %v9147
  %v9149 = vrot.slane %v9148, 2
  %v9150 = vadd.f32 %v9148, %v9149
  %v9151 = vrot.slane %v9150, 1
  %v9152 = vadd.f32 %v9150, %v9151
  %v9153 = vrot.slane %v9112, 4
  %v9154 = vadd.f32 %v9112, %v9153
  %v9155 = vrot.slane %v9154, 2
  %v9156 = vadd.f32 %v9154, %v9155
  %v9157 = vrot.slane %v9156, 1
  %v9158 = vadd.f32 %v9156, %v9157
  %v9159 = vrot.slane %v9113, 4
  %v9160 = vadd.f32 %v9113, %v9159
  %v9161 = vrot.slane %v9160, 2
  %v9162 = vadd.f32 %v9160, %v9161
  %v9163 = vrot.slane %v9162, 1
  %v9164 = vadd.f32 %v9162, %v9163
  %v9165 = vrot.slane %v9114, 4
  %v9166 = vadd.f32 %v9114, %v9165
  %v9167 = vrot.slane %v9166, 2
  %v9168 = vadd.f32 %v9166, %v9167
  %v9169 = vrot.slane %v9168, 1
  %v9170 = vadd.f32 %v9168, %v9169
  %v9171 = vrot.slane %v9115, 4
  %v9172 = vadd.f32 %v9115, %v9171
  %v9173 = vrot.slane %v9172, 2
  %v9174 = vadd.f32 %v9172, %v9173
  %v9175 = vrot.slane %v9174, 1
  %v9176 = vadd.f32 %v9174, %v9175
  %v9177 = vrot.slane %v9116, 4
  %v9178 = vadd.f32 %v9116, %v9177
  %v9179 = vrot.slane %v9178, 2
  %v9180 = vadd.f32 %v9178, %v9179
  %v9181 = vrot.slane %v9180, 1
  %v9182 = vadd.f32 %v9180, %v9181
  %v9183 = vrot.slane %v9117, 4
  %v9184 = vadd.f32 %v9117, %v9183
  %v9185 = vrot.slane %v9184, 2
  %v9186 = vadd.f32 %v9184, %v9185
  %v9187 = vrot.slane %v9186, 1
  %v9188 = vadd.f32 %v9186, %v9187
  %v9189 = vrot.slane %v9118, 4
  %v9190 = vadd.f32 %v9118, %v9189
  %v9191 = vrot.slane %v9190, 2
  %v9192 = vadd.f32 %v9190, %v9191
  %v9193 = vrot.slane %v9192, 1
  %v9194 = vadd.f32 %v9192, %v9193
  %v9195 = vrot.slane %v9119, 4
  %v9196 = vadd.f32 %v9119, %v9195
  %v9197 = vrot.slane %v9196, 2
  %v9198 = vadd.f32 %v9196, %v9197
  %v9199 = vrot.slane %v9198, 1
  %v9200 = vadd.f32 %v9198, %v9199
  %v9201 = vrot.slane %v9120, 4
  %v9202 = vadd.f32 %v9120, %v9201
  %v9203 = vrot.slane %v9202, 2
  %v9204 = vadd.f32 %v9202, %v9203
  %v9205 = vrot.slane %v9204, 1
  %v9206 = vadd.f32 %v9204, %v9205
  %v9207 = vrot.slane %v9121, 4
  %v9208 = vadd.f32 %v9121, %v9207
  %v9209 = vrot.slane %v9208, 2
  %v9210 = vadd.f32 %v9208, %v9209
  %v9211 = vrot.slane %v9210, 1
  %v9212 = vadd.f32 %v9210, %v9211
  %v9213 = vrot.slane %v9122, 4
  %v9214 = vadd.f32 %v9122, %v9213
  %v9215 = vrot.slane %v9214, 2
  %v9216 = vadd.f32 %v9214, %v9215
  %v9217 = vrot.slane %v9216, 1
  %v9218 = vadd.f32 %v9216, %v9217
  %s9219 = sld [smem:[#allocation2]]
  %v9220 = vstv %s9219
  %v9221 = vadd.f32 %v9128, %v9220
  %v9222 = vadd.f32 %v9134, %v9220
  %v9223 = vadd.f32 %v9140, %v9220
  %v9224 = vadd.f32 %v9146, %v9220
  %v9225 = vadd.f32 %v9152, %v9220
  %v9226 = vadd.f32 %v9158, %v9220
  %v9227 = vadd.f32 %v9164, %v9220
  %v9228 = vadd.f32 %v9170, %v9220
  %v9229 = vadd.f32 %v9176, %v9220
  %v9230 = vadd.f32 %v9182, %v9220
  %v9231 = vadd.f32 %v9188, %v9220
  %v9232 = vadd.f32 %v9194, %v9220
  %v9233 = vadd.f32 %v9200, %v9220
  %v9234 = vadd.f32 %v9206, %v9220
  %v9235 = vadd.f32 %v9212, %v9220
  %v9236 = vadd.f32 %v9218, %v9220
  %v9253 = vcombine.low %v9221, %v9222
  %v9254 = vcombine.low %v9223, %v9224
  %v9255 = vcombine.low %v9225, %v9226
  %v9256 = vcombine.low %v9227, %v9228
  %v9258 = vunpack.c.l.s4 1966171168
  %v9259 = vunpack.c.0.s8 %v9258
  %v9260 = vlaneseq
  %v9261 = vshrl.u32 %v9260, 7
  %v9262 = vsub.s32 %v9259, %v9261
  %v9263 = vrot.slane %v9253, %v9262
  %v9265 = vunpack.c.l.s4 1966171168
  %v9266 = vunpack.c.0.s8 %v9265
  %v9267 = vlaneseq
  %v9268 = vshrl.u32 %v9267, 7
  %v9269 = vsub.s32 %v9266, %v9268
  %v9270 = vrot.slane %v9254, %v9269
  %v9272 = vunpack.c.l.s4 1966171168
  %v9273 = vunpack.c.0.s8 %v9272
  %v9274 = vlaneseq
  %v9275 = vshrl.u32 %v9274, 7
  %v9276 = vsub.s32 %v9273, %v9275
  %v9277 = vrot.slane %v9255, %v9276
  %v9279 = vunpack.c.l.s4 1966171168
  %v9280 = vunpack.c.0.s8 %v9279
  %v9281 = vlaneseq
  %v9282 = vshrl.u32 %v9281, 7
  %v9283 = vsub.s32 %v9280, %v9282
  %v9284 = vrot.slane %v9256, %v9283
  %v9285 = vcombine.low %v9263, %v9270
  %v9286 = vcombine.low %v9277, %v9284
  %v9288 = vunpack.c.l.s4 1966171168
  %v9289 = vunpack.c.0.s8 %v9288
  %v9290 = vlaneseq
  %v9291 = vshrl.u32 %v9290, 7
  %v9292 = vsub.s32 %v9289, %v9291
  %v9293 = vrot.slane %v9285, %v9292
  %v9295 = vunpack.c.l.s4 1966171168
  %v9296 = vunpack.c.0.s8 %v9295
  %v9297 = vlaneseq
  %v9298 = vshrl.u32 %v9297, 7
  %v9299 = vsub.s32 %v9296, %v9298
  %v9300 = vrot.slane %v9286, %v9299
  %v9301 = vcombine.low %v9293, %v9300
  %v9302 = vcombine.low %v9229, %v9230
  %v9303 = vcombine.low %v9231, %v9232
  %v9304 = vcombine.low %v9233, %v9234
  %v9305 = vcombine.low %v9235, %v9236
  %v9307 = vunpack.c.l.s4 1966171168
  %v9308 = vunpack.c.0.s8 %v9307
  %v9309 = vlaneseq
  %v9310 = vshrl.u32 %v9309, 7
  %v9311 = vsub.s32 %v9308, %v9310
  %v9312 = vrot.slane %v9302, %v9311
  %v9314 = vunpack.c.l.s4 1966171168
  %v9315 = vunpack.c.0.s8 %v9314
  %v9316 = vlaneseq
  %v9317 = vshrl.u32 %v9316, 7
  %v9318 = vsub.s32 %v9315, %v9317
  %v9319 = vrot.slane %v9303, %v9318
  %v9321 = vunpack.c.l.s4 1966171168
  %v9322 = vunpack.c.0.s8 %v9321
  %v9323 = vlaneseq
  %v9324 = vshrl.u32 %v9323, 7
  %v9325 = vsub.s32 %v9322, %v9324
  %v9326 = vrot.slane %v9304, %v9325
  %v9328 = vunpack.c.l.s4 1966171168
  %v9329 = vunpack.c.0.s8 %v9328
  %v9330 = vlaneseq
  %v9331 = vshrl.u32 %v9330, 7
  %v9332 = vsub.s32 %v9329, %v9331
  %v9333 = vrot.slane %v9305, %v9332
  %v9334 = vcombine.low %v9312, %v9319
  %v9335 = vcombine.low %v9326, %v9333
  %v9337 = vunpack.c.l.s4 1966171168
  %v9338 = vunpack.c.0.s8 %v9337
  %v9339 = vlaneseq
  %v9340 = vshrl.u32 %v9339, 7
  %v9341 = vsub.s32 %v9338, %v9340
  %v9342 = vrot.slane %v9334, %v9341
  %v9344 = vunpack.c.l.s4 1966171168
  %v9345 = vunpack.c.0.s8 %v9344
  %v9346 = vlaneseq
  %v9347 = vshrl.u32 %v9346, 7
  %v9348 = vsub.s32 %v9345, %v9347
  %v9349 = vrot.slane %v9335, %v9348
  %v9350 = vcombine.low %v9342, %v9349
  %9353 = vst [vmem:[%s9] sm:$0xff] %v9301
  %9354 = vst [vmem:[%s9 + $0x8] sm:$0xff] %v9350
  // Predicated region
  $region38: #{regression_model_forward.1} parent=0 // pred_check
    _
  $region39: #{regression_model_forward.1} parent=0 // pred_check_branch
    %9356 = sbr.rel (0) target = $region41
  $region40: #{regression_model_forward.1} parent=0 // pred_region
    _
  $region41: #{regression_model_forward.1} parent=0 // pred_fallthru
    _
  // Predicated region
  $region42: #{regression_model_forward.1} parent=0 // pred_check
    _
  $region43: #{regression_model_forward.1} parent=0 // pred_check_branch
    %9358 = sbr.rel (0) target = $region45
  $region44: #{regression_model_forward.1} parent=0 // pred_region
    _
  $region45: #{regression_model_forward.1} parent=0 // pred_fallthru
    _

</llo_original>
